<compile_context>
chip_gen: v7x
topology: tpu7x:2x2x1
jax: 0.10.0
libtpu: 0.0.40
codegen_flags: <defaults>
</compile_context>

<pallas_src>
import math

import numpy as np
import jax
import jax.numpy as jnp
from jax.experimental import pallas as pl
from jax.experimental.pallas import tpu as pltpu


# --------------------------------------------------------------------------- #
# Static index helpers
# --------------------------------------------------------------------------- #
# pooled1 row i maps to the fold-by-4 coords of the pad=2 map:  i + 2 = 4*U + rg
#   rg in {0,1}: valid U in {1..4} (Uix = U-1);  rg in {2,3}: U in {0..3} (Uix = U)
# PERM16[rg*4 + Uix] = i   (same table is used for columns)
PERM16 = np.array(
    [4 * u + (rg + 2 if rg < 2 else rg - 2) for rg in range(4) for u in range(4)],
    dtype=np.int32)


# --------------------------------------------------------------------------- #
# One-time weight preparation (host / numpy)
# --------------------------------------------------------------------------- #
def _prep_conv1(w1):
    """(5,5,3,32) HWIO -> (192,128): K=(tap a,b; rh; rw; ci), cols=(phase 2e+f; co)."""
    w = np.asarray(w1, np.float32)
    cin, cout = w.shape[2], w.shape[3]
    out = np.zeros((2, 2, 4, 4, cin, 2, 2, cout), np.float32)
    for a in range(2):
        for b in range(2):
            for rh in range(4):
                for rw in range(4):
                    for e in range(2):
                        for f in range(2):
                            kh = 4 * a + rh - 2 * e
                            kw = 4 * b + rw - 2 * f
                            if 0 <= kh < 5 and 0 <= kw < 5:
                                out[a, b, rh, rw, :, e, f, :] = w[kh, kw]
    return jnp.asarray(out.reshape(2 * 2 * 16 * cin, 4 * cout), jnp.bfloat16)


def _prep_conv2(w2):
    """(5,5,32,128) HWIO -> (2048,512):
       K=(tap a,b; class ch,cw; rhi; rwi; ci), cols=(phase 2e+f; co)."""
    w = np.asarray(w2, np.float32)
    cin, cout = w.shape[2], w.shape[3]
    out = np.zeros((2, 2, 2, 2, 2, 2, cin, 2, 2, cout), np.float32)
    for a in range(2):
        for b in range(2):
            for ch in range(2):
                for cw in range(2):
                    for rhi in range(2):
                        for rwi in range(2):
                            rg, cg = 2 * ch + rhi, 2 * cw + rwi
                            for e in range(2):
                                for f in range(2):
                                    kh = 4 * a + rg - 2 * e
                                    kw = 4 * b + cg - 2 * f
                                    if 0 <= kh < 5 and 0 <= kw < 5:
                                        out[a, b, ch, cw, rhi, rwi, :, e, f, :] = w[kh, kw]
    return jnp.asarray(out.reshape(64 * cin, 4 * cout), jnp.bfloat16)


def _prep_conv3(w3):
    """(5,5,128,256) HWIO -> dense im2col matrix (3200,256); K order (kh,kw,ci)."""
    w = np.asarray(w3, np.float32)
    return jnp.asarray(w.reshape(5 * 5 * w.shape[2], w.shape[3]), jnp.bfloat16)


def _prep_fc1(fw1):
    """(1024,128) with torch-flatten rows (c*4 + s) -> rows ordered (s*256 + c)."""
    w = np.asarray(fw1, np.float32).reshape(256, 4, 128).transpose(1, 0, 2)
    return jnp.asarray(w.reshape(1024, 128), jnp.bfloat16)


def prepare_params(p):
    return dict(
        w1p=_prep_conv1(p["w1"]),
        b1t=jnp.tile(p["b1"].astype(jnp.float32), 4).reshape(1, 128),
        w2p=_prep_conv2(p["w2"]),
        b2t=jnp.tile(p["b2"].astype(jnp.float32), 4).reshape(1, 512),
        w3m=_prep_conv3(p["w3"]),
        b3=p["b3"].astype(jnp.float32).reshape(1, 256),
        fw1p=_prep_fc1(p["fw1"]),
        fb1=p["fb1"].astype(jnp.float32).reshape(1, 128),
        fw2=p["fw2"].astype(jnp.bfloat16),
        fb2=p["fb2"].astype(jnp.float32).reshape(1, 2),
    )


# --------------------------------------------------------------------------- #
# Host-side input re-layout (pure relayout; produces the stage-1 GEMM lhs)
# --------------------------------------------------------------------------- #
def _fold_input(x_nchw):
    """NCHW f32 -> (N*256, 192) bf16, rows ordered (rg, cg, n, Uix, Vix)."""
    N, C, H, W = x_nchw.shape
    assert C == 3 and H == 64 and W == 64, "Challenge expects 3x64x64 inputs"
    x = jnp.transpose(x_nchw, (0, 2, 3, 1)).astype(jnp.bfloat16)        # (N,64,64,3)
    xp = jnp.pad(x, ((0, 0), (2, 2), (2, 2), (0, 0)))                   # (N,68,68,3)
    xf = xp.reshape(N, 17, 4, 17, 4, 3).transpose(0, 1, 3, 2, 4, 5)     # (N,17,17,4,4,3)
    taps = [xf[:, a:a + 16, b:b + 16] for a in (0, 1) for b in (0, 1)]
    lhs = jnp.stack(taps, axis=3).reshape(N, 16, 16, 192)               # K=(tap,rh,rw,ci)
    perm = jnp.asarray(PERM16)
    lhs = jnp.take(lhs, perm, axis=1)                                   # rows -> (rg,Uix)
    lhs = jnp.take(lhs, perm, axis=2)                                   # cols -> (cg,Vix)
    lhs = lhs.reshape(N, 4, 4, 4, 4, 192).transpose(1, 3, 0, 2, 4, 5)
    return lhs.reshape(N * 256, 192)


# --------------------------------------------------------------------------- #
# Fused Pallas kernel
# --------------------------------------------------------------------------- #
def _challenge_kernel(lhs1_ref, w1_ref, b1_ref, w2_ref, b2_ref, w3_ref, b3_ref,
                      fw1_ref, fb1_ref, fw2_ref, fb2_ref, o_ref):
    n = o_ref.shape[0]

    # ---------------- conv1 + bias + ReLU + 2x2 max-pool (one GEMM) -------- #
    y1 = jnp.dot(lhs1_ref[...], w1_ref[...], preferred_element_type=jnp.float32)
    y1 = jnp.maximum(y1 + b1_ref[...], 0.0)                              # (256n,128)
    p1 = jnp.maximum(jnp.maximum(y1[:, 0:32], y1[:, 32:64]),
                     jnp.maximum(y1[:, 64:96], y1[:, 96:128]))           # (256n, 32)
    p1 = p1.astype(jnp.bfloat16)

    # rows are ordered (rg, cg, n, Uix, Vix): regroup into fold-by-4 blocks
    p1r = p1.reshape(16, n, 4, 4, 32)                                    # [(rg,cg),n,U,V,c]

    def cls(ch, cw):                       # 128-lane class block (same U/V offsets)
        return jnp.concatenate(
            [p1r[(2 * ch + rhi) * 4 + (2 * cw + rwi)]
             for rhi in range(2) for rwi in range(2)], axis=-1)          # (n,4,4,128)

    classes = [cls(ch, cw) for ch in range(2) for cw in range(2)]

    def shift(x, du, dv):                  # y[:,p,q,:] = x[:,p+du,q+dv,:], zero-filled
        if du == 1:
            x = jnp.concatenate([x[:, 1:], jnp.zeros_like(x[:, :1])], axis=1)
        elif du == -1:
            x = jnp.concatenate([jnp.zeros_like(x[:, :1]), x[:, :-1]], axis=1)
        if dv == 1:
            x = jnp.concatenate([x[:, :, 1:], jnp.zeros_like(x[:, :, :1])], axis=2)
        elif dv == -1:
            x = jnp.concatenate([jnp.zeros_like(x[:, :, :1]), x[:, :, :-1]], axis=2)
        return x

    # ---------------- conv2 + bias + ReLU + pool (one GEMM, taps in K) ----- #
    parts = []
    for a in range(2):
        for b in range(2):
            for ch in range(2):
                for cw in range(2):
                    parts.append(shift(classes[ch * 2 + cw], a + ch - 1, b + cw - 1))
    lhs2 = jnp.concatenate(parts, axis=-1).reshape(n * 16, 2048)         # (16n,2048)
    y2 = jnp.dot(lhs2, w2_ref[...], preferred_element_type=jnp.float32)
    y2 = jnp.maximum(y2 + b2_ref[...], 0.0)                              # (16n, 512)
    p2 = jnp.maximum(jnp.maximum(y2[:, 0:128], y2[:, 128:256]),
                     jnp.maximum(y2[:, 256:384], y2[:, 384:512]))        # (16n, 128)
    p2 = p2.astype(jnp.bfloat16).reshape(n, 4, 4, 128)

    # ---------------- conv3 + bias + ReLU (dense im2col GEMM) -------------- #
    zero = jnp.zeros((n, 128), jnp.bfloat16)
    rows = []
    for oh in range(2):
        for ow in range(2):
            chunks = []
            for kh in range(5):
                ih = 2 * oh + kh - 2
                for kw in range(5):
                    iw = 2 * ow + kw - 2
                    chunks.append(p2[:, ih, iw, :]
                                  if (0 <= ih < 4 and 0 <= iw < 4) else zero)
            rows.append(jnp.concatenate(chunks, axis=-1))                # (n,3200)
    lhs3 = jnp.concatenate(rows, axis=0)                                 # (4n,3200)
    y3 = jnp.dot(lhs3, w3_ref[...], preferred_element_type=jnp.float32)
    act3 = jnp.maximum(y3 + b3_ref[...], 0.0)                            # (4n, 256)

    # -------- flatten (torch NCHW order absorbed into fc1 rows) + MLP ------ #
    flat = jnp.concatenate([act3[s * n:(s + 1) * n, :] for s in range(4)],
                           axis=-1).astype(jnp.bfloat16)                 # (n,1024)
    h = jnp.dot(flat, fw1_ref[...], preferred_element_type=jnp.float32)
    h = jnp.maximum(h + fb1_ref[...], 0.0).astype(jnp.bfloat16)          # (n, 128)
    out = jnp.dot(h, fw2_ref[...], preferred_element_type=jnp.float32) + fb2_ref[...]
    o_ref[...] = out


def _vmem_spec():
    return pl.BlockSpec(memory_space=pltpu.MemorySpace.VMEM)


@jax.jit
def challenge_forward(x_nchw, prep):
    N = x_nchw.shape[0]
    lhs1 = _fold_input(x_nchw)
    return pl.pallas_call(
        _challenge_kernel,
        out_shape=jax.ShapeDtypeStruct((N, 2), jnp.float32),
        in_specs=[_vmem_spec() for _ in range(11)],
        out_specs=_vmem_spec(),
        compiler_params=pltpu.CompilerParams(vmem_limit_bytes=32 * 1024 * 1024),
    )(lhs1, prep["w1p"], prep["b1t"], prep["w2p"], prep["b2t"],
      prep["w3m"], prep["b3"], prep["fw1p"], prep["fb1"],
      prep["fw2"], prep["fb2"])


# --------------------------------------------------------------------------- #
# Deterministic parameters (same statistics as the torch module's init)
# --------------------------------------------------------------------------- #
def init_params():
    key = jax.random.PRNGKey(42)
    k1, k2, k3, k4, k5 = jax.random.split(key, 5)
    w1 = jax.random.normal(k1, (5, 5, 3, 32), jnp.float32) * math.sqrt(1.0 / (5 * 5 * 3))
    w2 = jax.random.normal(k2, (5, 5, 32, 128), jnp.float32) * math.sqrt(1.0 / (5 * 5 * 32))
    w3 = jax.random.normal(k3, (5, 5, 128, 256), jnp.float32) * math.sqrt(1.0 / (5 * 5 * 128))
    fw1 = jax.random.normal(k4, (1024, 128), jnp.float32) * math.sqrt(1.0 / 1024)
    fw2 = jax.random.normal(k5, (128, 2), jnp.float32) * math.sqrt(1.0 / 128)
    return {
        "w1": w1, "b1": jnp.zeros((32,), jnp.float32),
        "w2": w2, "b2": jnp.zeros((128,), jnp.float32),
        "w3": w3, "b3": jnp.zeros((256,), jnp.float32),
        "fw1": fw1, "fb1": jnp.zeros((128,), jnp.float32),
        "fw2": fw2, "fb2": jnp.zeros((2,), jnp.float32),
    }


# --------------------------------------------------------------------------- #
# Plain-JAX (f32) reference for validation
# --------------------------------------------------------------------------- #
def reference_forward(x_nchw, params):
    hi = jax.lax.Precision.HIGHEST

    def conv(x, w_hwio, b):
        w_oihw = jnp.transpose(w_hwio, (3, 2, 0, 1))
        y = jax.lax.conv_general_dilated(
            x, w_oihw, window_strides=(2, 2), padding=((2, 2), (2, 2)),
            dimension_numbers=("NCHW", "OIHW", "NCHW"), precision=hi)
        return jax.nn.relu(y + b[None, :, None, None])

    def pool(x):
        return jax.lax.reduce_window(x, -jnp.inf, jax.lax.max,
                                     (1, 1, 2, 2), (1, 1, 2, 2), "VALID")

    x = pool(conv(x_nchw, params["w1"], params["b1"]))
    x = pool(conv(x, params["w2"], params["b2"]))
    x = conv(x, params["w3"], params["b3"])
    x = x.reshape(x.shape[0], -1)                       # NCHW flatten (torch .view)
    x = jax.nn.relu(jnp.dot(x, params["fw1"], precision=hi) + params["fb1"])
    return jnp.dot(x, params["fw2"], precision=hi) + params["fb2"]


# --------------------------------------------------------------------------- #
# main
# --------------------------------------------------------------------------- #
if __name__ == "__main__":
    params = init_params()
    prep = prepare_params(params)
    # batch=2, NCHW 3x64x64 (the only spatial size consistent with fc_1 = 256*2*2)
    x = jax.random.normal(jax.random.PRNGKey(0), (2, 3, 64, 64), jnp.float32)

    out = jax.block_until_ready(challenge_forward(x, prep))
    ref = jax.block_until_ready(reference_forward(x, params))

    assert out.shape == (2, 2), f"unexpected output shape {out.shape}"
    max_err = float(jnp.max(jnp.abs(out - ref)))
    assert max_err < 5e-2, f"mismatch vs reference, max abs err = {max_err}"

    print("KERNEL_OK")
</pallas_src>

<mosaic_0001>
module attributes {stable_mosaic.version = 11 : i64} {
  func.func @_challenge_kernel(%arg0: memref<512x192xbf16, #tpu.memory_space<vmem>>, %arg1: memref<192x128xbf16, #tpu.memory_space<vmem>>, %arg2: memref<1x128xf32, #tpu.memory_space<vmem>>, %arg3: memref<2048x512xbf16, #tpu.memory_space<vmem>>, %arg4: memref<1x512xf32, #tpu.memory_space<vmem>>, %arg5: memref<3200x256xbf16, #tpu.memory_space<vmem>>, %arg6: memref<1x256xf32, #tpu.memory_space<vmem>>, %arg7: memref<1024x128xbf16, #tpu.memory_space<vmem>>, %arg8: memref<1x128xf32, #tpu.memory_space<vmem>>, %arg9: memref<128x2xbf16, #tpu.memory_space<vmem>>, %arg10: memref<1x2xf32, #tpu.memory_space<vmem>>, %arg11: memref<2x2xf32, #tpu.memory_space<vmem>>) attributes {dimension_semantics = [], scalar_prefetch = 0 : i64, scratch_operands = 0 : i64, tpu.core_type = #tpu.core_type<tc>} {
    %c0 = arith.constant 0 : index
    %c0_0 = arith.constant 0 : index
    %0 = vector.load %arg0[%c0, %c0_0] : memref<512x192xbf16, #tpu.memory_space<vmem>>, vector<512x192xbf16>
    %c0_1 = arith.constant 0 : index
    %c0_2 = arith.constant 0 : index
    %1 = vector.load %arg1[%c0_1, %c0_2] : memref<192x128xbf16, #tpu.memory_space<vmem>>, vector<192x128xbf16>
    %cst = arith.constant dense<0.000000e+00> : vector<512x128xf32>
    %2 = tpu.matmul %0, %1, %cst {dimension_numbers = #tpu.dot_dimension_numbers<[1], [0], [0], [1], [0, 0, 1, 1], [], []>} : vector<512x192xbf16>, vector<192x128xbf16>, vector<512x128xf32> -> vector<512x128xf32>
    %c0_3 = arith.constant 0 : index
    %c0_4 = arith.constant 0 : index
    %3 = vector.load %arg2[%c0_3, %c0_4] : memref<1x128xf32, #tpu.memory_space<vmem>>, vector<1x128xf32>
    %4 = vector.broadcast %3 : vector<1x128xf32> to vector<512x128xf32>
    %5 = arith.addf %2, %4 : vector<512x128xf32>
    %cst_5 = arith.constant 0.000000e+00 : f32
    %6 = vector.broadcast %cst_5 : f32 to vector<512x128xf32>
    %7 = arith.maximumf %5, %6 : vector<512x128xf32>
    %8 = vector.extract_strided_slice %7 {offsets = [0, 0], sizes = [512, 32], strides = [1, 1]} : vector<512x128xf32> to vector<512x32xf32>
    %9 = vector.extract_strided_slice %7 {offsets = [0, 32], sizes = [512, 32], strides = [1, 1]} : vector<512x128xf32> to vector<512x32xf32>
    %10 = arith.maximumf %8, %9 : vector<512x32xf32>
    %11 = vector.extract_strided_slice %7 {offsets = [0, 64], sizes = [512, 32], strides = [1, 1]} : vector<512x128xf32> to vector<512x32xf32>
    %12 = vector.extract_strided_slice %7 {offsets = [0, 96], sizes = [512, 32], strides = [1, 1]} : vector<512x128xf32> to vector<512x32xf32>
    %13 = arith.maximumf %11, %12 : vector<512x32xf32>
    %14 = arith.maximumf %10, %13 : vector<512x32xf32>
    %15 = arith.truncf %14 : vector<512x32xf32> to vector<512x32xbf16>
    %16 = vector.shape_cast %15 : vector<512x32xbf16> to vector<16x2x4x4x32xbf16>
    %17 = vector.extract_strided_slice %16 {offsets = [0, 0, 0, 0, 0], sizes = [1, 2, 4, 4, 32], strides = [1, 1, 1, 1, 1]} : vector<16x2x4x4x32xbf16> to vector<1x2x4x4x32xbf16>
    %18 = vector.shape_cast %17 : vector<1x2x4x4x32xbf16> to vector<2x4x4x32xbf16>
    %19 = vector.extract_strided_slice %16 {offsets = [1, 0, 0, 0, 0], sizes = [1, 2, 4, 4, 32], strides = [1, 1, 1, 1, 1]} : vector<16x2x4x4x32xbf16> to vector<1x2x4x4x32xbf16>
    %20 = vector.shape_cast %19 : vector<1x2x4x4x32xbf16> to vector<2x4x4x32xbf16>
    %21 = vector.extract_strided_slice %16 {offsets = [4, 0, 0, 0, 0], sizes = [1, 2, 4, 4, 32], strides = [1, 1, 1, 1, 1]} : vector<16x2x4x4x32xbf16> to vector<1x2x4x4x32xbf16>
    %22 = vector.shape_cast %21 : vector<1x2x4x4x32xbf16> to vector<2x4x4x32xbf16>
    %23 = vector.extract_strided_slice %16 {offsets = [5, 0, 0, 0, 0], sizes = [1, 2, 4, 4, 32], strides = [1, 1, 1, 1, 1]} : vector<16x2x4x4x32xbf16> to vector<1x2x4x4x32xbf16>
    %24 = vector.shape_cast %23 : vector<1x2x4x4x32xbf16> to vector<2x4x4x32xbf16>
    %25 = tpu.concatenate %18, %20, %22, %24 in 3 : vector<2x4x4x32xbf16>, vector<2x4x4x32xbf16>, vector<2x4x4x32xbf16>, vector<2x4x4x32xbf16> -> vector<2x4x4x128xbf16>
    %26 = vector.extract_strided_slice %16 {offsets = [2, 0, 0, 0, 0], sizes = [1, 2, 4, 4, 32], strides = [1, 1, 1, 1, 1]} : vector<16x2x4x4x32xbf16> to vector<1x2x4x4x32xbf16>
    %27 = vector.shape_cast %26 : vector<1x2x4x4x32xbf16> to vector<2x4x4x32xbf16>
    %28 = vector.extract_strided_slice %16 {offsets = [3, 0, 0, 0, 0], sizes = [1, 2, 4, 4, 32], strides = [1, 1, 1, 1, 1]} : vector<16x2x4x4x32xbf16> to vector<1x2x4x4x32xbf16>
    %29 = vector.shape_cast %28 : vector<1x2x4x4x32xbf16> to vector<2x4x4x32xbf16>
    %30 = vector.extract_strided_slice %16 {offsets = [6, 0, 0, 0, 0], sizes = [1, 2, 4, 4, 32], strides = [1, 1, 1, 1, 1]} : vector<16x2x4x4x32xbf16> to vector<1x2x4x4x32xbf16>
    %31 = vector.shape_cast %30 : vector<1x2x4x4x32xbf16> to vector<2x4x4x32xbf16>
    %32 = vector.extract_strided_slice %16 {offsets = [7, 0, 0, 0, 0], sizes = [1, 2, 4, 4, 32], strides = [1, 1, 1, 1, 1]} : vector<16x2x4x4x32xbf16> to vector<1x2x4x4x32xbf16>
    %33 = vector.shape_cast %32 : vector<1x2x4x4x32xbf16> to vector<2x4x4x32xbf16>
    %34 = tpu.concatenate %27, %29, %31, %33 in 3 : vector<2x4x4x32xbf16>, vector<2x4x4x32xbf16>, vector<2x4x4x32xbf16>, vector<2x4x4x32xbf16> -> vector<2x4x4x128xbf16>
    %35 = vector.extract_strided_slice %16 {offsets = [8, 0, 0, 0, 0], sizes = [1, 2, 4, 4, 32], strides = [1, 1, 1, 1, 1]} : vector<16x2x4x4x32xbf16> to vector<1x2x4x4x32xbf16>
    %36 = vector.shape_cast %35 : vector<1x2x4x4x32xbf16> to vector<2x4x4x32xbf16>
    %37 = vector.extract_strided_slice %16 {offsets = [9, 0, 0, 0, 0], sizes = [1, 2, 4, 4, 32], strides = [1, 1, 1, 1, 1]} : vector<16x2x4x4x32xbf16> to vector<1x2x4x4x32xbf16>
    %38 = vector.shape_cast %37 : vector<1x2x4x4x32xbf16> to vector<2x4x4x32xbf16>
    %39 = vector.extract_strided_slice %16 {offsets = [12, 0, 0, 0, 0], sizes = [1, 2, 4, 4, 32], strides = [1, 1, 1, 1, 1]} : vector<16x2x4x4x32xbf16> to vector<1x2x4x4x32xbf16>
    %40 = vector.shape_cast %39 : vector<1x2x4x4x32xbf16> to vector<2x4x4x32xbf16>
    %41 = vector.extract_strided_slice %16 {offsets = [13, 0, 0, 0, 0], sizes = [1, 2, 4, 4, 32], strides = [1, 1, 1, 1, 1]} : vector<16x2x4x4x32xbf16> to vector<1x2x4x4x32xbf16>
    %42 = vector.shape_cast %41 : vector<1x2x4x4x32xbf16> to vector<2x4x4x32xbf16>
    %43 = tpu.concatenate %36, %38, %40, %42 in 3 : vector<2x4x4x32xbf16>, vector<2x4x4x32xbf16>, vector<2x4x4x32xbf16>, vector<2x4x4x32xbf16> -> vector<2x4x4x128xbf16>
    %44 = vector.extract_strided_slice %16 {offsets = [10, 0, 0, 0, 0], sizes = [1, 2, 4, 4, 32], strides = [1, 1, 1, 1, 1]} : vector<16x2x4x4x32xbf16> to vector<1x2x4x4x32xbf16>
    %45 = vector.shape_cast %44 : vector<1x2x4x4x32xbf16> to vector<2x4x4x32xbf16>
    %46 = vector.extract_strided_slice %16 {offsets = [11, 0, 0, 0, 0], sizes = [1, 2, 4, 4, 32], strides = [1, 1, 1, 1, 1]} : vector<16x2x4x4x32xbf16> to vector<1x2x4x4x32xbf16>
    %47 = vector.shape_cast %46 : vector<1x2x4x4x32xbf16> to vector<2x4x4x32xbf16>
    %48 = vector.extract_strided_slice %16 {offsets = [14, 0, 0, 0, 0], sizes = [1, 2, 4, 4, 32], strides = [1, 1, 1, 1, 1]} : vector<16x2x4x4x32xbf16> to vector<1x2x4x4x32xbf16>
    %49 = vector.shape_cast %48 : vector<1x2x4x4x32xbf16> to vector<2x4x4x32xbf16>
    %50 = vector.extract_strided_slice %16 {offsets = [15, 0, 0, 0, 0], sizes = [1, 2, 4, 4, 32], strides = [1, 1, 1, 1, 1]} : vector<16x2x4x4x32xbf16> to vector<1x2x4x4x32xbf16>
    %51 = vector.shape_cast %50 : vector<1x2x4x4x32xbf16> to vector<2x4x4x32xbf16>
    %52 = tpu.concatenate %45, %47, %49, %51 in 3 : vector<2x4x4x32xbf16>, vector<2x4x4x32xbf16>, vector<2x4x4x32xbf16>, vector<2x4x4x32xbf16> -> vector<2x4x4x128xbf16>
    %cst_6 = arith.constant 0.000000e+00 : bf16
    %53 = vector.broadcast %cst_6 : bf16 to vector<2x1x4x128xbf16>
    %54 = vector.extract_strided_slice %25 {offsets = [0, 0, 0, 0], sizes = [2, 3, 4, 128], strides = [1, 1, 1, 1]} : vector<2x4x4x128xbf16> to vector<2x3x4x128xbf16>
    %55 = tpu.concatenate %53, %54 in 1 : vector<2x1x4x128xbf16>, vector<2x3x4x128xbf16> -> vector<2x4x4x128xbf16>
    %cst_7 = arith.constant 0.000000e+00 : bf16
    %56 = vector.broadcast %cst_7 : bf16 to vector<2x4x1x128xbf16>
    %57 = vector.extract_strided_slice %55 {offsets = [0, 0, 0, 0], sizes = [2, 4, 3, 128], strides = [1, 1, 1, 1]} : vector<2x4x4x128xbf16> to vector<2x4x3x128xbf16>
    %58 = tpu.concatenate %56, %57 in 2 : vector<2x4x1x128xbf16>, vector<2x4x3x128xbf16> -> vector<2x4x4x128xbf16>
    %cst_8 = arith.constant 0.000000e+00 : bf16
    %59 = vector.broadcast %cst_8 : bf16 to vector<2x1x4x128xbf16>
    %60 = vector.extract_strided_slice %34 {offsets = [0, 0, 0, 0], sizes = [2, 3, 4, 128], strides = [1, 1, 1, 1]} : vector<2x4x4x128xbf16> to vector<2x3x4x128xbf16>
    %61 = tpu.concatenate %59, %60 in 1 : vector<2x1x4x128xbf16>, vector<2x3x4x128xbf16> -> vector<2x4x4x128xbf16>
    %cst_9 = arith.constant 0.000000e+00 : bf16
    %62 = vector.broadcast %cst_9 : bf16 to vector<2x4x1x128xbf16>
    %63 = vector.extract_strided_slice %43 {offsets = [0, 0, 0, 0], sizes = [2, 4, 3, 128], strides = [1, 1, 1, 1]} : vector<2x4x4x128xbf16> to vector<2x4x3x128xbf16>
    %64 = tpu.concatenate %62, %63 in 2 : vector<2x4x1x128xbf16>, vector<2x4x3x128xbf16> -> vector<2x4x4x128xbf16>
    %cst_10 = arith.constant 0.000000e+00 : bf16
    %65 = vector.broadcast %cst_10 : bf16 to vector<2x1x4x128xbf16>
    %66 = vector.extract_strided_slice %25 {offsets = [0, 0, 0, 0], sizes = [2, 3, 4, 128], strides = [1, 1, 1, 1]} : vector<2x4x4x128xbf16> to vector<2x3x4x128xbf16>
    %67 = tpu.concatenate %65, %66 in 1 : vector<2x1x4x128xbf16>, vector<2x3x4x128xbf16> -> vector<2x4x4x128xbf16>
    %cst_11 = arith.constant 0.000000e+00 : bf16
    %68 = vector.broadcast %cst_11 : bf16 to vector<2x1x4x128xbf16>
    %69 = vector.extract_strided_slice %34 {offsets = [0, 0, 0, 0], sizes = [2, 3, 4, 128], strides = [1, 1, 1, 1]} : vector<2x4x4x128xbf16> to vector<2x3x4x128xbf16>
    %70 = tpu.concatenate %68, %69 in 1 : vector<2x1x4x128xbf16>, vector<2x3x4x128xbf16> -> vector<2x4x4x128xbf16>
    %71 = vector.extract_strided_slice %70 {offsets = [0, 0, 1, 0], sizes = [2, 4, 3, 128], strides = [1, 1, 1, 1]} : vector<2x4x4x128xbf16> to vector<2x4x3x128xbf16>
    %cst_12 = arith.constant 0.000000e+00 : bf16
    %72 = vector.broadcast %cst_12 : bf16 to vector<2x4x1x128xbf16>
    %73 = tpu.concatenate %71, %72 in 2 : vector<2x4x3x128xbf16>, vector<2x4x1x128xbf16> -> vector<2x4x4x128xbf16>
    %74 = vector.extract_strided_slice %52 {offsets = [0, 0, 1, 0], sizes = [2, 4, 3, 128], strides = [1, 1, 1, 1]} : vector<2x4x4x128xbf16> to vector<2x4x3x128xbf16>
    %cst_13 = arith.constant 0.000000e+00 : bf16
    %75 = vector.broadcast %cst_13 : bf16 to vector<2x4x1x128xbf16>
    %76 = tpu.concatenate %74, %75 in 2 : vector<2x4x3x128xbf16>, vector<2x4x1x128xbf16> -> vector<2x4x4x128xbf16>
    %cst_14 = arith.constant 0.000000e+00 : bf16
    %77 = vector.broadcast %cst_14 : bf16 to vector<2x4x1x128xbf16>
    %78 = vector.extract_strided_slice %25 {offsets = [0, 0, 0, 0], sizes = [2, 4, 3, 128], strides = [1, 1, 1, 1]} : vector<2x4x4x128xbf16> to vector<2x4x3x128xbf16>
    %79 = tpu.concatenate %77, %78 in 2 : vector<2x4x1x128xbf16>, vector<2x4x3x128xbf16> -> vector<2x4x4x128xbf16>
    %80 = vector.extract_strided_slice %43 {offsets = [0, 1, 0, 0], sizes = [2, 3, 4, 128], strides = [1, 1, 1, 1]} : vector<2x4x4x128xbf16> to vector<2x3x4x128xbf16>
    %cst_15 = arith.constant 0.000000e+00 : bf16
    %81 = vector.broadcast %cst_15 : bf16 to vector<2x1x4x128xbf16>
    %82 = tpu.concatenate %80, %81 in 1 : vector<2x3x4x128xbf16>, vector<2x1x4x128xbf16> -> vector<2x4x4x128xbf16>
    %cst_16 = arith.constant 0.000000e+00 : bf16
    %83 = vector.broadcast %cst_16 : bf16 to vector<2x4x1x128xbf16>
    %84 = vector.extract_strided_slice %82 {offsets = [0, 0, 0, 0], sizes = [2, 4, 3, 128], strides = [1, 1, 1, 1]} : vector<2x4x4x128xbf16> to vector<2x4x3x128xbf16>
    %85 = tpu.concatenate %83, %84 in 2 : vector<2x4x1x128xbf16>, vector<2x4x3x128xbf16> -> vector<2x4x4x128xbf16>
    %86 = vector.extract_strided_slice %52 {offsets = [0, 1, 0, 0], sizes = [2, 3, 4, 128], strides = [1, 1, 1, 1]} : vector<2x4x4x128xbf16> to vector<2x3x4x128xbf16>
    %cst_17 = arith.constant 0.000000e+00 : bf16
    %87 = vector.broadcast %cst_17 : bf16 to vector<2x1x4x128xbf16>
    %88 = tpu.concatenate %86, %87 in 1 : vector<2x3x4x128xbf16>, vector<2x1x4x128xbf16> -> vector<2x4x4x128xbf16>
    %89 = vector.extract_strided_slice %34 {offsets = [0, 0, 1, 0], sizes = [2, 4, 3, 128], strides = [1, 1, 1, 1]} : vector<2x4x4x128xbf16> to vector<2x4x3x128xbf16>
    %cst_18 = arith.constant 0.000000e+00 : bf16
    %90 = vector.broadcast %cst_18 : bf16 to vector<2x4x1x128xbf16>
    %91 = tpu.concatenate %89, %90 in 2 : vector<2x4x3x128xbf16>, vector<2x4x1x128xbf16> -> vector<2x4x4x128xbf16>
    %92 = vector.extract_strided_slice %43 {offsets = [0, 1, 0, 0], sizes = [2, 3, 4, 128], strides = [1, 1, 1, 1]} : vector<2x4x4x128xbf16> to vector<2x3x4x128xbf16>
    %cst_19 = arith.constant 0.000000e+00 : bf16
    %93 = vector.broadcast %cst_19 : bf16 to vector<2x1x4x128xbf16>
    %94 = tpu.concatenate %92, %93 in 1 : vector<2x3x4x128xbf16>, vector<2x1x4x128xbf16> -> vector<2x4x4x128xbf16>
    %95 = vector.extract_strided_slice %52 {offsets = [0, 1, 0, 0], sizes = [2, 3, 4, 128], strides = [1, 1, 1, 1]} : vector<2x4x4x128xbf16> to vector<2x3x4x128xbf16>
    %cst_20 = arith.constant 0.000000e+00 : bf16
    %96 = vector.broadcast %cst_20 : bf16 to vector<2x1x4x128xbf16>
    %97 = tpu.concatenate %95, %96 in 1 : vector<2x3x4x128xbf16>, vector<2x1x4x128xbf16> -> vector<2x4x4x128xbf16>
    %98 = vector.extract_strided_slice %97 {offsets = [0, 0, 1, 0], sizes = [2, 4, 3, 128], strides = [1, 1, 1, 1]} : vector<2x4x4x128xbf16> to vector<2x4x3x128xbf16>
    %cst_21 = arith.constant 0.000000e+00 : bf16
    %99 = vector.broadcast %cst_21 : bf16 to vector<2x4x1x128xbf16>
    %100 = tpu.concatenate %98, %99 in 2 : vector<2x4x3x128xbf16>, vector<2x4x1x128xbf16> -> vector<2x4x4x128xbf16>
    %101 = tpu.concatenate %58, %61, %64, %52, %67, %73, %43, %76, %79, %34, %85, %88, %25, %91, %94, %100 in 3 : vector<2x4x4x128xbf16>, vector<2x4x4x128xbf16>, vector<2x4x4x128xbf16>, vector<2x4x4x128xbf16>, vector<2x4x4x128xbf16>, vector<2x4x4x128xbf16>, vector<2x4x4x128xbf16>, vector<2x4x4x128xbf16>, vector<2x4x4x128xbf16>, vector<2x4x4x128xbf16>, vector<2x4x4x128xbf16>, vector<2x4x4x128xbf16>, vector<2x4x4x128xbf16>, vector<2x4x4x128xbf16>, vector<2x4x4x128xbf16>, vector<2x4x4x128xbf16> -> vector<2x4x4x2048xbf16>
    %102 = vector.shape_cast %101 : vector<2x4x4x2048xbf16> to vector<32x2048xbf16>
    %c0_22 = arith.constant 0 : index
    %c0_23 = arith.constant 0 : index
    %103 = vector.load %arg3[%c0_22, %c0_23] : memref<2048x512xbf16, #tpu.memory_space<vmem>>, vector<2048x512xbf16>
    %cst_24 = arith.constant dense<0.000000e+00> : vector<32x512xf32>
    %104 = tpu.matmul %102, %103, %cst_24 {dimension_numbers = #tpu.dot_dimension_numbers<[1], [0], [0], [1], [0, 0, 1, 1], [], []>} : vector<32x2048xbf16>, vector<2048x512xbf16>, vector<32x512xf32> -> vector<32x512xf32>
    %c0_25 = arith.constant 0 : index
    %c0_26 = arith.constant 0 : index
    %105 = vector.load %arg4[%c0_25, %c0_26] : memref<1x512xf32, #tpu.memory_space<vmem>>, vector<1x512xf32>
    %106 = vector.broadcast %105 : vector<1x512xf32> to vector<32x512xf32>
    %107 = arith.addf %104, %106 : vector<32x512xf32>
    %cst_27 = arith.constant 0.000000e+00 : f32
    %108 = vector.broadcast %cst_27 : f32 to vector<32x512xf32>
    %109 = arith.maximumf %107, %108 : vector<32x512xf32>
    %110 = vector.extract_strided_slice %109 {offsets = [0, 0], sizes = [32, 128], strides = [1, 1]} : vector<32x512xf32> to vector<32x128xf32>
    %111 = vector.extract_strided_slice %109 {offsets = [0, 128], sizes = [32, 128], strides = [1, 1]} : vector<32x512xf32> to vector<32x128xf32>
    %112 = arith.maximumf %110, %111 : vector<32x128xf32>
    %113 = vector.extract_strided_slice %109 {offsets = [0, 256], sizes = [32, 128], strides = [1, 1]} : vector<32x512xf32> to vector<32x128xf32>
    %114 = vector.extract_strided_slice %109 {offsets = [0, 384], sizes = [32, 128], strides = [1, 1]} : vector<32x512xf32> to vector<32x128xf32>
    %115 = arith.maximumf %113, %114 : vector<32x128xf32>
    %116 = arith.maximumf %112, %115 : vector<32x128xf32>
    %117 = arith.truncf %116 : vector<32x128xf32> to vector<32x128xbf16>
    %118 = vector.shape_cast %117 : vector<32x128xbf16> to vector<2x4x4x128xbf16>
    %cst_28 = arith.constant 0.000000e+00 : bf16
    %119 = vector.broadcast %cst_28 : bf16 to vector<2x128xbf16>
    %120 = vector.extract_strided_slice %118 {offsets = [0, 0, 0, 0], sizes = [2, 1, 1, 128], strides = [1, 1, 1, 1]} : vector<2x4x4x128xbf16> to vector<2x1x1x128xbf16>
    %121 = vector.shape_cast %120 : vector<2x1x1x128xbf16> to vector<2x128xbf16>
    %122 = vector.extract_strided_slice %118 {offsets = [0, 0, 1, 0], sizes = [2, 1, 1, 128], strides = [1, 1, 1, 1]} : vector<2x4x4x128xbf16> to vector<2x1x1x128xbf16>
    %123 = vector.shape_cast %122 : vector<2x1x1x128xbf16> to vector<2x128xbf16>
    %124 = vector.extract_strided_slice %118 {offsets = [0, 0, 2, 0], sizes = [2, 1, 1, 128], strides = [1, 1, 1, 1]} : vector<2x4x4x128xbf16> to vector<2x1x1x128xbf16>
    %125 = vector.shape_cast %124 : vector<2x1x1x128xbf16> to vector<2x128xbf16>
    %126 = vector.extract_strided_slice %118 {offsets = [0, 1, 0, 0], sizes = [2, 1, 1, 128], strides = [1, 1, 1, 1]} : vector<2x4x4x128xbf16> to vector<2x1x1x128xbf16>
    %127 = vector.shape_cast %126 : vector<2x1x1x128xbf16> to vector<2x128xbf16>
    %128 = vector.extract_strided_slice %118 {offsets = [0, 1, 1, 0], sizes = [2, 1, 1, 128], strides = [1, 1, 1, 1]} : vector<2x4x4x128xbf16> to vector<2x1x1x128xbf16>
    %129 = vector.shape_cast %128 : vector<2x1x1x128xbf16> to vector<2x128xbf16>
    %130 = vector.extract_strided_slice %118 {offsets = [0, 1, 2, 0], sizes = [2, 1, 1, 128], strides = [1, 1, 1, 1]} : vector<2x4x4x128xbf16> to vector<2x1x1x128xbf16>
    %131 = vector.shape_cast %130 : vector<2x1x1x128xbf16> to vector<2x128xbf16>
    %132 = vector.extract_strided_slice %118 {offsets = [0, 2, 0, 0], sizes = [2, 1, 1, 128], strides = [1, 1, 1, 1]} : vector<2x4x4x128xbf16> to vector<2x1x1x128xbf16>
    %133 = vector.shape_cast %132 : vector<2x1x1x128xbf16> to vector<2x128xbf16>
    %134 = vector.extract_strided_slice %118 {offsets = [0, 2, 1, 0], sizes = [2, 1, 1, 128], strides = [1, 1, 1, 1]} : vector<2x4x4x128xbf16> to vector<2x1x1x128xbf16>
    %135 = vector.shape_cast %134 : vector<2x1x1x128xbf16> to vector<2x128xbf16>
    %136 = vector.extract_strided_slice %118 {offsets = [0, 2, 2, 0], sizes = [2, 1, 1, 128], strides = [1, 1, 1, 1]} : vector<2x4x4x128xbf16> to vector<2x1x1x128xbf16>
    %137 = vector.shape_cast %136 : vector<2x1x1x128xbf16> to vector<2x128xbf16>
    %138 = tpu.concatenate %119, %119, %119, %119, %119, %119, %119, %119, %119, %119, %119, %119, %121, %123, %125, %119 in 1 : vector<2x128xbf16>, vector<2x128xbf16>, vector<2x128xbf16>, vector<2x128xbf16>, vector<2x128xbf16>, vector<2x128xbf16>, vector<2x128xbf16>, vector<2x128xbf16>, vector<2x128xbf16>, vector<2x128xbf16>, vector<2x128xbf16>, vector<2x128xbf16>, vector<2x128xbf16>, vector<2x128xbf16>, vector<2x128xbf16>, vector<2x128xbf16> -> vector<2x2048xbf16>
    %139 = tpu.concatenate %119, %127, %129, %131, %119, %119, %133, %135, %137 in 1 : vector<2x128xbf16>, vector<2x128xbf16>, vector<2x128xbf16>, vector<2x128xbf16>, vector<2x128xbf16>, vector<2x128xbf16>, vector<2x128xbf16>, vector<2x128xbf16>, vector<2x128xbf16> -> vector<2x1152xbf16>
    %140 = tpu.concatenate %138, %139 in 1 : vector<2x2048xbf16>, vector<2x1152xbf16> -> vector<2x3200xbf16>
    %141 = vector.extract_strided_slice %118 {offsets = [0, 0, 0, 0], sizes = [2, 1, 1, 128], strides = [1, 1, 1, 1]} : vector<2x4x4x128xbf16> to vector<2x1x1x128xbf16>
    %142 = vector.shape_cast %141 : vector<2x1x1x128xbf16> to vector<2x128xbf16>
    %143 = vector.extract_strided_slice %118 {offsets = [0, 0, 1, 0], sizes = [2, 1, 1, 128], strides = [1, 1, 1, 1]} : vector<2x4x4x128xbf16> to vector<2x1x1x128xbf16>
    %144 = vector.shape_cast %143 : vector<2x1x1x128xbf16> to vector<2x128xbf16>
    %145 = vector.extract_strided_slice %118 {offsets = [0, 0, 2, 0], sizes = [2, 1, 1, 128], strides = [1, 1, 1, 1]} : vector<2x4x4x128xbf16> to vector<2x1x1x128xbf16>
    %146 = vector.shape_cast %145 : vector<2x1x1x128xbf16> to vector<2x128xbf16>
    %147 = vector.extract_strided_slice %118 {offsets = [0, 0, 3, 0], sizes = [2, 1, 1, 128], strides = [1, 1, 1, 1]} : vector<2x4x4x128xbf16> to vector<2x1x1x128xbf16>
    %148 = vector.shape_cast %147 : vector<2x1x1x128xbf16> to vector<2x128xbf16>
    %149 = vector.extract_strided_slice %118 {offsets = [0, 1, 0, 0], sizes = [2, 1, 1, 128], strides = [1, 1, 1, 1]} : vector<2x4x4x128xbf16> to vector<2x1x1x128xbf16>
    %150 = vector.shape_cast %149 : vector<2x1x1x128xbf16> to vector<2x128xbf16>
    %151 = vector.extract_strided_slice %118 {offsets = [0, 1, 1, 0], sizes = [2, 1, 1, 128], strides = [1, 1, 1, 1]} : vector<2x4x4x128xbf16> to vector<2x1x1x128xbf16>
    %152 = vector.shape_cast %151 : vector<2x1x1x128xbf16> to vector<2x128xbf16>
    %153 = vector.extract_strided_slice %118 {offsets = [0, 1, 2, 0], sizes = [2, 1, 1, 128], strides = [1, 1, 1, 1]} : vector<2x4x4x128xbf16> to vector<2x1x1x128xbf16>
    %154 = vector.shape_cast %153 : vector<2x1x1x128xbf16> to vector<2x128xbf16>
    %155 = vector.extract_strided_slice %118 {offsets = [0, 1, 3, 0], sizes = [2, 1, 1, 128], strides = [1, 1, 1, 1]} : vector<2x4x4x128xbf16> to vector<2x1x1x128xbf16>
    %156 = vector.shape_cast %155 : vector<2x1x1x128xbf16> to vector<2x128xbf16>
    %157 = vector.extract_strided_slice %118 {offsets = [0, 2, 0, 0], sizes = [2, 1, 1, 128], strides = [1, 1, 1, 1]} : vector<2x4x4x128xbf16> to vector<2x1x1x128xbf16>
    %158 = vector.shape_cast %157 : vector<2x1x1x128xbf16> to vector<2x128xbf16>
    %159 = vector.extract_strided_slice %118 {offsets = [0, 2, 1, 0], sizes = [2, 1, 1, 128], strides = [1, 1, 1, 1]} : vector<2x4x4x128xbf16> to vector<2x1x1x128xbf16>
    %160 = vector.shape_cast %159 : vector<2x1x1x128xbf16> to vector<2x128xbf16>
    %161 = vector.extract_strided_slice %118 {offsets = [0, 2, 2, 0], sizes = [2, 1, 1, 128], strides = [1, 1, 1, 1]} : vector<2x4x4x128xbf16> to vector<2x1x1x128xbf16>
    %162 = vector.shape_cast %161 : vector<2x1x1x128xbf16> to vector<2x128xbf16>
    %163 = vector.extract_strided_slice %118 {offsets = [0, 2, 3, 0], sizes = [2, 1, 1, 128], strides = [1, 1, 1, 1]} : vector<2x4x4x128xbf16> to vector<2x1x1x128xbf16>
    %164 = vector.shape_cast %163 : vector<2x1x1x128xbf16> to vector<2x128xbf16>
    %165 = tpu.concatenate %119, %119, %119, %119, %119, %119, %119, %119, %119, %119, %142, %144, %146, %148, %119, %150 in 1 : vector<2x128xbf16>, vector<2x128xbf16>, vector<2x128xbf16>, vector<2x128xbf16>, vector<2x128xbf16>, vector<2x128xbf16>, vector<2x128xbf16>, vector<2x128xbf16>, vector<2x128xbf16>, vector<2x128xbf16>, vector<2x128xbf16>, vector<2x128xbf16>, vector<2x128xbf16>, vector<2x128xbf16>, vector<2x128xbf16>, vector<2x128xbf16> -> vector<2x2048xbf16>
    %166 = tpu.concatenate %152, %154, %156, %119, %158, %160, %162, %164, %119 in 1 : vector<2x128xbf16>, vector<2x128xbf16>, vector<2x128xbf16>, vector<2x128xbf16>, vector<2x128xbf16>, vector<2x128xbf16>, vector<2x128xbf16>, vector<2x128xbf16>, vector<2x128xbf16> -> vector<2x1152xbf16>
    %167 = tpu.concatenate %165, %166 in 1 : vector<2x2048xbf16>, vector<2x1152xbf16> -> vector<2x3200xbf16>
    %168 = vector.extract_strided_slice %118 {offsets = [0, 0, 0, 0], sizes = [2, 1, 1, 128], strides = [1, 1, 1, 1]} : vector<2x4x4x128xbf16> to vector<2x1x1x128xbf16>
    %169 = vector.shape_cast %168 : vector<2x1x1x128xbf16> to vector<2x128xbf16>
    %170 = vector.extract_strided_slice %118 {offsets = [0, 0, 1, 0], sizes = [2, 1, 1, 128], strides = [1, 1, 1, 1]} : vector<2x4x4x128xbf16> to vector<2x1x1x128xbf16>
    %171 = vector.shape_cast %170 : vector<2x1x1x128xbf16> to vector<2x128xbf16>
    %172 = vector.extract_strided_slice %118 {offsets = [0, 0, 2, 0], sizes = [2, 1, 1, 128], strides = [1, 1, 1, 1]} : vector<2x4x4x128xbf16> to vector<2x1x1x128xbf16>
    %173 = vector.shape_cast %172 : vector<2x1x1x128xbf16> to vector<2x128xbf16>
    %174 = vector.extract_strided_slice %118 {offsets = [0, 1, 0, 0], sizes = [2, 1, 1, 128], strides = [1, 1, 1, 1]} : vector<2x4x4x128xbf16> to vector<2x1x1x128xbf16>
    %175 = vector.shape_cast %174 : vector<2x1x1x128xbf16> to vector<2x128xbf16>
    %176 = vector.extract_strided_slice %118 {offsets = [0, 1, 1, 0], sizes = [2, 1, 1, 128], strides = [1, 1, 1, 1]} : vector<2x4x4x128xbf16> to vector<2x1x1x128xbf16>
    %177 = vector.shape_cast %176 : vector<2x1x1x128xbf16> to vector<2x128xbf16>
    %178 = vector.extract_strided_slice %118 {offsets = [0, 1, 2, 0], sizes = [2, 1, 1, 128], strides = [1, 1, 1, 1]} : vector<2x4x4x128xbf16> to vector<2x1x1x128xbf16>
    %179 = vector.shape_cast %178 : vector<2x1x1x128xbf16> to vector<2x128xbf16>
    %180 = vector.extract_strided_slice %118 {offsets = [0, 2, 0, 0], sizes = [2, 1, 1, 128], strides = [1, 1, 1, 1]} : vector<2x4x4x128xbf16> to vector<2x1x1x128xbf16>
    %181 = vector.shape_cast %180 : vector<2x1x1x128xbf16> to vector<2x128xbf16>
    %182 = vector.extract_strided_slice %118 {offsets = [0, 2, 1, 0], sizes = [2, 1, 1, 128], strides = [1, 1, 1, 1]} : vector<2x4x4x128xbf16> to vector<2x1x1x128xbf16>
    %183 = vector.shape_cast %182 : vector<2x1x1x128xbf16> to vector<2x128xbf16>
    %184 = vector.extract_strided_slice %118 {offsets = [0, 2, 2, 0], sizes = [2, 1, 1, 128], strides = [1, 1, 1, 1]} : vector<2x4x4x128xbf16> to vector<2x1x1x128xbf16>
    %185 = vector.shape_cast %184 : vector<2x1x1x128xbf16> to vector<2x128xbf16>
    %186 = vector.extract_strided_slice %118 {offsets = [0, 3, 0, 0], sizes = [2, 1, 1, 128], strides = [1, 1, 1, 1]} : vector<2x4x4x128xbf16> to vector<2x1x1x128xbf16>
    %187 = vector.shape_cast %186 : vector<2x1x1x128xbf16> to vector<2x128xbf16>
    %188 = vector.extract_strided_slice %118 {offsets = [0, 3, 1, 0], sizes = [2, 1, 1, 128], strides = [1, 1, 1, 1]} : vector<2x4x4x128xbf16> to vector<2x1x1x128xbf16>
    %189 = vector.shape_cast %188 : vector<2x1x1x128xbf16> to vector<2x128xbf16>
    %190 = vector.extract_strided_slice %118 {offsets = [0, 3, 2, 0], sizes = [2, 1, 1, 128], strides = [1, 1, 1, 1]} : vector<2x4x4x128xbf16> to vector<2x1x1x128xbf16>
    %191 = vector.shape_cast %190 : vector<2x1x1x128xbf16> to vector<2x128xbf16>
    %192 = tpu.concatenate %119, %119, %169, %171, %173, %119, %119, %175, %177, %179, %119, %119, %181, %183, %185, %119 in 1 : vector<2x128xbf16>, vector<2x128xbf16>, vector<2x128xbf16>, vector<2x128xbf16>, vector<2x128xbf16>, vector<2x128xbf16>, vector<2x128xbf16>, vector<2x128xbf16>, vector<2x128xbf16>, vector<2x128xbf16>, vector<2x128xbf16>, vector<2x128xbf16>, vector<2x128xbf16>, vector<2x128xbf16>, vector<2x128xbf16>, vector<2x128xbf16> -> vector<2x2048xbf16>
    %193 = tpu.concatenate %119, %187, %189, %191, %119, %119, %119, %119, %119 in 1 : vector<2x128xbf16>, vector<2x128xbf16>, vector<2x128xbf16>, vector<2x128xbf16>, vector<2x128xbf16>, vector<2x128xbf16>, vector<2x128xbf16>, vector<2x128xbf16>, vector<2x128xbf16> -> vector<2x1152xbf16>
    %194 = tpu.concatenate %192, %193 in 1 : vector<2x2048xbf16>, vector<2x1152xbf16> -> vector<2x3200xbf16>
    %195 = vector.extract_strided_slice %118 {offsets = [0, 0, 0, 0], sizes = [2, 1, 1, 128], strides = [1, 1, 1, 1]} : vector<2x4x4x128xbf16> to vector<2x1x1x128xbf16>
    %196 = vector.shape_cast %195 : vector<2x1x1x128xbf16> to vector<2x128xbf16>
    %197 = vector.extract_strided_slice %118 {offsets = [0, 0, 1, 0], sizes = [2, 1, 1, 128], strides = [1, 1, 1, 1]} : vector<2x4x4x128xbf16> to vector<2x1x1x128xbf16>
    %198 = vector.shape_cast %197 : vector<2x1x1x128xbf16> to vector<2x128xbf16>
    %199 = vector.extract_strided_slice %118 {offsets = [0, 0, 2, 0], sizes = [2, 1, 1, 128], strides = [1, 1, 1, 1]} : vector<2x4x4x128xbf16> to vector<2x1x1x128xbf16>
    %200 = vector.shape_cast %199 : vector<2x1x1x128xbf16> to vector<2x128xbf16>
    %201 = vector.extract_strided_slice %118 {offsets = [0, 0, 3, 0], sizes = [2, 1, 1, 128], strides = [1, 1, 1, 1]} : vector<2x4x4x128xbf16> to vector<2x1x1x128xbf16>
    %202 = vector.shape_cast %201 : vector<2x1x1x128xbf16> to vector<2x128xbf16>
    %203 = vector.extract_strided_slice %118 {offsets = [0, 1, 0, 0], sizes = [2, 1, 1, 128], strides = [1, 1, 1, 1]} : vector<2x4x4x128xbf16> to vector<2x1x1x128xbf16>
    %204 = vector.shape_cast %203 : vector<2x1x1x128xbf16> to vector<2x128xbf16>
    %205 = vector.extract_strided_slice %118 {offsets = [0, 1, 1, 0], sizes = [2, 1, 1, 128], strides = [1, 1, 1, 1]} : vector<2x4x4x128xbf16> to vector<2x1x1x128xbf16>
    %206 = vector.shape_cast %205 : vector<2x1x1x128xbf16> to vector<2x128xbf16>
    %207 = vector.extract_strided_slice %118 {offsets = [0, 1, 2, 0], sizes = [2, 1, 1, 128], strides = [1, 1, 1, 1]} : vector<2x4x4x128xbf16> to vector<2x1x1x128xbf16>
    %208 = vector.shape_cast %207 : vector<2x1x1x128xbf16> to vector<2x128xbf16>
    %209 = vector.extract_strided_slice %118 {offsets = [0, 1, 3, 0], sizes = [2, 1, 1, 128], strides = [1, 1, 1, 1]} : vector<2x4x4x128xbf16> to vector<2x1x1x128xbf16>
    %210 = vector.shape_cast %209 : vector<2x1x1x128xbf16> to vector<2x128xbf16>
    %211 = vector.extract_strided_slice %118 {offsets = [0, 2, 0, 0], sizes = [2, 1, 1, 128], strides = [1, 1, 1, 1]} : vector<2x4x4x128xbf16> to vector<2x1x1x128xbf16>
    %212 = vector.shape_cast %211 : vector<2x1x1x128xbf16> to vector<2x128xbf16>
    %213 = vector.extract_strided_slice %118 {offsets = [0, 2, 1, 0], sizes = [2, 1, 1, 128], strides = [1, 1, 1, 1]} : vector<2x4x4x128xbf16> to vector<2x1x1x128xbf16>
    %214 = vector.shape_cast %213 : vector<2x1x1x128xbf16> to vector<2x128xbf16>
    %215 = vector.extract_strided_slice %118 {offsets = [0, 2, 2, 0], sizes = [2, 1, 1, 128], strides = [1, 1, 1, 1]} : vector<2x4x4x128xbf16> to vector<2x1x1x128xbf16>
    %216 = vector.shape_cast %215 : vector<2x1x1x128xbf16> to vector<2x128xbf16>
    %217 = vector.extract_strided_slice %118 {offsets = [0, 2, 3, 0], sizes = [2, 1, 1, 128], strides = [1, 1, 1, 1]} : vector<2x4x4x128xbf16> to vector<2x1x1x128xbf16>
    %218 = vector.shape_cast %217 : vector<2x1x1x128xbf16> to vector<2x128xbf16>
    %219 = vector.extract_strided_slice %118 {offsets = [0, 3, 0, 0], sizes = [2, 1, 1, 128], strides = [1, 1, 1, 1]} : vector<2x4x4x128xbf16> to vector<2x1x1x128xbf16>
    %220 = vector.shape_cast %219 : vector<2x1x1x128xbf16> to vector<2x128xbf16>
    %221 = vector.extract_strided_slice %118 {offsets = [0, 3, 1, 0], sizes = [2, 1, 1, 128], strides = [1, 1, 1, 1]} : vector<2x4x4x128xbf16> to vector<2x1x1x128xbf16>
    %222 = vector.shape_cast %221 : vector<2x1x1x128xbf16> to vector<2x128xbf16>
    %223 = vector.extract_strided_slice %118 {offsets = [0, 3, 2, 0], sizes = [2, 1, 1, 128], strides = [1, 1, 1, 1]} : vector<2x4x4x128xbf16> to vector<2x1x1x128xbf16>
    %224 = vector.shape_cast %223 : vector<2x1x1x128xbf16> to vector<2x128xbf16>
    %225 = vector.extract_strided_slice %118 {offsets = [0, 3, 3, 0], sizes = [2, 1, 1, 128], strides = [1, 1, 1, 1]} : vector<2x4x4x128xbf16> to vector<2x1x1x128xbf16>
    %226 = vector.shape_cast %225 : vector<2x1x1x128xbf16> to vector<2x128xbf16>
    %227 = tpu.concatenate %196, %198, %200, %202, %119, %204, %206, %208, %210, %119, %212, %214, %216, %218, %119, %220 in 1 : vector<2x128xbf16>, vector<2x128xbf16>, vector<2x128xbf16>, vector<2x128xbf16>, vector<2x128xbf16>, vector<2x128xbf16>, vector<2x128xbf16>, vector<2x128xbf16>, vector<2x128xbf16>, vector<2x128xbf16>, vector<2x128xbf16>, vector<2x128xbf16>, vector<2x128xbf16>, vector<2x128xbf16>, vector<2x128xbf16>, vector<2x128xbf16> -> vector<2x2048xbf16>
    %228 = tpu.concatenate %222, %224, %226, %119, %119, %119, %119, %119, %119 in 1 : vector<2x128xbf16>, vector<2x128xbf16>, vector<2x128xbf16>, vector<2x128xbf16>, vector<2x128xbf16>, vector<2x128xbf16>, vector<2x128xbf16>, vector<2x128xbf16>, vector<2x128xbf16> -> vector<2x1152xbf16>
    %229 = tpu.concatenate %227, %228 in 1 : vector<2x2048xbf16>, vector<2x1152xbf16> -> vector<2x3200xbf16>
    %230 = tpu.concatenate %140, %167, %194, %229 in 0 : vector<2x3200xbf16>, vector<2x3200xbf16>, vector<2x3200xbf16>, vector<2x3200xbf16> -> vector<8x3200xbf16>
    %c0_29 = arith.constant 0 : index
    %c0_30 = arith.constant 0 : index
    %231 = vector.load %arg5[%c0_29, %c0_30] : memref<3200x256xbf16, #tpu.memory_space<vmem>>, vector<3200x256xbf16>
    %cst_31 = arith.constant dense<0.000000e+00> : vector<8x256xf32>
    %232 = tpu.matmul %230, %231, %cst_31 {dimension_numbers = #tpu.dot_dimension_numbers<[1], [0], [0], [1], [0, 0, 1, 1], [], []>} : vector<8x3200xbf16>, vector<3200x256xbf16>, vector<8x256xf32> -> vector<8x256xf32>
    %c0_32 = arith.constant 0 : index
    %c0_33 = arith.constant 0 : index
    %233 = vector.load %arg6[%c0_32, %c0_33] : memref<1x256xf32, #tpu.memory_space<vmem>>, vector<1x256xf32>
    %234 = vector.broadcast %233 : vector<1x256xf32> to vector<8x256xf32>
    %235 = arith.addf %232, %234 : vector<8x256xf32>
    %cst_34 = arith.constant 0.000000e+00 : f32
    %236 = vector.broadcast %cst_34 : f32 to vector<8x256xf32>
    %237 = arith.maximumf %235, %236 : vector<8x256xf32>
    %238 = vector.extract_strided_slice %237 {offsets = [0, 0], sizes = [2, 256], strides = [1, 1]} : vector<8x256xf32> to vector<2x256xf32>
    %239 = vector.extract_strided_slice %237 {offsets = [2, 0], sizes = [2, 256], strides = [1, 1]} : vector<8x256xf32> to vector<2x256xf32>
    %240 = vector.extract_strided_slice %237 {offsets = [4, 0], sizes = [2, 256], strides = [1, 1]} : vector<8x256xf32> to vector<2x256xf32>
    %241 = vector.extract_strided_slice %237 {offsets = [6, 0], sizes = [2, 256], strides = [1, 1]} : vector<8x256xf32> to vector<2x256xf32>
    %242 = tpu.concatenate %238, %239, %240, %241 in 1 : vector<2x256xf32>, vector<2x256xf32>, vector<2x256xf32>, vector<2x256xf32> -> vector<2x1024xf32>
    %243 = arith.truncf %242 : vector<2x1024xf32> to vector<2x1024xbf16>
    %c0_35 = arith.constant 0 : index
    %c0_36 = arith.constant 0 : index
    %244 = vector.load %arg7[%c0_35, %c0_36] : memref<1024x128xbf16, #tpu.memory_space<vmem>>, vector<1024x128xbf16>
    %cst_37 = arith.constant dense<0.000000e+00> : vector<2x128xf32>
    %245 = tpu.matmul %243, %244, %cst_37 {dimension_numbers = #tpu.dot_dimension_numbers<[1], [0], [0], [1], [0, 0, 1, 1], [], []>} : vector<2x1024xbf16>, vector<1024x128xbf16>, vector<2x128xf32> -> vector<2x128xf32>
    %c0_38 = arith.constant 0 : index
    %c0_39 = arith.constant 0 : index
    %246 = vector.load %arg8[%c0_38, %c0_39] : memref<1x128xf32, #tpu.memory_space<vmem>>, vector<1x128xf32>
    %247 = vector.broadcast %246 : vector<1x128xf32> to vector<2x128xf32>
    %248 = arith.addf %245, %247 : vector<2x128xf32>
    %cst_40 = arith.constant 0.000000e+00 : f32
    %249 = vector.broadcast %cst_40 : f32 to vector<2x128xf32>
    %250 = arith.maximumf %248, %249 : vector<2x128xf32>
    %251 = arith.truncf %250 : vector<2x128xf32> to vector<2x128xbf16>
    %c0_41 = arith.constant 0 : index
    %c0_42 = arith.constant 0 : index
    %252 = vector.load %arg9[%c0_41, %c0_42] : memref<128x2xbf16, #tpu.memory_space<vmem>>, vector<128x2xbf16>
    %cst_43 = arith.constant dense<0.000000e+00> : vector<2x2xf32>
    %253 = tpu.matmul %251, %252, %cst_43 {dimension_numbers = #tpu.dot_dimension_numbers<[1], [0], [0], [1], [0, 0, 1, 1], [], []>} : vector<2x128xbf16>, vector<128x2xbf16>, vector<2x2xf32> -> vector<2x2xf32>
    %c0_44 = arith.constant 0 : index
    %c0_45 = arith.constant 0 : index
    %254 = vector.load %arg10[%c0_44, %c0_45] : memref<1x2xf32, #tpu.memory_space<vmem>>, vector<1x2xf32>
    %255 = vector.broadcast %254 : vector<1x2xf32> to vector<2x2xf32>
    %256 = arith.addf %253, %255 : vector<2x2xf32>
    %c0_46 = arith.constant 0 : index
    %c0_47 = arith.constant 0 : index
    %257 = vector.load %arg11[%c0_46, %c0_47] : memref<2x2xf32, #tpu.memory_space<vmem>>, vector<2x2xf32>
    tpu.vector_store %arg11[%c0_46, %c0_47], %256 {strides = array<i32>} : memref<2x2xf32, #tpu.memory_space<vmem>>, vector<2x2xf32>,
    return
  }
}

</mosaic_0001>

<llo_original>
// kernel: challenge_forward.1
$region0: #{challenge_forward.1}
  #allocation0 [shape = 'u32[]', space=smem, size = 0x4, offset = 0x4, fixed_abs, tag = 'smem constant byte address 0x4 - core index']
  #allocation1 [shape = 'u32[144,128]{1,0:T(1,128)}', space=vmem, size = 0x12000, scoped, tag = 'internal scratch']
  %s0 = inlined_call_operand.vmem [shape: bf16[512,192], index: 0, kind: input, shape index: {}]
  %s1 = inlined_call_operand.vmem [shape: bf16[192,128], index: 1, kind: input, shape index: {}]
  %s2 = inlined_call_operand.vmem [shape: f32[1,128], index: 2, kind: input, shape index: {}]
  %s3 = inlined_call_operand.vmem [shape: bf16[2048,512], index: 3, kind: input, shape index: {}]
  %s4 = inlined_call_operand.vmem [shape: f32[1,512], index: 4, kind: input, shape index: {}]
  %s5 = inlined_call_operand.vmem [shape: bf16[3200,256], index: 5, kind: input, shape index: {}]
  %s6 = inlined_call_operand.vmem [shape: f32[1,256], index: 6, kind: input, shape index: {}]
  %s7 = inlined_call_operand.vmem [shape: bf16[1024,128], index: 7, kind: input, shape index: {}]
  %s8 = inlined_call_operand.vmem [shape: f32[1,128], index: 8, kind: input, shape index: {}]
  %s9 = inlined_call_operand.vmem [shape: bf16[128,2], index: 9, kind: input, shape index: {}]
  %s10 = inlined_call_operand.vmem [shape: f32[1,2], index: 10, kind: input, shape index: {}]
  %s11 = inlined_call_operand.hbm [shape: f32[2,2], index: 11, kind: output, shape index: {}]
  %s12 = sld [smem:[#allocation0]]
  $region54: #{challenge_forward.1} parent=0
    _
  %s14 = ssub.s32 1, %s12
  %s15 = scalar_select 0, %s14, %s12
  $region1: #{challenge_forward.1} parent=0
    #allocation2 [shape = 'u8[1024]{0}', space=vmem, size = 0x400, scoped, tag = 'output window, operand 0, single buffered']
    #allocation3 [shape = 's32[1]{0}', space=sflag, size = 0x4, scoped, tag = 'scoped memory for challenge_forward.1']
    %16 = vsyncpa [#allocation3], 0
    // Predicated region
    $region2: #{challenge_forward.1} parent=1 // pred_check
      _
    $region3: #{challenge_forward.1} parent=1 // pred_check_branch
      %18 = sbr.rel (0) target = $region5
    $region4: #{challenge_forward.1} parent=1 // pred_region
      _
    $region5: #{challenge_forward.1} parent=1 // pred_fallthru
      _
    // Predicated region
    $region6: #{challenge_forward.1} parent=1 // pred_check
      _
    $region7: #{challenge_forward.1} parent=1 // pred_check_branch
      %20 = sbr.rel (0) target = $region9
    $region8: #{challenge_forward.1} parent=1 // pred_region
      _
    $region9: #{challenge_forward.1} parent=1 // pred_fallthru
      _
    // Predicated region
    $region10: #{challenge_forward.1} parent=1 // pred_check
      _
    $region11: #{challenge_forward.1} parent=1 // pred_check_branch
      %22 = sbr.rel (0) target = $region13
    $region12: #{challenge_forward.1} parent=1 // pred_region
      _
    $region13: #{challenge_forward.1} parent=1 // pred_fallthru
      _
    // Predicated region
    $region14: #{challenge_forward.1} parent=1 // pred_check
      _
    $region15: #{challenge_forward.1} parent=1 // pred_check_branch
      %24 = sbr.rel (0) target = $region17
    $region16: #{challenge_forward.1} parent=1 // pred_region
      _
    $region17: #{challenge_forward.1} parent=1 // pred_fallthru
      _
    // Predicated region
    $region18: #{challenge_forward.1} parent=1 // pred_check
      _
    $region19: #{challenge_forward.1} parent=1 // pred_check_branch
      %26 = sbr.rel (0) target = $region21
    $region20: #{challenge_forward.1} parent=1 // pred_region
      _
    $region21: #{challenge_forward.1} parent=1 // pred_fallthru
      _
    // Predicated region
    $region22: #{challenge_forward.1} parent=1 // pred_check
      _
    $region23: #{challenge_forward.1} parent=1 // pred_check_branch
      %28 = sbr.rel (0) target = $region25
    $region24: #{challenge_forward.1} parent=1 // pred_region
      _
    $region25: #{challenge_forward.1} parent=1 // pred_fallthru
      _
    // Predicated region
    $region26: #{challenge_forward.1} parent=1 // pred_check
      _
    $region27: #{challenge_forward.1} parent=1 // pred_check_branch
      %30 = sbr.rel (0) target = $region29
    $region28: #{challenge_forward.1} parent=1 // pred_region
      _
    $region29: #{challenge_forward.1} parent=1 // pred_fallthru
      _
    // Predicated region
    $region30: #{challenge_forward.1} parent=1 // pred_check
      _
    $region31: #{challenge_forward.1} parent=1 // pred_check_branch
      %32 = sbr.rel (0) target = $region33
    $region32: #{challenge_forward.1} parent=1 // pred_region
      _
    $region33: #{challenge_forward.1} parent=1 // pred_fallthru
      _
    // Predicated region
    $region34: #{challenge_forward.1} parent=1 // pred_check
      _
    $region35: #{challenge_forward.1} parent=1 // pred_check_branch
      %34 = sbr.rel (0) target = $region37
    $region36: #{challenge_forward.1} parent=1 // pred_region
      _
    $region37: #{challenge_forward.1} parent=1 // pred_fallthru
      _
    // Predicated region
    $region38: #{challenge_forward.1} parent=1 // pred_check
      _
    $region39: #{challenge_forward.1} parent=1 // pred_check_branch
      %36 = sbr.rel (0) target = $region41
    $region40: #{challenge_forward.1} parent=1 // pred_region
      _
    $region41: #{challenge_forward.1} parent=1 // pred_fallthru
      _
    // Predicated region
    $region42: #{challenge_forward.1} parent=1 // pred_check
      _
    $region43: #{challenge_forward.1} parent=1 // pred_check_branch
      %38 = sbr.rel (0) target = $region45
    $region44: #{challenge_forward.1} parent=1 // pred_region
      _
    $region45: #{challenge_forward.1} parent=1 // pred_fallthru
      _
    %v40 = vld [vmem:[%s0] sm:$0xff]
    %v41 = vld [vmem:[%s0 + $0x8] sm:$0xff]
    %v42 = vld [vmem:[%s0 + $0x10] sm:$0xff]
    %v43 = vld [vmem:[%s0 + $0x18] sm:$0xff]
    %v44 = vld [vmem:[%s0 + $0x20] sm:$0xff]
    %v45 = vld [vmem:[%s0 + $0x28] sm:$0xff]
    %v46 = vld [vmem:[%s0 + $0x30] sm:$0xff]
    %v47 = vld [vmem:[%s0 + $0x38] sm:$0xff]
    %v48 = vld [vmem:[%s0 + $0x40] sm:$0xff]
    %v49 = vld [vmem:[%s0 + $0x48] sm:$0xff]
    %v50 = vld [vmem:[%s0 + $0x50] sm:$0xff]
    %v51 = vld [vmem:[%s0 + $0x58] sm:$0xff]
    %v52 = vld [vmem:[%s0 + $0x60] sm:$0xff]
    %v53 = vld [vmem:[%s0 + $0x68] sm:$0xff]
    %v54 = vld [vmem:[%s0 + $0x70] sm:$0xff]
    %v55 = vld [vmem:[%s0 + $0x78] sm:$0xff]
    %v56 = vld [vmem:[%s0 + $0x80] sm:$0xff]
    %v57 = vld [vmem:[%s0 + $0x88] sm:$0xff]
    %v58 = vld [vmem:[%s0 + $0x90] sm:$0xff]
    %v59 = vld [vmem:[%s0 + $0x98] sm:$0xff]
    %v60 = vld [vmem:[%s0 + $0xa0] sm:$0xff]
    %v61 = vld [vmem:[%s0 + $0xa8] sm:$0xff]
    %v62 = vld [vmem:[%s0 + $0xb0] sm:$0xff]
    %v63 = vld [vmem:[%s0 + $0xb8] sm:$0xff]
    %v64 = vld [vmem:[%s0 + $0xc0] sm:$0xff]
    %v65 = vld [vmem:[%s0 + $0xc8] sm:$0xff]
    %v66 = vld [vmem:[%s0 + $0xd0] sm:$0xff]
    %v67 = vld [vmem:[%s0 + $0xd8] sm:$0xff]
    %v68 = vld [vmem:[%s0 + $0xe0] sm:$0xff]
    %v69 = vld [vmem:[%s0 + $0xe8] sm:$0xff]
    %v70 = vld [vmem:[%s0 + $0xf0] sm:$0xff]
    %v71 = vld [vmem:[%s0 + $0xf8] sm:$0xff]
    %v72 = vld [vmem:[%s0 + $0x100] sm:$0xff]
    %v73 = vld [vmem:[%s0 + $0x108] sm:$0xff]
    %v74 = vld [vmem:[%s0 + $0x110] sm:$0xff]
    %v75 = vld [vmem:[%s0 + $0x118] sm:$0xff]
    %v76 = vld [vmem:[%s0 + $0x120] sm:$0xff]
    %v77 = vld [vmem:[%s0 + $0x128] sm:$0xff]
    %v78 = vld [vmem:[%s0 + $0x130] sm:$0xff]
    %v79 = vld [vmem:[%s0 + $0x138] sm:$0xff]
    %v80 = vld [vmem:[%s0 + $0x140] sm:$0xff]
    %v81 = vld [vmem:[%s0 + $0x148] sm:$0xff]
    %v82 = vld [vmem:[%s0 + $0x150] sm:$0xff]
    %v83 = vld [vmem:[%s0 + $0x158] sm:$0xff]
    %v84 = vld [vmem:[%s0 + $0x160] sm:$0xff]
    %v85 = vld [vmem:[%s0 + $0x168] sm:$0xff]
    %v86 = vld [vmem:[%s0 + $0x170] sm:$0xff]
    %v87 = vld [vmem:[%s0 + $0x178] sm:$0xff]
    %v88 = vld [vmem:[%s0 + $0x180] sm:$0xff]
    %v89 = vld [vmem:[%s0 + $0x188] sm:$0xff]
    %v90 = vld [vmem:[%s0 + $0x190] sm:$0xff]
    %v91 = vld [vmem:[%s0 + $0x198] sm:$0xff]
    %v92 = vld [vmem:[%s0 + $0x1a0] sm:$0xff]
    %v93 = vld [vmem:[%s0 + $0x1a8] sm:$0xff]
    %v94 = vld [vmem:[%s0 + $0x1b0] sm:$0xff]
    %v95 = vld [vmem:[%s0 + $0x1b8] sm:$0xff]
    %v96 = vld [vmem:[%s0 + $0x1c0] sm:$0xff]
    %v97 = vld [vmem:[%s0 + $0x1c8] sm:$0xff]
    %v98 = vld [vmem:[%s0 + $0x1d0] sm:$0xff]
    %v99 = vld [vmem:[%s0 + $0x1d8] sm:$0xff]
    %v100 = vld [vmem:[%s0 + $0x1e0] sm:$0xff]
    %v101 = vld [vmem:[%s0 + $0x1e8] sm:$0xff]
    %v102 = vld [vmem:[%s0 + $0x1f0] sm:$0xff]
    %v103 = vld [vmem:[%s0 + $0x1f8] sm:$0xff]
    %v104 = vld [vmem:[%s1] sm:$0xf]
    %v105 = vld [vmem:[%s1 + $0x4] sm:$0xf]
    %v106 = vld [vmem:[%s1 + $0x8] sm:$0xf]
    %v107 = vld [vmem:[%s1 + $0xc] sm:$0xf]
    %v108 = vld [vmem:[%s1 + $0x10] sm:$0xf]
    %v109 = vld [vmem:[%s1 + $0x14] sm:$0xf]
    %v110 = vld [vmem:[%s1 + $0x18] sm:$0xf]
    %v111 = vld [vmem:[%s1 + $0x1c] sm:$0xf]
    %v112 = vld [vmem:[%s1 + $0x20] sm:$0xf]
    %v113 = vld [vmem:[%s1 + $0x24] sm:$0xf]
    %v114 = vld [vmem:[%s1 + $0x28] sm:$0xf]
    %v115 = vld [vmem:[%s1 + $0x2c] sm:$0xf]
    %v116 = vld [vmem:[%s1 + $0x30] sm:$0xf]
    %v117 = vld [vmem:[%s1 + $0x34] sm:$0xf]
    %v118 = vld [vmem:[%s1 + $0x38] sm:$0xf]
    %v119 = vld [vmem:[%s1 + $0x3c] sm:$0xf]
    %v120 = vld [vmem:[%s1 + $0x40] sm:$0xf]
    %v121 = vld [vmem:[%s1 + $0x44] sm:$0xf]
    %v122 = vld [vmem:[%s1 + $0x48] sm:$0xf]
    %v123 = vld [vmem:[%s1 + $0x4c] sm:$0xf]
    %v124 = vld [vmem:[%s1 + $0x50] sm:$0xf]
    %v125 = vld [vmem:[%s1 + $0x54] sm:$0xf]
    %v126 = vld [vmem:[%s1 + $0x58] sm:$0xf]
    %v127 = vld [vmem:[%s1 + $0x5c] sm:$0xf]
    %v128 = vld [vmem:[%s2] sm:$0x1]
    %v130 = vlaneseq
    %v131 = vshrl.u32 %v130, 7
    %v132 = vsub.s32 0, %v131
    %v133 = vrot.slane %v128, %v132
    %v199 = vunpack.c.l.b16 %v40
    %v200 = vunpack.c.h.b16 %v40
    %v201 = vunpack.c.l.b16 %v41
    %v202 = vunpack.c.h.b16 %v41
    %v203 = vunpack.c.l.b16 %v42
    %v204 = vunpack.c.h.b16 %v42
    %v205 = vunpack.c.l.b16 %v43
    %v206 = vunpack.c.h.b16 %v43
    %v207 = vunpack.c.l.b16 %v44
    %v208 = vunpack.c.h.b16 %v44
    %v209 = vunpack.c.l.b16 %v45
    %v210 = vunpack.c.h.b16 %v45
    %v211 = vunpack.c.l.b16 %v46
    %v212 = vunpack.c.h.b16 %v46
    %v213 = vunpack.c.l.b16 %v47
    %v214 = vunpack.c.h.b16 %v47
    %v215 = vunpack.c.l.b16 %v48
    %v216 = vunpack.c.h.b16 %v48
    %v217 = vunpack.c.l.b16 %v49
    %v218 = vunpack.c.h.b16 %v49
    %v219 = vunpack.c.l.b16 %v50
    %v220 = vunpack.c.h.b16 %v50
    %v221 = vunpack.c.l.b16 %v51
    %v222 = vunpack.c.h.b16 %v51
    %v223 = vunpack.c.l.b16 %v52
    %v224 = vunpack.c.h.b16 %v52
    %v225 = vunpack.c.l.b16 %v53
    %v226 = vunpack.c.h.b16 %v53
    %v227 = vunpack.c.l.b16 %v54
    %v228 = vunpack.c.h.b16 %v54
    %v229 = vunpack.c.l.b16 %v55
    %v230 = vunpack.c.h.b16 %v55
    %v231 = vunpack.c.l.b16 %v56
    %v232 = vunpack.c.h.b16 %v56
    %v233 = vunpack.c.l.b16 %v57
    %v234 = vunpack.c.h.b16 %v57
    %v235 = vunpack.c.l.b16 %v58
    %v236 = vunpack.c.h.b16 %v58
    %v237 = vunpack.c.l.b16 %v59
    %v238 = vunpack.c.h.b16 %v59
    %v239 = vunpack.c.l.b16 %v60
    %v240 = vunpack.c.h.b16 %v60
    %v241 = vunpack.c.l.b16 %v61
    %v242 = vunpack.c.h.b16 %v61
    %v243 = vunpack.c.l.b16 %v62
    %v244 = vunpack.c.h.b16 %v62
    %v245 = vunpack.c.l.b16 %v63
    %v246 = vunpack.c.h.b16 %v63
    %v247 = vunpack.c.l.b16 %v64
    %v248 = vunpack.c.h.b16 %v64
    %v249 = vunpack.c.l.b16 %v65
    %v250 = vunpack.c.h.b16 %v65
    %v251 = vunpack.c.l.b16 %v66
    %v252 = vunpack.c.h.b16 %v66
    %v253 = vunpack.c.l.b16 %v67
    %v254 = vunpack.c.h.b16 %v67
    %v255 = vunpack.c.l.b16 %v68
    %v256 = vunpack.c.h.b16 %v68
    %v257 = vunpack.c.l.b16 %v69
    %v258 = vunpack.c.h.b16 %v69
    %v259 = vunpack.c.l.b16 %v70
    %v260 = vunpack.c.h.b16 %v70
    %v261 = vunpack.c.l.b16 %v71
    %v262 = vunpack.c.h.b16 %v71
    %v263 = vunpack.c.l.b16 %v72
    %v264 = vunpack.c.h.b16 %v72
    %v265 = vunpack.c.l.b16 %v73
    %v266 = vunpack.c.h.b16 %v73
    %v267 = vunpack.c.l.b16 %v74
    %v268 = vunpack.c.h.b16 %v74
    %v269 = vunpack.c.l.b16 %v75
    %v270 = vunpack.c.h.b16 %v75
    %v271 = vunpack.c.l.b16 %v76
    %v272 = vunpack.c.h.b16 %v76
    %v273 = vunpack.c.l.b16 %v77
    %v274 = vunpack.c.h.b16 %v77
    %v275 = vunpack.c.l.b16 %v78
    %v276 = vunpack.c.h.b16 %v78
    %v277 = vunpack.c.l.b16 %v79
    %v278 = vunpack.c.h.b16 %v79
    %v279 = vunpack.c.l.b16 %v80
    %v280 = vunpack.c.h.b16 %v80
    %v281 = vunpack.c.l.b16 %v81
    %v282 = vunpack.c.h.b16 %v81
    %v283 = vunpack.c.l.b16 %v82
    %v284 = vunpack.c.h.b16 %v82
    %v285 = vunpack.c.l.b16 %v83
    %v286 = vunpack.c.h.b16 %v83
    %v287 = vunpack.c.l.b16 %v84
    %v288 = vunpack.c.h.b16 %v84
    %v289 = vunpack.c.l.b16 %v85
    %v290 = vunpack.c.h.b16 %v85
    %v291 = vunpack.c.l.b16 %v86
    %v292 = vunpack.c.h.b16 %v86
    %v293 = vunpack.c.l.b16 %v87
    %v294 = vunpack.c.h.b16 %v87
    %v295 = vunpack.c.l.b16 %v88
    %v296 = vunpack.c.h.b16 %v88
    %v297 = vunpack.c.l.b16 %v89
    %v298 = vunpack.c.h.b16 %v89
    %v299 = vunpack.c.l.b16 %v90
    %v300 = vunpack.c.h.b16 %v90
    %v301 = vunpack.c.l.b16 %v91
    %v302 = vunpack.c.h.b16 %v91
    %v303 = vunpack.c.l.b16 %v92
    %v304 = vunpack.c.h.b16 %v92
    %v305 = vunpack.c.l.b16 %v93
    %v306 = vunpack.c.h.b16 %v93
    %v307 = vunpack.c.l.b16 %v94
    %v308 = vunpack.c.h.b16 %v94
    %v309 = vunpack.c.l.b16 %v95
    %v310 = vunpack.c.h.b16 %v95
    %v311 = vunpack.c.l.b16 %v96
    %v312 = vunpack.c.h.b16 %v96
    %v313 = vunpack.c.l.b16 %v97
    %v314 = vunpack.c.h.b16 %v97
    %v315 = vunpack.c.l.b16 %v98
    %v316 = vunpack.c.h.b16 %v98
    %v317 = vunpack.c.l.b16 %v99
    %v318 = vunpack.c.h.b16 %v99
    %v319 = vunpack.c.l.b16 %v100
    %v320 = vunpack.c.h.b16 %v100
    %v321 = vunpack.c.l.b16 %v101
    %v322 = vunpack.c.h.b16 %v101
    %v323 = vunpack.c.l.b16 %v102
    %v324 = vunpack.c.h.b16 %v102
    %v325 = vunpack.c.l.b16 %v103
    %v326 = vunpack.c.h.b16 %v103
    %v327 = vpack.c.b16 %v201, %v199
    %v328 = vpack.c.b16 %v202, %v200
    %v329 = vpack.c.b16 %v205, %v203
    %v330 = vpack.c.b16 %v206, %v204
    %v331 = vpack.c.b16 %v209, %v207
    %v332 = vpack.c.b16 %v210, %v208
    %v333 = vpack.c.b16 %v213, %v211
    %v334 = vpack.c.b16 %v214, %v212
    %v335 = vpack.c.b16 %v217, %v215
    %v336 = vpack.c.b16 %v218, %v216
    %v337 = vpack.c.b16 %v221, %v219
    %v338 = vpack.c.b16 %v222, %v220
    %v339 = vpack.c.b16 %v225, %v223
    %v340 = vpack.c.b16 %v226, %v224
    %v341 = vpack.c.b16 %v229, %v227
    %v342 = vpack.c.b16 %v230, %v228
    %v343 = vpack.c.b16 %v233, %v231
    %v344 = vpack.c.b16 %v234, %v232
    %v345 = vpack.c.b16 %v237, %v235
    %v346 = vpack.c.b16 %v238, %v236
    %v347 = vpack.c.b16 %v241, %v239
    %v348 = vpack.c.b16 %v242, %v240
    %v349 = vpack.c.b16 %v245, %v243
    %v350 = vpack.c.b16 %v246, %v244
    %v351 = vpack.c.b16 %v249, %v247
    %v352 = vpack.c.b16 %v250, %v248
    %v353 = vpack.c.b16 %v253, %v251
    %v354 = vpack.c.b16 %v254, %v252
    %v355 = vpack.c.b16 %v257, %v255
    %v356 = vpack.c.b16 %v258, %v256
    %v357 = vpack.c.b16 %v261, %v259
    %v358 = vpack.c.b16 %v262, %v260
    %v359 = vpack.c.b16 %v265, %v263
    %v360 = vpack.c.b16 %v266, %v264
    %v361 = vpack.c.b16 %v269, %v267
    %v362 = vpack.c.b16 %v270, %v268
    %v363 = vpack.c.b16 %v273, %v271
    %v364 = vpack.c.b16 %v274, %v272
    %v365 = vpack.c.b16 %v277, %v275
    %v366 = vpack.c.b16 %v278, %v276
    %v367 = vpack.c.b16 %v281, %v279
    %v368 = vpack.c.b16 %v282, %v280
    %v369 = vpack.c.b16 %v285, %v283
    %v370 = vpack.c.b16 %v286, %v284
    %v371 = vpack.c.b16 %v289, %v287
    %v372 = vpack.c.b16 %v290, %v288
    %v373 = vpack.c.b16 %v293, %v291
    %v374 = vpack.c.b16 %v294, %v292
    %v375 = vpack.c.b16 %v297, %v295
    %v376 = vpack.c.b16 %v298, %v296
    %v377 = vpack.c.b16 %v301, %v299
    %v378 = vpack.c.b16 %v302, %v300
    %v379 = vpack.c.b16 %v305, %v303
    %v380 = vpack.c.b16 %v306, %v304
    %v381 = vpack.c.b16 %v309, %v307
    %v382 = vpack.c.b16 %v310, %v308
    %v383 = vpack.c.b16 %v313, %v311
    %v384 = vpack.c.b16 %v314, %v312
    %v385 = vpack.c.b16 %v317, %v315
    %v386 = vpack.c.b16 %v318, %v316
    %v387 = vpack.c.b16 %v321, %v319
    %v388 = vpack.c.b16 %v322, %v320
    %v389 = vpack.c.b16 %v325, %v323
    %v390 = vpack.c.b16 %v326, %v324
    %v447 = vunpack.c.l.b16 %v104
    %v448 = vunpack.c.l.b16 %v105
    %v449 = vunpack.c.l.b16 %v106
    %v450 = vunpack.c.l.b16 %v107
    %v451 = vunpack.c.l.b16 %v108
    %v452 = vunpack.c.l.b16 %v109
    %v453 = vunpack.c.l.b16 %v110
    %v454 = vunpack.c.l.b16 %v111
    %v455 = vunpack.c.l.b16 %v112
    %v456 = vunpack.c.l.b16 %v113
    %v457 = vunpack.c.l.b16 %v114
    %v458 = vunpack.c.l.b16 %v115
    %v459 = vunpack.c.l.b16 %v116
    %v460 = vunpack.c.l.b16 %v117
    %v461 = vunpack.c.l.b16 %v118
    %v462 = vunpack.c.l.b16 %v119
    %v463 = vunpack.c.l.b16 %v120
    %v464 = vunpack.c.l.b16 %v121
    %v465 = vunpack.c.l.b16 %v122
    %v466 = vunpack.c.l.b16 %v123
    %v467 = vunpack.c.l.b16 %v124
    %v468 = vunpack.c.l.b16 %v125
    %v469 = vunpack.c.l.b16 %v126
    %v470 = vunpack.c.l.b16 %v127
    %v471 = vpack.c.b16 %v448, %v447
    %v472 = vpack.c.b16 %v450, %v449
    %v473 = vpack.c.b16 %v452, %v451
    %v474 = vpack.c.b16 %v454, %v453
    %v475 = vpack.c.b16 %v456, %v455
    %v476 = vpack.c.b16 %v458, %v457
    %v477 = vpack.c.b16 %v460, %v459
    %v478 = vpack.c.b16 %v462, %v461
    %v479 = vpack.c.b16 %v464, %v463
    %v480 = vpack.c.b16 %v466, %v465
    %v481 = vpack.c.b16 %v468, %v467
    %v482 = vpack.c.b16 %v470, %v469
    %vm495 = vcmask 523264
    %v497 = vsel %vm495, %v328, 0
    %v500 = vsel %vm495, %v330, 0
    %v503 = vsel %vm495, %v332, 0
    %v506 = vsel %vm495, %v334, 0
    %v509 = vsel %vm495, %v336, 0
    %v512 = vsel %vm495, %v338, 0
    %v515 = vsel %vm495, %v340, 0
    %v518 = vsel %vm495, %v342, 0
    %v521 = vsel %vm495, %v344, 0
    %v524 = vsel %vm495, %v346, 0
    %v527 = vsel %vm495, %v348, 0
    %v530 = vsel %vm495, %v350, 0
    %v533 = vsel %vm495, %v352, 0
    %v536 = vsel %vm495, %v354, 0
    %v539 = vsel %vm495, %v356, 0
    %v542 = vsel %vm495, %v358, 0
    %v545 = vsel %vm495, %v360, 0
    %v548 = vsel %vm495, %v362, 0
    %v551 = vsel %vm495, %v364, 0
    %v554 = vsel %vm495, %v366, 0
    %v557 = vsel %vm495, %v368, 0
    %v560 = vsel %vm495, %v370, 0
    %v563 = vsel %vm495, %v372, 0
    %v566 = vsel %vm495, %v374, 0
    %v569 = vsel %vm495, %v376, 0
    %v572 = vsel %vm495, %v378, 0
    %v575 = vsel %vm495, %v380, 0
    %v578 = vsel %vm495, %v382, 0
    %v581 = vsel %vm495, %v384, 0
    %v584 = vsel %vm495, %v386, 0
    %v587 = vsel %vm495, %v388, 0
    %v590 = vsel %vm495, %v390, 0
    %592 = vmatprep.subr.bf16.mxu0 0
    %593 = vmatpush1.bf16.msra.mxu0 %v471
    %594 = vmatprep.subr.bf16.mxu0 0
    %595 = vmatpush1.bf16.msra.mxu0 %v472
    %596 = vmatprep.subr.bf16.mxu0 0
    %597 = vmatpush1.bf16.msra.mxu0 %v473
    %598 = vmatprep.subr.bf16.mxu0 0
    %599 = vmatpush1.bf16.msra.mxu0 %v474
    %600 = vmatprep.subr.bf16.mxu0 0
    %601 = vmatpush1.bf16.msra.mxu0 %v475
    %602 = vmatprep.subr.bf16.mxu0 0
    %603 = vmatpush1.bf16.msra.mxu0 %v476
    %604 = vmatprep.subr.bf16.mxu0 0
    %605 = vmatpush1.bf16.msra.mxu0 %v477
    %606 = vmatprep.subr.bf16.mxu0 0
    %607 = vmatpush1.bf16.msra.mxu0 %v478
    %608 = vmatprep.subr.bf16.mxu0 0
    %609 = vmatpush1.bf16.msra.mxu0 %v479
    %610 = vmatprep.subr.bf16.mxu0 0
    %611 = vmatpush1.bf16.msra.mxu0 %v480
    %612 = vmatprep.subr.bf16.mxu0 0
    %613 = vmatpush1.bf16.msra.mxu0 %v481
    %614 = vmatprep.subr.bf16.mxu0 0
    %615 = vmatpush1.bf16.msra.mxu0 %v482
    %616 = vmatprep.subr.bf16.mxu0 0
    %617 = vmatpush1.bf16.msra.mxu0 0
    %618 = vmatprep.subr.bf16.mxu0 0
    %619 = vmatpush1.bf16.msra.mxu0 0
    %620 = vmatprep.subr.bf16.mxu0 0
    %621 = vmatpush1.bf16.msra.mxu0 0
    %622 = vmatprep.subr.bf16.mxu0 0
    %623 = vmatpush1.bf16.msra.mxu0 0
    %624 = vmatprep.mubr.bf16.mxu0 %v497
    %625 = vmatmul.mubr.bf16.gmra.mrb[0].mxu0 %v327
    %v626 = vpop.f32.mrb[0].mxu0
    %v627 = vadd.f32 %v133, %v626
    %v628 = vpop.f32.mrb[0].mxu0
    %v629 = vpop.f32.mrb[0].mxu0
    %v630 = vadd.f32 %v133, %v629
    %v631 = vpop.f32.mrb[0].mxu0
    %632 = vmatprep.mubr.bf16.mxu0 %v500
    %633 = vmatmul.mubr.bf16.gmra.mrb[0].mxu0 %v329
    %v634 = vpop.f32.mrb[0].mxu0
    %v635 = vadd.f32 %v133, %v634
    %v636 = vpop.f32.mrb[0].mxu0
    %v637 = vpop.f32.mrb[0].mxu0
    %v638 = vadd.f32 %v133, %v637
    %v639 = vpop.f32.mrb[0].mxu0
    %640 = vmatprep.mubr.bf16.mxu0 %v503
    %641 = vmatmul.mubr.bf16.gmra.mrb[0].mxu0 %v331
    %v642 = vpop.f32.mrb[0].mxu0
    %v643 = vadd.f32 %v133, %v642
    %v644 = vpop.f32.mrb[0].mxu0
    %v645 = vpop.f32.mrb[0].mxu0
    %v646 = vadd.f32 %v133, %v645
    %v647 = vpop.f32.mrb[0].mxu0
    %648 = vmatprep.mubr.bf16.mxu0 %v506
    %649 = vmatmul.mubr.bf16.gmra.mrb[0].mxu0 %v333
    %v650 = vpop.f32.mrb[0].mxu0
    %v651 = vadd.f32 %v133, %v650
    %v652 = vpop.f32.mrb[0].mxu0
    %v653 = vpop.f32.mrb[0].mxu0
    %v654 = vadd.f32 %v133, %v653
    %v655 = vpop.f32.mrb[0].mxu0
    %656 = vmatprep.mubr.bf16.mxu0 %v509
    %657 = vmatmul.mubr.bf16.gmra.mrb[0].mxu0 %v335
    %v658 = vpop.f32.mrb[0].mxu0
    %v659 = vadd.f32 %v133, %v658
    %v660 = vpop.f32.mrb[0].mxu0
    %v661 = vpop.f32.mrb[0].mxu0
    %v662 = vadd.f32 %v133, %v661
    %v663 = vpop.f32.mrb[0].mxu0
    %664 = vmatprep.mubr.bf16.mxu0 %v512
    %665 = vmatmul.mubr.bf16.gmra.mrb[0].mxu0 %v337
    %v666 = vpop.f32.mrb[0].mxu0
    %v667 = vadd.f32 %v133, %v666
    %v668 = vpop.f32.mrb[0].mxu0
    %v669 = vpop.f32.mrb[0].mxu0
    %v670 = vadd.f32 %v133, %v669
    %v671 = vpop.f32.mrb[0].mxu0
    %672 = vmatprep.mubr.bf16.mxu0 %v515
    %673 = vmatmul.mubr.bf16.gmra.mrb[0].mxu0 %v339
    %v674 = vpop.f32.mrb[0].mxu0
    %v675 = vadd.f32 %v133, %v674
    %v676 = vpop.f32.mrb[0].mxu0
    %v677 = vpop.f32.mrb[0].mxu0
    %v678 = vadd.f32 %v133, %v677
    %v679 = vpop.f32.mrb[0].mxu0
    %680 = vmatprep.mubr.bf16.mxu0 %v518
    %681 = vmatmul.mubr.bf16.gmra.mrb[0].mxu0 %v341
    %v682 = vpop.f32.mrb[0].mxu0
    %v683 = vadd.f32 %v133, %v682
    %v684 = vpop.f32.mrb[0].mxu0
    %v685 = vpop.f32.mrb[0].mxu0
    %v686 = vadd.f32 %v133, %v685
    %v687 = vpop.f32.mrb[0].mxu0
    %688 = vmatprep.mubr.bf16.mxu0 %v521
    %689 = vmatmul.mubr.bf16.gmra.mrb[0].mxu0 %v343
    %v690 = vpop.f32.mrb[0].mxu0
    %v691 = vadd.f32 %v133, %v690
    %v692 = vpop.f32.mrb[0].mxu0
    %v693 = vpop.f32.mrb[0].mxu0
    %v694 = vadd.f32 %v133, %v693
    %v695 = vpop.f32.mrb[0].mxu0
    %696 = vmatprep.mubr.bf16.mxu0 %v524
    %697 = vmatmul.mubr.bf16.gmra.mrb[0].mxu0 %v345
    %v698 = vpop.f32.mrb[0].mxu0
    %v699 = vadd.f32 %v133, %v698
    %v700 = vpop.f32.mrb[0].mxu0
    %v701 = vpop.f32.mrb[0].mxu0
    %v702 = vadd.f32 %v133, %v701
    %v703 = vpop.f32.mrb[0].mxu0
    %704 = vmatprep.mubr.bf16.mxu0 %v527
    %705 = vmatmul.mubr.bf16.gmra.mrb[0].mxu0 %v347
    %v706 = vpop.f32.mrb[0].mxu0
    %v707 = vadd.f32 %v133, %v706
    %v708 = vpop.f32.mrb[0].mxu0
    %v709 = vpop.f32.mrb[0].mxu0
    %v710 = vadd.f32 %v133, %v709
    %v711 = vpop.f32.mrb[0].mxu0
    %712 = vmatprep.mubr.bf16.mxu0 %v530
    %713 = vmatmul.mubr.bf16.gmra.mrb[0].mxu0 %v349
    %v714 = vpop.f32.mrb[0].mxu0
    %v715 = vadd.f32 %v133, %v714
    %v716 = vpop.f32.mrb[0].mxu0
    %v717 = vpop.f32.mrb[0].mxu0
    %v718 = vadd.f32 %v133, %v717
    %v719 = vpop.f32.mrb[0].mxu0
    %720 = vmatprep.mubr.bf16.mxu0 %v533
    %721 = vmatmul.mubr.bf16.gmra.mrb[0].mxu0 %v351
    %v722 = vpop.f32.mrb[0].mxu0
    %v723 = vadd.f32 %v133, %v722
    %v724 = vpop.f32.mrb[0].mxu0
    %v725 = vpop.f32.mrb[0].mxu0
    %v726 = vadd.f32 %v133, %v725
    %v727 = vpop.f32.mrb[0].mxu0
    %728 = vmatprep.mubr.bf16.mxu0 %v536
    %729 = vmatmul.mubr.bf16.gmra.mrb[0].mxu0 %v353
    %v730 = vpop.f32.mrb[0].mxu0
    %v731 = vadd.f32 %v133, %v730
    %v732 = vpop.f32.mrb[0].mxu0
    %v733 = vpop.f32.mrb[0].mxu0
    %v734 = vadd.f32 %v133, %v733
    %v735 = vpop.f32.mrb[0].mxu0
    %736 = vmatprep.mubr.bf16.mxu0 %v539
    %737 = vmatmul.mubr.bf16.gmra.mrb[0].mxu0 %v355
    %v738 = vpop.f32.mrb[0].mxu0
    %v739 = vadd.f32 %v133, %v738
    %v740 = vpop.f32.mrb[0].mxu0
    %v741 = vpop.f32.mrb[0].mxu0
    %v742 = vadd.f32 %v133, %v741
    %v743 = vpop.f32.mrb[0].mxu0
    %744 = vmatprep.mubr.bf16.mxu0 %v542
    %745 = vmatmul.mubr.bf16.gmra.mrb[0].mxu0 %v357
    %v746 = vpop.f32.mrb[0].mxu0
    %v747 = vadd.f32 %v133, %v746
    %v748 = vpop.f32.mrb[0].mxu0
    %v749 = vpop.f32.mrb[0].mxu0
    %v750 = vadd.f32 %v133, %v749
    %v751 = vpop.f32.mrb[0].mxu0
    %752 = vmatprep.mubr.bf16.mxu0 %v545
    %753 = vmatmul.mubr.bf16.gmra.mrb[0].mxu0 %v359
    %v754 = vpop.f32.mrb[0].mxu0
    %v755 = vadd.f32 %v133, %v754
    %v756 = vpop.f32.mrb[0].mxu0
    %v757 = vpop.f32.mrb[0].mxu0
    %v758 = vadd.f32 %v133, %v757
    %v759 = vpop.f32.mrb[0].mxu0
    %760 = vmatprep.mubr.bf16.mxu0 %v548
    %761 = vmatmul.mubr.bf16.gmra.mrb[0].mxu0 %v361
    %v762 = vpop.f32.mrb[0].mxu0
    %v763 = vadd.f32 %v133, %v762
    %v764 = vpop.f32.mrb[0].mxu0
    %v765 = vpop.f32.mrb[0].mxu0
    %v766 = vadd.f32 %v133, %v765
    %v767 = vpop.f32.mrb[0].mxu0
    %768 = vmatprep.mubr.bf16.mxu0 %v551
    %769 = vmatmul.mubr.bf16.gmra.mrb[0].mxu0 %v363
    %v770 = vpop.f32.mrb[0].mxu0
    %v771 = vadd.f32 %v133, %v770
    %v772 = vpop.f32.mrb[0].mxu0
    %v773 = vpop.f32.mrb[0].mxu0
    %v774 = vadd.f32 %v133, %v773
    %v775 = vpop.f32.mrb[0].mxu0
    %776 = vmatprep.mubr.bf16.mxu0 %v554
    %777 = vmatmul.mubr.bf16.gmra.mrb[0].mxu0 %v365
    %v778 = vpop.f32.mrb[0].mxu0
    %v779 = vadd.f32 %v133, %v778
    %v780 = vpop.f32.mrb[0].mxu0
    %v781 = vpop.f32.mrb[0].mxu0
    %v782 = vadd.f32 %v133, %v781
    %v783 = vpop.f32.mrb[0].mxu0
    %784 = vmatprep.mubr.bf16.mxu0 %v557
    %785 = vmatmul.mubr.bf16.gmra.mrb[0].mxu0 %v367
    %v786 = vpop.f32.mrb[0].mxu0
    %v787 = vadd.f32 %v133, %v786
    %v788 = vpop.f32.mrb[0].mxu0
    %v789 = vpop.f32.mrb[0].mxu0
    %v790 = vadd.f32 %v133, %v789
    %v791 = vpop.f32.mrb[0].mxu0
    %792 = vmatprep.mubr.bf16.mxu0 %v560
    %793 = vmatmul.mubr.bf16.gmra.mrb[0].mxu0 %v369
    %v794 = vpop.f32.mrb[0].mxu0
    %v795 = vadd.f32 %v133, %v794
    %v796 = vpop.f32.mrb[0].mxu0
    %v797 = vpop.f32.mrb[0].mxu0
    %v798 = vadd.f32 %v133, %v797
    %v799 = vpop.f32.mrb[0].mxu0
    %800 = vmatprep.mubr.bf16.mxu0 %v563
    %801 = vmatmul.mubr.bf16.gmra.mrb[0].mxu0 %v371
    %v802 = vpop.f32.mrb[0].mxu0
    %v803 = vadd.f32 %v133, %v802
    %v804 = vpop.f32.mrb[0].mxu0
    %v805 = vpop.f32.mrb[0].mxu0
    %v806 = vadd.f32 %v133, %v805
    %v807 = vpop.f32.mrb[0].mxu0
    %808 = vmatprep.mubr.bf16.mxu0 %v566
    %809 = vmatmul.mubr.bf16.gmra.mrb[0].mxu0 %v373
    %v810 = vpop.f32.mrb[0].mxu0
    %v811 = vadd.f32 %v133, %v810
    %v812 = vpop.f32.mrb[0].mxu0
    %v813 = vpop.f32.mrb[0].mxu0
    %v814 = vadd.f32 %v133, %v813
    %v815 = vpop.f32.mrb[0].mxu0
    %816 = vmatprep.mubr.bf16.mxu0 %v569
    %817 = vmatmul.mubr.bf16.gmra.mrb[0].mxu0 %v375
    %v818 = vpop.f32.mrb[0].mxu0
    %v819 = vadd.f32 %v133, %v818
    %v820 = vpop.f32.mrb[0].mxu0
    %v821 = vpop.f32.mrb[0].mxu0
    %v822 = vadd.f32 %v133, %v821
    %v823 = vpop.f32.mrb[0].mxu0
    %824 = vmatprep.mubr.bf16.mxu0 %v572
    %825 = vmatmul.mubr.bf16.gmra.mrb[0].mxu0 %v377
    %v826 = vpop.f32.mrb[0].mxu0
    %v827 = vadd.f32 %v133, %v826
    %v828 = vpop.f32.mrb[0].mxu0
    %v829 = vpop.f32.mrb[0].mxu0
    %v830 = vadd.f32 %v133, %v829
    %v831 = vpop.f32.mrb[0].mxu0
    %832 = vmatprep.mubr.bf16.mxu0 %v575
    %833 = vmatmul.mubr.bf16.gmra.mrb[0].mxu0 %v379
    %v834 = vpop.f32.mrb[0].mxu0
    %v835 = vadd.f32 %v133, %v834
    %v836 = vpop.f32.mrb[0].mxu0
    %v837 = vpop.f32.mrb[0].mxu0
    %v838 = vadd.f32 %v133, %v837
    %v839 = vpop.f32.mrb[0].mxu0
    %840 = vmatprep.mubr.bf16.mxu0 %v578
    %841 = vmatmul.mubr.bf16.gmra.mrb[0].mxu0 %v381
    %v842 = vpop.f32.mrb[0].mxu0
    %v843 = vadd.f32 %v133, %v842
    %v844 = vpop.f32.mrb[0].mxu0
    %v845 = vpop.f32.mrb[0].mxu0
    %v846 = vadd.f32 %v133, %v845
    %v847 = vpop.f32.mrb[0].mxu0
    %848 = vmatprep.mubr.bf16.mxu0 %v581
    %849 = vmatmul.mubr.bf16.gmra.mrb[0].mxu0 %v383
    %v850 = vpop.f32.mrb[0].mxu0
    %v851 = vadd.f32 %v133, %v850
    %v852 = vpop.f32.mrb[0].mxu0
    %v853 = vpop.f32.mrb[0].mxu0
    %v854 = vadd.f32 %v133, %v853
    %v855 = vpop.f32.mrb[0].mxu0
    %856 = vmatprep.mubr.bf16.mxu0 %v584
    %857 = vmatmul.mubr.bf16.gmra.mrb[0].mxu0 %v385
    %v858 = vpop.f32.mrb[0].mxu0
    %v859 = vadd.f32 %v133, %v858
    %v860 = vpop.f32.mrb[0].mxu0
    %v861 = vpop.f32.mrb[0].mxu0
    %v862 = vadd.f32 %v133, %v861
    %v863 = vpop.f32.mrb[0].mxu0
    %864 = vmatprep.mubr.bf16.mxu0 %v587
    %865 = vmatmul.mubr.bf16.gmra.mrb[0].mxu0 %v387
    %v866 = vpop.f32.mrb[0].mxu0
    %v867 = vadd.f32 %v133, %v866
    %v868 = vpop.f32.mrb[0].mxu0
    %v869 = vpop.f32.mrb[0].mxu0
    %v870 = vadd.f32 %v133, %v869
    %v871 = vpop.f32.mrb[0].mxu0
    %872 = vmatprep.mubr.bf16.mxu0 %v590
    %873 = vmatmul.mubr.bf16.gmra.mrb[0].mxu0 %v389
    %v874 = vpop.f32.mrb[0].mxu0
    %v875 = vadd.f32 %v133, %v874
    %v876 = vpop.f32.mrb[0].mxu0
    %v877 = vpop.f32.mrb[0].mxu0
    %v878 = vadd.f32 %v133, %v877
    %v879 = vpop.f32.mrb[0].mxu0
    %880 = vdwg.mxu0
    %v881 = vmax.f32 %v627, 0.0
    %v882 = vmax.f32 %v630, 0.0
    %v883 = vmax.f32 %v635, 0.0
    %v884 = vmax.f32 %v638, 0.0
    %v885 = vmax.f32 %v643, 0.0
    %v886 = vmax.f32 %v646, 0.0
    %v887 = vmax.f32 %v651, 0.0
    %v888 = vmax.f32 %v654, 0.0
    %v889 = vmax.f32 %v659, 0.0
    %v890 = vmax.f32 %v662, 0.0
    %v891 = vmax.f32 %v667, 0.0
    %v892 = vmax.f32 %v670, 0.0
    %v893 = vmax.f32 %v675, 0.0
    %v894 = vmax.f32 %v678, 0.0
    %v895 = vmax.f32 %v683, 0.0
    %v896 = vmax.f32 %v686, 0.0
    %v897 = vmax.f32 %v691, 0.0
    %v898 = vmax.f32 %v694, 0.0
    %v899 = vmax.f32 %v699, 0.0
    %v900 = vmax.f32 %v702, 0.0
    %v901 = vmax.f32 %v707, 0.0
    %v902 = vmax.f32 %v710, 0.0
    %v903 = vmax.f32 %v715, 0.0
    %v904 = vmax.f32 %v718, 0.0
    %v905 = vmax.f32 %v723, 0.0
    %v906 = vmax.f32 %v726, 0.0
    %v907 = vmax.f32 %v731, 0.0
    %v908 = vmax.f32 %v734, 0.0
    %v909 = vmax.f32 %v739, 0.0
    %v910 = vmax.f32 %v742, 0.0
    %v911 = vmax.f32 %v747, 0.0
    %v912 = vmax.f32 %v750, 0.0
    %v913 = vmax.f32 %v755, 0.0
    %v914 = vmax.f32 %v758, 0.0
    %v915 = vmax.f32 %v763, 0.0
    %v916 = vmax.f32 %v766, 0.0
    %v917 = vmax.f32 %v771, 0.0
    %v918 = vmax.f32 %v774, 0.0
    %v919 = vmax.f32 %v779, 0.0
    %v920 = vmax.f32 %v782, 0.0
    %v921 = vmax.f32 %v787, 0.0
    %v922 = vmax.f32 %v790, 0.0
    %v923 = vmax.f32 %v795, 0.0
    %v924 = vmax.f32 %v798, 0.0
    %v925 = vmax.f32 %v803, 0.0
    %v926 = vmax.f32 %v806, 0.0
    %v927 = vmax.f32 %v811, 0.0
    %v928 = vmax.f32 %v814, 0.0
    %v929 = vmax.f32 %v819, 0.0
    %v930 = vmax.f32 %v822, 0.0
    %v931 = vmax.f32 %v827, 0.0
    %v932 = vmax.f32 %v830, 0.0
    %v933 = vmax.f32 %v835, 0.0
    %v934 = vmax.f32 %v838, 0.0
    %v935 = vmax.f32 %v843, 0.0
    %v936 = vmax.f32 %v846, 0.0
    %v937 = vmax.f32 %v851, 0.0
    %v938 = vmax.f32 %v854, 0.0
    %v939 = vmax.f32 %v859, 0.0
    %v940 = vmax.f32 %v862, 0.0
    %v941 = vmax.f32 %v867, 0.0
    %v942 = vmax.f32 %v870, 0.0
    %v943 = vmax.f32 %v875, 0.0
    %v944 = vmax.f32 %v878, 0.0
    %1009 = vrot.lane.b32.xlu0 %v881, 96
    %v1010 = vpop.permute.xlu0 %1009
    %1011 = vrot.lane.b32.xlu0 %v882, 96
    %v1012 = vpop.permute.xlu0 %1011
    %1013 = vrot.lane.b32.xlu0 %v883, 96
    %v1014 = vpop.permute.xlu0 %1013
    %1015 = vrot.lane.b32.xlu0 %v884, 96
    %v1016 = vpop.permute.xlu0 %1015
    %1017 = vrot.lane.b32.xlu0 %v885, 96
    %v1018 = vpop.permute.xlu0 %1017
    %1019 = vrot.lane.b32.xlu0 %v886, 96
    %v1020 = vpop.permute.xlu0 %1019
    %1021 = vrot.lane.b32.xlu0 %v887, 96
    %v1022 = vpop.permute.xlu0 %1021
    %1023 = vrot.lane.b32.xlu0 %v888, 96
    %v1024 = vpop.permute.xlu0 %1023
    %1025 = vrot.lane.b32.xlu0 %v889, 96
    %v1026 = vpop.permute.xlu0 %1025
    %1027 = vrot.lane.b32.xlu0 %v890, 96
    %v1028 = vpop.permute.xlu0 %1027
    %1029 = vrot.lane.b32.xlu0 %v891, 96
    %v1030 = vpop.permute.xlu0 %1029
    %1031 = vrot.lane.b32.xlu0 %v892, 96
    %v1032 = vpop.permute.xlu0 %1031
    %1033 = vrot.lane.b32.xlu0 %v893, 96
    %v1034 = vpop.permute.xlu0 %1033
    %1035 = vrot.lane.b32.xlu0 %v894, 96
    %v1036 = vpop.permute.xlu0 %1035
    %1037 = vrot.lane.b32.xlu0 %v895, 96
    %v1038 = vpop.permute.xlu0 %1037
    %1039 = vrot.lane.b32.xlu0 %v896, 96
    %v1040 = vpop.permute.xlu0 %1039
    %1041 = vrot.lane.b32.xlu0 %v897, 96
    %v1042 = vpop.permute.xlu0 %1041
    %1043 = vrot.lane.b32.xlu0 %v898, 96
    %v1044 = vpop.permute.xlu0 %1043
    %1045 = vrot.lane.b32.xlu0 %v899, 96
    %v1046 = vpop.permute.xlu0 %1045
    %1047 = vrot.lane.b32.xlu0 %v900, 96
    %v1048 = vpop.permute.xlu0 %1047
    %1049 = vrot.lane.b32.xlu0 %v901, 96
    %v1050 = vpop.permute.xlu0 %1049
    %1051 = vrot.lane.b32.xlu0 %v902, 96
    %v1052 = vpop.permute.xlu0 %1051
    %1053 = vrot.lane.b32.xlu0 %v903, 96
    %v1054 = vpop.permute.xlu0 %1053
    %1055 = vrot.lane.b32.xlu0 %v904, 96
    %v1056 = vpop.permute.xlu0 %1055
    %1057 = vrot.lane.b32.xlu0 %v905, 96
    %v1058 = vpop.permute.xlu0 %1057
    %1059 = vrot.lane.b32.xlu0 %v906, 96
    %v1060 = vpop.permute.xlu0 %1059
    %1061 = vrot.lane.b32.xlu0 %v907, 96
    %v1062 = vpop.permute.xlu0 %1061
    %1063 = vrot.lane.b32.xlu0 %v908, 96
    %v1064 = vpop.permute.xlu0 %1063
    %1065 = vrot.lane.b32.xlu0 %v909, 96
    %v1066 = vpop.permute.xlu0 %1065
    %1067 = vrot.lane.b32.xlu0 %v910, 96
    %v1068 = vpop.permute.xlu0 %1067
    %1069 = vrot.lane.b32.xlu0 %v911, 96
    %v1070 = vpop.permute.xlu0 %1069
    %1071 = vrot.lane.b32.xlu0 %v912, 96
    %v1072 = vpop.permute.xlu0 %1071
    %1073 = vrot.lane.b32.xlu0 %v913, 96
    %v1074 = vpop.permute.xlu0 %1073
    %1075 = vrot.lane.b32.xlu0 %v914, 96
    %v1076 = vpop.permute.xlu0 %1075
    %1077 = vrot.lane.b32.xlu0 %v915, 96
    %v1078 = vpop.permute.xlu0 %1077
    %1079 = vrot.lane.b32.xlu0 %v916, 96
    %v1080 = vpop.permute.xlu0 %1079
    %1081 = vrot.lane.b32.xlu0 %v917, 96
    %v1082 = vpop.permute.xlu0 %1081
    %1083 = vrot.lane.b32.xlu0 %v918, 96
    %v1084 = vpop.permute.xlu0 %1083
    %1085 = vrot.lane.b32.xlu0 %v919, 96
    %v1086 = vpop.permute.xlu0 %1085
    %1087 = vrot.lane.b32.xlu0 %v920, 96
    %v1088 = vpop.permute.xlu0 %1087
    %1089 = vrot.lane.b32.xlu0 %v921, 96
    %v1090 = vpop.permute.xlu0 %1089
    %1091 = vrot.lane.b32.xlu0 %v922, 96
    %v1092 = vpop.permute.xlu0 %1091
    %1093 = vrot.lane.b32.xlu0 %v923, 96
    %v1094 = vpop.permute.xlu0 %1093
    %1095 = vrot.lane.b32.xlu0 %v924, 96
    %v1096 = vpop.permute.xlu0 %1095
    %1097 = vrot.lane.b32.xlu0 %v925, 96
    %v1098 = vpop.permute.xlu0 %1097
    %1099 = vrot.lane.b32.xlu0 %v926, 96
    %v1100 = vpop.permute.xlu0 %1099
    %1101 = vrot.lane.b32.xlu0 %v927, 96
    %v1102 = vpop.permute.xlu0 %1101
    %1103 = vrot.lane.b32.xlu0 %v928, 96
    %v1104 = vpop.permute.xlu0 %1103
    %1105 = vrot.lane.b32.xlu0 %v929, 96
    %v1106 = vpop.permute.xlu0 %1105
    %1107 = vrot.lane.b32.xlu0 %v930, 96
    %v1108 = vpop.permute.xlu0 %1107
    %1109 = vrot.lane.b32.xlu0 %v931, 96
    %v1110 = vpop.permute.xlu0 %1109
    %1111 = vrot.lane.b32.xlu0 %v932, 96
    %v1112 = vpop.permute.xlu0 %1111
    %1113 = vrot.lane.b32.xlu0 %v933, 96
    %v1114 = vpop.permute.xlu0 %1113
    %1115 = vrot.lane.b32.xlu0 %v934, 96
    %v1116 = vpop.permute.xlu0 %1115
    %1117 = vrot.lane.b32.xlu0 %v935, 96
    %v1118 = vpop.permute.xlu0 %1117
    %1119 = vrot.lane.b32.xlu0 %v936, 96
    %v1120 = vpop.permute.xlu0 %1119
    %1121 = vrot.lane.b32.xlu0 %v937, 96
    %v1122 = vpop.permute.xlu0 %1121
    %1123 = vrot.lane.b32.xlu0 %v938, 96
    %v1124 = vpop.permute.xlu0 %1123
    %1125 = vrot.lane.b32.xlu0 %v939, 96
    %v1126 = vpop.permute.xlu0 %1125
    %1127 = vrot.lane.b32.xlu0 %v940, 96
    %v1128 = vpop.permute.xlu0 %1127
    %1129 = vrot.lane.b32.xlu0 %v941, 96
    %v1130 = vpop.permute.xlu0 %1129
    %1131 = vrot.lane.b32.xlu0 %v942, 96
    %v1132 = vpop.permute.xlu0 %1131
    %1133 = vrot.lane.b32.xlu0 %v943, 96
    %v1134 = vpop.permute.xlu0 %1133
    %1135 = vrot.lane.b32.xlu0 %v944, 96
    %v1136 = vpop.permute.xlu0 %1135
    %v1201 = vmax.f32 %v881, %v1010
    %v1202 = vmax.f32 %v882, %v1012
    %v1203 = vmax.f32 %v883, %v1014
    %v1204 = vmax.f32 %v884, %v1016
    %v1205 = vmax.f32 %v885, %v1018
    %v1206 = vmax.f32 %v886, %v1020
    %v1207 = vmax.f32 %v887, %v1022
    %v1208 = vmax.f32 %v888, %v1024
    %v1209 = vmax.f32 %v889, %v1026
    %v1210 = vmax.f32 %v890, %v1028
    %v1211 = vmax.f32 %v891, %v1030
    %v1212 = vmax.f32 %v892, %v1032
    %v1213 = vmax.f32 %v893, %v1034
    %v1214 = vmax.f32 %v894, %v1036
    %v1215 = vmax.f32 %v895, %v1038
    %v1216 = vmax.f32 %v896, %v1040
    %v1217 = vmax.f32 %v897, %v1042
    %v1218 = vmax.f32 %v898, %v1044
    %v1219 = vmax.f32 %v899, %v1046
    %v1220 = vmax.f32 %v900, %v1048
    %v1221 = vmax.f32 %v901, %v1050
    %v1222 = vmax.f32 %v902, %v1052
    %v1223 = vmax.f32 %v903, %v1054
    %v1224 = vmax.f32 %v904, %v1056
    %v1225 = vmax.f32 %v905, %v1058
    %v1226 = vmax.f32 %v906, %v1060
    %v1227 = vmax.f32 %v907, %v1062
    %v1228 = vmax.f32 %v908, %v1064
    %v1229 = vmax.f32 %v909, %v1066
    %v1230 = vmax.f32 %v910, %v1068
    %v1231 = vmax.f32 %v911, %v1070
    %v1232 = vmax.f32 %v912, %v1072
    %v1233 = vmax.f32 %v913, %v1074
    %v1234 = vmax.f32 %v914, %v1076
    %v1235 = vmax.f32 %v915, %v1078
    %v1236 = vmax.f32 %v916, %v1080
    %v1237 = vmax.f32 %v917, %v1082
    %v1238 = vmax.f32 %v918, %v1084
    %v1239 = vmax.f32 %v919, %v1086
    %v1240 = vmax.f32 %v920, %v1088
    %v1241 = vmax.f32 %v921, %v1090
    %v1242 = vmax.f32 %v922, %v1092
    %v1243 = vmax.f32 %v923, %v1094
    %v1244 = vmax.f32 %v924, %v1096
    %v1245 = vmax.f32 %v925, %v1098
    %v1246 = vmax.f32 %v926, %v1100
    %v1247 = vmax.f32 %v927, %v1102
    %v1248 = vmax.f32 %v928, %v1104
    %v1249 = vmax.f32 %v929, %v1106
    %v1250 = vmax.f32 %v930, %v1108
    %v1251 = vmax.f32 %v931, %v1110
    %v1252 = vmax.f32 %v932, %v1112
    %v1253 = vmax.f32 %v933, %v1114
    %v1254 = vmax.f32 %v934, %v1116
    %v1255 = vmax.f32 %v935, %v1118
    %v1256 = vmax.f32 %v936, %v1120
    %v1257 = vmax.f32 %v937, %v1122
    %v1258 = vmax.f32 %v938, %v1124
    %v1259 = vmax.f32 %v939, %v1126
    %v1260 = vmax.f32 %v940, %v1128
    %v1261 = vmax.f32 %v941, %v1130
    %v1262 = vmax.f32 %v942, %v1132
    %v1263 = vmax.f32 %v943, %v1134
    %v1264 = vmax.f32 %v944, %v1136
    %1329 = vrot.lane.b32.xlu0 %v1201, 64
    %v1330 = vpop.permute.xlu0 %1329
    %1331 = vrot.lane.b32.xlu0 %v1202, 64
    %v1332 = vpop.permute.xlu0 %1331
    %1333 = vrot.lane.b32.xlu0 %v1203, 64
    %v1334 = vpop.permute.xlu0 %1333
    %1335 = vrot.lane.b32.xlu0 %v1204, 64
    %v1336 = vpop.permute.xlu0 %1335
    %1337 = vrot.lane.b32.xlu0 %v1205, 64
    %v1338 = vpop.permute.xlu0 %1337
    %1339 = vrot.lane.b32.xlu0 %v1206, 64
    %v1340 = vpop.permute.xlu0 %1339
    %1341 = vrot.lane.b32.xlu0 %v1207, 64
    %v1342 = vpop.permute.xlu0 %1341
    %1343 = vrot.lane.b32.xlu0 %v1208, 64
    %v1344 = vpop.permute.xlu0 %1343
    %1345 = vrot.lane.b32.xlu0 %v1209, 64
    %v1346 = vpop.permute.xlu0 %1345
    %1347 = vrot.lane.b32.xlu0 %v1210, 64
    %v1348 = vpop.permute.xlu0 %1347
    %1349 = vrot.lane.b32.xlu0 %v1211, 64
    %v1350 = vpop.permute.xlu0 %1349
    %1351 = vrot.lane.b32.xlu0 %v1212, 64
    %v1352 = vpop.permute.xlu0 %1351
    %1353 = vrot.lane.b32.xlu0 %v1213, 64
    %v1354 = vpop.permute.xlu0 %1353
    %1355 = vrot.lane.b32.xlu0 %v1214, 64
    %v1356 = vpop.permute.xlu0 %1355
    %1357 = vrot.lane.b32.xlu0 %v1215, 64
    %v1358 = vpop.permute.xlu0 %1357
    %1359 = vrot.lane.b32.xlu0 %v1216, 64
    %v1360 = vpop.permute.xlu0 %1359
    %1361 = vrot.lane.b32.xlu0 %v1217, 64
    %v1362 = vpop.permute.xlu0 %1361
    %1363 = vrot.lane.b32.xlu0 %v1218, 64
    %v1364 = vpop.permute.xlu0 %1363
    %1365 = vrot.lane.b32.xlu0 %v1219, 64
    %v1366 = vpop.permute.xlu0 %1365
    %1367 = vrot.lane.b32.xlu0 %v1220, 64
    %v1368 = vpop.permute.xlu0 %1367
    %1369 = vrot.lane.b32.xlu0 %v1221, 64
    %v1370 = vpop.permute.xlu0 %1369
    %1371 = vrot.lane.b32.xlu0 %v1222, 64
    %v1372 = vpop.permute.xlu0 %1371
    %1373 = vrot.lane.b32.xlu0 %v1223, 64
    %v1374 = vpop.permute.xlu0 %1373
    %1375 = vrot.lane.b32.xlu0 %v1224, 64
    %v1376 = vpop.permute.xlu0 %1375
    %1377 = vrot.lane.b32.xlu0 %v1225, 64
    %v1378 = vpop.permute.xlu0 %1377
    %1379 = vrot.lane.b32.xlu0 %v1226, 64
    %v1380 = vpop.permute.xlu0 %1379
    %1381 = vrot.lane.b32.xlu0 %v1227, 64
    %v1382 = vpop.permute.xlu0 %1381
    %1383 = vrot.lane.b32.xlu0 %v1228, 64
    %v1384 = vpop.permute.xlu0 %1383
    %1385 = vrot.lane.b32.xlu0 %v1229, 64
    %v1386 = vpop.permute.xlu0 %1385
    %1387 = vrot.lane.b32.xlu0 %v1230, 64
    %v1388 = vpop.permute.xlu0 %1387
    %1389 = vrot.lane.b32.xlu0 %v1231, 64
    %v1390 = vpop.permute.xlu0 %1389
    %1391 = vrot.lane.b32.xlu0 %v1232, 64
    %v1392 = vpop.permute.xlu0 %1391
    %1393 = vrot.lane.b32.xlu0 %v1233, 64
    %v1394 = vpop.permute.xlu0 %1393
    %1395 = vrot.lane.b32.xlu0 %v1234, 64
    %v1396 = vpop.permute.xlu0 %1395
    %1397 = vrot.lane.b32.xlu0 %v1235, 64
    %v1398 = vpop.permute.xlu0 %1397
    %1399 = vrot.lane.b32.xlu0 %v1236, 64
    %v1400 = vpop.permute.xlu0 %1399
    %1401 = vrot.lane.b32.xlu0 %v1237, 64
    %v1402 = vpop.permute.xlu0 %1401
    %1403 = vrot.lane.b32.xlu0 %v1238, 64
    %v1404 = vpop.permute.xlu0 %1403
    %1405 = vrot.lane.b32.xlu0 %v1239, 64
    %v1406 = vpop.permute.xlu0 %1405
    %1407 = vrot.lane.b32.xlu0 %v1240, 64
    %v1408 = vpop.permute.xlu0 %1407
    %1409 = vrot.lane.b32.xlu0 %v1241, 64
    %v1410 = vpop.permute.xlu0 %1409
    %1411 = vrot.lane.b32.xlu0 %v1242, 64
    %v1412 = vpop.permute.xlu0 %1411
    %1413 = vrot.lane.b32.xlu0 %v1243, 64
    %v1414 = vpop.permute.xlu0 %1413
    %1415 = vrot.lane.b32.xlu0 %v1244, 64
    %v1416 = vpop.permute.xlu0 %1415
    %1417 = vrot.lane.b32.xlu0 %v1245, 64
    %v1418 = vpop.permute.xlu0 %1417
    %1419 = vrot.lane.b32.xlu0 %v1246, 64
    %v1420 = vpop.permute.xlu0 %1419
    %1421 = vrot.lane.b32.xlu0 %v1247, 64
    %v1422 = vpop.permute.xlu0 %1421
    %1423 = vrot.lane.b32.xlu0 %v1248, 64
    %v1424 = vpop.permute.xlu0 %1423
    %1425 = vrot.lane.b32.xlu0 %v1249, 64
    %v1426 = vpop.permute.xlu0 %1425
    %1427 = vrot.lane.b32.xlu0 %v1250, 64
    %v1428 = vpop.permute.xlu0 %1427
    %1429 = vrot.lane.b32.xlu0 %v1251, 64
    %v1430 = vpop.permute.xlu0 %1429
    %1431 = vrot.lane.b32.xlu0 %v1252, 64
    %v1432 = vpop.permute.xlu0 %1431
    %1433 = vrot.lane.b32.xlu0 %v1253, 64
    %v1434 = vpop.permute.xlu0 %1433
    %1435 = vrot.lane.b32.xlu0 %v1254, 64
    %v1436 = vpop.permute.xlu0 %1435
    %1437 = vrot.lane.b32.xlu0 %v1255, 64
    %v1438 = vpop.permute.xlu0 %1437
    %1439 = vrot.lane.b32.xlu0 %v1256, 64
    %v1440 = vpop.permute.xlu0 %1439
    %1441 = vrot.lane.b32.xlu0 %v1257, 64
    %v1442 = vpop.permute.xlu0 %1441
    %1443 = vrot.lane.b32.xlu0 %v1258, 64
    %v1444 = vpop.permute.xlu0 %1443
    %1445 = vrot.lane.b32.xlu0 %v1259, 64
    %v1446 = vpop.permute.xlu0 %1445
    %1447 = vrot.lane.b32.xlu0 %v1260, 64
    %v1448 = vpop.permute.xlu0 %1447
    %1449 = vrot.lane.b32.xlu0 %v1261, 64
    %v1450 = vpop.permute.xlu0 %1449
    %1451 = vrot.lane.b32.xlu0 %v1262, 64
    %v1452 = vpop.permute.xlu0 %1451
    %1453 = vrot.lane.b32.xlu0 %v1263, 64
    %v1454 = vpop.permute.xlu0 %1453
    %1455 = vrot.lane.b32.xlu0 %v1264, 64
    %v1456 = vpop.permute.xlu0 %1455
    %v1521 = vmax.f32 %v1201, %v1330
    %v1522 = vmax.f32 %v1202, %v1332
    %v1523 = vmax.f32 %v1203, %v1334
    %v1524 = vmax.f32 %v1204, %v1336
    %v1525 = vmax.f32 %v1205, %v1338
    %v1526 = vmax.f32 %v1206, %v1340
    %v1527 = vmax.f32 %v1207, %v1342
    %v1528 = vmax.f32 %v1208, %v1344
    %v1529 = vmax.f32 %v1209, %v1346
    %v1530 = vmax.f32 %v1210, %v1348
    %v1531 = vmax.f32 %v1211, %v1350
    %v1532 = vmax.f32 %v1212, %v1352
    %v1533 = vmax.f32 %v1213, %v1354
    %v1534 = vmax.f32 %v1214, %v1356
    %v1535 = vmax.f32 %v1215, %v1358
    %v1536 = vmax.f32 %v1216, %v1360
    %v1537 = vmax.f32 %v1217, %v1362
    %v1538 = vmax.f32 %v1218, %v1364
    %v1539 = vmax.f32 %v1219, %v1366
    %v1540 = vmax.f32 %v1220, %v1368
    %v1541 = vmax.f32 %v1221, %v1370
    %v1542 = vmax.f32 %v1222, %v1372
    %v1543 = vmax.f32 %v1223, %v1374
    %v1544 = vmax.f32 %v1224, %v1376
    %v1545 = vmax.f32 %v1225, %v1378
    %v1546 = vmax.f32 %v1226, %v1380
    %v1547 = vmax.f32 %v1227, %v1382
    %v1548 = vmax.f32 %v1228, %v1384
    %v1549 = vmax.f32 %v1229, %v1386
    %v1550 = vmax.f32 %v1230, %v1388
    %v1551 = vmax.f32 %v1231, %v1390
    %v1552 = vmax.f32 %v1232, %v1392
    %v1553 = vmax.f32 %v1233, %v1394
    %v1554 = vmax.f32 %v1234, %v1396
    %v1555 = vmax.f32 %v1235, %v1398
    %v1556 = vmax.f32 %v1236, %v1400
    %v1557 = vmax.f32 %v1237, %v1402
    %v1558 = vmax.f32 %v1238, %v1404
    %v1559 = vmax.f32 %v1239, %v1406
    %v1560 = vmax.f32 %v1240, %v1408
    %v1561 = vmax.f32 %v1241, %v1410
    %v1562 = vmax.f32 %v1242, %v1412
    %v1563 = vmax.f32 %v1243, %v1414
    %v1564 = vmax.f32 %v1244, %v1416
    %v1565 = vmax.f32 %v1245, %v1418
    %v1566 = vmax.f32 %v1246, %v1420
    %v1567 = vmax.f32 %v1247, %v1422
    %v1568 = vmax.f32 %v1248, %v1424
    %v1569 = vmax.f32 %v1249, %v1426
    %v1570 = vmax.f32 %v1250, %v1428
    %v1571 = vmax.f32 %v1251, %v1430
    %v1572 = vmax.f32 %v1252, %v1432
    %v1573 = vmax.f32 %v1253, %v1434
    %v1574 = vmax.f32 %v1254, %v1436
    %v1575 = vmax.f32 %v1255, %v1438
    %v1576 = vmax.f32 %v1256, %v1440
    %v1577 = vmax.f32 %v1257, %v1442
    %v1578 = vmax.f32 %v1258, %v1444
    %v1579 = vmax.f32 %v1259, %v1446
    %v1580 = vmax.f32 %v1260, %v1448
    %v1581 = vmax.f32 %v1261, %v1450
    %v1582 = vmax.f32 %v1262, %v1452
    %v1583 = vmax.f32 %v1263, %v1454
    %v1584 = vmax.f32 %v1264, %v1456
    %v1585 = vpack.c.bf16 %v1522, %v1521
    %v1586 = vpack.c.bf16 %v1524, %v1523
    %v1587 = vpack.c.bf16 %v1526, %v1525
    %v1588 = vpack.c.bf16 %v1528, %v1527
    %v1589 = vpack.c.bf16 %v1530, %v1529
    %v1590 = vpack.c.bf16 %v1532, %v1531
    %v1591 = vpack.c.bf16 %v1534, %v1533
    %v1592 = vpack.c.bf16 %v1536, %v1535
    %v1593 = vpack.c.bf16 %v1538, %v1537
    %v1594 = vpack.c.bf16 %v1540, %v1539
    %v1595 = vpack.c.bf16 %v1542, %v1541
    %v1596 = vpack.c.bf16 %v1544, %v1543
    %v1597 = vpack.c.bf16 %v1546, %v1545
    %v1598 = vpack.c.bf16 %v1548, %v1547
    %v1599 = vpack.c.bf16 %v1550, %v1549
    %v1600 = vpack.c.bf16 %v1552, %v1551
    %v1601 = vpack.c.bf16 %v1554, %v1553
    %v1602 = vpack.c.bf16 %v1556, %v1555
    %v1603 = vpack.c.bf16 %v1558, %v1557
    %v1604 = vpack.c.bf16 %v1560, %v1559
    %v1605 = vpack.c.bf16 %v1562, %v1561
    %v1606 = vpack.c.bf16 %v1564, %v1563
    %v1607 = vpack.c.bf16 %v1566, %v1565
    %v1608 = vpack.c.bf16 %v1568, %v1567
    %v1609 = vpack.c.bf16 %v1570, %v1569
    %v1610 = vpack.c.bf16 %v1572, %v1571
    %v1611 = vpack.c.bf16 %v1574, %v1573
    %v1612 = vpack.c.bf16 %v1576, %v1575
    %v1613 = vpack.c.bf16 %v1578, %v1577
    %v1614 = vpack.c.bf16 %v1580, %v1579
    %v1615 = vpack.c.bf16 %v1582, %v1581
    %v1616 = vpack.c.bf16 %v1584, %v1583
    %v1649 = vcombine.high %v1585, %v1585
    %v1651 = vunpack.c.l.s4 1983009808
    %v1652 = vunpack.c.0.s8 %v1651
    %v1653 = vlaneseq
    %v1654 = vshrl.u32 %v1653, 7
    %v1655 = vsub.s32 %v1652, %v1654
    %v1656 = vrot.slane %v1585, %v1655
    %v1658 = vunpack.c.l.s4 1983009808
    %v1659 = vunpack.c.0.s8 %v1658
    %v1660 = vlaneseq
    %v1661 = vshrl.u32 %v1660, 7
    %v1662 = vsub.s32 %v1659, %v1661
    %v1663 = vrot.slane %v1649, %v1662
    %v1664 = vcombine.high %v1656, %v1656
    %v1665 = vcombine.high %v1663, %v1663
    %v1666 = vcombine.high %v1586, %v1586
    %v1668 = vunpack.c.l.s4 1983009808
    %v1669 = vunpack.c.0.s8 %v1668
    %v1670 = vlaneseq
    %v1671 = vshrl.u32 %v1670, 7
    %v1672 = vsub.s32 %v1669, %v1671
    %v1673 = vrot.slane %v1586, %v1672
    %v1675 = vunpack.c.l.s4 1983009808
    %v1676 = vunpack.c.0.s8 %v1675
    %v1677 = vlaneseq
    %v1678 = vshrl.u32 %v1677, 7
    %v1679 = vsub.s32 %v1676, %v1678
    %v1680 = vrot.slane %v1666, %v1679
    %v1681 = vcombine.high %v1673, %v1673
    %v1682 = vcombine.high %v1680, %v1680
    %v1683 = vcombine.high %v1587, %v1587
    %v1685 = vunpack.c.l.s4 1983009808
    %v1686 = vunpack.c.0.s8 %v1685
    %v1687 = vlaneseq
    %v1688 = vshrl.u32 %v1687, 7
    %v1689 = vsub.s32 %v1686, %v1688
    %v1690 = vrot.slane %v1587, %v1689
    %v1692 = vunpack.c.l.s4 1983009808
    %v1693 = vunpack.c.0.s8 %v1692
    %v1694 = vlaneseq
    %v1695 = vshrl.u32 %v1694, 7
    %v1696 = vsub.s32 %v1693, %v1695
    %v1697 = vrot.slane %v1683, %v1696
    %v1698 = vcombine.high %v1690, %v1690
    %v1699 = vcombine.high %v1697, %v1697
    %v1700 = vcombine.high %v1588, %v1588
    %v1702 = vunpack.c.l.s4 1983009808
    %v1703 = vunpack.c.0.s8 %v1702
    %v1704 = vlaneseq
    %v1705 = vshrl.u32 %v1704, 7
    %v1706 = vsub.s32 %v1703, %v1705
    %v1707 = vrot.slane %v1588, %v1706
    %v1709 = vunpack.c.l.s4 1983009808
    %v1710 = vunpack.c.0.s8 %v1709
    %v1711 = vlaneseq
    %v1712 = vshrl.u32 %v1711, 7
    %v1713 = vsub.s32 %v1710, %v1712
    %v1714 = vrot.slane %v1700, %v1713
    %v1715 = vcombine.high %v1707, %v1707
    %v1716 = vcombine.high %v1714, %v1714
    %v1717 = vcombine.high %v1589, %v1589
    %v1719 = vunpack.c.l.s4 1983009808
    %v1720 = vunpack.c.0.s8 %v1719
    %v1721 = vlaneseq
    %v1722 = vshrl.u32 %v1721, 7
    %v1723 = vsub.s32 %v1720, %v1722
    %v1724 = vrot.slane %v1589, %v1723
    %v1726 = vunpack.c.l.s4 1983009808
    %v1727 = vunpack.c.0.s8 %v1726
    %v1728 = vlaneseq
    %v1729 = vshrl.u32 %v1728, 7
    %v1730 = vsub.s32 %v1727, %v1729
    %v1731 = vrot.slane %v1717, %v1730
    %v1732 = vcombine.high %v1724, %v1724
    %v1733 = vcombine.high %v1731, %v1731
    %v1734 = vcombine.high %v1590, %v1590
    %v1736 = vunpack.c.l.s4 1983009808
    %v1737 = vunpack.c.0.s8 %v1736
    %v1738 = vlaneseq
    %v1739 = vshrl.u32 %v1738, 7
    %v1740 = vsub.s32 %v1737, %v1739
    %v1741 = vrot.slane %v1590, %v1740
    %v1743 = vunpack.c.l.s4 1983009808
    %v1744 = vunpack.c.0.s8 %v1743
    %v1745 = vlaneseq
    %v1746 = vshrl.u32 %v1745, 7
    %v1747 = vsub.s32 %v1744, %v1746
    %v1748 = vrot.slane %v1734, %v1747
    %v1749 = vcombine.high %v1741, %v1741
    %v1750 = vcombine.high %v1748, %v1748
    %v1751 = vcombine.high %v1591, %v1591
    %v1753 = vunpack.c.l.s4 1983009808
    %v1754 = vunpack.c.0.s8 %v1753
    %v1755 = vlaneseq
    %v1756 = vshrl.u32 %v1755, 7
    %v1757 = vsub.s32 %v1754, %v1756
    %v1758 = vrot.slane %v1591, %v1757
    %v1760 = vunpack.c.l.s4 1983009808
    %v1761 = vunpack.c.0.s8 %v1760
    %v1762 = vlaneseq
    %v1763 = vshrl.u32 %v1762, 7
    %v1764 = vsub.s32 %v1761, %v1763
    %v1765 = vrot.slane %v1751, %v1764
    %v1766 = vcombine.high %v1758, %v1758
    %v1767 = vcombine.high %v1765, %v1765
    %v1768 = vcombine.high %v1592, %v1592
    %v1770 = vunpack.c.l.s4 1983009808
    %v1771 = vunpack.c.0.s8 %v1770
    %v1772 = vlaneseq
    %v1773 = vshrl.u32 %v1772, 7
    %v1774 = vsub.s32 %v1771, %v1773
    %v1775 = vrot.slane %v1592, %v1774
    %v1777 = vunpack.c.l.s4 1983009808
    %v1778 = vunpack.c.0.s8 %v1777
    %v1779 = vlaneseq
    %v1780 = vshrl.u32 %v1779, 7
    %v1781 = vsub.s32 %v1778, %v1780
    %v1782 = vrot.slane %v1768, %v1781
    %v1783 = vcombine.high %v1775, %v1775
    %v1784 = vcombine.high %v1782, %v1782
    %v1785 = vcombine.high %v1593, %v1593
    %v1787 = vunpack.c.l.s4 1983009808
    %v1788 = vunpack.c.0.s8 %v1787
    %v1789 = vlaneseq
    %v1790 = vshrl.u32 %v1789, 7
    %v1791 = vsub.s32 %v1788, %v1790
    %v1792 = vrot.slane %v1593, %v1791
    %v1794 = vunpack.c.l.s4 1983009808
    %v1795 = vunpack.c.0.s8 %v1794
    %v1796 = vlaneseq
    %v1797 = vshrl.u32 %v1796, 7
    %v1798 = vsub.s32 %v1795, %v1797
    %v1799 = vrot.slane %v1785, %v1798
    %v1800 = vcombine.high %v1792, %v1792
    %v1801 = vcombine.high %v1799, %v1799
    %v1802 = vcombine.high %v1594, %v1594
    %v1804 = vunpack.c.l.s4 1983009808
    %v1805 = vunpack.c.0.s8 %v1804
    %v1806 = vlaneseq
    %v1807 = vshrl.u32 %v1806, 7
    %v1808 = vsub.s32 %v1805, %v1807
    %v1809 = vrot.slane %v1594, %v1808
    %v1811 = vunpack.c.l.s4 1983009808
    %v1812 = vunpack.c.0.s8 %v1811
    %v1813 = vlaneseq
    %v1814 = vshrl.u32 %v1813, 7
    %v1815 = vsub.s32 %v1812, %v1814
    %v1816 = vrot.slane %v1802, %v1815
    %v1817 = vcombine.high %v1809, %v1809
    %v1818 = vcombine.high %v1816, %v1816
    %v1819 = vcombine.high %v1595, %v1595
    %v1821 = vunpack.c.l.s4 1983009808
    %v1822 = vunpack.c.0.s8 %v1821
    %v1823 = vlaneseq
    %v1824 = vshrl.u32 %v1823, 7
    %v1825 = vsub.s32 %v1822, %v1824
    %v1826 = vrot.slane %v1595, %v1825
    %v1828 = vunpack.c.l.s4 1983009808
    %v1829 = vunpack.c.0.s8 %v1828
    %v1830 = vlaneseq
    %v1831 = vshrl.u32 %v1830, 7
    %v1832 = vsub.s32 %v1829, %v1831
    %v1833 = vrot.slane %v1819, %v1832
    %v1834 = vcombine.high %v1826, %v1826
    %v1835 = vcombine.high %v1833, %v1833
    %v1836 = vcombine.high %v1596, %v1596
    %v1838 = vunpack.c.l.s4 1983009808
    %v1839 = vunpack.c.0.s8 %v1838
    %v1840 = vlaneseq
    %v1841 = vshrl.u32 %v1840, 7
    %v1842 = vsub.s32 %v1839, %v1841
    %v1843 = vrot.slane %v1596, %v1842
    %v1845 = vunpack.c.l.s4 1983009808
    %v1846 = vunpack.c.0.s8 %v1845
    %v1847 = vlaneseq
    %v1848 = vshrl.u32 %v1847, 7
    %v1849 = vsub.s32 %v1846, %v1848
    %v1850 = vrot.slane %v1836, %v1849
    %v1851 = vcombine.high %v1843, %v1843
    %v1852 = vcombine.high %v1850, %v1850
    %v1853 = vcombine.high %v1597, %v1597
    %v1855 = vunpack.c.l.s4 1983009808
    %v1856 = vunpack.c.0.s8 %v1855
    %v1857 = vlaneseq
    %v1858 = vshrl.u32 %v1857, 7
    %v1859 = vsub.s32 %v1856, %v1858
    %v1860 = vrot.slane %v1597, %v1859
    %v1862 = vunpack.c.l.s4 1983009808
    %v1863 = vunpack.c.0.s8 %v1862
    %v1864 = vlaneseq
    %v1865 = vshrl.u32 %v1864, 7
    %v1866 = vsub.s32 %v1863, %v1865
    %v1867 = vrot.slane %v1853, %v1866
    %v1868 = vcombine.high %v1860, %v1860
    %v1869 = vcombine.high %v1867, %v1867
    %v1870 = vcombine.high %v1598, %v1598
    %v1872 = vunpack.c.l.s4 1983009808
    %v1873 = vunpack.c.0.s8 %v1872
    %v1874 = vlaneseq
    %v1875 = vshrl.u32 %v1874, 7
    %v1876 = vsub.s32 %v1873, %v1875
    %v1877 = vrot.slane %v1598, %v1876
    %v1879 = vunpack.c.l.s4 1983009808
    %v1880 = vunpack.c.0.s8 %v1879
    %v1881 = vlaneseq
    %v1882 = vshrl.u32 %v1881, 7
    %v1883 = vsub.s32 %v1880, %v1882
    %v1884 = vrot.slane %v1870, %v1883
    %v1885 = vcombine.high %v1877, %v1877
    %v1886 = vcombine.high %v1884, %v1884
    %v1887 = vcombine.high %v1599, %v1599
    %v1889 = vunpack.c.l.s4 1983009808
    %v1890 = vunpack.c.0.s8 %v1889
    %v1891 = vlaneseq
    %v1892 = vshrl.u32 %v1891, 7
    %v1893 = vsub.s32 %v1890, %v1892
    %v1894 = vrot.slane %v1599, %v1893
    %v1896 = vunpack.c.l.s4 1983009808
    %v1897 = vunpack.c.0.s8 %v1896
    %v1898 = vlaneseq
    %v1899 = vshrl.u32 %v1898, 7
    %v1900 = vsub.s32 %v1897, %v1899
    %v1901 = vrot.slane %v1887, %v1900
    %v1902 = vcombine.high %v1894, %v1894
    %v1903 = vcombine.high %v1901, %v1901
    %v1904 = vcombine.high %v1600, %v1600
    %v1906 = vunpack.c.l.s4 1983009808
    %v1907 = vunpack.c.0.s8 %v1906
    %v1908 = vlaneseq
    %v1909 = vshrl.u32 %v1908, 7
    %v1910 = vsub.s32 %v1907, %v1909
    %v1911 = vrot.slane %v1600, %v1910
    %v1913 = vunpack.c.l.s4 1983009808
    %v1914 = vunpack.c.0.s8 %v1913
    %v1915 = vlaneseq
    %v1916 = vshrl.u32 %v1915, 7
    %v1917 = vsub.s32 %v1914, %v1916
    %v1918 = vrot.slane %v1904, %v1917
    %v1919 = vcombine.high %v1911, %v1911
    %v1920 = vcombine.high %v1918, %v1918
    %v1921 = vcombine.high %v1601, %v1601
    %v1923 = vunpack.c.l.s4 1983009808
    %v1924 = vunpack.c.0.s8 %v1923
    %v1925 = vlaneseq
    %v1926 = vshrl.u32 %v1925, 7
    %v1927 = vsub.s32 %v1924, %v1926
    %v1928 = vrot.slane %v1601, %v1927
    %v1930 = vunpack.c.l.s4 1983009808
    %v1931 = vunpack.c.0.s8 %v1930
    %v1932 = vlaneseq
    %v1933 = vshrl.u32 %v1932, 7
    %v1934 = vsub.s32 %v1931, %v1933
    %v1935 = vrot.slane %v1921, %v1934
    %v1936 = vcombine.high %v1928, %v1928
    %v1937 = vcombine.high %v1935, %v1935
    %v1938 = vcombine.high %v1602, %v1602
    %v1940 = vunpack.c.l.s4 1983009808
    %v1941 = vunpack.c.0.s8 %v1940
    %v1942 = vlaneseq
    %v1943 = vshrl.u32 %v1942, 7
    %v1944 = vsub.s32 %v1941, %v1943
    %v1945 = vrot.slane %v1602, %v1944
    %v1947 = vunpack.c.l.s4 1983009808
    %v1948 = vunpack.c.0.s8 %v1947
    %v1949 = vlaneseq
    %v1950 = vshrl.u32 %v1949, 7
    %v1951 = vsub.s32 %v1948, %v1950
    %v1952 = vrot.slane %v1938, %v1951
    %v1953 = vcombine.high %v1945, %v1945
    %v1954 = vcombine.high %v1952, %v1952
    %v1955 = vcombine.high %v1603, %v1603
    %v1957 = vunpack.c.l.s4 1983009808
    %v1958 = vunpack.c.0.s8 %v1957
    %v1959 = vlaneseq
    %v1960 = vshrl.u32 %v1959, 7
    %v1961 = vsub.s32 %v1958, %v1960
    %v1962 = vrot.slane %v1603, %v1961
    %v1964 = vunpack.c.l.s4 1983009808
    %v1965 = vunpack.c.0.s8 %v1964
    %v1966 = vlaneseq
    %v1967 = vshrl.u32 %v1966, 7
    %v1968 = vsub.s32 %v1965, %v1967
    %v1969 = vrot.slane %v1955, %v1968
    %v1970 = vcombine.high %v1962, %v1962
    %v1971 = vcombine.high %v1969, %v1969
    %v1972 = vcombine.high %v1604, %v1604
    %v1974 = vunpack.c.l.s4 1983009808
    %v1975 = vunpack.c.0.s8 %v1974
    %v1976 = vlaneseq
    %v1977 = vshrl.u32 %v1976, 7
    %v1978 = vsub.s32 %v1975, %v1977
    %v1979 = vrot.slane %v1604, %v1978
    %v1981 = vunpack.c.l.s4 1983009808
    %v1982 = vunpack.c.0.s8 %v1981
    %v1983 = vlaneseq
    %v1984 = vshrl.u32 %v1983, 7
    %v1985 = vsub.s32 %v1982, %v1984
    %v1986 = vrot.slane %v1972, %v1985
    %v1987 = vcombine.high %v1979, %v1979
    %v1988 = vcombine.high %v1986, %v1986
    %v1989 = vcombine.high %v1605, %v1605
    %v1991 = vunpack.c.l.s4 1983009808
    %v1992 = vunpack.c.0.s8 %v1991
    %v1993 = vlaneseq
    %v1994 = vshrl.u32 %v1993, 7
    %v1995 = vsub.s32 %v1992, %v1994
    %v1996 = vrot.slane %v1605, %v1995
    %v1998 = vunpack.c.l.s4 1983009808
    %v1999 = vunpack.c.0.s8 %v1998
    %v2000 = vlaneseq
    %v2001 = vshrl.u32 %v2000, 7
    %v2002 = vsub.s32 %v1999, %v2001
    %v2003 = vrot.slane %v1989, %v2002
    %v2004 = vcombine.high %v1996, %v1996
    %v2005 = vcombine.high %v2003, %v2003
    %v2006 = vcombine.high %v1606, %v1606
    %v2008 = vunpack.c.l.s4 1983009808
    %v2009 = vunpack.c.0.s8 %v2008
    %v2010 = vlaneseq
    %v2011 = vshrl.u32 %v2010, 7
    %v2012 = vsub.s32 %v2009, %v2011
    %v2013 = vrot.slane %v1606, %v2012
    %v2015 = vunpack.c.l.s4 1983009808
    %v2016 = vunpack.c.0.s8 %v2015
    %v2017 = vlaneseq
    %v2018 = vshrl.u32 %v2017, 7
    %v2019 = vsub.s32 %v2016, %v2018
    %v2020 = vrot.slane %v2006, %v2019
    %v2021 = vcombine.high %v2013, %v2013
    %v2022 = vcombine.high %v2020, %v2020
    %v2023 = vcombine.high %v1607, %v1607
    %v2025 = vunpack.c.l.s4 1983009808
    %v2026 = vunpack.c.0.s8 %v2025
    %v2027 = vlaneseq
    %v2028 = vshrl.u32 %v2027, 7
    %v2029 = vsub.s32 %v2026, %v2028
    %v2030 = vrot.slane %v1607, %v2029
    %v2032 = vunpack.c.l.s4 1983009808
    %v2033 = vunpack.c.0.s8 %v2032
    %v2034 = vlaneseq
    %v2035 = vshrl.u32 %v2034, 7
    %v2036 = vsub.s32 %v2033, %v2035
    %v2037 = vrot.slane %v2023, %v2036
    %v2038 = vcombine.high %v2030, %v2030
    %v2039 = vcombine.high %v2037, %v2037
    %v2040 = vcombine.high %v1608, %v1608
    %v2042 = vunpack.c.l.s4 1983009808
    %v2043 = vunpack.c.0.s8 %v2042
    %v2044 = vlaneseq
    %v2045 = vshrl.u32 %v2044, 7
    %v2046 = vsub.s32 %v2043, %v2045
    %v2047 = vrot.slane %v1608, %v2046
    %v2049 = vunpack.c.l.s4 1983009808
    %v2050 = vunpack.c.0.s8 %v2049
    %v2051 = vlaneseq
    %v2052 = vshrl.u32 %v2051, 7
    %v2053 = vsub.s32 %v2050, %v2052
    %v2054 = vrot.slane %v2040, %v2053
    %v2055 = vcombine.high %v2047, %v2047
    %v2056 = vcombine.high %v2054, %v2054
    %v2057 = vcombine.high %v1609, %v1609
    %v2059 = vunpack.c.l.s4 1983009808
    %v2060 = vunpack.c.0.s8 %v2059
    %v2061 = vlaneseq
    %v2062 = vshrl.u32 %v2061, 7
    %v2063 = vsub.s32 %v2060, %v2062
    %v2064 = vrot.slane %v1609, %v2063
    %v2066 = vunpack.c.l.s4 1983009808
    %v2067 = vunpack.c.0.s8 %v2066
    %v2068 = vlaneseq
    %v2069 = vshrl.u32 %v2068, 7
    %v2070 = vsub.s32 %v2067, %v2069
    %v2071 = vrot.slane %v2057, %v2070
    %v2072 = vcombine.high %v2064, %v2064
    %v2073 = vcombine.high %v2071, %v2071
    %v2074 = vcombine.high %v1610, %v1610
    %v2076 = vunpack.c.l.s4 1983009808
    %v2077 = vunpack.c.0.s8 %v2076
    %v2078 = vlaneseq
    %v2079 = vshrl.u32 %v2078, 7
    %v2080 = vsub.s32 %v2077, %v2079
    %v2081 = vrot.slane %v1610, %v2080
    %v2083 = vunpack.c.l.s4 1983009808
    %v2084 = vunpack.c.0.s8 %v2083
    %v2085 = vlaneseq
    %v2086 = vshrl.u32 %v2085, 7
    %v2087 = vsub.s32 %v2084, %v2086
    %v2088 = vrot.slane %v2074, %v2087
    %v2089 = vcombine.high %v2081, %v2081
    %v2090 = vcombine.high %v2088, %v2088
    %v2091 = vcombine.high %v1611, %v1611
    %v2093 = vunpack.c.l.s4 1983009808
    %v2094 = vunpack.c.0.s8 %v2093
    %v2095 = vlaneseq
    %v2096 = vshrl.u32 %v2095, 7
    %v2097 = vsub.s32 %v2094, %v2096
    %v2098 = vrot.slane %v1611, %v2097
    %v2100 = vunpack.c.l.s4 1983009808
    %v2101 = vunpack.c.0.s8 %v2100
    %v2102 = vlaneseq
    %v2103 = vshrl.u32 %v2102, 7
    %v2104 = vsub.s32 %v2101, %v2103
    %v2105 = vrot.slane %v2091, %v2104
    %v2106 = vcombine.high %v2098, %v2098
    %v2107 = vcombine.high %v2105, %v2105
    %v2108 = vcombine.high %v1612, %v1612
    %v2110 = vunpack.c.l.s4 1983009808
    %v2111 = vunpack.c.0.s8 %v2110
    %v2112 = vlaneseq
    %v2113 = vshrl.u32 %v2112, 7
    %v2114 = vsub.s32 %v2111, %v2113
    %v2115 = vrot.slane %v1612, %v2114
    %v2117 = vunpack.c.l.s4 1983009808
    %v2118 = vunpack.c.0.s8 %v2117
    %v2119 = vlaneseq
    %v2120 = vshrl.u32 %v2119, 7
    %v2121 = vsub.s32 %v2118, %v2120
    %v2122 = vrot.slane %v2108, %v2121
    %v2123 = vcombine.high %v2115, %v2115
    %v2124 = vcombine.high %v2122, %v2122
    %v2125 = vcombine.high %v1613, %v1613
    %v2127 = vunpack.c.l.s4 1983009808
    %v2128 = vunpack.c.0.s8 %v2127
    %v2129 = vlaneseq
    %v2130 = vshrl.u32 %v2129, 7
    %v2131 = vsub.s32 %v2128, %v2130
    %v2132 = vrot.slane %v1613, %v2131
    %v2134 = vunpack.c.l.s4 1983009808
    %v2135 = vunpack.c.0.s8 %v2134
    %v2136 = vlaneseq
    %v2137 = vshrl.u32 %v2136, 7
    %v2138 = vsub.s32 %v2135, %v2137
    %v2139 = vrot.slane %v2125, %v2138
    %v2140 = vcombine.high %v2132, %v2132
    %v2141 = vcombine.high %v2139, %v2139
    %v2142 = vcombine.high %v1614, %v1614
    %v2144 = vunpack.c.l.s4 1983009808
    %v2145 = vunpack.c.0.s8 %v2144
    %v2146 = vlaneseq
    %v2147 = vshrl.u32 %v2146, 7
    %v2148 = vsub.s32 %v2145, %v2147
    %v2149 = vrot.slane %v1614, %v2148
    %v2151 = vunpack.c.l.s4 1983009808
    %v2152 = vunpack.c.0.s8 %v2151
    %v2153 = vlaneseq
    %v2154 = vshrl.u32 %v2153, 7
    %v2155 = vsub.s32 %v2152, %v2154
    %v2156 = vrot.slane %v2142, %v2155
    %v2157 = vcombine.high %v2149, %v2149
    %v2158 = vcombine.high %v2156, %v2156
    %v2159 = vcombine.high %v1615, %v1615
    %v2161 = vunpack.c.l.s4 1983009808
    %v2162 = vunpack.c.0.s8 %v2161
    %v2163 = vlaneseq
    %v2164 = vshrl.u32 %v2163, 7
    %v2165 = vsub.s32 %v2162, %v2164
    %v2166 = vrot.slane %v1615, %v2165
    %v2168 = vunpack.c.l.s4 1983009808
    %v2169 = vunpack.c.0.s8 %v2168
    %v2170 = vlaneseq
    %v2171 = vshrl.u32 %v2170, 7
    %v2172 = vsub.s32 %v2169, %v2171
    %v2173 = vrot.slane %v2159, %v2172
    %v2174 = vcombine.high %v2166, %v2166
    %v2175 = vcombine.high %v2173, %v2173
    %v2176 = vcombine.high %v1616, %v1616
    %v2178 = vunpack.c.l.s4 1983009808
    %v2179 = vunpack.c.0.s8 %v2178
    %v2180 = vlaneseq
    %v2181 = vshrl.u32 %v2180, 7
    %v2182 = vsub.s32 %v2179, %v2181
    %v2183 = vrot.slane %v1616, %v2182
    %v2185 = vunpack.c.l.s4 1983009808
    %v2186 = vunpack.c.0.s8 %v2185
    %v2187 = vlaneseq
    %v2188 = vshrl.u32 %v2187, 7
    %v2189 = vsub.s32 %v2186, %v2188
    %v2190 = vrot.slane %v2176, %v2189
    %v2191 = vcombine.high %v2183, %v2183
    %v2192 = vcombine.high %v2190, %v2190
    %v2194 = vunpack.c.l.s4 1983009808
    %v2195 = vunpack.c.0.s8 %v2194
    %v2196 = vlaneseq
    %v2197 = vshrl.u32 %v2196, 7
    %v2198 = vsub.s32 %v2195, %v2197
    %v2199 = vrot.slane %v1690, %v2198
    %v2201 = vunpack.c.l.s4 1983009808
    %v2202 = vunpack.c.0.s8 %v2201
    %v2203 = vlaneseq
    %v2204 = vshrl.u32 %v2203, 7
    %v2205 = vsub.s32 %v2202, %v2204
    %v2206 = vrot.slane %v1698, %v2205
    %v2208 = vunpack.c.l.s4 1983009808
    %v2209 = vunpack.c.0.s8 %v2208
    %v2210 = vlaneseq
    %v2211 = vshrl.u32 %v2210, 7
    %v2212 = vsub.s32 %v2209, %v2211
    %v2213 = vrot.slane %v1697, %v2212
    %v2215 = vunpack.c.l.s4 1983009808
    %v2216 = vunpack.c.0.s8 %v2215
    %v2217 = vlaneseq
    %v2218 = vshrl.u32 %v2217, 7
    %v2219 = vsub.s32 %v2216, %v2218
    %v2220 = vrot.slane %v1699, %v2219
    %v2222 = vunpack.c.l.s4 1983009808
    %v2223 = vunpack.c.0.s8 %v2222
    %v2224 = vlaneseq
    %v2225 = vshrl.u32 %v2224, 7
    %v2226 = vsub.s32 %v2223, %v2225
    %v2227 = vrot.slane %v1707, %v2226
    %v2229 = vunpack.c.l.s4 1983009808
    %v2230 = vunpack.c.0.s8 %v2229
    %v2231 = vlaneseq
    %v2232 = vshrl.u32 %v2231, 7
    %v2233 = vsub.s32 %v2230, %v2232
    %v2234 = vrot.slane %v1715, %v2233
    %v2236 = vunpack.c.l.s4 1983009808
    %v2237 = vunpack.c.0.s8 %v2236
    %v2238 = vlaneseq
    %v2239 = vshrl.u32 %v2238, 7
    %v2240 = vsub.s32 %v2237, %v2239
    %v2241 = vrot.slane %v1714, %v2240
    %v2243 = vunpack.c.l.s4 1983009808
    %v2244 = vunpack.c.0.s8 %v2243
    %v2245 = vlaneseq
    %v2246 = vshrl.u32 %v2245, 7
    %v2247 = vsub.s32 %v2244, %v2246
    %v2248 = vrot.slane %v1716, %v2247
    %2249 = vrot.lane.b32.xlu0 %v2199, 32
    %v2250 = vpop.permute.xlu0 %2249
    %2251 = vrot.lane.b32.xlu0 %v2206, 32
    %v2252 = vpop.permute.xlu0 %2251
    %2253 = vrot.lane.b32.xlu0 %v2213, 32
    %v2254 = vpop.permute.xlu0 %2253
    %2255 = vrot.lane.b32.xlu0 %v2220, 32
    %v2256 = vpop.permute.xlu0 %2255
    %2257 = vrot.lane.b32.xlu0 %v2227, 32
    %v2258 = vpop.permute.xlu0 %2257
    %2259 = vrot.lane.b32.xlu0 %v2234, 32
    %v2260 = vpop.permute.xlu0 %2259
    %2261 = vrot.lane.b32.xlu0 %v2241, 32
    %v2262 = vpop.permute.xlu0 %2261
    %2263 = vrot.lane.b32.xlu0 %v2248, 32
    %v2264 = vpop.permute.xlu0 %2263
    %v2266 = vunpack.c.l.s4 1983009808
    %v2267 = vunpack.c.0.s8 %v2266
    %v2268 = vlaneseq
    %v2269 = vshrl.u32 %v2268, 7
    %v2270 = vsub.s32 %v2267, %v2269
    %v2271 = vrot.slane %v1792, %v2270
    %v2273 = vunpack.c.l.s4 1983009808
    %v2274 = vunpack.c.0.s8 %v2273
    %v2275 = vlaneseq
    %v2276 = vshrl.u32 %v2275, 7
    %v2277 = vsub.s32 %v2274, %v2276
    %v2278 = vrot.slane %v1800, %v2277
    %v2280 = vunpack.c.l.s4 1983009808
    %v2281 = vunpack.c.0.s8 %v2280
    %v2282 = vlaneseq
    %v2283 = vshrl.u32 %v2282, 7
    %v2284 = vsub.s32 %v2281, %v2283
    %v2285 = vrot.slane %v1799, %v2284
    %v2287 = vunpack.c.l.s4 1983009808
    %v2288 = vunpack.c.0.s8 %v2287
    %v2289 = vlaneseq
    %v2290 = vshrl.u32 %v2289, 7
    %v2291 = vsub.s32 %v2288, %v2290
    %v2292 = vrot.slane %v1801, %v2291
    %v2294 = vunpack.c.l.s4 1983009808
    %v2295 = vunpack.c.0.s8 %v2294
    %v2296 = vlaneseq
    %v2297 = vshrl.u32 %v2296, 7
    %v2298 = vsub.s32 %v2295, %v2297
    %v2299 = vrot.slane %v1809, %v2298
    %v2301 = vunpack.c.l.s4 1983009808
    %v2302 = vunpack.c.0.s8 %v2301
    %v2303 = vlaneseq
    %v2304 = vshrl.u32 %v2303, 7
    %v2305 = vsub.s32 %v2302, %v2304
    %v2306 = vrot.slane %v1817, %v2305
    %v2308 = vunpack.c.l.s4 1983009808
    %v2309 = vunpack.c.0.s8 %v2308
    %v2310 = vlaneseq
    %v2311 = vshrl.u32 %v2310, 7
    %v2312 = vsub.s32 %v2309, %v2311
    %v2313 = vrot.slane %v1816, %v2312
    %v2315 = vunpack.c.l.s4 1983009808
    %v2316 = vunpack.c.0.s8 %v2315
    %v2317 = vlaneseq
    %v2318 = vshrl.u32 %v2317, 7
    %v2319 = vsub.s32 %v2316, %v2318
    %v2320 = vrot.slane %v1818, %v2319
    %2321 = vrot.lane.b32.xlu0 %v2271, 64
    %v2322 = vpop.permute.xlu0 %2321
    %2323 = vrot.lane.b32.xlu0 %v2278, 64
    %v2324 = vpop.permute.xlu0 %2323
    %2325 = vrot.lane.b32.xlu0 %v2285, 64
    %v2326 = vpop.permute.xlu0 %2325
    %2327 = vrot.lane.b32.xlu0 %v2292, 64
    %v2328 = vpop.permute.xlu0 %2327
    %2329 = vrot.lane.b32.xlu0 %v2299, 64
    %v2330 = vpop.permute.xlu0 %2329
    %2331 = vrot.lane.b32.xlu0 %v2306, 64
    %v2332 = vpop.permute.xlu0 %2331
    %2333 = vrot.lane.b32.xlu0 %v2313, 64
    %v2334 = vpop.permute.xlu0 %2333
    %2335 = vrot.lane.b32.xlu0 %v2320, 64
    %v2336 = vpop.permute.xlu0 %2335
    %v2338 = vunpack.c.l.s4 1983009808
    %v2339 = vunpack.c.0.s8 %v2338
    %v2340 = vlaneseq
    %v2341 = vshrl.u32 %v2340, 7
    %v2342 = vsub.s32 %v2339, %v2341
    %v2343 = vrot.slane %v1826, %v2342
    %v2345 = vunpack.c.l.s4 1983009808
    %v2346 = vunpack.c.0.s8 %v2345
    %v2347 = vlaneseq
    %v2348 = vshrl.u32 %v2347, 7
    %v2349 = vsub.s32 %v2346, %v2348
    %v2350 = vrot.slane %v1834, %v2349
    %v2352 = vunpack.c.l.s4 1983009808
    %v2353 = vunpack.c.0.s8 %v2352
    %v2354 = vlaneseq
    %v2355 = vshrl.u32 %v2354, 7
    %v2356 = vsub.s32 %v2353, %v2355
    %v2357 = vrot.slane %v1833, %v2356
    %v2359 = vunpack.c.l.s4 1983009808
    %v2360 = vunpack.c.0.s8 %v2359
    %v2361 = vlaneseq
    %v2362 = vshrl.u32 %v2361, 7
    %v2363 = vsub.s32 %v2360, %v2362
    %v2364 = vrot.slane %v1835, %v2363
    %v2366 = vunpack.c.l.s4 1983009808
    %v2367 = vunpack.c.0.s8 %v2366
    %v2368 = vlaneseq
    %v2369 = vshrl.u32 %v2368, 7
    %v2370 = vsub.s32 %v2367, %v2369
    %v2371 = vrot.slane %v1843, %v2370
    %v2373 = vunpack.c.l.s4 1983009808
    %v2374 = vunpack.c.0.s8 %v2373
    %v2375 = vlaneseq
    %v2376 = vshrl.u32 %v2375, 7
    %v2377 = vsub.s32 %v2374, %v2376
    %v2378 = vrot.slane %v1851, %v2377
    %v2380 = vunpack.c.l.s4 1983009808
    %v2381 = vunpack.c.0.s8 %v2380
    %v2382 = vlaneseq
    %v2383 = vshrl.u32 %v2382, 7
    %v2384 = vsub.s32 %v2381, %v2383
    %v2385 = vrot.slane %v1850, %v2384
    %v2387 = vunpack.c.l.s4 1983009808
    %v2388 = vunpack.c.0.s8 %v2387
    %v2389 = vlaneseq
    %v2390 = vshrl.u32 %v2389, 7
    %v2391 = vsub.s32 %v2388, %v2390
    %v2392 = vrot.slane %v1852, %v2391
    %2393 = vrot.lane.b32.xlu0 %v2343, 96
    %v2394 = vpop.permute.xlu0 %2393
    %2395 = vrot.lane.b32.xlu0 %v2350, 96
    %v2396 = vpop.permute.xlu0 %2395
    %2397 = vrot.lane.b32.xlu0 %v2357, 96
    %v2398 = vpop.permute.xlu0 %2397
    %2399 = vrot.lane.b32.xlu0 %v2364, 96
    %v2400 = vpop.permute.xlu0 %2399
    %2401 = vrot.lane.b32.xlu0 %v2371, 96
    %v2402 = vpop.permute.xlu0 %2401
    %2403 = vrot.lane.b32.xlu0 %v2378, 96
    %v2404 = vpop.permute.xlu0 %2403
    %2405 = vrot.lane.b32.xlu0 %v2385, 96
    %v2406 = vpop.permute.xlu0 %2405
    %2407 = vrot.lane.b32.xlu0 %v2392, 96
    %v2408 = vpop.permute.xlu0 %2407
    %vm2409 = vcmask 261120
    %v2412 = vsel %vm2409, %v1656, %v2250
    %v2415 = vsel %vm2409, %v1664, %v2252
    %v2418 = vsel %vm2409, %v1663, %v2254
    %v2421 = vsel %vm2409, %v1665, %v2256
    %v2424 = vsel %vm2409, %v1673, %v2258
    %v2427 = vsel %vm2409, %v1681, %v2260
    %v2430 = vsel %vm2409, %v1680, %v2262
    %v2433 = vsel %vm2409, %v1682, %v2264
    %v2435 = vsel %vm495, %v2412, %v2322
    %v2437 = vsel %vm495, %v2415, %v2324
    %v2439 = vsel %vm495, %v2418, %v2326
    %v2441 = vsel %vm495, %v2421, %v2328
    %v2443 = vsel %vm495, %v2424, %v2330
    %v2445 = vsel %vm495, %v2427, %v2332
    %v2447 = vsel %vm495, %v2430, %v2334
    %v2449 = vsel %vm495, %v2433, %v2336
    %vm2450 = vcmask 785408
    %v2452 = vsel %vm2450, %v2435, %v2394
    %v2454 = vsel %vm2450, %v2437, %v2396
    %v2456 = vsel %vm2450, %v2439, %v2398
    %v2458 = vsel %vm2450, %v2441, %v2400
    %v2460 = vsel %vm2450, %v2443, %v2402
    %v2462 = vsel %vm2450, %v2445, %v2404
    %v2464 = vsel %vm2450, %v2447, %v2406
    %v2466 = vsel %vm2450, %v2449, %v2408
    %v2468 = vunpack.c.l.s4 1983009808
    %v2469 = vunpack.c.0.s8 %v2468
    %v2470 = vlaneseq
    %v2471 = vshrl.u32 %v2470, 7
    %v2472 = vsub.s32 %v2469, %v2471
    %v2473 = vrot.slane %v1758, %v2472
    %v2475 = vunpack.c.l.s4 1983009808
    %v2476 = vunpack.c.0.s8 %v2475
    %v2477 = vlaneseq
    %v2478 = vshrl.u32 %v2477, 7
    %v2479 = vsub.s32 %v2476, %v2478
    %v2480 = vrot.slane %v1766, %v2479
    %v2482 = vunpack.c.l.s4 1983009808
    %v2483 = vunpack.c.0.s8 %v2482
    %v2484 = vlaneseq
    %v2485 = vshrl.u32 %v2484, 7
    %v2486 = vsub.s32 %v2483, %v2485
    %v2487 = vrot.slane %v1765, %v2486
    %v2489 = vunpack.c.l.s4 1983009808
    %v2490 = vunpack.c.0.s8 %v2489
    %v2491 = vlaneseq
    %v2492 = vshrl.u32 %v2491, 7
    %v2493 = vsub.s32 %v2490, %v2492
    %v2494 = vrot.slane %v1767, %v2493
    %v2496 = vunpack.c.l.s4 1983009808
    %v2497 = vunpack.c.0.s8 %v2496
    %v2498 = vlaneseq
    %v2499 = vshrl.u32 %v2498, 7
    %v2500 = vsub.s32 %v2497, %v2499
    %v2501 = vrot.slane %v1775, %v2500
    %v2503 = vunpack.c.l.s4 1983009808
    %v2504 = vunpack.c.0.s8 %v2503
    %v2505 = vlaneseq
    %v2506 = vshrl.u32 %v2505, 7
    %v2507 = vsub.s32 %v2504, %v2506
    %v2508 = vrot.slane %v1783, %v2507
    %v2510 = vunpack.c.l.s4 1983009808
    %v2511 = vunpack.c.0.s8 %v2510
    %v2512 = vlaneseq
    %v2513 = vshrl.u32 %v2512, 7
    %v2514 = vsub.s32 %v2511, %v2513
    %v2515 = vrot.slane %v1782, %v2514
    %v2517 = vunpack.c.l.s4 1983009808
    %v2518 = vunpack.c.0.s8 %v2517
    %v2519 = vlaneseq
    %v2520 = vshrl.u32 %v2519, 7
    %v2521 = vsub.s32 %v2518, %v2520
    %v2522 = vrot.slane %v1784, %v2521
    %2523 = vrot.lane.b32.xlu0 %v2473, 32
    %v2524 = vpop.permute.xlu0 %2523
    %2525 = vrot.lane.b32.xlu0 %v2480, 32
    %v2526 = vpop.permute.xlu0 %2525
    %2527 = vrot.lane.b32.xlu0 %v2487, 32
    %v2528 = vpop.permute.xlu0 %2527
    %2529 = vrot.lane.b32.xlu0 %v2494, 32
    %v2530 = vpop.permute.xlu0 %2529
    %2531 = vrot.lane.b32.xlu0 %v2501, 32
    %v2532 = vpop.permute.xlu0 %2531
    %2533 = vrot.lane.b32.xlu0 %v2508, 32
    %v2534 = vpop.permute.xlu0 %2533
    %2535 = vrot.lane.b32.xlu0 %v2515, 32
    %v2536 = vpop.permute.xlu0 %2535
    %2537 = vrot.lane.b32.xlu0 %v2522, 32
    %v2538 = vpop.permute.xlu0 %2537
    %v2540 = vunpack.c.l.s4 1983009808
    %v2541 = vunpack.c.0.s8 %v2540
    %v2542 = vlaneseq
    %v2543 = vshrl.u32 %v2542, 7
    %v2544 = vsub.s32 %v2541, %v2543
    %v2545 = vrot.slane %v1860, %v2544
    %v2547 = vunpack.c.l.s4 1983009808
    %v2548 = vunpack.c.0.s8 %v2547
    %v2549 = vlaneseq
    %v2550 = vshrl.u32 %v2549, 7
    %v2551 = vsub.s32 %v2548, %v2550
    %v2552 = vrot.slane %v1868, %v2551
    %v2554 = vunpack.c.l.s4 1983009808
    %v2555 = vunpack.c.0.s8 %v2554
    %v2556 = vlaneseq
    %v2557 = vshrl.u32 %v2556, 7
    %v2558 = vsub.s32 %v2555, %v2557
    %v2559 = vrot.slane %v1867, %v2558
    %v2561 = vunpack.c.l.s4 1983009808
    %v2562 = vunpack.c.0.s8 %v2561
    %v2563 = vlaneseq
    %v2564 = vshrl.u32 %v2563, 7
    %v2565 = vsub.s32 %v2562, %v2564
    %v2566 = vrot.slane %v1869, %v2565
    %v2568 = vunpack.c.l.s4 1983009808
    %v2569 = vunpack.c.0.s8 %v2568
    %v2570 = vlaneseq
    %v2571 = vshrl.u32 %v2570, 7
    %v2572 = vsub.s32 %v2569, %v2571
    %v2573 = vrot.slane %v1877, %v2572
    %v2575 = vunpack.c.l.s4 1983009808
    %v2576 = vunpack.c.0.s8 %v2575
    %v2577 = vlaneseq
    %v2578 = vshrl.u32 %v2577, 7
    %v2579 = vsub.s32 %v2576, %v2578
    %v2580 = vrot.slane %v1885, %v2579
    %v2582 = vunpack.c.l.s4 1983009808
    %v2583 = vunpack.c.0.s8 %v2582
    %v2584 = vlaneseq
    %v2585 = vshrl.u32 %v2584, 7
    %v2586 = vsub.s32 %v2583, %v2585
    %v2587 = vrot.slane %v1884, %v2586
    %v2589 = vunpack.c.l.s4 1983009808
    %v2590 = vunpack.c.0.s8 %v2589
    %v2591 = vlaneseq
    %v2592 = vshrl.u32 %v2591, 7
    %v2593 = vsub.s32 %v2590, %v2592
    %v2594 = vrot.slane %v1886, %v2593
    %2595 = vrot.lane.b32.xlu0 %v2545, 64
    %v2596 = vpop.permute.xlu0 %2595
    %2597 = vrot.lane.b32.xlu0 %v2552, 64
    %v2598 = vpop.permute.xlu0 %2597
    %2599 = vrot.lane.b32.xlu0 %v2559, 64
    %v2600 = vpop.permute.xlu0 %2599
    %2601 = vrot.lane.b32.xlu0 %v2566, 64
    %v2602 = vpop.permute.xlu0 %2601
    %2603 = vrot.lane.b32.xlu0 %v2573, 64
    %v2604 = vpop.permute.xlu0 %2603
    %2605 = vrot.lane.b32.xlu0 %v2580, 64
    %v2606 = vpop.permute.xlu0 %2605
    %2607 = vrot.lane.b32.xlu0 %v2587, 64
    %v2608 = vpop.permute.xlu0 %2607
    %2609 = vrot.lane.b32.xlu0 %v2594, 64
    %v2610 = vpop.permute.xlu0 %2609
    %v2612 = vunpack.c.l.s4 1983009808
    %v2613 = vunpack.c.0.s8 %v2612
    %v2614 = vlaneseq
    %v2615 = vshrl.u32 %v2614, 7
    %v2616 = vsub.s32 %v2613, %v2615
    %v2617 = vrot.slane %v1894, %v2616
    %v2619 = vunpack.c.l.s4 1983009808
    %v2620 = vunpack.c.0.s8 %v2619
    %v2621 = vlaneseq
    %v2622 = vshrl.u32 %v2621, 7
    %v2623 = vsub.s32 %v2620, %v2622
    %v2624 = vrot.slane %v1902, %v2623
    %v2626 = vunpack.c.l.s4 1983009808
    %v2627 = vunpack.c.0.s8 %v2626
    %v2628 = vlaneseq
    %v2629 = vshrl.u32 %v2628, 7
    %v2630 = vsub.s32 %v2627, %v2629
    %v2631 = vrot.slane %v1901, %v2630
    %v2633 = vunpack.c.l.s4 1983009808
    %v2634 = vunpack.c.0.s8 %v2633
    %v2635 = vlaneseq
    %v2636 = vshrl.u32 %v2635, 7
    %v2637 = vsub.s32 %v2634, %v2636
    %v2638 = vrot.slane %v1903, %v2637
    %v2640 = vunpack.c.l.s4 1983009808
    %v2641 = vunpack.c.0.s8 %v2640
    %v2642 = vlaneseq
    %v2643 = vshrl.u32 %v2642, 7
    %v2644 = vsub.s32 %v2641, %v2643
    %v2645 = vrot.slane %v1911, %v2644
    %v2647 = vunpack.c.l.s4 1983009808
    %v2648 = vunpack.c.0.s8 %v2647
    %v2649 = vlaneseq
    %v2650 = vshrl.u32 %v2649, 7
    %v2651 = vsub.s32 %v2648, %v2650
    %v2652 = vrot.slane %v1919, %v2651
    %v2654 = vunpack.c.l.s4 1983009808
    %v2655 = vunpack.c.0.s8 %v2654
    %v2656 = vlaneseq
    %v2657 = vshrl.u32 %v2656, 7
    %v2658 = vsub.s32 %v2655, %v2657
    %v2659 = vrot.slane %v1918, %v2658
    %v2661 = vunpack.c.l.s4 1983009808
    %v2662 = vunpack.c.0.s8 %v2661
    %v2663 = vlaneseq
    %v2664 = vshrl.u32 %v2663, 7
    %v2665 = vsub.s32 %v2662, %v2664
    %v2666 = vrot.slane %v1920, %v2665
    %2667 = vrot.lane.b32.xlu0 %v2617, 96
    %v2668 = vpop.permute.xlu0 %2667
    %2669 = vrot.lane.b32.xlu0 %v2624, 96
    %v2670 = vpop.permute.xlu0 %2669
    %2671 = vrot.lane.b32.xlu0 %v2631, 96
    %v2672 = vpop.permute.xlu0 %2671
    %2673 = vrot.lane.b32.xlu0 %v2638, 96
    %v2674 = vpop.permute.xlu0 %2673
    %2675 = vrot.lane.b32.xlu0 %v2645, 96
    %v2676 = vpop.permute.xlu0 %2675
    %2677 = vrot.lane.b32.xlu0 %v2652, 96
    %v2678 = vpop.permute.xlu0 %2677
    %2679 = vrot.lane.b32.xlu0 %v2659, 96
    %v2680 = vpop.permute.xlu0 %2679
    %2681 = vrot.lane.b32.xlu0 %v2666, 96
    %v2682 = vpop.permute.xlu0 %2681
    %v2685 = vsel %vm2409, %v1724, %v2524
    %v2688 = vsel %vm2409, %v1732, %v2526
    %v2691 = vsel %vm2409, %v1731, %v2528
    %v2694 = vsel %vm2409, %v1733, %v2530
    %v2697 = vsel %vm2409, %v1741, %v2532
    %v2700 = vsel %vm2409, %v1749, %v2534
    %v2703 = vsel %vm2409, %v1748, %v2536
    %v2706 = vsel %vm2409, %v1750, %v2538
    %v2708 = vsel %vm495, %v2685, %v2596
    %v2710 = vsel %vm495, %v2688, %v2598
    %v2712 = vsel %vm495, %v2691, %v2600
    %v2714 = vsel %vm495, %v2694, %v2602
    %v2716 = vsel %vm495, %v2697, %v2604
    %v2718 = vsel %vm495, %v2700, %v2606
    %v2720 = vsel %vm495, %v2703, %v2608
    %v2722 = vsel %vm495, %v2706, %v2610
    %v2724 = vsel %vm2450, %v2708, %v2668
    %v2726 = vsel %vm2450, %v2710, %v2670
    %v2728 = vsel %vm2450, %v2712, %v2672
    %v2730 = vsel %vm2450, %v2714, %v2674
    %v2732 = vsel %vm2450, %v2716, %v2676
    %v2734 = vsel %vm2450, %v2718, %v2678
    %v2736 = vsel %vm2450, %v2720, %v2680
    %v2738 = vsel %vm2450, %v2722, %v2682
    %v2740 = vunpack.c.l.s4 1983009808
    %v2741 = vunpack.c.0.s8 %v2740
    %v2742 = vlaneseq
    %v2743 = vshrl.u32 %v2742, 7
    %v2744 = vsub.s32 %v2741, %v2743
    %v2745 = vrot.slane %v1962, %v2744
    %v2747 = vunpack.c.l.s4 1983009808
    %v2748 = vunpack.c.0.s8 %v2747
    %v2749 = vlaneseq
    %v2750 = vshrl.u32 %v2749, 7
    %v2751 = vsub.s32 %v2748, %v2750
    %v2752 = vrot.slane %v1970, %v2751
    %v2754 = vunpack.c.l.s4 1983009808
    %v2755 = vunpack.c.0.s8 %v2754
    %v2756 = vlaneseq
    %v2757 = vshrl.u32 %v2756, 7
    %v2758 = vsub.s32 %v2755, %v2757
    %v2759 = vrot.slane %v1969, %v2758
    %v2761 = vunpack.c.l.s4 1983009808
    %v2762 = vunpack.c.0.s8 %v2761
    %v2763 = vlaneseq
    %v2764 = vshrl.u32 %v2763, 7
    %v2765 = vsub.s32 %v2762, %v2764
    %v2766 = vrot.slane %v1971, %v2765
    %v2768 = vunpack.c.l.s4 1983009808
    %v2769 = vunpack.c.0.s8 %v2768
    %v2770 = vlaneseq
    %v2771 = vshrl.u32 %v2770, 7
    %v2772 = vsub.s32 %v2769, %v2771
    %v2773 = vrot.slane %v1979, %v2772
    %v2775 = vunpack.c.l.s4 1983009808
    %v2776 = vunpack.c.0.s8 %v2775
    %v2777 = vlaneseq
    %v2778 = vshrl.u32 %v2777, 7
    %v2779 = vsub.s32 %v2776, %v2778
    %v2780 = vrot.slane %v1987, %v2779
    %v2782 = vunpack.c.l.s4 1983009808
    %v2783 = vunpack.c.0.s8 %v2782
    %v2784 = vlaneseq
    %v2785 = vshrl.u32 %v2784, 7
    %v2786 = vsub.s32 %v2783, %v2785
    %v2787 = vrot.slane %v1986, %v2786
    %v2789 = vunpack.c.l.s4 1983009808
    %v2790 = vunpack.c.0.s8 %v2789
    %v2791 = vlaneseq
    %v2792 = vshrl.u32 %v2791, 7
    %v2793 = vsub.s32 %v2790, %v2792
    %v2794 = vrot.slane %v1988, %v2793
    %2795 = vrot.lane.b32.xlu0 %v2745, 32
    %v2796 = vpop.permute.xlu0 %2795
    %2797 = vrot.lane.b32.xlu0 %v2752, 32
    %v2798 = vpop.permute.xlu0 %2797
    %2799 = vrot.lane.b32.xlu0 %v2759, 32
    %v2800 = vpop.permute.xlu0 %2799
    %2801 = vrot.lane.b32.xlu0 %v2766, 32
    %v2802 = vpop.permute.xlu0 %2801
    %2803 = vrot.lane.b32.xlu0 %v2773, 32
    %v2804 = vpop.permute.xlu0 %2803
    %2805 = vrot.lane.b32.xlu0 %v2780, 32
    %v2806 = vpop.permute.xlu0 %2805
    %2807 = vrot.lane.b32.xlu0 %v2787, 32
    %v2808 = vpop.permute.xlu0 %2807
    %2809 = vrot.lane.b32.xlu0 %v2794, 32
    %v2810 = vpop.permute.xlu0 %2809
    %v2812 = vunpack.c.l.s4 1983009808
    %v2813 = vunpack.c.0.s8 %v2812
    %v2814 = vlaneseq
    %v2815 = vshrl.u32 %v2814, 7
    %v2816 = vsub.s32 %v2813, %v2815
    %v2817 = vrot.slane %v2064, %v2816
    %v2819 = vunpack.c.l.s4 1983009808
    %v2820 = vunpack.c.0.s8 %v2819
    %v2821 = vlaneseq
    %v2822 = vshrl.u32 %v2821, 7
    %v2823 = vsub.s32 %v2820, %v2822
    %v2824 = vrot.slane %v2072, %v2823
    %v2826 = vunpack.c.l.s4 1983009808
    %v2827 = vunpack.c.0.s8 %v2826
    %v2828 = vlaneseq
    %v2829 = vshrl.u32 %v2828, 7
    %v2830 = vsub.s32 %v2827, %v2829
    %v2831 = vrot.slane %v2071, %v2830
    %v2833 = vunpack.c.l.s4 1983009808
    %v2834 = vunpack.c.0.s8 %v2833
    %v2835 = vlaneseq
    %v2836 = vshrl.u32 %v2835, 7
    %v2837 = vsub.s32 %v2834, %v2836
    %v2838 = vrot.slane %v2073, %v2837
    %v2840 = vunpack.c.l.s4 1983009808
    %v2841 = vunpack.c.0.s8 %v2840
    %v2842 = vlaneseq
    %v2843 = vshrl.u32 %v2842, 7
    %v2844 = vsub.s32 %v2841, %v2843
    %v2845 = vrot.slane %v2081, %v2844
    %v2847 = vunpack.c.l.s4 1983009808
    %v2848 = vunpack.c.0.s8 %v2847
    %v2849 = vlaneseq
    %v2850 = vshrl.u32 %v2849, 7
    %v2851 = vsub.s32 %v2848, %v2850
    %v2852 = vrot.slane %v2089, %v2851
    %v2854 = vunpack.c.l.s4 1983009808
    %v2855 = vunpack.c.0.s8 %v2854
    %v2856 = vlaneseq
    %v2857 = vshrl.u32 %v2856, 7
    %v2858 = vsub.s32 %v2855, %v2857
    %v2859 = vrot.slane %v2088, %v2858
    %v2861 = vunpack.c.l.s4 1983009808
    %v2862 = vunpack.c.0.s8 %v2861
    %v2863 = vlaneseq
    %v2864 = vshrl.u32 %v2863, 7
    %v2865 = vsub.s32 %v2862, %v2864
    %v2866 = vrot.slane %v2090, %v2865
    %2867 = vrot.lane.b32.xlu0 %v2817, 64
    %v2868 = vpop.permute.xlu0 %2867
    %2869 = vrot.lane.b32.xlu0 %v2824, 64
    %v2870 = vpop.permute.xlu0 %2869
    %2871 = vrot.lane.b32.xlu0 %v2831, 64
    %v2872 = vpop.permute.xlu0 %2871
    %2873 = vrot.lane.b32.xlu0 %v2838, 64
    %v2874 = vpop.permute.xlu0 %2873
    %2875 = vrot.lane.b32.xlu0 %v2845, 64
    %v2876 = vpop.permute.xlu0 %2875
    %2877 = vrot.lane.b32.xlu0 %v2852, 64
    %v2878 = vpop.permute.xlu0 %2877
    %2879 = vrot.lane.b32.xlu0 %v2859, 64
    %v2880 = vpop.permute.xlu0 %2879
    %2881 = vrot.lane.b32.xlu0 %v2866, 64
    %v2882 = vpop.permute.xlu0 %2881
    %v2884 = vunpack.c.l.s4 1983009808
    %v2885 = vunpack.c.0.s8 %v2884
    %v2886 = vlaneseq
    %v2887 = vshrl.u32 %v2886, 7
    %v2888 = vsub.s32 %v2885, %v2887
    %v2889 = vrot.slane %v2098, %v2888
    %v2891 = vunpack.c.l.s4 1983009808
    %v2892 = vunpack.c.0.s8 %v2891
    %v2893 = vlaneseq
    %v2894 = vshrl.u32 %v2893, 7
    %v2895 = vsub.s32 %v2892, %v2894
    %v2896 = vrot.slane %v2106, %v2895
    %v2898 = vunpack.c.l.s4 1983009808
    %v2899 = vunpack.c.0.s8 %v2898
    %v2900 = vlaneseq
    %v2901 = vshrl.u32 %v2900, 7
    %v2902 = vsub.s32 %v2899, %v2901
    %v2903 = vrot.slane %v2105, %v2902
    %v2905 = vunpack.c.l.s4 1983009808
    %v2906 = vunpack.c.0.s8 %v2905
    %v2907 = vlaneseq
    %v2908 = vshrl.u32 %v2907, 7
    %v2909 = vsub.s32 %v2906, %v2908
    %v2910 = vrot.slane %v2107, %v2909
    %v2912 = vunpack.c.l.s4 1983009808
    %v2913 = vunpack.c.0.s8 %v2912
    %v2914 = vlaneseq
    %v2915 = vshrl.u32 %v2914, 7
    %v2916 = vsub.s32 %v2913, %v2915
    %v2917 = vrot.slane %v2115, %v2916
    %v2919 = vunpack.c.l.s4 1983009808
    %v2920 = vunpack.c.0.s8 %v2919
    %v2921 = vlaneseq
    %v2922 = vshrl.u32 %v2921, 7
    %v2923 = vsub.s32 %v2920, %v2922
    %v2924 = vrot.slane %v2123, %v2923
    %v2926 = vunpack.c.l.s4 1983009808
    %v2927 = vunpack.c.0.s8 %v2926
    %v2928 = vlaneseq
    %v2929 = vshrl.u32 %v2928, 7
    %v2930 = vsub.s32 %v2927, %v2929
    %v2931 = vrot.slane %v2122, %v2930
    %v2933 = vunpack.c.l.s4 1983009808
    %v2934 = vunpack.c.0.s8 %v2933
    %v2935 = vlaneseq
    %v2936 = vshrl.u32 %v2935, 7
    %v2937 = vsub.s32 %v2934, %v2936
    %v2938 = vrot.slane %v2124, %v2937
    %2939 = vrot.lane.b32.xlu0 %v2889, 96
    %v2940 = vpop.permute.xlu0 %2939
    %2941 = vrot.lane.b32.xlu0 %v2896, 96
    %v2942 = vpop.permute.xlu0 %2941
    %2943 = vrot.lane.b32.xlu0 %v2903, 96
    %v2944 = vpop.permute.xlu0 %2943
    %2945 = vrot.lane.b32.xlu0 %v2910, 96
    %v2946 = vpop.permute.xlu0 %2945
    %2947 = vrot.lane.b32.xlu0 %v2917, 96
    %v2948 = vpop.permute.xlu0 %2947
    %2949 = vrot.lane.b32.xlu0 %v2924, 96
    %v2950 = vpop.permute.xlu0 %2949
    %2951 = vrot.lane.b32.xlu0 %v2931, 96
    %v2952 = vpop.permute.xlu0 %2951
    %2953 = vrot.lane.b32.xlu0 %v2938, 96
    %v2954 = vpop.permute.xlu0 %2953
    %v2957 = vsel %vm2409, %v1928, %v2796
    %v2960 = vsel %vm2409, %v1936, %v2798
    %v2963 = vsel %vm2409, %v1935, %v2800
    %v2966 = vsel %vm2409, %v1937, %v2802
    %v2969 = vsel %vm2409, %v1945, %v2804
    %v2972 = vsel %vm2409, %v1953, %v2806
    %v2975 = vsel %vm2409, %v1952, %v2808
    %v2978 = vsel %vm2409, %v1954, %v2810
    %v2980 = vsel %vm495, %v2957, %v2868
    %v2982 = vsel %vm495, %v2960, %v2870
    %v2984 = vsel %vm495, %v2963, %v2872
    %v2986 = vsel %vm495, %v2966, %v2874
    %v2988 = vsel %vm495, %v2969, %v2876
    %v2990 = vsel %vm495, %v2972, %v2878
    %v2992 = vsel %vm495, %v2975, %v2880
    %v2994 = vsel %vm495, %v2978, %v2882
    %v2996 = vsel %vm2450, %v2980, %v2940
    %v2998 = vsel %vm2450, %v2982, %v2942
    %v3000 = vsel %vm2450, %v2984, %v2944
    %v3002 = vsel %vm2450, %v2986, %v2946
    %v3004 = vsel %vm2450, %v2988, %v2948
    %v3006 = vsel %vm2450, %v2990, %v2950
    %v3008 = vsel %vm2450, %v2992, %v2952
    %v3010 = vsel %vm2450, %v2994, %v2954
    %v3012 = vunpack.c.l.s4 1983009808
    %v3013 = vunpack.c.0.s8 %v3012
    %v3014 = vlaneseq
    %v3015 = vshrl.u32 %v3014, 7
    %v3016 = vsub.s32 %v3013, %v3015
    %v3017 = vrot.slane %v2030, %v3016
    %v3019 = vunpack.c.l.s4 1983009808
    %v3020 = vunpack.c.0.s8 %v3019
    %v3021 = vlaneseq
    %v3022 = vshrl.u32 %v3021, 7
    %v3023 = vsub.s32 %v3020, %v3022
    %v3024 = vrot.slane %v2038, %v3023
    %v3026 = vunpack.c.l.s4 1983009808
    %v3027 = vunpack.c.0.s8 %v3026
    %v3028 = vlaneseq
    %v3029 = vshrl.u32 %v3028, 7
    %v3030 = vsub.s32 %v3027, %v3029
    %v3031 = vrot.slane %v2037, %v3030
    %v3033 = vunpack.c.l.s4 1983009808
    %v3034 = vunpack.c.0.s8 %v3033
    %v3035 = vlaneseq
    %v3036 = vshrl.u32 %v3035, 7
    %v3037 = vsub.s32 %v3034, %v3036
    %v3038 = vrot.slane %v2039, %v3037
    %v3040 = vunpack.c.l.s4 1983009808
    %v3041 = vunpack.c.0.s8 %v3040
    %v3042 = vlaneseq
    %v3043 = vshrl.u32 %v3042, 7
    %v3044 = vsub.s32 %v3041, %v3043
    %v3045 = vrot.slane %v2047, %v3044
    %v3047 = vunpack.c.l.s4 1983009808
    %v3048 = vunpack.c.0.s8 %v3047
    %v3049 = vlaneseq
    %v3050 = vshrl.u32 %v3049, 7
    %v3051 = vsub.s32 %v3048, %v3050
    %v3052 = vrot.slane %v2055, %v3051
    %v3054 = vunpack.c.l.s4 1983009808
    %v3055 = vunpack.c.0.s8 %v3054
    %v3056 = vlaneseq
    %v3057 = vshrl.u32 %v3056, 7
    %v3058 = vsub.s32 %v3055, %v3057
    %v3059 = vrot.slane %v2054, %v3058
    %v3061 = vunpack.c.l.s4 1983009808
    %v3062 = vunpack.c.0.s8 %v3061
    %v3063 = vlaneseq
    %v3064 = vshrl.u32 %v3063, 7
    %v3065 = vsub.s32 %v3062, %v3064
    %v3066 = vrot.slane %v2056, %v3065
    %3067 = vrot.lane.b32.xlu0 %v3017, 32
    %v3068 = vpop.permute.xlu0 %3067
    %3069 = vrot.lane.b32.xlu0 %v3024, 32
    %v3070 = vpop.permute.xlu0 %3069
    %3071 = vrot.lane.b32.xlu0 %v3031, 32
    %v3072 = vpop.permute.xlu0 %3071
    %3073 = vrot.lane.b32.xlu0 %v3038, 32
    %v3074 = vpop.permute.xlu0 %3073
    %3075 = vrot.lane.b32.xlu0 %v3045, 32
    %v3076 = vpop.permute.xlu0 %3075
    %3077 = vrot.lane.b32.xlu0 %v3052, 32
    %v3078 = vpop.permute.xlu0 %3077
    %3079 = vrot.lane.b32.xlu0 %v3059, 32
    %v3080 = vpop.permute.xlu0 %3079
    %3081 = vrot.lane.b32.xlu0 %v3066, 32
    %v3082 = vpop.permute.xlu0 %3081
    %v3084 = vunpack.c.l.s4 1983009808
    %v3085 = vunpack.c.0.s8 %v3084
    %v3086 = vlaneseq
    %v3087 = vshrl.u32 %v3086, 7
    %v3088 = vsub.s32 %v3085, %v3087
    %v3089 = vrot.slane %v2132, %v3088
    %v3091 = vunpack.c.l.s4 1983009808
    %v3092 = vunpack.c.0.s8 %v3091
    %v3093 = vlaneseq
    %v3094 = vshrl.u32 %v3093, 7
    %v3095 = vsub.s32 %v3092, %v3094
    %v3096 = vrot.slane %v2140, %v3095
    %v3098 = vunpack.c.l.s4 1983009808
    %v3099 = vunpack.c.0.s8 %v3098
    %v3100 = vlaneseq
    %v3101 = vshrl.u32 %v3100, 7
    %v3102 = vsub.s32 %v3099, %v3101
    %v3103 = vrot.slane %v2139, %v3102
    %v3105 = vunpack.c.l.s4 1983009808
    %v3106 = vunpack.c.0.s8 %v3105
    %v3107 = vlaneseq
    %v3108 = vshrl.u32 %v3107, 7
    %v3109 = vsub.s32 %v3106, %v3108
    %v3110 = vrot.slane %v2141, %v3109
    %v3112 = vunpack.c.l.s4 1983009808
    %v3113 = vunpack.c.0.s8 %v3112
    %v3114 = vlaneseq
    %v3115 = vshrl.u32 %v3114, 7
    %v3116 = vsub.s32 %v3113, %v3115
    %v3117 = vrot.slane %v2149, %v3116
    %v3119 = vunpack.c.l.s4 1983009808
    %v3120 = vunpack.c.0.s8 %v3119
    %v3121 = vlaneseq
    %v3122 = vshrl.u32 %v3121, 7
    %v3123 = vsub.s32 %v3120, %v3122
    %v3124 = vrot.slane %v2157, %v3123
    %v3126 = vunpack.c.l.s4 1983009808
    %v3127 = vunpack.c.0.s8 %v3126
    %v3128 = vlaneseq
    %v3129 = vshrl.u32 %v3128, 7
    %v3130 = vsub.s32 %v3127, %v3129
    %v3131 = vrot.slane %v2156, %v3130
    %v3133 = vunpack.c.l.s4 1983009808
    %v3134 = vunpack.c.0.s8 %v3133
    %v3135 = vlaneseq
    %v3136 = vshrl.u32 %v3135, 7
    %v3137 = vsub.s32 %v3134, %v3136
    %v3138 = vrot.slane %v2158, %v3137
    %3139 = vrot.lane.b32.xlu0 %v3089, 64
    %v3140 = vpop.permute.xlu0 %3139
    %3141 = vrot.lane.b32.xlu0 %v3096, 64
    %v3142 = vpop.permute.xlu0 %3141
    %3143 = vrot.lane.b32.xlu0 %v3103, 64
    %v3144 = vpop.permute.xlu0 %3143
    %3145 = vrot.lane.b32.xlu0 %v3110, 64
    %v3146 = vpop.permute.xlu0 %3145
    %3147 = vrot.lane.b32.xlu0 %v3117, 64
    %v3148 = vpop.permute.xlu0 %3147
    %3149 = vrot.lane.b32.xlu0 %v3124, 64
    %v3150 = vpop.permute.xlu0 %3149
    %3151 = vrot.lane.b32.xlu0 %v3131, 64
    %v3152 = vpop.permute.xlu0 %3151
    %3153 = vrot.lane.b32.xlu0 %v3138, 64
    %v3154 = vpop.permute.xlu0 %3153
    %v3156 = vunpack.c.l.s4 1983009808
    %v3157 = vunpack.c.0.s8 %v3156
    %v3158 = vlaneseq
    %v3159 = vshrl.u32 %v3158, 7
    %v3160 = vsub.s32 %v3157, %v3159
    %v3161 = vrot.slane %v2166, %v3160
    %v3163 = vunpack.c.l.s4 1983009808
    %v3164 = vunpack.c.0.s8 %v3163
    %v3165 = vlaneseq
    %v3166 = vshrl.u32 %v3165, 7
    %v3167 = vsub.s32 %v3164, %v3166
    %v3168 = vrot.slane %v2174, %v3167
    %v3170 = vunpack.c.l.s4 1983009808
    %v3171 = vunpack.c.0.s8 %v3170
    %v3172 = vlaneseq
    %v3173 = vshrl.u32 %v3172, 7
    %v3174 = vsub.s32 %v3171, %v3173
    %v3175 = vrot.slane %v2173, %v3174
    %v3177 = vunpack.c.l.s4 1983009808
    %v3178 = vunpack.c.0.s8 %v3177
    %v3179 = vlaneseq
    %v3180 = vshrl.u32 %v3179, 7
    %v3181 = vsub.s32 %v3178, %v3180
    %v3182 = vrot.slane %v2175, %v3181
    %v3184 = vunpack.c.l.s4 1983009808
    %v3185 = vunpack.c.0.s8 %v3184
    %v3186 = vlaneseq
    %v3187 = vshrl.u32 %v3186, 7
    %v3188 = vsub.s32 %v3185, %v3187
    %v3189 = vrot.slane %v2183, %v3188
    %v3191 = vunpack.c.l.s4 1983009808
    %v3192 = vunpack.c.0.s8 %v3191
    %v3193 = vlaneseq
    %v3194 = vshrl.u32 %v3193, 7
    %v3195 = vsub.s32 %v3192, %v3194
    %v3196 = vrot.slane %v2191, %v3195
    %v3198 = vunpack.c.l.s4 1983009808
    %v3199 = vunpack.c.0.s8 %v3198
    %v3200 = vlaneseq
    %v3201 = vshrl.u32 %v3200, 7
    %v3202 = vsub.s32 %v3199, %v3201
    %v3203 = vrot.slane %v2190, %v3202
    %v3205 = vunpack.c.l.s4 1983009808
    %v3206 = vunpack.c.0.s8 %v3205
    %v3207 = vlaneseq
    %v3208 = vshrl.u32 %v3207, 7
    %v3209 = vsub.s32 %v3206, %v3208
    %v3210 = vrot.slane %v2192, %v3209
    %3211 = vrot.lane.b32.xlu0 %v3161, 96
    %v3212 = vpop.permute.xlu0 %3211
    %3213 = vrot.lane.b32.xlu0 %v3168, 96
    %v3214 = vpop.permute.xlu0 %3213
    %3215 = vrot.lane.b32.xlu0 %v3175, 96
    %v3216 = vpop.permute.xlu0 %3215
    %3217 = vrot.lane.b32.xlu0 %v3182, 96
    %v3218 = vpop.permute.xlu0 %3217
    %3219 = vrot.lane.b32.xlu0 %v3189, 96
    %v3220 = vpop.permute.xlu0 %3219
    %3221 = vrot.lane.b32.xlu0 %v3196, 96
    %v3222 = vpop.permute.xlu0 %3221
    %3223 = vrot.lane.b32.xlu0 %v3203, 96
    %v3224 = vpop.permute.xlu0 %3223
    %3225 = vrot.lane.b32.xlu0 %v3210, 96
    %v3226 = vpop.permute.xlu0 %3225
    %v3229 = vsel %vm2409, %v1996, %v3068
    %v3232 = vsel %vm2409, %v2004, %v3070
    %v3235 = vsel %vm2409, %v2003, %v3072
    %v3238 = vsel %vm2409, %v2005, %v3074
    %v3241 = vsel %vm2409, %v2013, %v3076
    %v3244 = vsel %vm2409, %v2021, %v3078
    %v3247 = vsel %vm2409, %v2020, %v3080
    %v3250 = vsel %vm2409, %v2022, %v3082
    %v3252 = vsel %vm495, %v3229, %v3140
    %v3254 = vsel %vm495, %v3232, %v3142
    %v3256 = vsel %vm495, %v3235, %v3144
    %v3258 = vsel %vm495, %v3238, %v3146
    %v3260 = vsel %vm495, %v3241, %v3148
    %v3262 = vsel %vm495, %v3244, %v3150
    %v3264 = vsel %vm495, %v3247, %v3152
    %v3266 = vsel %vm495, %v3250, %v3154
    %v3268 = vsel %vm2450, %v3252, %v3212
    %v3270 = vsel %vm2450, %v3254, %v3214
    %v3272 = vsel %vm2450, %v3256, %v3216
    %v3274 = vsel %vm2450, %v3258, %v3218
    %v3276 = vsel %vm2450, %v3260, %v3220
    %v3278 = vsel %vm2450, %v3262, %v3222
    %v3280 = vsel %vm2450, %v3264, %v3224
    %v3282 = vsel %vm2450, %v3266, %v3226
    %v3284 = vshrl.u32 0, 16
    %v3286 = vrot.slane %v3284, 7
    %v3287 = vshll.u32 0, 16
    %v3289 = vor.u32 %v3286, %v3287
    %v3290 = vshrl.u32 %v2452, 16
    %v3292 = vrot.slane %v3290, 7
    %v3293 = vshll.u32 %v2452, 16
    %v3295 = vor.u32 %v3292, %v3293
    %v3296 = vshrl.u32 %v2454, 16
    %v3298 = vrot.slane %v3296, 7
    %v3299 = vshll.u32 %v2454, 16
    %v3301 = vor.u32 %v3298, %v3299
    %v3302 = vshrl.u32 %v2456, 16
    %v3304 = vrot.slane %v3302, 7
    %v3305 = vshll.u32 %v2456, 16
    %v3307 = vor.u32 %v3304, %v3305
    %v3308 = vshrl.u32 %v2460, 16
    %v3310 = vrot.slane %v3308, 7
    %v3311 = vshll.u32 %v2460, 16
    %v3313 = vor.u32 %v3310, %v3311
    %v3314 = vshrl.u32 %v2462, 16
    %v3316 = vrot.slane %v3314, 7
    %v3317 = vshll.u32 %v2462, 16
    %v3319 = vor.u32 %v3316, %v3317
    %v3320 = vshrl.u32 %v2464, 16
    %v3322 = vrot.slane %v3320, 7
    %v3323 = vshll.u32 %v2464, 16
    %v3325 = vor.u32 %v3322, %v3323
    %vm3333 = vcmask 1040384
    %vm3334 = vsmask.f32 256
    %vm3335 = vmand %vm3333, %vm3334
    %v3336 = vsel %vm3335, 0, %v3289
    %v3337 = vsel %vm3335, 0, %v3295
    %v3338 = vsel %vm3335, 0, %v3301
    %v3339 = vsel %vm3335, 0, %v3307
    %v3340 = vsel %vm3335, 0, %v3313
    %v3341 = vsel %vm3335, 0, %v3319
    %v3342 = vsel %vm3335, 0, %v3325
    %v3343 = vshrl.u32 %v2996, 16
    %v3345 = vrot.slane %v3343, 7
    %v3346 = vshll.u32 %v2996, 16
    %v3348 = vor.u32 %v3345, %v3346
    %v3349 = vshrl.u32 %v2998, 16
    %v3351 = vrot.slane %v3349, 7
    %v3352 = vshll.u32 %v2998, 16
    %v3354 = vor.u32 %v3351, %v3352
    %v3355 = vshrl.u32 %v3000, 16
    %v3357 = vrot.slane %v3355, 7
    %v3358 = vshll.u32 %v3000, 16
    %v3360 = vor.u32 %v3357, %v3358
    %v3361 = vshrl.u32 %v3002, 16
    %v3363 = vrot.slane %v3361, 7
    %v3364 = vshll.u32 %v3002, 16
    %v3366 = vor.u32 %v3363, %v3364
    %v3367 = vshrl.u32 %v3004, 16
    %v3369 = vrot.slane %v3367, 7
    %v3370 = vshll.u32 %v3004, 16
    %v3372 = vor.u32 %v3369, %v3370
    %v3373 = vshrl.u32 %v3006, 16
    %v3375 = vrot.slane %v3373, 7
    %v3376 = vshll.u32 %v3006, 16
    %v3378 = vor.u32 %v3375, %v3376
    %v3379 = vshrl.u32 %v3008, 16
    %v3381 = vrot.slane %v3379, 7
    %v3382 = vshll.u32 %v3008, 16
    %v3384 = vor.u32 %v3381, %v3382
    %v3385 = vshrl.u32 %v3010, 16
    %v3387 = vrot.slane %v3385, 7
    %v3388 = vshll.u32 %v3010, 16
    %v3390 = vor.u32 %v3387, %v3388
    %v3399 = vsel %vm3335, 0, %v3348
    %v3400 = vsel %vm3335, 0, %v3354
    %v3401 = vsel %vm3335, 0, %v3360
    %v3402 = vsel %vm3335, 0, %v3366
    %v3403 = vsel %vm3335, 0, %v3372
    %v3404 = vsel %vm3335, 0, %v3378
    %v3405 = vsel %vm3335, 0, %v3384
    %v3406 = vsel %vm3335, 0, %v3390
    %v3407 = vrot.slane %v3287, 1
    %v3408 = vor.u32 %v3284, %v3407
    %v3409 = vshrl.u32 %v2724, 16
    %v3411 = vshll.u32 %v2724, 16
    %v3413 = vrot.slane %v3411, 1
    %v3414 = vor.u32 %v3409, %v3413
    %v3415 = vshrl.u32 %v2726, 16
    %v3417 = vshll.u32 %v2726, 16
    %v3419 = vrot.slane %v3417, 1
    %v3420 = vor.u32 %v3415, %v3419
    %v3421 = vshrl.u32 %v2728, 16
    %v3423 = vshll.u32 %v2728, 16
    %v3425 = vrot.slane %v3423, 1
    %v3426 = vor.u32 %v3421, %v3425
    %v3427 = vshrl.u32 %v2732, 16
    %v3429 = vshll.u32 %v2732, 16
    %v3431 = vrot.slane %v3429, 1
    %v3432 = vor.u32 %v3427, %v3431
    %v3433 = vshrl.u32 %v2734, 16
    %v3435 = vshll.u32 %v2734, 16
    %v3437 = vrot.slane %v3435, 1
    %v3438 = vor.u32 %v3433, %v3437
    %v3439 = vshrl.u32 %v2736, 16
    %v3441 = vshll.u32 %v2736, 16
    %v3443 = vrot.slane %v3441, 1
    %v3444 = vor.u32 %v3439, %v3443
    %vm3452 = vcmask 1041408
    %vm3453 = vsmask.f32 1280
    %vm3454 = vmand %vm3452, %vm3453
    %v3455 = vsel %vm3454, %v3408, 0
    %v3456 = vsel %vm3454, %v3414, 0
    %v3457 = vsel %vm3454, %v3420, 0
    %v3458 = vsel %vm3454, %v3426, 0
    %v3459 = vsel %vm3454, %v3432, 0
    %v3460 = vsel %vm3454, %v3438, 0
    %v3461 = vsel %vm3454, %v3444, 0
    %v3462 = vshrl.u32 %v3268, 16
    %v3464 = vshll.u32 %v3268, 16
    %v3466 = vrot.slane %v3464, 1
    %v3467 = vor.u32 %v3462, %v3466
    %v3468 = vshrl.u32 %v3270, 16
    %v3470 = vshll.u32 %v3270, 16
    %v3472 = vrot.slane %v3470, 1
    %v3473 = vor.u32 %v3468, %v3472
    %v3474 = vshrl.u32 %v3272, 16
    %v3476 = vshll.u32 %v3272, 16
    %v3478 = vrot.slane %v3476, 1
    %v3479 = vor.u32 %v3474, %v3478
    %v3480 = vshrl.u32 %v3274, 16
    %v3482 = vshll.u32 %v3274, 16
    %v3484 = vrot.slane %v3482, 1
    %v3485 = vor.u32 %v3480, %v3484
    %v3486 = vshrl.u32 %v3276, 16
    %v3488 = vshll.u32 %v3276, 16
    %v3490 = vrot.slane %v3488, 1
    %v3491 = vor.u32 %v3486, %v3490
    %v3492 = vshrl.u32 %v3278, 16
    %v3494 = vshll.u32 %v3278, 16
    %v3496 = vrot.slane %v3494, 1
    %v3497 = vor.u32 %v3492, %v3496
    %v3498 = vshrl.u32 %v3280, 16
    %v3500 = vshll.u32 %v3280, 16
    %v3502 = vrot.slane %v3500, 1
    %v3503 = vor.u32 %v3498, %v3502
    %v3504 = vshrl.u32 %v3282, 16
    %v3506 = vshll.u32 %v3282, 16
    %v3508 = vrot.slane %v3506, 1
    %v3509 = vor.u32 %v3504, %v3508
    %v3518 = vsel %vm3454, %v3467, 0
    %v3519 = vsel %vm3454, %v3473, 0
    %v3520 = vsel %vm3454, %v3479, 0
    %v3521 = vsel %vm3454, %v3485, 0
    %v3522 = vsel %vm3454, %v3491, 0
    %v3523 = vsel %vm3454, %v3497, 0
    %v3524 = vsel %vm3454, %v3503, 0
    %v3525 = vsel %vm3454, %v3509, 0
    %v3526 = vshrl.u32 %v2458, 16
    %v3528 = vrot.slane %v3526, 7
    %v3529 = vshll.u32 %v2458, 16
    %v3531 = vor.u32 %v3528, %v3529
    %v3532 = vshrl.u32 %v2466, 16
    %v3534 = vrot.slane %v3532, 7
    %v3535 = vshll.u32 %v2466, 16
    %v3537 = vor.u32 %v3534, %v3535
    %v3540 = vsel %vm3335, 0, %v3531
    %v3541 = vsel %vm3335, 0, %v3537
    %v3542 = vshrl.u32 %v2730, 16
    %v3544 = vshll.u32 %v2730, 16
    %v3546 = vrot.slane %v3544, 1
    %v3547 = vor.u32 %v3542, %v3546
    %v3548 = vshrl.u32 %v2738, 16
    %v3550 = vshll.u32 %v2738, 16
    %v3552 = vrot.slane %v3550, 1
    %v3553 = vor.u32 %v3548, %v3552
    %v3556 = vsel %vm3454, %v3547, 0
    %v3557 = vsel %vm3454, %v3553, 0
    %v3625 = vcombine.low %v3336, 0
    %v3626 = vcombine.low %v3399, %v3268
    %v3628 = vunpack.c.l.s4 1983009808
    %v3629 = vunpack.c.0.s8 %v3628
    %v3630 = vlaneseq
    %v3631 = vshrl.u32 %v3630, 7
    %v3632 = vsub.s32 %v3629, %v3631
    %v3633 = vrot.slane %v3625, %v3632
    %v3635 = vunpack.c.l.s4 1983009808
    %v3636 = vunpack.c.0.s8 %v3635
    %v3637 = vlaneseq
    %v3638 = vshrl.u32 %v3637, 7
    %v3639 = vsub.s32 %v3636, %v3638
    %v3640 = vrot.slane %v3626, %v3639
    %v3641 = vcombine.low %v3633, %v3640
    %v3642 = vcombine.low 0, %v3455
    %v3643 = vcombine.low %v2996, %v3518
    %v3645 = vunpack.c.l.s4 1983009808
    %v3646 = vunpack.c.0.s8 %v3645
    %v3647 = vlaneseq
    %v3648 = vshrl.u32 %v3647, 7
    %v3649 = vsub.s32 %v3646, %v3648
    %v3650 = vrot.slane %v3642, %v3649
    %v3652 = vunpack.c.l.s4 1983009808
    %v3653 = vunpack.c.0.s8 %v3652
    %v3654 = vlaneseq
    %v3655 = vshrl.u32 %v3654, 7
    %v3656 = vsub.s32 %v3653, %v3655
    %v3657 = vrot.slane %v3643, %v3656
    %v3658 = vcombine.low %v3650, %v3657
    %v3659 = vcombine.low %v3337, %v2724
    %v3660 = vcombine.low %v3400, %v3270
    %v3662 = vunpack.c.l.s4 1983009808
    %v3663 = vunpack.c.0.s8 %v3662
    %v3664 = vlaneseq
    %v3665 = vshrl.u32 %v3664, 7
    %v3666 = vsub.s32 %v3663, %v3665
    %v3667 = vrot.slane %v3659, %v3666
    %v3669 = vunpack.c.l.s4 1983009808
    %v3670 = vunpack.c.0.s8 %v3669
    %v3671 = vlaneseq
    %v3672 = vshrl.u32 %v3671, 7
    %v3673 = vsub.s32 %v3670, %v3672
    %v3674 = vrot.slane %v3660, %v3673
    %v3675 = vcombine.low %v3667, %v3674
    %v3676 = vcombine.low %v2452, %v3456
    %v3677 = vcombine.low %v2998, %v3519
    %v3679 = vunpack.c.l.s4 1983009808
    %v3680 = vunpack.c.0.s8 %v3679
    %v3681 = vlaneseq
    %v3682 = vshrl.u32 %v3681, 7
    %v3683 = vsub.s32 %v3680, %v3682
    %v3684 = vrot.slane %v3676, %v3683
    %v3686 = vunpack.c.l.s4 1983009808
    %v3687 = vunpack.c.0.s8 %v3686
    %v3688 = vlaneseq
    %v3689 = vshrl.u32 %v3688, 7
    %v3690 = vsub.s32 %v3687, %v3689
    %v3691 = vrot.slane %v3677, %v3690
    %v3692 = vcombine.low %v3684, %v3691
    %v3693 = vcombine.low %v3338, %v2726
    %v3694 = vcombine.low %v3401, %v3272
    %v3696 = vunpack.c.l.s4 1983009808
    %v3697 = vunpack.c.0.s8 %v3696
    %v3698 = vlaneseq
    %v3699 = vshrl.u32 %v3698, 7
    %v3700 = vsub.s32 %v3697, %v3699
    %v3701 = vrot.slane %v3693, %v3700
    %v3703 = vunpack.c.l.s4 1983009808
    %v3704 = vunpack.c.0.s8 %v3703
    %v3705 = vlaneseq
    %v3706 = vshrl.u32 %v3705, 7
    %v3707 = vsub.s32 %v3704, %v3706
    %v3708 = vrot.slane %v3694, %v3707
    %v3709 = vcombine.low %v3701, %v3708
    %v3710 = vcombine.low %v2454, %v3457
    %v3711 = vcombine.low %v3000, %v3520
    %v3713 = vunpack.c.l.s4 1983009808
    %v3714 = vunpack.c.0.s8 %v3713
    %v3715 = vlaneseq
    %v3716 = vshrl.u32 %v3715, 7
    %v3717 = vsub.s32 %v3714, %v3716
    %v3718 = vrot.slane %v3710, %v3717
    %v3720 = vunpack.c.l.s4 1983009808
    %v3721 = vunpack.c.0.s8 %v3720
    %v3722 = vlaneseq
    %v3723 = vshrl.u32 %v3722, 7
    %v3724 = vsub.s32 %v3721, %v3723
    %v3725 = vrot.slane %v3711, %v3724
    %v3726 = vcombine.low %v3718, %v3725
    %v3727 = vcombine.low %v3339, %v2728
    %v3728 = vcombine.low %v3402, %v3274
    %v3730 = vunpack.c.l.s4 1983009808
    %v3731 = vunpack.c.0.s8 %v3730
    %v3732 = vlaneseq
    %v3733 = vshrl.u32 %v3732, 7
    %v3734 = vsub.s32 %v3731, %v3733
    %v3735 = vrot.slane %v3727, %v3734
    %v3737 = vunpack.c.l.s4 1983009808
    %v3738 = vunpack.c.0.s8 %v3737
    %v3739 = vlaneseq
    %v3740 = vshrl.u32 %v3739, 7
    %v3741 = vsub.s32 %v3738, %v3740
    %v3742 = vrot.slane %v3728, %v3741
    %v3743 = vcombine.low %v3735, %v3742
    %v3744 = vcombine.low %v2456, %v3458
    %v3745 = vcombine.low %v3002, %v3521
    %v3747 = vunpack.c.l.s4 1983009808
    %v3748 = vunpack.c.0.s8 %v3747
    %v3749 = vlaneseq
    %v3750 = vshrl.u32 %v3749, 7
    %v3751 = vsub.s32 %v3748, %v3750
    %v3752 = vrot.slane %v3744, %v3751
    %v3754 = vunpack.c.l.s4 1983009808
    %v3755 = vunpack.c.0.s8 %v3754
    %v3756 = vlaneseq
    %v3757 = vshrl.u32 %v3756, 7
    %v3758 = vsub.s32 %v3755, %v3757
    %v3759 = vrot.slane %v3745, %v3758
    %v3760 = vcombine.low %v3752, %v3759
    %v3761 = vcombine.low %v3540, %v2730
    %v3763 = vunpack.c.l.s4 1983009808
    %v3764 = vunpack.c.0.s8 %v3763
    %v3765 = vlaneseq
    %v3766 = vshrl.u32 %v3765, 7
    %v3767 = vsub.s32 %v3764, %v3766
    %v3768 = vrot.slane %v3761, %v3767
    %v3769 = vcombine.low %v3768, %v3633
    %v3770 = vcombine.low %v2458, %v3556
    %v3772 = vunpack.c.l.s4 1983009808
    %v3773 = vunpack.c.0.s8 %v3772
    %v3774 = vlaneseq
    %v3775 = vshrl.u32 %v3774, 7
    %v3776 = vsub.s32 %v3773, %v3775
    %v3777 = vrot.slane %v3770, %v3776
    %v3778 = vcombine.low %v3777, %v3650
    %v3779 = vcombine.low %v3403, %v3276
    %v3781 = vunpack.c.l.s4 1983009808
    %v3782 = vunpack.c.0.s8 %v3781
    %v3783 = vlaneseq
    %v3784 = vshrl.u32 %v3783, 7
    %v3785 = vsub.s32 %v3782, %v3784
    %v3786 = vrot.slane %v3779, %v3785
    %v3787 = vcombine.low %v3633, %v3786
    %v3788 = vcombine.low %v3004, %v3522
    %v3790 = vunpack.c.l.s4 1983009808
    %v3791 = vunpack.c.0.s8 %v3790
    %v3792 = vlaneseq
    %v3793 = vshrl.u32 %v3792, 7
    %v3794 = vsub.s32 %v3791, %v3793
    %v3795 = vrot.slane %v3788, %v3794
    %v3796 = vcombine.low %v3650, %v3795
    %v3797 = vcombine.low %v3340, %v2732
    %v3798 = vcombine.low %v3404, %v3278
    %v3800 = vunpack.c.l.s4 1983009808
    %v3801 = vunpack.c.0.s8 %v3800
    %v3802 = vlaneseq
    %v3803 = vshrl.u32 %v3802, 7
    %v3804 = vsub.s32 %v3801, %v3803
    %v3805 = vrot.slane %v3797, %v3804
    %v3807 = vunpack.c.l.s4 1983009808
    %v3808 = vunpack.c.0.s8 %v3807
    %v3809 = vlaneseq
    %v3810 = vshrl.u32 %v3809, 7
    %v3811 = vsub.s32 %v3808, %v3810
    %v3812 = vrot.slane %v3798, %v3811
    %v3813 = vcombine.low %v3805, %v3812
    %v3814 = vcombine.low %v2460, %v3459
    %v3815 = vcombine.low %v3006, %v3523
    %v3817 = vunpack.c.l.s4 1983009808
    %v3818 = vunpack.c.0.s8 %v3817
    %v3819 = vlaneseq
    %v3820 = vshrl.u32 %v3819, 7
    %v3821 = vsub.s32 %v3818, %v3820
    %v3822 = vrot.slane %v3814, %v3821
    %v3824 = vunpack.c.l.s4 1983009808
    %v3825 = vunpack.c.0.s8 %v3824
    %v3826 = vlaneseq
    %v3827 = vshrl.u32 %v3826, 7
    %v3828 = vsub.s32 %v3825, %v3827
    %v3829 = vrot.slane %v3815, %v3828
    %v3830 = vcombine.low %v3822, %v3829
    %v3831 = vcombine.low %v3341, %v2734
    %v3832 = vcombine.low %v3405, %v3280
    %v3834 = vunpack.c.l.s4 1983009808
    %v3835 = vunpack.c.0.s8 %v3834
    %v3836 = vlaneseq
    %v3837 = vshrl.u32 %v3836, 7
    %v3838 = vsub.s32 %v3835, %v3837
    %v3839 = vrot.slane %v3831, %v3838
    %v3841 = vunpack.c.l.s4 1983009808
    %v3842 = vunpack.c.0.s8 %v3841
    %v3843 = vlaneseq
    %v3844 = vshrl.u32 %v3843, 7
    %v3845 = vsub.s32 %v3842, %v3844
    %v3846 = vrot.slane %v3832, %v3845
    %v3847 = vcombine.low %v3839, %v3846
    %v3848 = vcombine.low %v2462, %v3460
    %v3849 = vcombine.low %v3008, %v3524
    %v3851 = vunpack.c.l.s4 1983009808
    %v3852 = vunpack.c.0.s8 %v3851
    %v3853 = vlaneseq
    %v3854 = vshrl.u32 %v3853, 7
    %v3855 = vsub.s32 %v3852, %v3854
    %v3856 = vrot.slane %v3848, %v3855
    %v3858 = vunpack.c.l.s4 1983009808
    %v3859 = vunpack.c.0.s8 %v3858
    %v3860 = vlaneseq
    %v3861 = vshrl.u32 %v3860, 7
    %v3862 = vsub.s32 %v3859, %v3861
    %v3863 = vrot.slane %v3849, %v3862
    %v3864 = vcombine.low %v3856, %v3863
    %v3865 = vcombine.low %v3342, %v2736
    %v3866 = vcombine.low %v3406, %v3282
    %v3868 = vunpack.c.l.s4 1983009808
    %v3869 = vunpack.c.0.s8 %v3868
    %v3870 = vlaneseq
    %v3871 = vshrl.u32 %v3870, 7
    %v3872 = vsub.s32 %v3869, %v3871
    %v3873 = vrot.slane %v3865, %v3872
    %v3875 = vunpack.c.l.s4 1983009808
    %v3876 = vunpack.c.0.s8 %v3875
    %v3877 = vlaneseq
    %v3878 = vshrl.u32 %v3877, 7
    %v3879 = vsub.s32 %v3876, %v3878
    %v3880 = vrot.slane %v3866, %v3879
    %v3881 = vcombine.low %v3873, %v3880
    %v3882 = vcombine.low %v2464, %v3461
    %v3883 = vcombine.low %v3010, %v3525
    %v3885 = vunpack.c.l.s4 1983009808
    %v3886 = vunpack.c.0.s8 %v3885
    %v3887 = vlaneseq
    %v3888 = vshrl.u32 %v3887, 7
    %v3889 = vsub.s32 %v3886, %v3888
    %v3890 = vrot.slane %v3882, %v3889
    %v3892 = vunpack.c.l.s4 1983009808
    %v3893 = vunpack.c.0.s8 %v3892
    %v3894 = vlaneseq
    %v3895 = vshrl.u32 %v3894, 7
    %v3896 = vsub.s32 %v3893, %v3895
    %v3897 = vrot.slane %v3883, %v3896
    %v3898 = vcombine.low %v3890, %v3897
    %v3899 = vcombine.low %v3541, %v2738
    %v3901 = vunpack.c.l.s4 1983009808
    %v3902 = vunpack.c.0.s8 %v3901
    %v3903 = vlaneseq
    %v3904 = vshrl.u32 %v3903, 7
    %v3905 = vsub.s32 %v3902, %v3904
    %v3906 = vrot.slane %v3899, %v3905
    %v3907 = vcombine.low %v3906, %v3633
    %v3908 = vcombine.low %v2466, %v3557
    %v3910 = vunpack.c.l.s4 1983009808
    %v3911 = vunpack.c.0.s8 %v3910
    %v3912 = vlaneseq
    %v3913 = vshrl.u32 %v3912, 7
    %v3914 = vsub.s32 %v3911, %v3913
    %v3915 = vrot.slane %v3908, %v3914
    %v3916 = vcombine.low %v3915, %v3650
    %v3917 = vld [vmem:[%s3] sm:$0xff]
    %v3918 = vld [vmem:[%s3 + $0x8] sm:$0xff]
    %v3919 = vld [vmem:[%s3 + $0x10] sm:$0xff]
    %v3920 = vld [vmem:[%s3 + $0x18] sm:$0xff]
    %v3921 = vld [vmem:[%s3 + $0x20] sm:$0xff]
    %v3922 = vld [vmem:[%s3 + $0x28] sm:$0xff]
    %v3923 = vld [vmem:[%s3 + $0x30] sm:$0xff]
    %v3924 = vld [vmem:[%s3 + $0x38] sm:$0xff]
    %v3925 = vld [vmem:[%s3 + $0x40] sm:$0xff]
    %v3926 = vld [vmem:[%s3 + $0x48] sm:$0xff]
    %v3927 = vld [vmem:[%s3 + $0x50] sm:$0xff]
    %v3928 = vld [vmem:[%s3 + $0x58] sm:$0xff]
    %v3929 = vld [vmem:[%s3 + $0x60] sm:$0xff]
    %v3930 = vld [vmem:[%s3 + $0x68] sm:$0xff]
    %v3931 = vld [vmem:[%s3 + $0x70] sm:$0xff]
    %v3932 = vld [vmem:[%s3 + $0x78] sm:$0xff]
    %v3933 = vld [vmem:[%s3 + $0x80] sm:$0xff]
    %v3934 = vld [vmem:[%s3 + $0x88] sm:$0xff]
    %v3935 = vld [vmem:[%s3 + $0x90] sm:$0xff]
    %v3936 = vld [vmem:[%s3 + $0x98] sm:$0xff]
    %v3937 = vld [vmem:[%s3 + $0xa0] sm:$0xff]
    %v3938 = vld [vmem:[%s3 + $0xa8] sm:$0xff]
    %v3939 = vld [vmem:[%s3 + $0xb0] sm:$0xff]
    %v3940 = vld [vmem:[%s3 + $0xb8] sm:$0xff]
    %v3941 = vld [vmem:[%s3 + $0xc0] sm:$0xff]
    %v3942 = vld [vmem:[%s3 + $0xc8] sm:$0xff]
    %v3943 = vld [vmem:[%s3 + $0xd0] sm:$0xff]
    %v3944 = vld [vmem:[%s3 + $0xd8] sm:$0xff]
    %v3945 = vld [vmem:[%s3 + $0xe0] sm:$0xff]
    %v3946 = vld [vmem:[%s3 + $0xe8] sm:$0xff]
    %v3947 = vld [vmem:[%s3 + $0xf0] sm:$0xff]
    %v3948 = vld [vmem:[%s3 + $0xf8] sm:$0xff]
    %v3949 = vld [vmem:[%s3 + $0x100] sm:$0xff]
    %v3950 = vld [vmem:[%s3 + $0x108] sm:$0xff]
    %v3951 = vld [vmem:[%s3 + $0x110] sm:$0xff]
    %v3952 = vld [vmem:[%s3 + $0x118] sm:$0xff]
    %v3953 = vld [vmem:[%s3 + $0x120] sm:$0xff]
    %v3954 = vld [vmem:[%s3 + $0x128] sm:$0xff]
    %v3955 = vld [vmem:[%s3 + $0x130] sm:$0xff]
    %v3956 = vld [vmem:[%s3 + $0x138] sm:$0xff]
    %v3957 = vld [vmem:[%s3 + $0x140] sm:$0xff]
    %v3958 = vld [vmem:[%s3 + $0x148] sm:$0xff]
    %v3959 = vld [vmem:[%s3 + $0x150] sm:$0xff]
    %v3960 = vld [vmem:[%s3 + $0x158] sm:$0xff]
    %v3961 = vld [vmem:[%s3 + $0x160] sm:$0xff]
    %v3962 = vld [vmem:[%s3 + $0x168] sm:$0xff]
    %v3963 = vld [vmem:[%s3 + $0x170] sm:$0xff]
    %v3964 = vld [vmem:[%s3 + $0x178] sm:$0xff]
    %v3965 = vld [vmem:[%s3 + $0x180] sm:$0xff]
    %v3966 = vld [vmem:[%s3 + $0x188] sm:$0xff]
    %v3967 = vld [vmem:[%s3 + $0x190] sm:$0xff]
    %v3968 = vld [vmem:[%s3 + $0x198] sm:$0xff]
    %v3969 = vld [vmem:[%s3 + $0x1a0] sm:$0xff]
    %v3970 = vld [vmem:[%s3 + $0x1a8] sm:$0xff]
    %v3971 = vld [vmem:[%s3 + $0x1b0] sm:$0xff]
    %v3972 = vld [vmem:[%s3 + $0x1b8] sm:$0xff]
    %v3973 = vld [vmem:[%s3 + $0x1c0] sm:$0xff]
    %v3974 = vld [vmem:[%s3 + $0x1c8] sm:$0xff]
    %v3975 = vld [vmem:[%s3 + $0x1d0] sm:$0xff]
    %v3976 = vld [vmem:[%s3 + $0x1d8] sm:$0xff]
    %v3977 = vld [vmem:[%s3 + $0x1e0] sm:$0xff]
    %v3978 = vld [vmem:[%s3 + $0x1e8] sm:$0xff]
    %v3979 = vld [vmem:[%s3 + $0x1f0] sm:$0xff]
    %v3980 = vld [vmem:[%s3 + $0x1f8] sm:$0xff]
    %v3981 = vld [vmem:[%s3 + $0x200] sm:$0xff]
    %v3982 = vld [vmem:[%s3 + $0x208] sm:$0xff]
    %v3983 = vld [vmem:[%s3 + $0x210] sm:$0xff]
    %v3984 = vld [vmem:[%s3 + $0x218] sm:$0xff]
    %v3985 = vld [vmem:[%s3 + $0x220] sm:$0xff]
    %v3986 = vld [vmem:[%s3 + $0x228] sm:$0xff]
    %v3987 = vld [vmem:[%s3 + $0x230] sm:$0xff]
    %v3988 = vld [vmem:[%s3 + $0x238] sm:$0xff]
    %v3989 = vld [vmem:[%s3 + $0x240] sm:$0xff]
    %v3990 = vld [vmem:[%s3 + $0x248] sm:$0xff]
    %v3991 = vld [vmem:[%s3 + $0x250] sm:$0xff]
    %v3992 = vld [vmem:[%s3 + $0x258] sm:$0xff]
    %v3993 = vld [vmem:[%s3 + $0x260] sm:$0xff]
    %v3994 = vld [vmem:[%s3 + $0x268] sm:$0xff]
    %v3995 = vld [vmem:[%s3 + $0x270] sm:$0xff]
    %v3996 = vld [vmem:[%s3 + $0x278] sm:$0xff]
    %v3997 = vld [vmem:[%s3 + $0x280] sm:$0xff]
    %v3998 = vld [vmem:[%s3 + $0x288] sm:$0xff]
    %v3999 = vld [vmem:[%s3 + $0x290] sm:$0xff]
    %v4000 = vld [vmem:[%s3 + $0x298] sm:$0xff]
    %v4001 = vld [vmem:[%s3 + $0x2a0] sm:$0xff]
    %v4002 = vld [vmem:[%s3 + $0x2a8] sm:$0xff]
    %v4003 = vld [vmem:[%s3 + $0x2b0] sm:$0xff]
    %v4004 = vld [vmem:[%s3 + $0x2b8] sm:$0xff]
    %v4005 = vld [vmem:[%s3 + $0x2c0] sm:$0xff]
    %v4006 = vld [vmem:[%s3 + $0x2c8] sm:$0xff]
    %v4007 = vld [vmem:[%s3 + $0x2d0] sm:$0xff]
    %v4008 = vld [vmem:[%s3 + $0x2d8] sm:$0xff]
    %v4009 = vld [vmem:[%s3 + $0x2e0] sm:$0xff]
    %v4010 = vld [vmem:[%s3 + $0x2e8] sm:$0xff]
    %v4011 = vld [vmem:[%s3 + $0x2f0] sm:$0xff]
    %v4012 = vld [vmem:[%s3 + $0x2f8] sm:$0xff]
    %v4013 = vld [vmem:[%s3 + $0x300] sm:$0xff]
    %v4014 = vld [vmem:[%s3 + $0x308] sm:$0xff]
    %v4015 = vld [vmem:[%s3 + $0x310] sm:$0xff]
    %v4016 = vld [vmem:[%s3 + $0x318] sm:$0xff]
    %v4017 = vld [vmem:[%s3 + $0x320] sm:$0xff]
    %v4018 = vld [vmem:[%s3 + $0x328] sm:$0xff]
    %v4019 = vld [vmem:[%s3 + $0x330] sm:$0xff]
    %v4020 = vld [vmem:[%s3 + $0x338] sm:$0xff]
    %v4021 = vld [vmem:[%s3 + $0x340] sm:$0xff]
    %v4022 = vld [vmem:[%s3 + $0x348] sm:$0xff]
    %v4023 = vld [vmem:[%s3 + $0x350] sm:$0xff]
    %v4024 = vld [vmem:[%s3 + $0x358] sm:$0xff]
    %v4025 = vld [vmem:[%s3 + $0x360] sm:$0xff]
    %v4026 = vld [vmem:[%s3 + $0x368] sm:$0xff]
    %v4027 = vld [vmem:[%s3 + $0x370] sm:$0xff]
    %v4028 = vld [vmem:[%s3 + $0x378] sm:$0xff]
    %v4029 = vld [vmem:[%s3 + $0x380] sm:$0xff]
    %v4030 = vld [vmem:[%s3 + $0x388] sm:$0xff]
    %v4031 = vld [vmem:[%s3 + $0x390] sm:$0xff]
    %v4032 = vld [vmem:[%s3 + $0x398] sm:$0xff]
    %v4033 = vld [vmem:[%s3 + $0x3a0] sm:$0xff]
    %v4034 = vld [vmem:[%s3 + $0x3a8] sm:$0xff]
    %v4035 = vld [vmem:[%s3 + $0x3b0] sm:$0xff]
    %v4036 = vld [vmem:[%s3 + $0x3b8] sm:$0xff]
    %v4037 = vld [vmem:[%s3 + $0x3c0] sm:$0xff]
    %v4038 = vld [vmem:[%s3 + $0x3c8] sm:$0xff]
    %v4039 = vld [vmem:[%s3 + $0x3d0] sm:$0xff]
    %v4040 = vld [vmem:[%s3 + $0x3d8] sm:$0xff]
    %v4041 = vld [vmem:[%s3 + $0x3e0] sm:$0xff]
    %v4042 = vld [vmem:[%s3 + $0x3e8] sm:$0xff]
    %v4043 = vld [vmem:[%s3 + $0x3f0] sm:$0xff]
    %v4044 = vld [vmem:[%s3 + $0x3f8] sm:$0xff]
    %v4045 = vld [vmem:[%s3 + $0x400] sm:$0xff]
    %v4046 = vld [vmem:[%s3 + $0x408] sm:$0xff]
    %v4047 = vld [vmem:[%s3 + $0x410] sm:$0xff]
    %v4048 = vld [vmem:[%s3 + $0x418] sm:$0xff]
    %v4049 = vld [vmem:[%s3 + $0x420] sm:$0xff]
    %v4050 = vld [vmem:[%s3 + $0x428] sm:$0xff]
    %v4051 = vld [vmem:[%s3 + $0x430] sm:$0xff]
    %v4052 = vld [vmem:[%s3 + $0x438] sm:$0xff]
    %v4053 = vld [vmem:[%s3 + $0x440] sm:$0xff]
    %v4054 = vld [vmem:[%s3 + $0x448] sm:$0xff]
    %v4055 = vld [vmem:[%s3 + $0x450] sm:$0xff]
    %v4056 = vld [vmem:[%s3 + $0x458] sm:$0xff]
    %v4057 = vld [vmem:[%s3 + $0x460] sm:$0xff]
    %v4058 = vld [vmem:[%s3 + $0x468] sm:$0xff]
    %v4059 = vld [vmem:[%s3 + $0x470] sm:$0xff]
    %v4060 = vld [vmem:[%s3 + $0x478] sm:$0xff]
    %v4061 = vld [vmem:[%s3 + $0x480] sm:$0xff]
    %v4062 = vld [vmem:[%s3 + $0x488] sm:$0xff]
    %v4063 = vld [vmem:[%s3 + $0x490] sm:$0xff]
    %v4064 = vld [vmem:[%s3 + $0x498] sm:$0xff]
    %v4065 = vld [vmem:[%s3 + $0x4a0] sm:$0xff]
    %v4066 = vld [vmem:[%s3 + $0x4a8] sm:$0xff]
    %v4067 = vld [vmem:[%s3 + $0x4b0] sm:$0xff]
    %v4068 = vld [vmem:[%s3 + $0x4b8] sm:$0xff]
    %v4069 = vld [vmem:[%s3 + $0x4c0] sm:$0xff]
    %v4070 = vld [vmem:[%s3 + $0x4c8] sm:$0xff]
    %v4071 = vld [vmem:[%s3 + $0x4d0] sm:$0xff]
    %v4072 = vld [vmem:[%s3 + $0x4d8] sm:$0xff]
    %v4073 = vld [vmem:[%s3 + $0x4e0] sm:$0xff]
    %v4074 = vld [vmem:[%s3 + $0x4e8] sm:$0xff]
    %v4075 = vld [vmem:[%s3 + $0x4f0] sm:$0xff]
    %v4076 = vld [vmem:[%s3 + $0x4f8] sm:$0xff]
    %v4077 = vld [vmem:[%s3 + $0x500] sm:$0xff]
    %v4078 = vld [vmem:[%s3 + $0x508] sm:$0xff]
    %v4079 = vld [vmem:[%s3 + $0x510] sm:$0xff]
    %v4080 = vld [vmem:[%s3 + $0x518] sm:$0xff]
    %v4081 = vld [vmem:[%s3 + $0x520] sm:$0xff]
    %v4082 = vld [vmem:[%s3 + $0x528] sm:$0xff]
    %v4083 = vld [vmem:[%s3 + $0x530] sm:$0xff]
    %v4084 = vld [vmem:[%s3 + $0x538] sm:$0xff]
    %v4085 = vld [vmem:[%s3 + $0x540] sm:$0xff]
    %v4086 = vld [vmem:[%s3 + $0x548] sm:$0xff]
    %v4087 = vld [vmem:[%s3 + $0x550] sm:$0xff]
    %v4088 = vld [vmem:[%s3 + $0x558] sm:$0xff]
    %v4089 = vld [vmem:[%s3 + $0x560] sm:$0xff]
    %v4090 = vld [vmem:[%s3 + $0x568] sm:$0xff]
    %v4091 = vld [vmem:[%s3 + $0x570] sm:$0xff]
    %v4092 = vld [vmem:[%s3 + $0x578] sm:$0xff]
    %v4093 = vld [vmem:[%s3 + $0x580] sm:$0xff]
    %v4094 = vld [vmem:[%s3 + $0x588] sm:$0xff]
    %v4095 = vld [vmem:[%s3 + $0x590] sm:$0xff]
    %v4096 = vld [vmem:[%s3 + $0x598] sm:$0xff]
    %v4097 = vld [vmem:[%s3 + $0x5a0] sm:$0xff]
    %v4098 = vld [vmem:[%s3 + $0x5a8] sm:$0xff]
    %v4099 = vld [vmem:[%s3 + $0x5b0] sm:$0xff]
    %v4100 = vld [vmem:[%s3 + $0x5b8] sm:$0xff]
    %v4101 = vld [vmem:[%s3 + $0x5c0] sm:$0xff]
    %v4102 = vld [vmem:[%s3 + $0x5c8] sm:$0xff]
    %v4103 = vld [vmem:[%s3 + $0x5d0] sm:$0xff]
    %v4104 = vld [vmem:[%s3 + $0x5d8] sm:$0xff]
    %v4105 = vld [vmem:[%s3 + $0x5e0] sm:$0xff]
    %v4106 = vld [vmem:[%s3 + $0x5e8] sm:$0xff]
    %v4107 = vld [vmem:[%s3 + $0x5f0] sm:$0xff]
    %v4108 = vld [vmem:[%s3 + $0x5f8] sm:$0xff]
    %v4109 = vld [vmem:[%s3 + $0x600] sm:$0xff]
    %v4110 = vld [vmem:[%s3 + $0x608] sm:$0xff]
    %v4111 = vld [vmem:[%s3 + $0x610] sm:$0xff]
    %v4112 = vld [vmem:[%s3 + $0x618] sm:$0xff]
    %v4113 = vld [vmem:[%s3 + $0x620] sm:$0xff]
    %v4114 = vld [vmem:[%s3 + $0x628] sm:$0xff]
    %v4115 = vld [vmem:[%s3 + $0x630] sm:$0xff]
    %v4116 = vld [vmem:[%s3 + $0x638] sm:$0xff]
    %v4117 = vld [vmem:[%s3 + $0x640] sm:$0xff]
    %v4118 = vld [vmem:[%s3 + $0x648] sm:$0xff]
    %v4119 = vld [vmem:[%s3 + $0x650] sm:$0xff]
    %v4120 = vld [vmem:[%s3 + $0x658] sm:$0xff]
    %v4121 = vld [vmem:[%s3 + $0x660] sm:$0xff]
    %v4122 = vld [vmem:[%s3 + $0x668] sm:$0xff]
    %v4123 = vld [vmem:[%s3 + $0x670] sm:$0xff]
    %v4124 = vld [vmem:[%s3 + $0x678] sm:$0xff]
    %v4125 = vld [vmem:[%s3 + $0x680] sm:$0xff]
    %v4126 = vld [vmem:[%s3 + $0x688] sm:$0xff]
    %v4127 = vld [vmem:[%s3 + $0x690] sm:$0xff]
    %v4128 = vld [vmem:[%s3 + $0x698] sm:$0xff]
    %v4129 = vld [vmem:[%s3 + $0x6a0] sm:$0xff]
    %v4130 = vld [vmem:[%s3 + $0x6a8] sm:$0xff]
    %v4131 = vld [vmem:[%s3 + $0x6b0] sm:$0xff]
    %v4132 = vld [vmem:[%s3 + $0x6b8] sm:$0xff]
    %v4133 = vld [vmem:[%s3 + $0x6c0] sm:$0xff]
    %v4134 = vld [vmem:[%s3 + $0x6c8] sm:$0xff]
    %v4135 = vld [vmem:[%s3 + $0x6d0] sm:$0xff]
    %v4136 = vld [vmem:[%s3 + $0x6d8] sm:$0xff]
    %v4137 = vld [vmem:[%s3 + $0x6e0] sm:$0xff]
    %v4138 = vld [vmem:[%s3 + $0x6e8] sm:$0xff]
    %v4139 = vld [vmem:[%s3 + $0x6f0] sm:$0xff]
    %v4140 = vld [vmem:[%s3 + $0x6f8] sm:$0xff]
    %v4141 = vld [vmem:[%s3 + $0x700] sm:$0xff]
    %v4142 = vld [vmem:[%s3 + $0x708] sm:$0xff]
    %v4143 = vld [vmem:[%s3 + $0x710] sm:$0xff]
    %v4144 = vld [vmem:[%s3 + $0x718] sm:$0xff]
    %v4145 = vld [vmem:[%s3 + $0x720] sm:$0xff]
    %v4146 = vld [vmem:[%s3 + $0x728] sm:$0xff]
    %v4147 = vld [vmem:[%s3 + $0x730] sm:$0xff]
    %v4148 = vld [vmem:[%s3 + $0x738] sm:$0xff]
    %v4149 = vld [vmem:[%s3 + $0x740] sm:$0xff]
    %v4150 = vld [vmem:[%s3 + $0x748] sm:$0xff]
    %v4151 = vld [vmem:[%s3 + $0x750] sm:$0xff]
    %v4152 = vld [vmem:[%s3 + $0x758] sm:$0xff]
    %v4153 = vld [vmem:[%s3 + $0x760] sm:$0xff]
    %v4154 = vld [vmem:[%s3 + $0x768] sm:$0xff]
    %v4155 = vld [vmem:[%s3 + $0x770] sm:$0xff]
    %v4156 = vld [vmem:[%s3 + $0x778] sm:$0xff]
    %v4157 = vld [vmem:[%s3 + $0x780] sm:$0xff]
    %v4158 = vld [vmem:[%s3 + $0x788] sm:$0xff]
    %v4159 = vld [vmem:[%s3 + $0x790] sm:$0xff]
    %v4160 = vld [vmem:[%s3 + $0x798] sm:$0xff]
    %v4161 = vld [vmem:[%s3 + $0x7a0] sm:$0xff]
    %v4162 = vld [vmem:[%s3 + $0x7a8] sm:$0xff]
    %v4163 = vld [vmem:[%s3 + $0x7b0] sm:$0xff]
    %v4164 = vld [vmem:[%s3 + $0x7b8] sm:$0xff]
    %v4165 = vld [vmem:[%s3 + $0x7c0] sm:$0xff]
    %v4166 = vld [vmem:[%s3 + $0x7c8] sm:$0xff]
    %v4167 = vld [vmem:[%s3 + $0x7d0] sm:$0xff]
    %v4168 = vld [vmem:[%s3 + $0x7d8] sm:$0xff]
    %v4169 = vld [vmem:[%s3 + $0x7e0] sm:$0xff]
    %v4170 = vld [vmem:[%s3 + $0x7e8] sm:$0xff]
    %v4171 = vld [vmem:[%s3 + $0x7f0] sm:$0xff]
    %v4172 = vld [vmem:[%s3 + $0x7f8] sm:$0xff]
    %v4173 = vld [vmem:[%s3 + $0x800] sm:$0xff]
    %v4174 = vld [vmem:[%s3 + $0x808] sm:$0xff]
    %v4175 = vld [vmem:[%s3 + $0x810] sm:$0xff]
    %v4176 = vld [vmem:[%s3 + $0x818] sm:$0xff]
    %v4177 = vld [vmem:[%s3 + $0x820] sm:$0xff]
    %v4178 = vld [vmem:[%s3 + $0x828] sm:$0xff]
    %v4179 = vld [vmem:[%s3 + $0x830] sm:$0xff]
    %v4180 = vld [vmem:[%s3 + $0x838] sm:$0xff]
    %v4181 = vld [vmem:[%s3 + $0x840] sm:$0xff]
    %v4182 = vld [vmem:[%s3 + $0x848] sm:$0xff]
    %v4183 = vld [vmem:[%s3 + $0x850] sm:$0xff]
    %v4184 = vld [vmem:[%s3 + $0x858] sm:$0xff]
    %v4185 = vld [vmem:[%s3 + $0x860] sm:$0xff]
    %v4186 = vld [vmem:[%s3 + $0x868] sm:$0xff]
    %v4187 = vld [vmem:[%s3 + $0x870] sm:$0xff]
    %v4188 = vld [vmem:[%s3 + $0x878] sm:$0xff]
    %v4189 = vld [vmem:[%s3 + $0x880] sm:$0xff]
    %v4190 = vld [vmem:[%s3 + $0x888] sm:$0xff]
    %v4191 = vld [vmem:[%s3 + $0x890] sm:$0xff]
    %v4192 = vld [vmem:[%s3 + $0x898] sm:$0xff]
    %v4193 = vld [vmem:[%s3 + $0x8a0] sm:$0xff]
    %v4194 = vld [vmem:[%s3 + $0x8a8] sm:$0xff]
    %v4195 = vld [vmem:[%s3 + $0x8b0] sm:$0xff]
    %v4196 = vld [vmem:[%s3 + $0x8b8] sm:$0xff]
    %v4197 = vld [vmem:[%s3 + $0x8c0] sm:$0xff]
    %v4198 = vld [vmem:[%s3 + $0x8c8] sm:$0xff]
    %v4199 = vld [vmem:[%s3 + $0x8d0] sm:$0xff]
    %v4200 = vld [vmem:[%s3 + $0x8d8] sm:$0xff]
    %v4201 = vld [vmem:[%s3 + $0x8e0] sm:$0xff]
    %v4202 = vld [vmem:[%s3 + $0x8e8] sm:$0xff]
    %v4203 = vld [vmem:[%s3 + $0x8f0] sm:$0xff]
    %v4204 = vld [vmem:[%s3 + $0x8f8] sm:$0xff]
    %v4205 = vld [vmem:[%s3 + $0x900] sm:$0xff]
    %v4206 = vld [vmem:[%s3 + $0x908] sm:$0xff]
    %v4207 = vld [vmem:[%s3 + $0x910] sm:$0xff]
    %v4208 = vld [vmem:[%s3 + $0x918] sm:$0xff]
    %v4209 = vld [vmem:[%s3 + $0x920] sm:$0xff]
    %v4210 = vld [vmem:[%s3 + $0x928] sm:$0xff]
    %v4211 = vld [vmem:[%s3 + $0x930] sm:$0xff]
    %v4212 = vld [vmem:[%s3 + $0x938] sm:$0xff]
    %v4213 = vld [vmem:[%s3 + $0x940] sm:$0xff]
    %v4214 = vld [vmem:[%s3 + $0x948] sm:$0xff]
    %v4215 = vld [vmem:[%s3 + $0x950] sm:$0xff]
    %v4216 = vld [vmem:[%s3 + $0x958] sm:$0xff]
    %v4217 = vld [vmem:[%s3 + $0x960] sm:$0xff]
    %v4218 = vld [vmem:[%s3 + $0x968] sm:$0xff]
    %v4219 = vld [vmem:[%s3 + $0x970] sm:$0xff]
    %v4220 = vld [vmem:[%s3 + $0x978] sm:$0xff]
    %v4221 = vld [vmem:[%s3 + $0x980] sm:$0xff]
    %v4222 = vld [vmem:[%s3 + $0x988] sm:$0xff]
    %v4223 = vld [vmem:[%s3 + $0x990] sm:$0xff]
    %v4224 = vld [vmem:[%s3 + $0x998] sm:$0xff]
    %v4225 = vld [vmem:[%s3 + $0x9a0] sm:$0xff]
    %v4226 = vld [vmem:[%s3 + $0x9a8] sm:$0xff]
    %v4227 = vld [vmem:[%s3 + $0x9b0] sm:$0xff]
    %v4228 = vld [vmem:[%s3 + $0x9b8] sm:$0xff]
    %v4229 = vld [vmem:[%s3 + $0x9c0] sm:$0xff]
    %v4230 = vld [vmem:[%s3 + $0x9c8] sm:$0xff]
    %v4231 = vld [vmem:[%s3 + $0x9d0] sm:$0xff]
    %v4232 = vld [vmem:[%s3 + $0x9d8] sm:$0xff]
    %v4233 = vld [vmem:[%s3 + $0x9e0] sm:$0xff]
    %v4234 = vld [vmem:[%s3 + $0x9e8] sm:$0xff]
    %v4235 = vld [vmem:[%s3 + $0x9f0] sm:$0xff]
    %v4236 = vld [vmem:[%s3 + $0x9f8] sm:$0xff]
    %v4237 = vld [vmem:[%s3 + $0xa00] sm:$0xff]
    %v4238 = vld [vmem:[%s3 + $0xa08] sm:$0xff]
    %v4239 = vld [vmem:[%s3 + $0xa10] sm:$0xff]
    %v4240 = vld [vmem:[%s3 + $0xa18] sm:$0xff]
    %v4241 = vld [vmem:[%s3 + $0xa20] sm:$0xff]
    %v4242 = vld [vmem:[%s3 + $0xa28] sm:$0xff]
    %v4243 = vld [vmem:[%s3 + $0xa30] sm:$0xff]
    %v4244 = vld [vmem:[%s3 + $0xa38] sm:$0xff]
    %v4245 = vld [vmem:[%s3 + $0xa40] sm:$0xff]
    %v4246 = vld [vmem:[%s3 + $0xa48] sm:$0xff]
    %v4247 = vld [vmem:[%s3 + $0xa50] sm:$0xff]
    %v4248 = vld [vmem:[%s3 + $0xa58] sm:$0xff]
    %v4249 = vld [vmem:[%s3 + $0xa60] sm:$0xff]
    %v4250 = vld [vmem:[%s3 + $0xa68] sm:$0xff]
    %v4251 = vld [vmem:[%s3 + $0xa70] sm:$0xff]
    %v4252 = vld [vmem:[%s3 + $0xa78] sm:$0xff]
    %v4253 = vld [vmem:[%s3 + $0xa80] sm:$0xff]
    %v4254 = vld [vmem:[%s3 + $0xa88] sm:$0xff]
    %v4255 = vld [vmem:[%s3 + $0xa90] sm:$0xff]
    %v4256 = vld [vmem:[%s3 + $0xa98] sm:$0xff]
    %v4257 = vld [vmem:[%s3 + $0xaa0] sm:$0xff]
    %v4258 = vld [vmem:[%s3 + $0xaa8] sm:$0xff]
    %v4259 = vld [vmem:[%s3 + $0xab0] sm:$0xff]
    %v4260 = vld [vmem:[%s3 + $0xab8] sm:$0xff]
    %v4261 = vld [vmem:[%s3 + $0xac0] sm:$0xff]
    %v4262 = vld [vmem:[%s3 + $0xac8] sm:$0xff]
    %v4263 = vld [vmem:[%s3 + $0xad0] sm:$0xff]
    %v4264 = vld [vmem:[%s3 + $0xad8] sm:$0xff]
    %v4265 = vld [vmem:[%s3 + $0xae0] sm:$0xff]
    %v4266 = vld [vmem:[%s3 + $0xae8] sm:$0xff]
    %v4267 = vld [vmem:[%s3 + $0xaf0] sm:$0xff]
    %v4268 = vld [vmem:[%s3 + $0xaf8] sm:$0xff]
    %v4269 = vld [vmem:[%s3 + $0xb00] sm:$0xff]
    %v4270 = vld [vmem:[%s3 + $0xb08] sm:$0xff]
    %v4271 = vld [vmem:[%s3 + $0xb10] sm:$0xff]
    %v4272 = vld [vmem:[%s3 + $0xb18] sm:$0xff]
    %v4273 = vld [vmem:[%s3 + $0xb20] sm:$0xff]
    %v4274 = vld [vmem:[%s3 + $0xb28] sm:$0xff]
    %v4275 = vld [vmem:[%s3 + $0xb30] sm:$0xff]
    %v4276 = vld [vmem:[%s3 + $0xb38] sm:$0xff]
    %v4277 = vld [vmem:[%s3 + $0xb40] sm:$0xff]
    %v4278 = vld [vmem:[%s3 + $0xb48] sm:$0xff]
    %v4279 = vld [vmem:[%s3 + $0xb50] sm:$0xff]
    %v4280 = vld [vmem:[%s3 + $0xb58] sm:$0xff]
    %v4281 = vld [vmem:[%s3 + $0xb60] sm:$0xff]
    %v4282 = vld [vmem:[%s3 + $0xb68] sm:$0xff]
    %v4283 = vld [vmem:[%s3 + $0xb70] sm:$0xff]
    %v4284 = vld [vmem:[%s3 + $0xb78] sm:$0xff]
    %v4285 = vld [vmem:[%s3 + $0xb80] sm:$0xff]
    %v4286 = vld [vmem:[%s3 + $0xb88] sm:$0xff]
    %v4287 = vld [vmem:[%s3 + $0xb90] sm:$0xff]
    %v4288 = vld [vmem:[%s3 + $0xb98] sm:$0xff]
    %v4289 = vld [vmem:[%s3 + $0xba0] sm:$0xff]
    %v4290 = vld [vmem:[%s3 + $0xba8] sm:$0xff]
    %v4291 = vld [vmem:[%s3 + $0xbb0] sm:$0xff]
    %v4292 = vld [vmem:[%s3 + $0xbb8] sm:$0xff]
    %v4293 = vld [vmem:[%s3 + $0xbc0] sm:$0xff]
    %v4294 = vld [vmem:[%s3 + $0xbc8] sm:$0xff]
    %v4295 = vld [vmem:[%s3 + $0xbd0] sm:$0xff]
    %v4296 = vld [vmem:[%s3 + $0xbd8] sm:$0xff]
    %v4297 = vld [vmem:[%s3 + $0xbe0] sm:$0xff]
    %v4298 = vld [vmem:[%s3 + $0xbe8] sm:$0xff]
    %v4299 = vld [vmem:[%s3 + $0xbf0] sm:$0xff]
    %v4300 = vld [vmem:[%s3 + $0xbf8] sm:$0xff]
    %v4301 = vld [vmem:[%s3 + $0xc00] sm:$0xff]
    %v4302 = vld [vmem:[%s3 + $0xc08] sm:$0xff]
    %v4303 = vld [vmem:[%s3 + $0xc10] sm:$0xff]
    %v4304 = vld [vmem:[%s3 + $0xc18] sm:$0xff]
    %v4305 = vld [vmem:[%s3 + $0xc20] sm:$0xff]
    %v4306 = vld [vmem:[%s3 + $0xc28] sm:$0xff]
    %v4307 = vld [vmem:[%s3 + $0xc30] sm:$0xff]
    %v4308 = vld [vmem:[%s3 + $0xc38] sm:$0xff]
    %v4309 = vld [vmem:[%s3 + $0xc40] sm:$0xff]
    %v4310 = vld [vmem:[%s3 + $0xc48] sm:$0xff]
    %v4311 = vld [vmem:[%s3 + $0xc50] sm:$0xff]
    %v4312 = vld [vmem:[%s3 + $0xc58] sm:$0xff]
    %v4313 = vld [vmem:[%s3 + $0xc60] sm:$0xff]
    %v4314 = vld [vmem:[%s3 + $0xc68] sm:$0xff]
    %v4315 = vld [vmem:[%s3 + $0xc70] sm:$0xff]
    %v4316 = vld [vmem:[%s3 + $0xc78] sm:$0xff]
    %v4317 = vld [vmem:[%s3 + $0xc80] sm:$0xff]
    %v4318 = vld [vmem:[%s3 + $0xc88] sm:$0xff]
    %v4319 = vld [vmem:[%s3 + $0xc90] sm:$0xff]
    %v4320 = vld [vmem:[%s3 + $0xc98] sm:$0xff]
    %v4321 = vld [vmem:[%s3 + $0xca0] sm:$0xff]
    %v4322 = vld [vmem:[%s3 + $0xca8] sm:$0xff]
    %v4323 = vld [vmem:[%s3 + $0xcb0] sm:$0xff]
    %v4324 = vld [vmem:[%s3 + $0xcb8] sm:$0xff]
    %v4325 = vld [vmem:[%s3 + $0xcc0] sm:$0xff]
    %v4326 = vld [vmem:[%s3 + $0xcc8] sm:$0xff]
    %v4327 = vld [vmem:[%s3 + $0xcd0] sm:$0xff]
    %v4328 = vld [vmem:[%s3 + $0xcd8] sm:$0xff]
    %v4329 = vld [vmem:[%s3 + $0xce0] sm:$0xff]
    %v4330 = vld [vmem:[%s3 + $0xce8] sm:$0xff]
    %v4331 = vld [vmem:[%s3 + $0xcf0] sm:$0xff]
    %v4332 = vld [vmem:[%s3 + $0xcf8] sm:$0xff]
    %v4333 = vld [vmem:[%s3 + $0xd00] sm:$0xff]
    %v4334 = vld [vmem:[%s3 + $0xd08] sm:$0xff]
    %v4335 = vld [vmem:[%s3 + $0xd10] sm:$0xff]
    %v4336 = vld [vmem:[%s3 + $0xd18] sm:$0xff]
    %v4337 = vld [vmem:[%s3 + $0xd20] sm:$0xff]
    %v4338 = vld [vmem:[%s3 + $0xd28] sm:$0xff]
    %v4339 = vld [vmem:[%s3 + $0xd30] sm:$0xff]
    %v4340 = vld [vmem:[%s3 + $0xd38] sm:$0xff]
    %v4341 = vld [vmem:[%s3 + $0xd40] sm:$0xff]
    %v4342 = vld [vmem:[%s3 + $0xd48] sm:$0xff]
    %v4343 = vld [vmem:[%s3 + $0xd50] sm:$0xff]
    %v4344 = vld [vmem:[%s3 + $0xd58] sm:$0xff]
    %v4345 = vld [vmem:[%s3 + $0xd60] sm:$0xff]
    %v4346 = vld [vmem:[%s3 + $0xd68] sm:$0xff]
    %v4347 = vld [vmem:[%s3 + $0xd70] sm:$0xff]
    %v4348 = vld [vmem:[%s3 + $0xd78] sm:$0xff]
    %v4349 = vld [vmem:[%s3 + $0xd80] sm:$0xff]
    %v4350 = vld [vmem:[%s3 + $0xd88] sm:$0xff]
    %v4351 = vld [vmem:[%s3 + $0xd90] sm:$0xff]
    %v4352 = vld [vmem:[%s3 + $0xd98] sm:$0xff]
    %v4353 = vld [vmem:[%s3 + $0xda0] sm:$0xff]
    %v4354 = vld [vmem:[%s3 + $0xda8] sm:$0xff]
    %v4355 = vld [vmem:[%s3 + $0xdb0] sm:$0xff]
    %v4356 = vld [vmem:[%s3 + $0xdb8] sm:$0xff]
    %v4357 = vld [vmem:[%s3 + $0xdc0] sm:$0xff]
    %v4358 = vld [vmem:[%s3 + $0xdc8] sm:$0xff]
    %v4359 = vld [vmem:[%s3 + $0xdd0] sm:$0xff]
    %v4360 = vld [vmem:[%s3 + $0xdd8] sm:$0xff]
    %v4361 = vld [vmem:[%s3 + $0xde0] sm:$0xff]
    %v4362 = vld [vmem:[%s3 + $0xde8] sm:$0xff]
    %v4363 = vld [vmem:[%s3 + $0xdf0] sm:$0xff]
    %v4364 = vld [vmem:[%s3 + $0xdf8] sm:$0xff]
    %v4365 = vld [vmem:[%s3 + $0xe00] sm:$0xff]
    %v4366 = vld [vmem:[%s3 + $0xe08] sm:$0xff]
    %v4367 = vld [vmem:[%s3 + $0xe10] sm:$0xff]
    %v4368 = vld [vmem:[%s3 + $0xe18] sm:$0xff]
    %v4369 = vld [vmem:[%s3 + $0xe20] sm:$0xff]
    %v4370 = vld [vmem:[%s3 + $0xe28] sm:$0xff]
    %v4371 = vld [vmem:[%s3 + $0xe30] sm:$0xff]
    %v4372 = vld [vmem:[%s3 + $0xe38] sm:$0xff]
    %v4373 = vld [vmem:[%s3 + $0xe40] sm:$0xff]
    %v4374 = vld [vmem:[%s3 + $0xe48] sm:$0xff]
    %v4375 = vld [vmem:[%s3 + $0xe50] sm:$0xff]
    %v4376 = vld [vmem:[%s3 + $0xe58] sm:$0xff]
    %v4377 = vld [vmem:[%s3 + $0xe60] sm:$0xff]
    %v4378 = vld [vmem:[%s3 + $0xe68] sm:$0xff]
    %v4379 = vld [vmem:[%s3 + $0xe70] sm:$0xff]
    %v4380 = vld [vmem:[%s3 + $0xe78] sm:$0xff]
    %v4381 = vld [vmem:[%s3 + $0xe80] sm:$0xff]
    %v4382 = vld [vmem:[%s3 + $0xe88] sm:$0xff]
    %v4383 = vld [vmem:[%s3 + $0xe90] sm:$0xff]
    %v4384 = vld [vmem:[%s3 + $0xe98] sm:$0xff]
    %v4385 = vld [vmem:[%s3 + $0xea0] sm:$0xff]
    %v4386 = vld [vmem:[%s3 + $0xea8] sm:$0xff]
    %v4387 = vld [vmem:[%s3 + $0xeb0] sm:$0xff]
    %v4388 = vld [vmem:[%s3 + $0xeb8] sm:$0xff]
    %v4389 = vld [vmem:[%s3 + $0xec0] sm:$0xff]
    %v4390 = vld [vmem:[%s3 + $0xec8] sm:$0xff]
    %v4391 = vld [vmem:[%s3 + $0xed0] sm:$0xff]
    %v4392 = vld [vmem:[%s3 + $0xed8] sm:$0xff]
    %v4393 = vld [vmem:[%s3 + $0xee0] sm:$0xff]
    %v4394 = vld [vmem:[%s3 + $0xee8] sm:$0xff]
    %v4395 = vld [vmem:[%s3 + $0xef0] sm:$0xff]
    %v4396 = vld [vmem:[%s3 + $0xef8] sm:$0xff]
    %v4397 = vld [vmem:[%s3 + $0xf00] sm:$0xff]
    %v4398 = vld [vmem:[%s3 + $0xf08] sm:$0xff]
    %v4399 = vld [vmem:[%s3 + $0xf10] sm:$0xff]
    %v4400 = vld [vmem:[%s3 + $0xf18] sm:$0xff]
    %v4401 = vld [vmem:[%s3 + $0xf20] sm:$0xff]
    %v4402 = vld [vmem:[%s3 + $0xf28] sm:$0xff]
    %v4403 = vld [vmem:[%s3 + $0xf30] sm:$0xff]
    %v4404 = vld [vmem:[%s3 + $0xf38] sm:$0xff]
    %v4405 = vld [vmem:[%s3 + $0xf40] sm:$0xff]
    %v4406 = vld [vmem:[%s3 + $0xf48] sm:$0xff]
    %v4407 = vld [vmem:[%s3 + $0xf50] sm:$0xff]
    %v4408 = vld [vmem:[%s3 + $0xf58] sm:$0xff]
    %v4409 = vld [vmem:[%s3 + $0xf60] sm:$0xff]
    %v4410 = vld [vmem:[%s3 + $0xf68] sm:$0xff]
    %v4411 = vld [vmem:[%s3 + $0xf70] sm:$0xff]
    %v4412 = vld [vmem:[%s3 + $0xf78] sm:$0xff]
    %v4413 = vld [vmem:[%s3 + $0xf80] sm:$0xff]
    %v4414 = vld [vmem:[%s3 + $0xf88] sm:$0xff]
    %v4415 = vld [vmem:[%s3 + $0xf90] sm:$0xff]
    %v4416 = vld [vmem:[%s3 + $0xf98] sm:$0xff]
    %v4417 = vld [vmem:[%s3 + $0xfa0] sm:$0xff]
    %v4418 = vld [vmem:[%s3 + $0xfa8] sm:$0xff]
    %v4419 = vld [vmem:[%s3 + $0xfb0] sm:$0xff]
    %v4420 = vld [vmem:[%s3 + $0xfb8] sm:$0xff]
    %v4421 = vld [vmem:[%s3 + $0xfc0] sm:$0xff]
    %v4422 = vld [vmem:[%s3 + $0xfc8] sm:$0xff]
    %v4423 = vld [vmem:[%s3 + $0xfd0] sm:$0xff]
    %v4424 = vld [vmem:[%s3 + $0xfd8] sm:$0xff]
    %v4425 = vld [vmem:[%s3 + $0xfe0] sm:$0xff]
    %v4426 = vld [vmem:[%s3 + $0xfe8] sm:$0xff]
    %v4427 = vld [vmem:[%s3 + $0xff0] sm:$0xff]
    %v4428 = vld [vmem:[%s3 + $0xff8] sm:$0xff]
    %v4429 = vld [vmem:[%s4] sm:$0xf]
    %v4431 = vlaneseq
    %v4432 = vshrl.u32 %v4431, 7
    %v4433 = vsub.s32 0, %v4432
    %v4434 = vrot.slane %v4429, %v4433
    %v4435 = vlaneseq
    %v4436 = vshrl.u32 %v4435, 7
    %v4437 = vsub.s32 1, %v4436
    %v4438 = vrot.slane %v4429, %v4437
    %v4439 = vlaneseq
    %v4440 = vshrl.u32 %v4439, 7
    %v4441 = vsub.s32 2, %v4440
    %v4442 = vrot.slane %v4429, %v4441
    %v4443 = vlaneseq
    %v4444 = vshrl.u32 %v4443, 7
    %v4445 = vsub.s32 3, %v4444
    %v4446 = vrot.slane %v4429, %v4445
    %v4451 = vcombine.low %v3641, %v3675
    %v4452 = vcombine.high %v3641, %v3675
    %v4453 = vcombine.low %v3709, %v3743
    %v4454 = vcombine.high %v3709, %v3743
    %v4456 = vunpack.c.l.s4 1983009808
    %v4457 = vunpack.c.0.s8 %v4456
    %v4458 = vlaneseq
    %v4459 = vshrl.u32 %v4458, 7
    %v4460 = vsub.s32 %v4457, %v4459
    %v4461 = vrot.slane %v4451, %v4460
    %v4463 = vunpack.c.l.s4 1983009808
    %v4464 = vunpack.c.0.s8 %v4463
    %v4465 = vlaneseq
    %v4466 = vshrl.u32 %v4465, 7
    %v4467 = vsub.s32 %v4464, %v4466
    %v4468 = vrot.slane %v4452, %v4467
    %v4470 = vunpack.c.l.s4 1983009808
    %v4471 = vunpack.c.0.s8 %v4470
    %v4472 = vlaneseq
    %v4473 = vshrl.u32 %v4472, 7
    %v4474 = vsub.s32 %v4471, %v4473
    %v4475 = vrot.slane %v4453, %v4474
    %v4477 = vunpack.c.l.s4 1983009808
    %v4478 = vunpack.c.0.s8 %v4477
    %v4479 = vlaneseq
    %v4480 = vshrl.u32 %v4479, 7
    %v4481 = vsub.s32 %v4478, %v4480
    %v4482 = vrot.slane %v4454, %v4481
    %v4483 = vcombine.low %v4461, %v4475
    %v4484 = vcombine.high %v4461, %v4475
    %v4485 = vcombine.low %v4468, %v4482
    %v4486 = vcombine.high %v4468, %v4482
    %v4487 = vcombine.low %v3658, %v3692
    %v4488 = vcombine.high %v3658, %v3692
    %v4489 = vcombine.low %v3726, %v3760
    %v4490 = vcombine.high %v3726, %v3760
    %v4492 = vunpack.c.l.s4 1983009808
    %v4493 = vunpack.c.0.s8 %v4492
    %v4494 = vlaneseq
    %v4495 = vshrl.u32 %v4494, 7
    %v4496 = vsub.s32 %v4493, %v4495
    %v4497 = vrot.slane %v4487, %v4496
    %v4499 = vunpack.c.l.s4 1983009808
    %v4500 = vunpack.c.0.s8 %v4499
    %v4501 = vlaneseq
    %v4502 = vshrl.u32 %v4501, 7
    %v4503 = vsub.s32 %v4500, %v4502
    %v4504 = vrot.slane %v4488, %v4503
    %v4506 = vunpack.c.l.s4 1983009808
    %v4507 = vunpack.c.0.s8 %v4506
    %v4508 = vlaneseq
    %v4509 = vshrl.u32 %v4508, 7
    %v4510 = vsub.s32 %v4507, %v4509
    %v4511 = vrot.slane %v4489, %v4510
    %v4513 = vunpack.c.l.s4 1983009808
    %v4514 = vunpack.c.0.s8 %v4513
    %v4515 = vlaneseq
    %v4516 = vshrl.u32 %v4515, 7
    %v4517 = vsub.s32 %v4514, %v4516
    %v4518 = vrot.slane %v4490, %v4517
    %v4519 = vcombine.low %v4497, %v4511
    %v4520 = vcombine.high %v4497, %v4511
    %v4521 = vcombine.low %v4504, %v4518
    %v4522 = vcombine.high %v4504, %v4518
    %v4523 = vcombine.low %v3675, %v3709
    %v4524 = vcombine.high %v3675, %v3709
    %v4525 = vcombine.low %v3743, %v3769
    %v4526 = vcombine.high %v3743, %v3769
    %v4528 = vunpack.c.l.s4 1983009808
    %v4529 = vunpack.c.0.s8 %v4528
    %v4530 = vlaneseq
    %v4531 = vshrl.u32 %v4530, 7
    %v4532 = vsub.s32 %v4529, %v4531
    %v4533 = vrot.slane %v4523, %v4532
    %v4535 = vunpack.c.l.s4 1983009808
    %v4536 = vunpack.c.0.s8 %v4535
    %v4537 = vlaneseq
    %v4538 = vshrl.u32 %v4537, 7
    %v4539 = vsub.s32 %v4536, %v4538
    %v4540 = vrot.slane %v4524, %v4539
    %v4542 = vunpack.c.l.s4 1983009808
    %v4543 = vunpack.c.0.s8 %v4542
    %v4544 = vlaneseq
    %v4545 = vshrl.u32 %v4544, 7
    %v4546 = vsub.s32 %v4543, %v4545
    %v4547 = vrot.slane %v4525, %v4546
    %v4549 = vunpack.c.l.s4 1983009808
    %v4550 = vunpack.c.0.s8 %v4549
    %v4551 = vlaneseq
    %v4552 = vshrl.u32 %v4551, 7
    %v4553 = vsub.s32 %v4550, %v4552
    %v4554 = vrot.slane %v4526, %v4553
    %v4555 = vcombine.low %v4533, %v4547
    %v4556 = vcombine.high %v4533, %v4547
    %v4557 = vcombine.low %v4540, %v4554
    %v4558 = vcombine.high %v4540, %v4554
    %v4559 = vcombine.low %v3692, %v3726
    %v4560 = vcombine.high %v3692, %v3726
    %v4561 = vcombine.low %v3760, %v3778
    %v4562 = vcombine.high %v3760, %v3778
    %v4564 = vunpack.c.l.s4 1983009808
    %v4565 = vunpack.c.0.s8 %v4564
    %v4566 = vlaneseq
    %v4567 = vshrl.u32 %v4566, 7
    %v4568 = vsub.s32 %v4565, %v4567
    %v4569 = vrot.slane %v4559, %v4568
    %v4571 = vunpack.c.l.s4 1983009808
    %v4572 = vunpack.c.0.s8 %v4571
    %v4573 = vlaneseq
    %v4574 = vshrl.u32 %v4573, 7
    %v4575 = vsub.s32 %v4572, %v4574
    %v4576 = vrot.slane %v4560, %v4575
    %v4578 = vunpack.c.l.s4 1983009808
    %v4579 = vunpack.c.0.s8 %v4578
    %v4580 = vlaneseq
    %v4581 = vshrl.u32 %v4580, 7
    %v4582 = vsub.s32 %v4579, %v4581
    %v4583 = vrot.slane %v4561, %v4582
    %v4585 = vunpack.c.l.s4 1983009808
    %v4586 = vunpack.c.0.s8 %v4585
    %v4587 = vlaneseq
    %v4588 = vshrl.u32 %v4587, 7
    %v4589 = vsub.s32 %v4586, %v4588
    %v4590 = vrot.slane %v4562, %v4589
    %v4591 = vcombine.low %v4569, %v4583
    %v4592 = vcombine.high %v4569, %v4583
    %v4593 = vcombine.low %v4576, %v4590
    %v4594 = vcombine.high %v4576, %v4590
    %v4595 = vcombine.low %v3787, %v3813
    %v4596 = vcombine.high %v3787, %v3813
    %v4597 = vcombine.low %v3847, %v3881
    %v4598 = vcombine.high %v3847, %v3881
    %v4600 = vunpack.c.l.s4 1983009808
    %v4601 = vunpack.c.0.s8 %v4600
    %v4602 = vlaneseq
    %v4603 = vshrl.u32 %v4602, 7
    %v4604 = vsub.s32 %v4601, %v4603
    %v4605 = vrot.slane %v4595, %v4604
    %v4607 = vunpack.c.l.s4 1983009808
    %v4608 = vunpack.c.0.s8 %v4607
    %v4609 = vlaneseq
    %v4610 = vshrl.u32 %v4609, 7
    %v4611 = vsub.s32 %v4608, %v4610
    %v4612 = vrot.slane %v4596, %v4611
    %v4614 = vunpack.c.l.s4 1983009808
    %v4615 = vunpack.c.0.s8 %v4614
    %v4616 = vlaneseq
    %v4617 = vshrl.u32 %v4616, 7
    %v4618 = vsub.s32 %v4615, %v4617
    %v4619 = vrot.slane %v4597, %v4618
    %v4621 = vunpack.c.l.s4 1983009808
    %v4622 = vunpack.c.0.s8 %v4621
    %v4623 = vlaneseq
    %v4624 = vshrl.u32 %v4623, 7
    %v4625 = vsub.s32 %v4622, %v4624
    %v4626 = vrot.slane %v4598, %v4625
    %v4627 = vcombine.low %v4605, %v4619
    %v4628 = vcombine.high %v4605, %v4619
    %v4629 = vcombine.low %v4612, %v4626
    %v4630 = vcombine.high %v4612, %v4626
    %v4631 = vcombine.low %v3796, %v3830
    %v4632 = vcombine.high %v3796, %v3830
    %v4633 = vcombine.low %v3864, %v3898
    %v4634 = vcombine.high %v3864, %v3898
    %v4636 = vunpack.c.l.s4 1983009808
    %v4637 = vunpack.c.0.s8 %v4636
    %v4638 = vlaneseq
    %v4639 = vshrl.u32 %v4638, 7
    %v4640 = vsub.s32 %v4637, %v4639
    %v4641 = vrot.slane %v4631, %v4640
    %v4643 = vunpack.c.l.s4 1983009808
    %v4644 = vunpack.c.0.s8 %v4643
    %v4645 = vlaneseq
    %v4646 = vshrl.u32 %v4645, 7
    %v4647 = vsub.s32 %v4644, %v4646
    %v4648 = vrot.slane %v4632, %v4647
    %v4650 = vunpack.c.l.s4 1983009808
    %v4651 = vunpack.c.0.s8 %v4650
    %v4652 = vlaneseq
    %v4653 = vshrl.u32 %v4652, 7
    %v4654 = vsub.s32 %v4651, %v4653
    %v4655 = vrot.slane %v4633, %v4654
    %v4657 = vunpack.c.l.s4 1983009808
    %v4658 = vunpack.c.0.s8 %v4657
    %v4659 = vlaneseq
    %v4660 = vshrl.u32 %v4659, 7
    %v4661 = vsub.s32 %v4658, %v4660
    %v4662 = vrot.slane %v4634, %v4661
    %v4663 = vcombine.low %v4641, %v4655
    %v4664 = vcombine.high %v4641, %v4655
    %v4665 = vcombine.low %v4648, %v4662
    %v4666 = vcombine.high %v4648, %v4662
    %v4667 = vcombine.low %v3813, %v3847
    %v4668 = vcombine.high %v3813, %v3847
    %v4669 = vcombine.low %v3881, %v3907
    %v4670 = vcombine.high %v3881, %v3907
    %v4672 = vunpack.c.l.s4 1983009808
    %v4673 = vunpack.c.0.s8 %v4672
    %v4674 = vlaneseq
    %v4675 = vshrl.u32 %v4674, 7
    %v4676 = vsub.s32 %v4673, %v4675
    %v4677 = vrot.slane %v4667, %v4676
    %v4679 = vunpack.c.l.s4 1983009808
    %v4680 = vunpack.c.0.s8 %v4679
    %v4681 = vlaneseq
    %v4682 = vshrl.u32 %v4681, 7
    %v4683 = vsub.s32 %v4680, %v4682
    %v4684 = vrot.slane %v4668, %v4683
    %v4686 = vunpack.c.l.s4 1983009808
    %v4687 = vunpack.c.0.s8 %v4686
    %v4688 = vlaneseq
    %v4689 = vshrl.u32 %v4688, 7
    %v4690 = vsub.s32 %v4687, %v4689
    %v4691 = vrot.slane %v4669, %v4690
    %v4693 = vunpack.c.l.s4 1983009808
    %v4694 = vunpack.c.0.s8 %v4693
    %v4695 = vlaneseq
    %v4696 = vshrl.u32 %v4695, 7
    %v4697 = vsub.s32 %v4694, %v4696
    %v4698 = vrot.slane %v4670, %v4697
    %v4699 = vcombine.low %v4677, %v4691
    %v4700 = vcombine.high %v4677, %v4691
    %v4701 = vcombine.low %v4684, %v4698
    %v4702 = vcombine.high %v4684, %v4698
    %v4703 = vcombine.low %v3830, %v3864
    %v4704 = vcombine.high %v3830, %v3864
    %v4705 = vcombine.low %v3898, %v3916
    %v4706 = vcombine.high %v3898, %v3916
    %v4708 = vunpack.c.l.s4 1983009808
    %v4709 = vunpack.c.0.s8 %v4708
    %v4710 = vlaneseq
    %v4711 = vshrl.u32 %v4710, 7
    %v4712 = vsub.s32 %v4709, %v4711
    %v4713 = vrot.slane %v4703, %v4712
    %v4715 = vunpack.c.l.s4 1983009808
    %v4716 = vunpack.c.0.s8 %v4715
    %v4717 = vlaneseq
    %v4718 = vshrl.u32 %v4717, 7
    %v4719 = vsub.s32 %v4716, %v4718
    %v4720 = vrot.slane %v4704, %v4719
    %v4722 = vunpack.c.l.s4 1983009808
    %v4723 = vunpack.c.0.s8 %v4722
    %v4724 = vlaneseq
    %v4725 = vshrl.u32 %v4724, 7
    %v4726 = vsub.s32 %v4723, %v4725
    %v4727 = vrot.slane %v4705, %v4726
    %v4729 = vunpack.c.l.s4 1983009808
    %v4730 = vunpack.c.0.s8 %v4729
    %v4731 = vlaneseq
    %v4732 = vshrl.u32 %v4731, 7
    %v4733 = vsub.s32 %v4730, %v4732
    %v4734 = vrot.slane %v4706, %v4733
    %v4735 = vcombine.low %v4713, %v4727
    %v4736 = vcombine.high %v4713, %v4727
    %v4737 = vcombine.low %v4720, %v4734
    %v4738 = vcombine.high %v4720, %v4734
    %v5283 = vunpack.c.l.b16 %v3917
    %v5284 = vunpack.c.h.b16 %v3917
    %v5285 = vunpack.c.l.b16 %v3918
    %v5286 = vunpack.c.h.b16 %v3918
    %v5287 = vunpack.c.l.b16 %v3919
    %v5288 = vunpack.c.h.b16 %v3919
    %v5289 = vunpack.c.l.b16 %v3920
    %v5290 = vunpack.c.h.b16 %v3920
    %v5291 = vunpack.c.l.b16 %v3921
    %v5292 = vunpack.c.h.b16 %v3921
    %v5293 = vunpack.c.l.b16 %v3922
    %v5294 = vunpack.c.h.b16 %v3922
    %v5295 = vunpack.c.l.b16 %v3923
    %v5296 = vunpack.c.h.b16 %v3923
    %v5297 = vunpack.c.l.b16 %v3924
    %v5298 = vunpack.c.h.b16 %v3924
    %v5299 = vunpack.c.l.b16 %v3925
    %v5300 = vunpack.c.h.b16 %v3925
    %v5301 = vunpack.c.l.b16 %v3926
    %v5302 = vunpack.c.h.b16 %v3926
    %v5303 = vunpack.c.l.b16 %v3927
    %v5304 = vunpack.c.h.b16 %v3927
    %v5305 = vunpack.c.l.b16 %v3928
    %v5306 = vunpack.c.h.b16 %v3928
    %v5307 = vunpack.c.l.b16 %v3929
    %v5308 = vunpack.c.h.b16 %v3929
    %v5309 = vunpack.c.l.b16 %v3930
    %v5310 = vunpack.c.h.b16 %v3930
    %v5311 = vunpack.c.l.b16 %v3931
    %v5312 = vunpack.c.h.b16 %v3931
    %v5313 = vunpack.c.l.b16 %v3932
    %v5314 = vunpack.c.h.b16 %v3932
    %v5315 = vunpack.c.l.b16 %v3933
    %v5316 = vunpack.c.h.b16 %v3933
    %v5317 = vunpack.c.l.b16 %v3934
    %v5318 = vunpack.c.h.b16 %v3934
    %v5319 = vunpack.c.l.b16 %v3935
    %v5320 = vunpack.c.h.b16 %v3935
    %v5321 = vunpack.c.l.b16 %v3936
    %v5322 = vunpack.c.h.b16 %v3936
    %v5323 = vunpack.c.l.b16 %v3937
    %v5324 = vunpack.c.h.b16 %v3937
    %v5325 = vunpack.c.l.b16 %v3938
    %v5326 = vunpack.c.h.b16 %v3938
    %v5327 = vunpack.c.l.b16 %v3939
    %v5328 = vunpack.c.h.b16 %v3939
    %v5329 = vunpack.c.l.b16 %v3940
    %v5330 = vunpack.c.h.b16 %v3940
    %v5331 = vunpack.c.l.b16 %v3941
    %v5332 = vunpack.c.h.b16 %v3941
    %v5333 = vunpack.c.l.b16 %v3942
    %v5334 = vunpack.c.h.b16 %v3942
    %v5335 = vunpack.c.l.b16 %v3943
    %v5336 = vunpack.c.h.b16 %v3943
    %v5337 = vunpack.c.l.b16 %v3944
    %v5338 = vunpack.c.h.b16 %v3944
    %v5339 = vunpack.c.l.b16 %v3945
    %v5340 = vunpack.c.h.b16 %v3945
    %v5341 = vunpack.c.l.b16 %v3946
    %v5342 = vunpack.c.h.b16 %v3946
    %v5343 = vunpack.c.l.b16 %v3947
    %v5344 = vunpack.c.h.b16 %v3947
    %v5345 = vunpack.c.l.b16 %v3948
    %v5346 = vunpack.c.h.b16 %v3948
    %v5347 = vunpack.c.l.b16 %v3949
    %v5348 = vunpack.c.h.b16 %v3949
    %v5349 = vunpack.c.l.b16 %v3950
    %v5350 = vunpack.c.h.b16 %v3950
    %v5351 = vunpack.c.l.b16 %v3951
    %v5352 = vunpack.c.h.b16 %v3951
    %v5353 = vunpack.c.l.b16 %v3952
    %v5354 = vunpack.c.h.b16 %v3952
    %v5355 = vunpack.c.l.b16 %v3953
    %v5356 = vunpack.c.h.b16 %v3953
    %v5357 = vunpack.c.l.b16 %v3954
    %v5358 = vunpack.c.h.b16 %v3954
    %v5359 = vunpack.c.l.b16 %v3955
    %v5360 = vunpack.c.h.b16 %v3955
    %v5361 = vunpack.c.l.b16 %v3956
    %v5362 = vunpack.c.h.b16 %v3956
    %v5363 = vunpack.c.l.b16 %v3957
    %v5364 = vunpack.c.h.b16 %v3957
    %v5365 = vunpack.c.l.b16 %v3958
    %v5366 = vunpack.c.h.b16 %v3958
    %v5367 = vunpack.c.l.b16 %v3959
    %v5368 = vunpack.c.h.b16 %v3959
    %v5369 = vunpack.c.l.b16 %v3960
    %v5370 = vunpack.c.h.b16 %v3960
    %v5371 = vunpack.c.l.b16 %v3961
    %v5372 = vunpack.c.h.b16 %v3961
    %v5373 = vunpack.c.l.b16 %v3962
    %v5374 = vunpack.c.h.b16 %v3962
    %v5375 = vunpack.c.l.b16 %v3963
    %v5376 = vunpack.c.h.b16 %v3963
    %v5377 = vunpack.c.l.b16 %v3964
    %v5378 = vunpack.c.h.b16 %v3964
    %v5379 = vunpack.c.l.b16 %v3965
    %v5380 = vunpack.c.h.b16 %v3965
    %v5381 = vunpack.c.l.b16 %v3966
    %v5382 = vunpack.c.h.b16 %v3966
    %v5383 = vunpack.c.l.b16 %v3967
    %v5384 = vunpack.c.h.b16 %v3967
    %v5385 = vunpack.c.l.b16 %v3968
    %v5386 = vunpack.c.h.b16 %v3968
    %v5387 = vunpack.c.l.b16 %v3969
    %v5388 = vunpack.c.h.b16 %v3969
    %v5389 = vunpack.c.l.b16 %v3970
    %v5390 = vunpack.c.h.b16 %v3970
    %v5391 = vunpack.c.l.b16 %v3971
    %v5392 = vunpack.c.h.b16 %v3971
    %v5393 = vunpack.c.l.b16 %v3972
    %v5394 = vunpack.c.h.b16 %v3972
    %v5395 = vunpack.c.l.b16 %v3973
    %v5396 = vunpack.c.h.b16 %v3973
    %v5397 = vunpack.c.l.b16 %v3974
    %v5398 = vunpack.c.h.b16 %v3974
    %v5399 = vunpack.c.l.b16 %v3975
    %v5400 = vunpack.c.h.b16 %v3975
    %v5401 = vunpack.c.l.b16 %v3976
    %v5402 = vunpack.c.h.b16 %v3976
    %v5403 = vunpack.c.l.b16 %v3977
    %v5404 = vunpack.c.h.b16 %v3977
    %v5405 = vunpack.c.l.b16 %v3978
    %v5406 = vunpack.c.h.b16 %v3978
    %v5407 = vunpack.c.l.b16 %v3979
    %v5408 = vunpack.c.h.b16 %v3979
    %v5409 = vunpack.c.l.b16 %v3980
    %v5410 = vunpack.c.h.b16 %v3980
    %v5411 = vunpack.c.l.b16 %v3981
    %v5412 = vunpack.c.h.b16 %v3981
    %v5413 = vunpack.c.l.b16 %v3982
    %v5414 = vunpack.c.h.b16 %v3982
    %v5415 = vunpack.c.l.b16 %v3983
    %v5416 = vunpack.c.h.b16 %v3983
    %v5417 = vunpack.c.l.b16 %v3984
    %v5418 = vunpack.c.h.b16 %v3984
    %v5419 = vunpack.c.l.b16 %v3985
    %v5420 = vunpack.c.h.b16 %v3985
    %v5421 = vunpack.c.l.b16 %v3986
    %v5422 = vunpack.c.h.b16 %v3986
    %v5423 = vunpack.c.l.b16 %v3987
    %v5424 = vunpack.c.h.b16 %v3987
    %v5425 = vunpack.c.l.b16 %v3988
    %v5426 = vunpack.c.h.b16 %v3988
    %v5427 = vunpack.c.l.b16 %v3989
    %v5428 = vunpack.c.h.b16 %v3989
    %v5429 = vunpack.c.l.b16 %v3990
    %v5430 = vunpack.c.h.b16 %v3990
    %v5431 = vunpack.c.l.b16 %v3991
    %v5432 = vunpack.c.h.b16 %v3991
    %v5433 = vunpack.c.l.b16 %v3992
    %v5434 = vunpack.c.h.b16 %v3992
    %v5435 = vunpack.c.l.b16 %v3993
    %v5436 = vunpack.c.h.b16 %v3993
    %v5437 = vunpack.c.l.b16 %v3994
    %v5438 = vunpack.c.h.b16 %v3994
    %v5439 = vunpack.c.l.b16 %v3995
    %v5440 = vunpack.c.h.b16 %v3995
    %v5441 = vunpack.c.l.b16 %v3996
    %v5442 = vunpack.c.h.b16 %v3996
    %v5443 = vunpack.c.l.b16 %v3997
    %v5444 = vunpack.c.h.b16 %v3997
    %v5445 = vunpack.c.l.b16 %v3998
    %v5446 = vunpack.c.h.b16 %v3998
    %v5447 = vunpack.c.l.b16 %v3999
    %v5448 = vunpack.c.h.b16 %v3999
    %v5449 = vunpack.c.l.b16 %v4000
    %v5450 = vunpack.c.h.b16 %v4000
    %v5451 = vunpack.c.l.b16 %v4001
    %v5452 = vunpack.c.h.b16 %v4001
    %v5453 = vunpack.c.l.b16 %v4002
    %v5454 = vunpack.c.h.b16 %v4002
    %v5455 = vunpack.c.l.b16 %v4003
    %v5456 = vunpack.c.h.b16 %v4003
    %v5457 = vunpack.c.l.b16 %v4004
    %v5458 = vunpack.c.h.b16 %v4004
    %v5459 = vunpack.c.l.b16 %v4005
    %v5460 = vunpack.c.h.b16 %v4005
    %v5461 = vunpack.c.l.b16 %v4006
    %v5462 = vunpack.c.h.b16 %v4006
    %v5463 = vunpack.c.l.b16 %v4007
    %v5464 = vunpack.c.h.b16 %v4007
    %v5465 = vunpack.c.l.b16 %v4008
    %v5466 = vunpack.c.h.b16 %v4008
    %v5467 = vunpack.c.l.b16 %v4009
    %v5468 = vunpack.c.h.b16 %v4009
    %v5469 = vunpack.c.l.b16 %v4010
    %v5470 = vunpack.c.h.b16 %v4010
    %v5471 = vunpack.c.l.b16 %v4011
    %v5472 = vunpack.c.h.b16 %v4011
    %v5473 = vunpack.c.l.b16 %v4012
    %v5474 = vunpack.c.h.b16 %v4012
    %v5475 = vunpack.c.l.b16 %v4013
    %v5476 = vunpack.c.h.b16 %v4013
    %v5477 = vunpack.c.l.b16 %v4014
    %v5478 = vunpack.c.h.b16 %v4014
    %v5479 = vunpack.c.l.b16 %v4015
    %v5480 = vunpack.c.h.b16 %v4015
    %v5481 = vunpack.c.l.b16 %v4016
    %v5482 = vunpack.c.h.b16 %v4016
    %v5483 = vunpack.c.l.b16 %v4017
    %v5484 = vunpack.c.h.b16 %v4017
    %v5485 = vunpack.c.l.b16 %v4018
    %v5486 = vunpack.c.h.b16 %v4018
    %v5487 = vunpack.c.l.b16 %v4019
    %v5488 = vunpack.c.h.b16 %v4019
    %v5489 = vunpack.c.l.b16 %v4020
    %v5490 = vunpack.c.h.b16 %v4020
    %v5491 = vunpack.c.l.b16 %v4021
    %v5492 = vunpack.c.h.b16 %v4021
    %v5493 = vunpack.c.l.b16 %v4022
    %v5494 = vunpack.c.h.b16 %v4022
    %v5495 = vunpack.c.l.b16 %v4023
    %v5496 = vunpack.c.h.b16 %v4023
    %v5497 = vunpack.c.l.b16 %v4024
    %v5498 = vunpack.c.h.b16 %v4024
    %v5499 = vunpack.c.l.b16 %v4025
    %v5500 = vunpack.c.h.b16 %v4025
    %v5501 = vunpack.c.l.b16 %v4026
    %v5502 = vunpack.c.h.b16 %v4026
    %v5503 = vunpack.c.l.b16 %v4027
    %v5504 = vunpack.c.h.b16 %v4027
    %v5505 = vunpack.c.l.b16 %v4028
    %v5506 = vunpack.c.h.b16 %v4028
    %v5507 = vunpack.c.l.b16 %v4029
    %v5508 = vunpack.c.h.b16 %v4029
    %v5509 = vunpack.c.l.b16 %v4030
    %v5510 = vunpack.c.h.b16 %v4030
    %v5511 = vunpack.c.l.b16 %v4031
    %v5512 = vunpack.c.h.b16 %v4031
    %v5513 = vunpack.c.l.b16 %v4032
    %v5514 = vunpack.c.h.b16 %v4032
    %v5515 = vunpack.c.l.b16 %v4033
    %v5516 = vunpack.c.h.b16 %v4033
    %v5517 = vunpack.c.l.b16 %v4034
    %v5518 = vunpack.c.h.b16 %v4034
    %v5519 = vunpack.c.l.b16 %v4035
    %v5520 = vunpack.c.h.b16 %v4035
    %v5521 = vunpack.c.l.b16 %v4036
    %v5522 = vunpack.c.h.b16 %v4036
    %v5523 = vunpack.c.l.b16 %v4037
    %v5524 = vunpack.c.h.b16 %v4037
    %v5525 = vunpack.c.l.b16 %v4038
    %v5526 = vunpack.c.h.b16 %v4038
    %v5527 = vunpack.c.l.b16 %v4039
    %v5528 = vunpack.c.h.b16 %v4039
    %v5529 = vunpack.c.l.b16 %v4040
    %v5530 = vunpack.c.h.b16 %v4040
    %v5531 = vunpack.c.l.b16 %v4041
    %v5532 = vunpack.c.h.b16 %v4041
    %v5533 = vunpack.c.l.b16 %v4042
    %v5534 = vunpack.c.h.b16 %v4042
    %v5535 = vunpack.c.l.b16 %v4043
    %v5536 = vunpack.c.h.b16 %v4043
    %v5537 = vunpack.c.l.b16 %v4044
    %v5538 = vunpack.c.h.b16 %v4044
    %v5539 = vunpack.c.l.b16 %v4045
    %v5540 = vunpack.c.h.b16 %v4045
    %v5541 = vunpack.c.l.b16 %v4046
    %v5542 = vunpack.c.h.b16 %v4046
    %v5543 = vunpack.c.l.b16 %v4047
    %v5544 = vunpack.c.h.b16 %v4047
    %v5545 = vunpack.c.l.b16 %v4048
    %v5546 = vunpack.c.h.b16 %v4048
    %v5547 = vunpack.c.l.b16 %v4049
    %v5548 = vunpack.c.h.b16 %v4049
    %v5549 = vunpack.c.l.b16 %v4050
    %v5550 = vunpack.c.h.b16 %v4050
    %v5551 = vunpack.c.l.b16 %v4051
    %v5552 = vunpack.c.h.b16 %v4051
    %v5553 = vunpack.c.l.b16 %v4052
    %v5554 = vunpack.c.h.b16 %v4052
    %v5555 = vunpack.c.l.b16 %v4053
    %v5556 = vunpack.c.h.b16 %v4053
    %v5557 = vunpack.c.l.b16 %v4054
    %v5558 = vunpack.c.h.b16 %v4054
    %v5559 = vunpack.c.l.b16 %v4055
    %v5560 = vunpack.c.h.b16 %v4055
    %v5561 = vunpack.c.l.b16 %v4056
    %v5562 = vunpack.c.h.b16 %v4056
    %v5563 = vunpack.c.l.b16 %v4057
    %v5564 = vunpack.c.h.b16 %v4057
    %v5565 = vunpack.c.l.b16 %v4058
    %v5566 = vunpack.c.h.b16 %v4058
    %v5567 = vunpack.c.l.b16 %v4059
    %v5568 = vunpack.c.h.b16 %v4059
    %v5569 = vunpack.c.l.b16 %v4060
    %v5570 = vunpack.c.h.b16 %v4060
    %v5571 = vunpack.c.l.b16 %v4061
    %v5572 = vunpack.c.h.b16 %v4061
    %v5573 = vunpack.c.l.b16 %v4062
    %v5574 = vunpack.c.h.b16 %v4062
    %v5575 = vunpack.c.l.b16 %v4063
    %v5576 = vunpack.c.h.b16 %v4063
    %v5577 = vunpack.c.l.b16 %v4064
    %v5578 = vunpack.c.h.b16 %v4064
    %v5579 = vunpack.c.l.b16 %v4065
    %v5580 = vunpack.c.h.b16 %v4065
    %v5581 = vunpack.c.l.b16 %v4066
    %v5582 = vunpack.c.h.b16 %v4066
    %v5583 = vunpack.c.l.b16 %v4067
    %v5584 = vunpack.c.h.b16 %v4067
    %v5585 = vunpack.c.l.b16 %v4068
    %v5586 = vunpack.c.h.b16 %v4068
    %v5587 = vunpack.c.l.b16 %v4069
    %v5588 = vunpack.c.h.b16 %v4069
    %v5589 = vunpack.c.l.b16 %v4070
    %v5590 = vunpack.c.h.b16 %v4070
    %v5591 = vunpack.c.l.b16 %v4071
    %v5592 = vunpack.c.h.b16 %v4071
    %v5593 = vunpack.c.l.b16 %v4072
    %v5594 = vunpack.c.h.b16 %v4072
    %v5595 = vunpack.c.l.b16 %v4073
    %v5596 = vunpack.c.h.b16 %v4073
    %v5597 = vunpack.c.l.b16 %v4074
    %v5598 = vunpack.c.h.b16 %v4074
    %v5599 = vunpack.c.l.b16 %v4075
    %v5600 = vunpack.c.h.b16 %v4075
    %v5601 = vunpack.c.l.b16 %v4076
    %v5602 = vunpack.c.h.b16 %v4076
    %v5603 = vunpack.c.l.b16 %v4077
    %v5604 = vunpack.c.h.b16 %v4077
    %v5605 = vunpack.c.l.b16 %v4078
    %v5606 = vunpack.c.h.b16 %v4078
    %v5607 = vunpack.c.l.b16 %v4079
    %v5608 = vunpack.c.h.b16 %v4079
    %v5609 = vunpack.c.l.b16 %v4080
    %v5610 = vunpack.c.h.b16 %v4080
    %v5611 = vunpack.c.l.b16 %v4081
    %v5612 = vunpack.c.h.b16 %v4081
    %v5613 = vunpack.c.l.b16 %v4082
    %v5614 = vunpack.c.h.b16 %v4082
    %v5615 = vunpack.c.l.b16 %v4083
    %v5616 = vunpack.c.h.b16 %v4083
    %v5617 = vunpack.c.l.b16 %v4084
    %v5618 = vunpack.c.h.b16 %v4084
    %v5619 = vunpack.c.l.b16 %v4085
    %v5620 = vunpack.c.h.b16 %v4085
    %v5621 = vunpack.c.l.b16 %v4086
    %v5622 = vunpack.c.h.b16 %v4086
    %v5623 = vunpack.c.l.b16 %v4087
    %v5624 = vunpack.c.h.b16 %v4087
    %v5625 = vunpack.c.l.b16 %v4088
    %v5626 = vunpack.c.h.b16 %v4088
    %v5627 = vunpack.c.l.b16 %v4089
    %v5628 = vunpack.c.h.b16 %v4089
    %v5629 = vunpack.c.l.b16 %v4090
    %v5630 = vunpack.c.h.b16 %v4090
    %v5631 = vunpack.c.l.b16 %v4091
    %v5632 = vunpack.c.h.b16 %v4091
    %v5633 = vunpack.c.l.b16 %v4092
    %v5634 = vunpack.c.h.b16 %v4092
    %v5635 = vunpack.c.l.b16 %v4093
    %v5636 = vunpack.c.h.b16 %v4093
    %v5637 = vunpack.c.l.b16 %v4094
    %v5638 = vunpack.c.h.b16 %v4094
    %v5639 = vunpack.c.l.b16 %v4095
    %v5640 = vunpack.c.h.b16 %v4095
    %v5641 = vunpack.c.l.b16 %v4096
    %v5642 = vunpack.c.h.b16 %v4096
    %v5643 = vunpack.c.l.b16 %v4097
    %v5644 = vunpack.c.h.b16 %v4097
    %v5645 = vunpack.c.l.b16 %v4098
    %v5646 = vunpack.c.h.b16 %v4098
    %v5647 = vunpack.c.l.b16 %v4099
    %v5648 = vunpack.c.h.b16 %v4099
    %v5649 = vunpack.c.l.b16 %v4100
    %v5650 = vunpack.c.h.b16 %v4100
    %v5651 = vunpack.c.l.b16 %v4101
    %v5652 = vunpack.c.h.b16 %v4101
    %v5653 = vunpack.c.l.b16 %v4102
    %v5654 = vunpack.c.h.b16 %v4102
    %v5655 = vunpack.c.l.b16 %v4103
    %v5656 = vunpack.c.h.b16 %v4103
    %v5657 = vunpack.c.l.b16 %v4104
    %v5658 = vunpack.c.h.b16 %v4104
    %v5659 = vunpack.c.l.b16 %v4105
    %v5660 = vunpack.c.h.b16 %v4105
    %v5661 = vunpack.c.l.b16 %v4106
    %v5662 = vunpack.c.h.b16 %v4106
    %v5663 = vunpack.c.l.b16 %v4107
    %v5664 = vunpack.c.h.b16 %v4107
    %v5665 = vunpack.c.l.b16 %v4108
    %v5666 = vunpack.c.h.b16 %v4108
    %v5667 = vunpack.c.l.b16 %v4109
    %v5668 = vunpack.c.h.b16 %v4109
    %v5669 = vunpack.c.l.b16 %v4110
    %v5670 = vunpack.c.h.b16 %v4110
    %v5671 = vunpack.c.l.b16 %v4111
    %v5672 = vunpack.c.h.b16 %v4111
    %v5673 = vunpack.c.l.b16 %v4112
    %v5674 = vunpack.c.h.b16 %v4112
    %v5675 = vunpack.c.l.b16 %v4113
    %v5676 = vunpack.c.h.b16 %v4113
    %v5677 = vunpack.c.l.b16 %v4114
    %v5678 = vunpack.c.h.b16 %v4114
    %v5679 = vunpack.c.l.b16 %v4115
    %v5680 = vunpack.c.h.b16 %v4115
    %v5681 = vunpack.c.l.b16 %v4116
    %v5682 = vunpack.c.h.b16 %v4116
    %v5683 = vunpack.c.l.b16 %v4117
    %v5684 = vunpack.c.h.b16 %v4117
    %v5685 = vunpack.c.l.b16 %v4118
    %v5686 = vunpack.c.h.b16 %v4118
    %v5687 = vunpack.c.l.b16 %v4119
    %v5688 = vunpack.c.h.b16 %v4119
    %v5689 = vunpack.c.l.b16 %v4120
    %v5690 = vunpack.c.h.b16 %v4120
    %v5691 = vunpack.c.l.b16 %v4121
    %v5692 = vunpack.c.h.b16 %v4121
    %v5693 = vunpack.c.l.b16 %v4122
    %v5694 = vunpack.c.h.b16 %v4122
    %v5695 = vunpack.c.l.b16 %v4123
    %v5696 = vunpack.c.h.b16 %v4123
    %v5697 = vunpack.c.l.b16 %v4124
    %v5698 = vunpack.c.h.b16 %v4124
    %v5699 = vunpack.c.l.b16 %v4125
    %v5700 = vunpack.c.h.b16 %v4125
    %v5701 = vunpack.c.l.b16 %v4126
    %v5702 = vunpack.c.h.b16 %v4126
    %v5703 = vunpack.c.l.b16 %v4127
    %v5704 = vunpack.c.h.b16 %v4127
    %v5705 = vunpack.c.l.b16 %v4128
    %v5706 = vunpack.c.h.b16 %v4128
    %v5707 = vunpack.c.l.b16 %v4129
    %v5708 = vunpack.c.h.b16 %v4129
    %v5709 = vunpack.c.l.b16 %v4130
    %v5710 = vunpack.c.h.b16 %v4130
    %v5711 = vunpack.c.l.b16 %v4131
    %v5712 = vunpack.c.h.b16 %v4131
    %v5713 = vunpack.c.l.b16 %v4132
    %v5714 = vunpack.c.h.b16 %v4132
    %v5715 = vunpack.c.l.b16 %v4133
    %v5716 = vunpack.c.h.b16 %v4133
    %v5717 = vunpack.c.l.b16 %v4134
    %v5718 = vunpack.c.h.b16 %v4134
    %v5719 = vunpack.c.l.b16 %v4135
    %v5720 = vunpack.c.h.b16 %v4135
    %v5721 = vunpack.c.l.b16 %v4136
    %v5722 = vunpack.c.h.b16 %v4136
    %v5723 = vunpack.c.l.b16 %v4137
    %v5724 = vunpack.c.h.b16 %v4137
    %v5725 = vunpack.c.l.b16 %v4138
    %v5726 = vunpack.c.h.b16 %v4138
    %v5727 = vunpack.c.l.b16 %v4139
    %v5728 = vunpack.c.h.b16 %v4139
    %v5729 = vunpack.c.l.b16 %v4140
    %v5730 = vunpack.c.h.b16 %v4140
    %v5731 = vunpack.c.l.b16 %v4141
    %v5732 = vunpack.c.h.b16 %v4141
    %v5733 = vunpack.c.l.b16 %v4142
    %v5734 = vunpack.c.h.b16 %v4142
    %v5735 = vunpack.c.l.b16 %v4143
    %v5736 = vunpack.c.h.b16 %v4143
    %v5737 = vunpack.c.l.b16 %v4144
    %v5738 = vunpack.c.h.b16 %v4144
    %v5739 = vunpack.c.l.b16 %v4145
    %v5740 = vunpack.c.h.b16 %v4145
    %v5741 = vunpack.c.l.b16 %v4146
    %v5742 = vunpack.c.h.b16 %v4146
    %v5743 = vunpack.c.l.b16 %v4147
    %v5744 = vunpack.c.h.b16 %v4147
    %v5745 = vunpack.c.l.b16 %v4148
    %v5746 = vunpack.c.h.b16 %v4148
    %v5747 = vunpack.c.l.b16 %v4149
    %v5748 = vunpack.c.h.b16 %v4149
    %v5749 = vunpack.c.l.b16 %v4150
    %v5750 = vunpack.c.h.b16 %v4150
    %v5751 = vunpack.c.l.b16 %v4151
    %v5752 = vunpack.c.h.b16 %v4151
    %v5753 = vunpack.c.l.b16 %v4152
    %v5754 = vunpack.c.h.b16 %v4152
    %v5755 = vunpack.c.l.b16 %v4153
    %v5756 = vunpack.c.h.b16 %v4153
    %v5757 = vunpack.c.l.b16 %v4154
    %v5758 = vunpack.c.h.b16 %v4154
    %v5759 = vunpack.c.l.b16 %v4155
    %v5760 = vunpack.c.h.b16 %v4155
    %v5761 = vunpack.c.l.b16 %v4156
    %v5762 = vunpack.c.h.b16 %v4156
    %v5763 = vunpack.c.l.b16 %v4157
    %v5764 = vunpack.c.h.b16 %v4157
    %v5765 = vunpack.c.l.b16 %v4158
    %v5766 = vunpack.c.h.b16 %v4158
    %v5767 = vunpack.c.l.b16 %v4159
    %v5768 = vunpack.c.h.b16 %v4159
    %v5769 = vunpack.c.l.b16 %v4160
    %v5770 = vunpack.c.h.b16 %v4160
    %v5771 = vunpack.c.l.b16 %v4161
    %v5772 = vunpack.c.h.b16 %v4161
    %v5773 = vunpack.c.l.b16 %v4162
    %v5774 = vunpack.c.h.b16 %v4162
    %v5775 = vunpack.c.l.b16 %v4163
    %v5776 = vunpack.c.h.b16 %v4163
    %v5777 = vunpack.c.l.b16 %v4164
    %v5778 = vunpack.c.h.b16 %v4164
    %v5779 = vunpack.c.l.b16 %v4165
    %v5780 = vunpack.c.h.b16 %v4165
    %v5781 = vunpack.c.l.b16 %v4166
    %v5782 = vunpack.c.h.b16 %v4166
    %v5783 = vunpack.c.l.b16 %v4167
    %v5784 = vunpack.c.h.b16 %v4167
    %v5785 = vunpack.c.l.b16 %v4168
    %v5786 = vunpack.c.h.b16 %v4168
    %v5787 = vunpack.c.l.b16 %v4169
    %v5788 = vunpack.c.h.b16 %v4169
    %v5789 = vunpack.c.l.b16 %v4170
    %v5790 = vunpack.c.h.b16 %v4170
    %v5791 = vunpack.c.l.b16 %v4171
    %v5792 = vunpack.c.h.b16 %v4171
    %v5793 = vunpack.c.l.b16 %v4172
    %v5794 = vunpack.c.h.b16 %v4172
    %v5795 = vunpack.c.l.b16 %v4173
    %v5796 = vunpack.c.h.b16 %v4173
    %v5797 = vunpack.c.l.b16 %v4174
    %v5798 = vunpack.c.h.b16 %v4174
    %v5799 = vunpack.c.l.b16 %v4175
    %v5800 = vunpack.c.h.b16 %v4175
    %v5801 = vunpack.c.l.b16 %v4176
    %v5802 = vunpack.c.h.b16 %v4176
    %v5803 = vunpack.c.l.b16 %v4177
    %v5804 = vunpack.c.h.b16 %v4177
    %v5805 = vunpack.c.l.b16 %v4178
    %v5806 = vunpack.c.h.b16 %v4178
    %v5807 = vunpack.c.l.b16 %v4179
    %v5808 = vunpack.c.h.b16 %v4179
    %v5809 = vunpack.c.l.b16 %v4180
    %v5810 = vunpack.c.h.b16 %v4180
    %v5811 = vunpack.c.l.b16 %v4181
    %v5812 = vunpack.c.h.b16 %v4181
    %v5813 = vunpack.c.l.b16 %v4182
    %v5814 = vunpack.c.h.b16 %v4182
    %v5815 = vunpack.c.l.b16 %v4183
    %v5816 = vunpack.c.h.b16 %v4183
    %v5817 = vunpack.c.l.b16 %v4184
    %v5818 = vunpack.c.h.b16 %v4184
    %v5819 = vunpack.c.l.b16 %v4185
    %v5820 = vunpack.c.h.b16 %v4185
    %v5821 = vunpack.c.l.b16 %v4186
    %v5822 = vunpack.c.h.b16 %v4186
    %v5823 = vunpack.c.l.b16 %v4187
    %v5824 = vunpack.c.h.b16 %v4187
    %v5825 = vunpack.c.l.b16 %v4188
    %v5826 = vunpack.c.h.b16 %v4188
    %v5827 = vunpack.c.l.b16 %v4189
    %v5828 = vunpack.c.h.b16 %v4189
    %v5829 = vunpack.c.l.b16 %v4190
    %v5830 = vunpack.c.h.b16 %v4190
    %v5831 = vunpack.c.l.b16 %v4191
    %v5832 = vunpack.c.h.b16 %v4191
    %v5833 = vunpack.c.l.b16 %v4192
    %v5834 = vunpack.c.h.b16 %v4192
    %v5835 = vunpack.c.l.b16 %v4193
    %v5836 = vunpack.c.h.b16 %v4193
    %v5837 = vunpack.c.l.b16 %v4194
    %v5838 = vunpack.c.h.b16 %v4194
    %v5839 = vunpack.c.l.b16 %v4195
    %v5840 = vunpack.c.h.b16 %v4195
    %v5841 = vunpack.c.l.b16 %v4196
    %v5842 = vunpack.c.h.b16 %v4196
    %v5843 = vunpack.c.l.b16 %v4197
    %v5844 = vunpack.c.h.b16 %v4197
    %v5845 = vunpack.c.l.b16 %v4198
    %v5846 = vunpack.c.h.b16 %v4198
    %v5847 = vunpack.c.l.b16 %v4199
    %v5848 = vunpack.c.h.b16 %v4199
    %v5849 = vunpack.c.l.b16 %v4200
    %v5850 = vunpack.c.h.b16 %v4200
    %v5851 = vunpack.c.l.b16 %v4201
    %v5852 = vunpack.c.h.b16 %v4201
    %v5853 = vunpack.c.l.b16 %v4202
    %v5854 = vunpack.c.h.b16 %v4202
    %v5855 = vunpack.c.l.b16 %v4203
    %v5856 = vunpack.c.h.b16 %v4203
    %v5857 = vunpack.c.l.b16 %v4204
    %v5858 = vunpack.c.h.b16 %v4204
    %v5859 = vunpack.c.l.b16 %v4205
    %v5860 = vunpack.c.h.b16 %v4205
    %v5861 = vunpack.c.l.b16 %v4206
    %v5862 = vunpack.c.h.b16 %v4206
    %v5863 = vunpack.c.l.b16 %v4207
    %v5864 = vunpack.c.h.b16 %v4207
    %v5865 = vunpack.c.l.b16 %v4208
    %v5866 = vunpack.c.h.b16 %v4208
    %v5867 = vunpack.c.l.b16 %v4209
    %v5868 = vunpack.c.h.b16 %v4209
    %v5869 = vunpack.c.l.b16 %v4210
    %v5870 = vunpack.c.h.b16 %v4210
    %v5871 = vunpack.c.l.b16 %v4211
    %v5872 = vunpack.c.h.b16 %v4211
    %v5873 = vunpack.c.l.b16 %v4212
    %v5874 = vunpack.c.h.b16 %v4212
    %v5875 = vunpack.c.l.b16 %v4213
    %v5876 = vunpack.c.h.b16 %v4213
    %v5877 = vunpack.c.l.b16 %v4214
    %v5878 = vunpack.c.h.b16 %v4214
    %v5879 = vunpack.c.l.b16 %v4215
    %v5880 = vunpack.c.h.b16 %v4215
    %v5881 = vunpack.c.l.b16 %v4216
    %v5882 = vunpack.c.h.b16 %v4216
    %v5883 = vunpack.c.l.b16 %v4217
    %v5884 = vunpack.c.h.b16 %v4217
    %v5885 = vunpack.c.l.b16 %v4218
    %v5886 = vunpack.c.h.b16 %v4218
    %v5887 = vunpack.c.l.b16 %v4219
    %v5888 = vunpack.c.h.b16 %v4219
    %v5889 = vunpack.c.l.b16 %v4220
    %v5890 = vunpack.c.h.b16 %v4220
    %v5891 = vunpack.c.l.b16 %v4221
    %v5892 = vunpack.c.h.b16 %v4221
    %v5893 = vunpack.c.l.b16 %v4222
    %v5894 = vunpack.c.h.b16 %v4222
    %v5895 = vunpack.c.l.b16 %v4223
    %v5896 = vunpack.c.h.b16 %v4223
    %v5897 = vunpack.c.l.b16 %v4224
    %v5898 = vunpack.c.h.b16 %v4224
    %v5899 = vunpack.c.l.b16 %v4225
    %v5900 = vunpack.c.h.b16 %v4225
    %v5901 = vunpack.c.l.b16 %v4226
    %v5902 = vunpack.c.h.b16 %v4226
    %v5903 = vunpack.c.l.b16 %v4227
    %v5904 = vunpack.c.h.b16 %v4227
    %v5905 = vunpack.c.l.b16 %v4228
    %v5906 = vunpack.c.h.b16 %v4228
    %v5907 = vunpack.c.l.b16 %v4229
    %v5908 = vunpack.c.h.b16 %v4229
    %v5909 = vunpack.c.l.b16 %v4230
    %v5910 = vunpack.c.h.b16 %v4230
    %v5911 = vunpack.c.l.b16 %v4231
    %v5912 = vunpack.c.h.b16 %v4231
    %v5913 = vunpack.c.l.b16 %v4232
    %v5914 = vunpack.c.h.b16 %v4232
    %v5915 = vunpack.c.l.b16 %v4233
    %v5916 = vunpack.c.h.b16 %v4233
    %v5917 = vunpack.c.l.b16 %v4234
    %v5918 = vunpack.c.h.b16 %v4234
    %v5919 = vunpack.c.l.b16 %v4235
    %v5920 = vunpack.c.h.b16 %v4235
    %v5921 = vunpack.c.l.b16 %v4236
    %v5922 = vunpack.c.h.b16 %v4236
    %v5923 = vunpack.c.l.b16 %v4237
    %v5924 = vunpack.c.h.b16 %v4237
    %v5925 = vunpack.c.l.b16 %v4238
    %v5926 = vunpack.c.h.b16 %v4238
    %v5927 = vunpack.c.l.b16 %v4239
    %v5928 = vunpack.c.h.b16 %v4239
    %v5929 = vunpack.c.l.b16 %v4240
    %v5930 = vunpack.c.h.b16 %v4240
    %v5931 = vunpack.c.l.b16 %v4241
    %v5932 = vunpack.c.h.b16 %v4241
    %v5933 = vunpack.c.l.b16 %v4242
    %v5934 = vunpack.c.h.b16 %v4242
    %v5935 = vunpack.c.l.b16 %v4243
    %v5936 = vunpack.c.h.b16 %v4243
    %v5937 = vunpack.c.l.b16 %v4244
    %v5938 = vunpack.c.h.b16 %v4244
    %v5939 = vunpack.c.l.b16 %v4245
    %v5940 = vunpack.c.h.b16 %v4245
    %v5941 = vunpack.c.l.b16 %v4246
    %v5942 = vunpack.c.h.b16 %v4246
    %v5943 = vunpack.c.l.b16 %v4247
    %v5944 = vunpack.c.h.b16 %v4247
    %v5945 = vunpack.c.l.b16 %v4248
    %v5946 = vunpack.c.h.b16 %v4248
    %v5947 = vunpack.c.l.b16 %v4249
    %v5948 = vunpack.c.h.b16 %v4249
    %v5949 = vunpack.c.l.b16 %v4250
    %v5950 = vunpack.c.h.b16 %v4250
    %v5951 = vunpack.c.l.b16 %v4251
    %v5952 = vunpack.c.h.b16 %v4251
    %v5953 = vunpack.c.l.b16 %v4252
    %v5954 = vunpack.c.h.b16 %v4252
    %v5955 = vunpack.c.l.b16 %v4253
    %v5956 = vunpack.c.h.b16 %v4253
    %v5957 = vunpack.c.l.b16 %v4254
    %v5958 = vunpack.c.h.b16 %v4254
    %v5959 = vunpack.c.l.b16 %v4255
    %v5960 = vunpack.c.h.b16 %v4255
    %v5961 = vunpack.c.l.b16 %v4256
    %v5962 = vunpack.c.h.b16 %v4256
    %v5963 = vunpack.c.l.b16 %v4257
    %v5964 = vunpack.c.h.b16 %v4257
    %v5965 = vunpack.c.l.b16 %v4258
    %v5966 = vunpack.c.h.b16 %v4258
    %v5967 = vunpack.c.l.b16 %v4259
    %v5968 = vunpack.c.h.b16 %v4259
    %v5969 = vunpack.c.l.b16 %v4260
    %v5970 = vunpack.c.h.b16 %v4260
    %v5971 = vunpack.c.l.b16 %v4261
    %v5972 = vunpack.c.h.b16 %v4261
    %v5973 = vunpack.c.l.b16 %v4262
    %v5974 = vunpack.c.h.b16 %v4262
    %v5975 = vunpack.c.l.b16 %v4263
    %v5976 = vunpack.c.h.b16 %v4263
    %v5977 = vunpack.c.l.b16 %v4264
    %v5978 = vunpack.c.h.b16 %v4264
    %v5979 = vunpack.c.l.b16 %v4265
    %v5980 = vunpack.c.h.b16 %v4265
    %v5981 = vunpack.c.l.b16 %v4266
    %v5982 = vunpack.c.h.b16 %v4266
    %v5983 = vunpack.c.l.b16 %v4267
    %v5984 = vunpack.c.h.b16 %v4267
    %v5985 = vunpack.c.l.b16 %v4268
    %v5986 = vunpack.c.h.b16 %v4268
    %v5987 = vunpack.c.l.b16 %v4269
    %v5988 = vunpack.c.h.b16 %v4269
    %v5989 = vunpack.c.l.b16 %v4270
    %v5990 = vunpack.c.h.b16 %v4270
    %v5991 = vunpack.c.l.b16 %v4271
    %v5992 = vunpack.c.h.b16 %v4271
    %v5993 = vunpack.c.l.b16 %v4272
    %v5994 = vunpack.c.h.b16 %v4272
    %v5995 = vunpack.c.l.b16 %v4273
    %v5996 = vunpack.c.h.b16 %v4273
    %v5997 = vunpack.c.l.b16 %v4274
    %v5998 = vunpack.c.h.b16 %v4274
    %v5999 = vunpack.c.l.b16 %v4275
    %v6000 = vunpack.c.h.b16 %v4275
    %v6001 = vunpack.c.l.b16 %v4276
    %v6002 = vunpack.c.h.b16 %v4276
    %v6003 = vunpack.c.l.b16 %v4277
    %v6004 = vunpack.c.h.b16 %v4277
    %v6005 = vunpack.c.l.b16 %v4278
    %v6006 = vunpack.c.h.b16 %v4278
    %v6007 = vunpack.c.l.b16 %v4279
    %v6008 = vunpack.c.h.b16 %v4279
    %v6009 = vunpack.c.l.b16 %v4280
    %v6010 = vunpack.c.h.b16 %v4280
    %v6011 = vunpack.c.l.b16 %v4281
    %v6012 = vunpack.c.h.b16 %v4281
    %v6013 = vunpack.c.l.b16 %v4282
    %v6014 = vunpack.c.h.b16 %v4282
    %v6015 = vunpack.c.l.b16 %v4283
    %v6016 = vunpack.c.h.b16 %v4283
    %v6017 = vunpack.c.l.b16 %v4284
    %v6018 = vunpack.c.h.b16 %v4284
    %v6019 = vunpack.c.l.b16 %v4285
    %v6020 = vunpack.c.h.b16 %v4285
    %v6021 = vunpack.c.l.b16 %v4286
    %v6022 = vunpack.c.h.b16 %v4286
    %v6023 = vunpack.c.l.b16 %v4287
    %v6024 = vunpack.c.h.b16 %v4287
    %v6025 = vunpack.c.l.b16 %v4288
    %v6026 = vunpack.c.h.b16 %v4288
    %v6027 = vunpack.c.l.b16 %v4289
    %v6028 = vunpack.c.h.b16 %v4289
    %v6029 = vunpack.c.l.b16 %v4290
    %v6030 = vunpack.c.h.b16 %v4290
    %v6031 = vunpack.c.l.b16 %v4291
    %v6032 = vunpack.c.h.b16 %v4291
    %v6033 = vunpack.c.l.b16 %v4292
    %v6034 = vunpack.c.h.b16 %v4292
    %v6035 = vunpack.c.l.b16 %v4293
    %v6036 = vunpack.c.h.b16 %v4293
    %v6037 = vunpack.c.l.b16 %v4294
    %v6038 = vunpack.c.h.b16 %v4294
    %v6039 = vunpack.c.l.b16 %v4295
    %v6040 = vunpack.c.h.b16 %v4295
    %v6041 = vunpack.c.l.b16 %v4296
    %v6042 = vunpack.c.h.b16 %v4296
    %v6043 = vunpack.c.l.b16 %v4297
    %v6044 = vunpack.c.h.b16 %v4297
    %v6045 = vunpack.c.l.b16 %v4298
    %v6046 = vunpack.c.h.b16 %v4298
    %v6047 = vunpack.c.l.b16 %v4299
    %v6048 = vunpack.c.h.b16 %v4299
    %v6049 = vunpack.c.l.b16 %v4300
    %v6050 = vunpack.c.h.b16 %v4300
    %v6051 = vunpack.c.l.b16 %v4301
    %v6052 = vunpack.c.h.b16 %v4301
    %v6053 = vunpack.c.l.b16 %v4302
    %v6054 = vunpack.c.h.b16 %v4302
    %v6055 = vunpack.c.l.b16 %v4303
    %v6056 = vunpack.c.h.b16 %v4303
    %v6057 = vunpack.c.l.b16 %v4304
    %v6058 = vunpack.c.h.b16 %v4304
    %v6059 = vunpack.c.l.b16 %v4305
    %v6060 = vunpack.c.h.b16 %v4305
    %v6061 = vunpack.c.l.b16 %v4306
    %v6062 = vunpack.c.h.b16 %v4306
    %v6063 = vunpack.c.l.b16 %v4307
    %v6064 = vunpack.c.h.b16 %v4307
    %v6065 = vunpack.c.l.b16 %v4308
    %v6066 = vunpack.c.h.b16 %v4308
    %v6067 = vunpack.c.l.b16 %v4309
    %v6068 = vunpack.c.h.b16 %v4309
    %v6069 = vunpack.c.l.b16 %v4310
    %v6070 = vunpack.c.h.b16 %v4310
    %v6071 = vunpack.c.l.b16 %v4311
    %v6072 = vunpack.c.h.b16 %v4311
    %v6073 = vunpack.c.l.b16 %v4312
    %v6074 = vunpack.c.h.b16 %v4312
    %v6075 = vunpack.c.l.b16 %v4313
    %v6076 = vunpack.c.h.b16 %v4313
    %v6077 = vunpack.c.l.b16 %v4314
    %v6078 = vunpack.c.h.b16 %v4314
    %v6079 = vunpack.c.l.b16 %v4315
    %v6080 = vunpack.c.h.b16 %v4315
    %v6081 = vunpack.c.l.b16 %v4316
    %v6082 = vunpack.c.h.b16 %v4316
    %v6083 = vunpack.c.l.b16 %v4317
    %v6084 = vunpack.c.h.b16 %v4317
    %v6085 = vunpack.c.l.b16 %v4318
    %v6086 = vunpack.c.h.b16 %v4318
    %v6087 = vunpack.c.l.b16 %v4319
    %v6088 = vunpack.c.h.b16 %v4319
    %v6089 = vunpack.c.l.b16 %v4320
    %v6090 = vunpack.c.h.b16 %v4320
    %v6091 = vunpack.c.l.b16 %v4321
    %v6092 = vunpack.c.h.b16 %v4321
    %v6093 = vunpack.c.l.b16 %v4322
    %v6094 = vunpack.c.h.b16 %v4322
    %v6095 = vunpack.c.l.b16 %v4323
    %v6096 = vunpack.c.h.b16 %v4323
    %v6097 = vunpack.c.l.b16 %v4324
    %v6098 = vunpack.c.h.b16 %v4324
    %v6099 = vunpack.c.l.b16 %v4325
    %v6100 = vunpack.c.h.b16 %v4325
    %v6101 = vunpack.c.l.b16 %v4326
    %v6102 = vunpack.c.h.b16 %v4326
    %v6103 = vunpack.c.l.b16 %v4327
    %v6104 = vunpack.c.h.b16 %v4327
    %v6105 = vunpack.c.l.b16 %v4328
    %v6106 = vunpack.c.h.b16 %v4328
    %v6107 = vunpack.c.l.b16 %v4329
    %v6108 = vunpack.c.h.b16 %v4329
    %v6109 = vunpack.c.l.b16 %v4330
    %v6110 = vunpack.c.h.b16 %v4330
    %v6111 = vunpack.c.l.b16 %v4331
    %v6112 = vunpack.c.h.b16 %v4331
    %v6113 = vunpack.c.l.b16 %v4332
    %v6114 = vunpack.c.h.b16 %v4332
    %v6115 = vunpack.c.l.b16 %v4333
    %v6116 = vunpack.c.h.b16 %v4333
    %v6117 = vunpack.c.l.b16 %v4334
    %v6118 = vunpack.c.h.b16 %v4334
    %v6119 = vunpack.c.l.b16 %v4335
    %v6120 = vunpack.c.h.b16 %v4335
    %v6121 = vunpack.c.l.b16 %v4336
    %v6122 = vunpack.c.h.b16 %v4336
    %v6123 = vunpack.c.l.b16 %v4337
    %v6124 = vunpack.c.h.b16 %v4337
    %v6125 = vunpack.c.l.b16 %v4338
    %v6126 = vunpack.c.h.b16 %v4338
    %v6127 = vunpack.c.l.b16 %v4339
    %v6128 = vunpack.c.h.b16 %v4339
    %v6129 = vunpack.c.l.b16 %v4340
    %v6130 = vunpack.c.h.b16 %v4340
    %v6131 = vunpack.c.l.b16 %v4341
    %v6132 = vunpack.c.h.b16 %v4341
    %v6133 = vunpack.c.l.b16 %v4342
    %v6134 = vunpack.c.h.b16 %v4342
    %v6135 = vunpack.c.l.b16 %v4343
    %v6136 = vunpack.c.h.b16 %v4343
    %v6137 = vunpack.c.l.b16 %v4344
    %v6138 = vunpack.c.h.b16 %v4344
    %v6139 = vunpack.c.l.b16 %v4345
    %v6140 = vunpack.c.h.b16 %v4345
    %v6141 = vunpack.c.l.b16 %v4346
    %v6142 = vunpack.c.h.b16 %v4346
    %v6143 = vunpack.c.l.b16 %v4347
    %v6144 = vunpack.c.h.b16 %v4347
    %v6145 = vunpack.c.l.b16 %v4348
    %v6146 = vunpack.c.h.b16 %v4348
    %v6147 = vunpack.c.l.b16 %v4349
    %v6148 = vunpack.c.h.b16 %v4349
    %v6149 = vunpack.c.l.b16 %v4350
    %v6150 = vunpack.c.h.b16 %v4350
    %v6151 = vunpack.c.l.b16 %v4351
    %v6152 = vunpack.c.h.b16 %v4351
    %v6153 = vunpack.c.l.b16 %v4352
    %v6154 = vunpack.c.h.b16 %v4352
    %v6155 = vunpack.c.l.b16 %v4353
    %v6156 = vunpack.c.h.b16 %v4353
    %v6157 = vunpack.c.l.b16 %v4354
    %v6158 = vunpack.c.h.b16 %v4354
    %v6159 = vunpack.c.l.b16 %v4355
    %v6160 = vunpack.c.h.b16 %v4355
    %v6161 = vunpack.c.l.b16 %v4356
    %v6162 = vunpack.c.h.b16 %v4356
    %v6163 = vunpack.c.l.b16 %v4357
    %v6164 = vunpack.c.h.b16 %v4357
    %v6165 = vunpack.c.l.b16 %v4358
    %v6166 = vunpack.c.h.b16 %v4358
    %v6167 = vunpack.c.l.b16 %v4359
    %v6168 = vunpack.c.h.b16 %v4359
    %v6169 = vunpack.c.l.b16 %v4360
    %v6170 = vunpack.c.h.b16 %v4360
    %v6171 = vunpack.c.l.b16 %v4361
    %v6172 = vunpack.c.h.b16 %v4361
    %v6173 = vunpack.c.l.b16 %v4362
    %v6174 = vunpack.c.h.b16 %v4362
    %v6175 = vunpack.c.l.b16 %v4363
    %v6176 = vunpack.c.h.b16 %v4363
    %v6177 = vunpack.c.l.b16 %v4364
    %v6178 = vunpack.c.h.b16 %v4364
    %v6179 = vunpack.c.l.b16 %v4365
    %v6180 = vunpack.c.h.b16 %v4365
    %v6181 = vunpack.c.l.b16 %v4366
    %v6182 = vunpack.c.h.b16 %v4366
    %v6183 = vunpack.c.l.b16 %v4367
    %v6184 = vunpack.c.h.b16 %v4367
    %v6185 = vunpack.c.l.b16 %v4368
    %v6186 = vunpack.c.h.b16 %v4368
    %v6187 = vunpack.c.l.b16 %v4369
    %v6188 = vunpack.c.h.b16 %v4369
    %v6189 = vunpack.c.l.b16 %v4370
    %v6190 = vunpack.c.h.b16 %v4370
    %v6191 = vunpack.c.l.b16 %v4371
    %v6192 = vunpack.c.h.b16 %v4371
    %v6193 = vunpack.c.l.b16 %v4372
    %v6194 = vunpack.c.h.b16 %v4372
    %v6195 = vunpack.c.l.b16 %v4373
    %v6196 = vunpack.c.h.b16 %v4373
    %v6197 = vunpack.c.l.b16 %v4374
    %v6198 = vunpack.c.h.b16 %v4374
    %v6199 = vunpack.c.l.b16 %v4375
    %v6200 = vunpack.c.h.b16 %v4375
    %v6201 = vunpack.c.l.b16 %v4376
    %v6202 = vunpack.c.h.b16 %v4376
    %v6203 = vunpack.c.l.b16 %v4377
    %v6204 = vunpack.c.h.b16 %v4377
    %v6205 = vunpack.c.l.b16 %v4378
    %v6206 = vunpack.c.h.b16 %v4378
    %v6207 = vunpack.c.l.b16 %v4379
    %v6208 = vunpack.c.h.b16 %v4379
    %v6209 = vunpack.c.l.b16 %v4380
    %v6210 = vunpack.c.h.b16 %v4380
    %v6211 = vunpack.c.l.b16 %v4381
    %v6212 = vunpack.c.h.b16 %v4381
    %v6213 = vunpack.c.l.b16 %v4382
    %v6214 = vunpack.c.h.b16 %v4382
    %v6215 = vunpack.c.l.b16 %v4383
    %v6216 = vunpack.c.h.b16 %v4383
    %v6217 = vunpack.c.l.b16 %v4384
    %v6218 = vunpack.c.h.b16 %v4384
    %v6219 = vunpack.c.l.b16 %v4385
    %v6220 = vunpack.c.h.b16 %v4385
    %v6221 = vunpack.c.l.b16 %v4386
    %v6222 = vunpack.c.h.b16 %v4386
    %v6223 = vunpack.c.l.b16 %v4387
    %v6224 = vunpack.c.h.b16 %v4387
    %v6225 = vunpack.c.l.b16 %v4388
    %v6226 = vunpack.c.h.b16 %v4388
    %v6227 = vunpack.c.l.b16 %v4389
    %v6228 = vunpack.c.h.b16 %v4389
    %v6229 = vunpack.c.l.b16 %v4390
    %v6230 = vunpack.c.h.b16 %v4390
    %v6231 = vunpack.c.l.b16 %v4391
    %v6232 = vunpack.c.h.b16 %v4391
    %v6233 = vunpack.c.l.b16 %v4392
    %v6234 = vunpack.c.h.b16 %v4392
    %v6235 = vunpack.c.l.b16 %v4393
    %v6236 = vunpack.c.h.b16 %v4393
    %v6237 = vunpack.c.l.b16 %v4394
    %v6238 = vunpack.c.h.b16 %v4394
    %v6239 = vunpack.c.l.b16 %v4395
    %v6240 = vunpack.c.h.b16 %v4395
    %v6241 = vunpack.c.l.b16 %v4396
    %v6242 = vunpack.c.h.b16 %v4396
    %v6243 = vunpack.c.l.b16 %v4397
    %v6244 = vunpack.c.h.b16 %v4397
    %v6245 = vunpack.c.l.b16 %v4398
    %v6246 = vunpack.c.h.b16 %v4398
    %v6247 = vunpack.c.l.b16 %v4399
    %v6248 = vunpack.c.h.b16 %v4399
    %v6249 = vunpack.c.l.b16 %v4400
    %v6250 = vunpack.c.h.b16 %v4400
    %v6251 = vunpack.c.l.b16 %v4401
    %v6252 = vunpack.c.h.b16 %v4401
    %v6253 = vunpack.c.l.b16 %v4402
    %v6254 = vunpack.c.h.b16 %v4402
    %v6255 = vunpack.c.l.b16 %v4403
    %v6256 = vunpack.c.h.b16 %v4403
    %v6257 = vunpack.c.l.b16 %v4404
    %v6258 = vunpack.c.h.b16 %v4404
    %v6259 = vunpack.c.l.b16 %v4405
    %v6260 = vunpack.c.h.b16 %v4405
    %v6261 = vunpack.c.l.b16 %v4406
    %v6262 = vunpack.c.h.b16 %v4406
    %v6263 = vunpack.c.l.b16 %v4407
    %v6264 = vunpack.c.h.b16 %v4407
    %v6265 = vunpack.c.l.b16 %v4408
    %v6266 = vunpack.c.h.b16 %v4408
    %v6267 = vunpack.c.l.b16 %v4409
    %v6268 = vunpack.c.h.b16 %v4409
    %v6269 = vunpack.c.l.b16 %v4410
    %v6270 = vunpack.c.h.b16 %v4410
    %v6271 = vunpack.c.l.b16 %v4411
    %v6272 = vunpack.c.h.b16 %v4411
    %v6273 = vunpack.c.l.b16 %v4412
    %v6274 = vunpack.c.h.b16 %v4412
    %v6275 = vunpack.c.l.b16 %v4413
    %v6276 = vunpack.c.h.b16 %v4413
    %v6277 = vunpack.c.l.b16 %v4414
    %v6278 = vunpack.c.h.b16 %v4414
    %v6279 = vunpack.c.l.b16 %v4415
    %v6280 = vunpack.c.h.b16 %v4415
    %v6281 = vunpack.c.l.b16 %v4416
    %v6282 = vunpack.c.h.b16 %v4416
    %v6283 = vunpack.c.l.b16 %v4417
    %v6284 = vunpack.c.h.b16 %v4417
    %v6285 = vunpack.c.l.b16 %v4418
    %v6286 = vunpack.c.h.b16 %v4418
    %v6287 = vunpack.c.l.b16 %v4419
    %v6288 = vunpack.c.h.b16 %v4419
    %v6289 = vunpack.c.l.b16 %v4420
    %v6290 = vunpack.c.h.b16 %v4420
    %v6291 = vunpack.c.l.b16 %v4421
    %v6292 = vunpack.c.h.b16 %v4421
    %v6293 = vunpack.c.l.b16 %v4422
    %v6294 = vunpack.c.h.b16 %v4422
    %v6295 = vunpack.c.l.b16 %v4423
    %v6296 = vunpack.c.h.b16 %v4423
    %v6297 = vunpack.c.l.b16 %v4424
    %v6298 = vunpack.c.h.b16 %v4424
    %v6299 = vunpack.c.l.b16 %v4425
    %v6300 = vunpack.c.h.b16 %v4425
    %v6301 = vunpack.c.l.b16 %v4426
    %v6302 = vunpack.c.h.b16 %v4426
    %v6303 = vunpack.c.l.b16 %v4427
    %v6304 = vunpack.c.h.b16 %v4427
    %v6305 = vunpack.c.l.b16 %v4428
    %v6306 = vunpack.c.h.b16 %v4428
    %v6307 = vpack.c.b16 %v5287, %v5283
    %v6308 = vpack.c.b16 %v5288, %v5284
    %v6309 = vpack.c.b16 %v5289, %v5285
    %v6310 = vpack.c.b16 %v5290, %v5286
    %v6311 = vpack.c.b16 %v5295, %v5291
    %v6312 = vpack.c.b16 %v5296, %v5292
    %v6313 = vpack.c.b16 %v5297, %v5293
    %v6314 = vpack.c.b16 %v5298, %v5294
    %v6315 = vpack.c.b16 %v5303, %v5299
    %v6316 = vpack.c.b16 %v5304, %v5300
    %v6317 = vpack.c.b16 %v5305, %v5301
    %v6318 = vpack.c.b16 %v5306, %v5302
    %v6319 = vpack.c.b16 %v5311, %v5307
    %v6320 = vpack.c.b16 %v5312, %v5308
    %v6321 = vpack.c.b16 %v5313, %v5309
    %v6322 = vpack.c.b16 %v5314, %v5310
    %v6323 = vpack.c.b16 %v5319, %v5315
    %v6324 = vpack.c.b16 %v5320, %v5316
    %v6325 = vpack.c.b16 %v5321, %v5317
    %v6326 = vpack.c.b16 %v5322, %v5318
    %v6327 = vpack.c.b16 %v5327, %v5323
    %v6328 = vpack.c.b16 %v5328, %v5324
    %v6329 = vpack.c.b16 %v5329, %v5325
    %v6330 = vpack.c.b16 %v5330, %v5326
    %v6331 = vpack.c.b16 %v5335, %v5331
    %v6332 = vpack.c.b16 %v5336, %v5332
    %v6333 = vpack.c.b16 %v5337, %v5333
    %v6334 = vpack.c.b16 %v5338, %v5334
    %v6335 = vpack.c.b16 %v5343, %v5339
    %v6336 = vpack.c.b16 %v5344, %v5340
    %v6337 = vpack.c.b16 %v5345, %v5341
    %v6338 = vpack.c.b16 %v5346, %v5342
    %v6339 = vpack.c.b16 %v5351, %v5347
    %v6340 = vpack.c.b16 %v5352, %v5348
    %v6341 = vpack.c.b16 %v5353, %v5349
    %v6342 = vpack.c.b16 %v5354, %v5350
    %v6343 = vpack.c.b16 %v5359, %v5355
    %v6344 = vpack.c.b16 %v5360, %v5356
    %v6345 = vpack.c.b16 %v5361, %v5357
    %v6346 = vpack.c.b16 %v5362, %v5358
    %v6347 = vpack.c.b16 %v5367, %v5363
    %v6348 = vpack.c.b16 %v5368, %v5364
    %v6349 = vpack.c.b16 %v5369, %v5365
    %v6350 = vpack.c.b16 %v5370, %v5366
    %v6351 = vpack.c.b16 %v5375, %v5371
    %v6352 = vpack.c.b16 %v5376, %v5372
    %v6353 = vpack.c.b16 %v5377, %v5373
    %v6354 = vpack.c.b16 %v5378, %v5374
    %v6355 = vpack.c.b16 %v5383, %v5379
    %v6356 = vpack.c.b16 %v5384, %v5380
    %v6357 = vpack.c.b16 %v5385, %v5381
    %v6358 = vpack.c.b16 %v5386, %v5382
    %v6359 = vpack.c.b16 %v5391, %v5387
    %v6360 = vpack.c.b16 %v5392, %v5388
    %v6361 = vpack.c.b16 %v5393, %v5389
    %v6362 = vpack.c.b16 %v5394, %v5390
    %v6363 = vpack.c.b16 %v5399, %v5395
    %v6364 = vpack.c.b16 %v5400, %v5396
    %v6365 = vpack.c.b16 %v5401, %v5397
    %v6366 = vpack.c.b16 %v5402, %v5398
    %v6367 = vpack.c.b16 %v5407, %v5403
    %v6368 = vpack.c.b16 %v5408, %v5404
    %v6369 = vpack.c.b16 %v5409, %v5405
    %v6370 = vpack.c.b16 %v5410, %v5406
    %v6371 = vpack.c.b16 %v5415, %v5411
    %v6372 = vpack.c.b16 %v5416, %v5412
    %v6373 = vpack.c.b16 %v5417, %v5413
    %v6374 = vpack.c.b16 %v5418, %v5414
    %v6375 = vpack.c.b16 %v5423, %v5419
    %v6376 = vpack.c.b16 %v5424, %v5420
    %v6377 = vpack.c.b16 %v5425, %v5421
    %v6378 = vpack.c.b16 %v5426, %v5422
    %v6379 = vpack.c.b16 %v5431, %v5427
    %v6380 = vpack.c.b16 %v5432, %v5428
    %v6381 = vpack.c.b16 %v5433, %v5429
    %v6382 = vpack.c.b16 %v5434, %v5430
    %v6383 = vpack.c.b16 %v5439, %v5435
    %v6384 = vpack.c.b16 %v5440, %v5436
    %v6385 = vpack.c.b16 %v5441, %v5437
    %v6386 = vpack.c.b16 %v5442, %v5438
    %v6387 = vpack.c.b16 %v5447, %v5443
    %v6388 = vpack.c.b16 %v5448, %v5444
    %v6389 = vpack.c.b16 %v5449, %v5445
    %v6390 = vpack.c.b16 %v5450, %v5446
    %v6391 = vpack.c.b16 %v5455, %v5451
    %v6392 = vpack.c.b16 %v5456, %v5452
    %v6393 = vpack.c.b16 %v5457, %v5453
    %v6394 = vpack.c.b16 %v5458, %v5454
    %v6395 = vpack.c.b16 %v5463, %v5459
    %v6396 = vpack.c.b16 %v5464, %v5460
    %v6397 = vpack.c.b16 %v5465, %v5461
    %v6398 = vpack.c.b16 %v5466, %v5462
    %v6399 = vpack.c.b16 %v5471, %v5467
    %v6400 = vpack.c.b16 %v5472, %v5468
    %v6401 = vpack.c.b16 %v5473, %v5469
    %v6402 = vpack.c.b16 %v5474, %v5470
    %v6403 = vpack.c.b16 %v5479, %v5475
    %v6404 = vpack.c.b16 %v5480, %v5476
    %v6405 = vpack.c.b16 %v5481, %v5477
    %v6406 = vpack.c.b16 %v5482, %v5478
    %v6407 = vpack.c.b16 %v5487, %v5483
    %v6408 = vpack.c.b16 %v5488, %v5484
    %v6409 = vpack.c.b16 %v5489, %v5485
    %v6410 = vpack.c.b16 %v5490, %v5486
    %v6411 = vpack.c.b16 %v5495, %v5491
    %v6412 = vpack.c.b16 %v5496, %v5492
    %v6413 = vpack.c.b16 %v5497, %v5493
    %v6414 = vpack.c.b16 %v5498, %v5494
    %v6415 = vpack.c.b16 %v5503, %v5499
    %v6416 = vpack.c.b16 %v5504, %v5500
    %v6417 = vpack.c.b16 %v5505, %v5501
    %v6418 = vpack.c.b16 %v5506, %v5502
    %v6419 = vpack.c.b16 %v5511, %v5507
    %v6420 = vpack.c.b16 %v5512, %v5508
    %v6421 = vpack.c.b16 %v5513, %v5509
    %v6422 = vpack.c.b16 %v5514, %v5510
    %v6423 = vpack.c.b16 %v5519, %v5515
    %v6424 = vpack.c.b16 %v5520, %v5516
    %v6425 = vpack.c.b16 %v5521, %v5517
    %v6426 = vpack.c.b16 %v5522, %v5518
    %v6427 = vpack.c.b16 %v5527, %v5523
    %v6428 = vpack.c.b16 %v5528, %v5524
    %v6429 = vpack.c.b16 %v5529, %v5525
    %v6430 = vpack.c.b16 %v5530, %v5526
    %v6431 = vpack.c.b16 %v5535, %v5531
    %v6432 = vpack.c.b16 %v5536, %v5532
    %v6433 = vpack.c.b16 %v5537, %v5533
    %v6434 = vpack.c.b16 %v5538, %v5534
    %v6435 = vpack.c.b16 %v5543, %v5539
    %v6436 = vpack.c.b16 %v5544, %v5540
    %v6437 = vpack.c.b16 %v5545, %v5541
    %v6438 = vpack.c.b16 %v5546, %v5542
    %v6439 = vpack.c.b16 %v5551, %v5547
    %v6440 = vpack.c.b16 %v5552, %v5548
    %v6441 = vpack.c.b16 %v5553, %v5549
    %v6442 = vpack.c.b16 %v5554, %v5550
    %v6443 = vpack.c.b16 %v5559, %v5555
    %v6444 = vpack.c.b16 %v5560, %v5556
    %v6445 = vpack.c.b16 %v5561, %v5557
    %v6446 = vpack.c.b16 %v5562, %v5558
    %v6447 = vpack.c.b16 %v5567, %v5563
    %v6448 = vpack.c.b16 %v5568, %v5564
    %v6449 = vpack.c.b16 %v5569, %v5565
    %v6450 = vpack.c.b16 %v5570, %v5566
    %v6451 = vpack.c.b16 %v5575, %v5571
    %v6452 = vpack.c.b16 %v5576, %v5572
    %v6453 = vpack.c.b16 %v5577, %v5573
    %v6454 = vpack.c.b16 %v5578, %v5574
    %v6455 = vpack.c.b16 %v5583, %v5579
    %v6456 = vpack.c.b16 %v5584, %v5580
    %v6457 = vpack.c.b16 %v5585, %v5581
    %v6458 = vpack.c.b16 %v5586, %v5582
    %v6459 = vpack.c.b16 %v5591, %v5587
    %v6460 = vpack.c.b16 %v5592, %v5588
    %v6461 = vpack.c.b16 %v5593, %v5589
    %v6462 = vpack.c.b16 %v5594, %v5590
    %v6463 = vpack.c.b16 %v5599, %v5595
    %v6464 = vpack.c.b16 %v5600, %v5596
    %v6465 = vpack.c.b16 %v5601, %v5597
    %v6466 = vpack.c.b16 %v5602, %v5598
    %v6467 = vpack.c.b16 %v5607, %v5603
    %v6468 = vpack.c.b16 %v5608, %v5604
    %v6469 = vpack.c.b16 %v5609, %v5605
    %v6470 = vpack.c.b16 %v5610, %v5606
    %v6471 = vpack.c.b16 %v5615, %v5611
    %v6472 = vpack.c.b16 %v5616, %v5612
    %v6473 = vpack.c.b16 %v5617, %v5613
    %v6474 = vpack.c.b16 %v5618, %v5614
    %v6475 = vpack.c.b16 %v5623, %v5619
    %v6476 = vpack.c.b16 %v5624, %v5620
    %v6477 = vpack.c.b16 %v5625, %v5621
    %v6478 = vpack.c.b16 %v5626, %v5622
    %v6479 = vpack.c.b16 %v5631, %v5627
    %v6480 = vpack.c.b16 %v5632, %v5628
    %v6481 = vpack.c.b16 %v5633, %v5629
    %v6482 = vpack.c.b16 %v5634, %v5630
    %v6483 = vpack.c.b16 %v5639, %v5635
    %v6484 = vpack.c.b16 %v5640, %v5636
    %v6485 = vpack.c.b16 %v5641, %v5637
    %v6486 = vpack.c.b16 %v5642, %v5638
    %v6487 = vpack.c.b16 %v5647, %v5643
    %v6488 = vpack.c.b16 %v5648, %v5644
    %v6489 = vpack.c.b16 %v5649, %v5645
    %v6490 = vpack.c.b16 %v5650, %v5646
    %v6491 = vpack.c.b16 %v5655, %v5651
    %v6492 = vpack.c.b16 %v5656, %v5652
    %v6493 = vpack.c.b16 %v5657, %v5653
    %v6494 = vpack.c.b16 %v5658, %v5654
    %v6495 = vpack.c.b16 %v5663, %v5659
    %v6496 = vpack.c.b16 %v5664, %v5660
    %v6497 = vpack.c.b16 %v5665, %v5661
    %v6498 = vpack.c.b16 %v5666, %v5662
    %v6499 = vpack.c.b16 %v5671, %v5667
    %v6500 = vpack.c.b16 %v5672, %v5668
    %v6501 = vpack.c.b16 %v5673, %v5669
    %v6502 = vpack.c.b16 %v5674, %v5670
    %v6503 = vpack.c.b16 %v5679, %v5675
    %v6504 = vpack.c.b16 %v5680, %v5676
    %v6505 = vpack.c.b16 %v5681, %v5677
    %v6506 = vpack.c.b16 %v5682, %v5678
    %v6507 = vpack.c.b16 %v5687, %v5683
    %v6508 = vpack.c.b16 %v5688, %v5684
    %v6509 = vpack.c.b16 %v5689, %v5685
    %v6510 = vpack.c.b16 %v5690, %v5686
    %v6511 = vpack.c.b16 %v5695, %v5691
    %v6512 = vpack.c.b16 %v5696, %v5692
    %v6513 = vpack.c.b16 %v5697, %v5693
    %v6514 = vpack.c.b16 %v5698, %v5694
    %v6515 = vpack.c.b16 %v5703, %v5699
    %v6516 = vpack.c.b16 %v5704, %v5700
    %v6517 = vpack.c.b16 %v5705, %v5701
    %v6518 = vpack.c.b16 %v5706, %v5702
    %v6519 = vpack.c.b16 %v5711, %v5707
    %v6520 = vpack.c.b16 %v5712, %v5708
    %v6521 = vpack.c.b16 %v5713, %v5709
    %v6522 = vpack.c.b16 %v5714, %v5710
    %v6523 = vpack.c.b16 %v5719, %v5715
    %v6524 = vpack.c.b16 %v5720, %v5716
    %v6525 = vpack.c.b16 %v5721, %v5717
    %v6526 = vpack.c.b16 %v5722, %v5718
    %v6527 = vpack.c.b16 %v5727, %v5723
    %v6528 = vpack.c.b16 %v5728, %v5724
    %v6529 = vpack.c.b16 %v5729, %v5725
    %v6530 = vpack.c.b16 %v5730, %v5726
    %v6531 = vpack.c.b16 %v5735, %v5731
    %v6532 = vpack.c.b16 %v5736, %v5732
    %v6533 = vpack.c.b16 %v5737, %v5733
    %v6534 = vpack.c.b16 %v5738, %v5734
    %v6535 = vpack.c.b16 %v5743, %v5739
    %v6536 = vpack.c.b16 %v5744, %v5740
    %v6537 = vpack.c.b16 %v5745, %v5741
    %v6538 = vpack.c.b16 %v5746, %v5742
    %v6539 = vpack.c.b16 %v5751, %v5747
    %v6540 = vpack.c.b16 %v5752, %v5748
    %v6541 = vpack.c.b16 %v5753, %v5749
    %v6542 = vpack.c.b16 %v5754, %v5750
    %v6543 = vpack.c.b16 %v5759, %v5755
    %v6544 = vpack.c.b16 %v5760, %v5756
    %v6545 = vpack.c.b16 %v5761, %v5757
    %v6546 = vpack.c.b16 %v5762, %v5758
    %v6547 = vpack.c.b16 %v5767, %v5763
    %v6548 = vpack.c.b16 %v5768, %v5764
    %v6549 = vpack.c.b16 %v5769, %v5765
    %v6550 = vpack.c.b16 %v5770, %v5766
    %v6551 = vpack.c.b16 %v5775, %v5771
    %v6552 = vpack.c.b16 %v5776, %v5772
    %v6553 = vpack.c.b16 %v5777, %v5773
    %v6554 = vpack.c.b16 %v5778, %v5774
    %v6555 = vpack.c.b16 %v5783, %v5779
    %v6556 = vpack.c.b16 %v5784, %v5780
    %v6557 = vpack.c.b16 %v5785, %v5781
    %v6558 = vpack.c.b16 %v5786, %v5782
    %v6559 = vpack.c.b16 %v5791, %v5787
    %v6560 = vpack.c.b16 %v5792, %v5788
    %v6561 = vpack.c.b16 %v5793, %v5789
    %v6562 = vpack.c.b16 %v5794, %v5790
    %v6563 = vpack.c.b16 %v5799, %v5795
    %v6564 = vpack.c.b16 %v5800, %v5796
    %v6565 = vpack.c.b16 %v5801, %v5797
    %v6566 = vpack.c.b16 %v5802, %v5798
    %v6567 = vpack.c.b16 %v5807, %v5803
    %v6568 = vpack.c.b16 %v5808, %v5804
    %v6569 = vpack.c.b16 %v5809, %v5805
    %v6570 = vpack.c.b16 %v5810, %v5806
    %v6571 = vpack.c.b16 %v5815, %v5811
    %v6572 = vpack.c.b16 %v5816, %v5812
    %v6573 = vpack.c.b16 %v5817, %v5813
    %v6574 = vpack.c.b16 %v5818, %v5814
    %v6575 = vpack.c.b16 %v5823, %v5819
    %v6576 = vpack.c.b16 %v5824, %v5820
    %v6577 = vpack.c.b16 %v5825, %v5821
    %v6578 = vpack.c.b16 %v5826, %v5822
    %v6579 = vpack.c.b16 %v5831, %v5827
    %v6580 = vpack.c.b16 %v5832, %v5828
    %v6581 = vpack.c.b16 %v5833, %v5829
    %v6582 = vpack.c.b16 %v5834, %v5830
    %v6583 = vpack.c.b16 %v5839, %v5835
    %v6584 = vpack.c.b16 %v5840, %v5836
    %v6585 = vpack.c.b16 %v5841, %v5837
    %v6586 = vpack.c.b16 %v5842, %v5838
    %v6587 = vpack.c.b16 %v5847, %v5843
    %v6588 = vpack.c.b16 %v5848, %v5844
    %v6589 = vpack.c.b16 %v5849, %v5845
    %v6590 = vpack.c.b16 %v5850, %v5846
    %v6591 = vpack.c.b16 %v5855, %v5851
    %v6592 = vpack.c.b16 %v5856, %v5852
    %v6593 = vpack.c.b16 %v5857, %v5853
    %v6594 = vpack.c.b16 %v5858, %v5854
    %v6595 = vpack.c.b16 %v5863, %v5859
    %v6596 = vpack.c.b16 %v5864, %v5860
    %v6597 = vpack.c.b16 %v5865, %v5861
    %v6598 = vpack.c.b16 %v5866, %v5862
    %v6599 = vpack.c.b16 %v5871, %v5867
    %v6600 = vpack.c.b16 %v5872, %v5868
    %v6601 = vpack.c.b16 %v5873, %v5869
    %v6602 = vpack.c.b16 %v5874, %v5870
    %v6603 = vpack.c.b16 %v5879, %v5875
    %v6604 = vpack.c.b16 %v5880, %v5876
    %v6605 = vpack.c.b16 %v5881, %v5877
    %v6606 = vpack.c.b16 %v5882, %v5878
    %v6607 = vpack.c.b16 %v5887, %v5883
    %v6608 = vpack.c.b16 %v5888, %v5884
    %v6609 = vpack.c.b16 %v5889, %v5885
    %v6610 = vpack.c.b16 %v5890, %v5886
    %v6611 = vpack.c.b16 %v5895, %v5891
    %v6612 = vpack.c.b16 %v5896, %v5892
    %v6613 = vpack.c.b16 %v5897, %v5893
    %v6614 = vpack.c.b16 %v5898, %v5894
    %v6615 = vpack.c.b16 %v5903, %v5899
    %v6616 = vpack.c.b16 %v5904, %v5900
    %v6617 = vpack.c.b16 %v5905, %v5901
    %v6618 = vpack.c.b16 %v5906, %v5902
    %v6619 = vpack.c.b16 %v5911, %v5907
    %v6620 = vpack.c.b16 %v5912, %v5908
    %v6621 = vpack.c.b16 %v5913, %v5909
    %v6622 = vpack.c.b16 %v5914, %v5910
    %v6623 = vpack.c.b16 %v5919, %v5915
    %v6624 = vpack.c.b16 %v5920, %v5916
    %v6625 = vpack.c.b16 %v5921, %v5917
    %v6626 = vpack.c.b16 %v5922, %v5918
    %v6627 = vpack.c.b16 %v5927, %v5923
    %v6628 = vpack.c.b16 %v5928, %v5924
    %v6629 = vpack.c.b16 %v5929, %v5925
    %v6630 = vpack.c.b16 %v5930, %v5926
    %v6631 = vpack.c.b16 %v5935, %v5931
    %v6632 = vpack.c.b16 %v5936, %v5932
    %v6633 = vpack.c.b16 %v5937, %v5933
    %v6634 = vpack.c.b16 %v5938, %v5934
    %v6635 = vpack.c.b16 %v5943, %v5939
    %v6636 = vpack.c.b16 %v5944, %v5940
    %v6637 = vpack.c.b16 %v5945, %v5941
    %v6638 = vpack.c.b16 %v5946, %v5942
    %v6639 = vpack.c.b16 %v5951, %v5947
    %v6640 = vpack.c.b16 %v5952, %v5948
    %v6641 = vpack.c.b16 %v5953, %v5949
    %v6642 = vpack.c.b16 %v5954, %v5950
    %v6643 = vpack.c.b16 %v5959, %v5955
    %v6644 = vpack.c.b16 %v5960, %v5956
    %v6645 = vpack.c.b16 %v5961, %v5957
    %v6646 = vpack.c.b16 %v5962, %v5958
    %v6647 = vpack.c.b16 %v5967, %v5963
    %v6648 = vpack.c.b16 %v5968, %v5964
    %v6649 = vpack.c.b16 %v5969, %v5965
    %v6650 = vpack.c.b16 %v5970, %v5966
    %v6651 = vpack.c.b16 %v5975, %v5971
    %v6652 = vpack.c.b16 %v5976, %v5972
    %v6653 = vpack.c.b16 %v5977, %v5973
    %v6654 = vpack.c.b16 %v5978, %v5974
    %v6655 = vpack.c.b16 %v5983, %v5979
    %v6656 = vpack.c.b16 %v5984, %v5980
    %v6657 = vpack.c.b16 %v5985, %v5981
    %v6658 = vpack.c.b16 %v5986, %v5982
    %v6659 = vpack.c.b16 %v5991, %v5987
    %v6660 = vpack.c.b16 %v5992, %v5988
    %v6661 = vpack.c.b16 %v5993, %v5989
    %v6662 = vpack.c.b16 %v5994, %v5990
    %v6663 = vpack.c.b16 %v5999, %v5995
    %v6664 = vpack.c.b16 %v6000, %v5996
    %v6665 = vpack.c.b16 %v6001, %v5997
    %v6666 = vpack.c.b16 %v6002, %v5998
    %v6667 = vpack.c.b16 %v6007, %v6003
    %v6668 = vpack.c.b16 %v6008, %v6004
    %v6669 = vpack.c.b16 %v6009, %v6005
    %v6670 = vpack.c.b16 %v6010, %v6006
    %v6671 = vpack.c.b16 %v6015, %v6011
    %v6672 = vpack.c.b16 %v6016, %v6012
    %v6673 = vpack.c.b16 %v6017, %v6013
    %v6674 = vpack.c.b16 %v6018, %v6014
    %v6675 = vpack.c.b16 %v6023, %v6019
    %v6676 = vpack.c.b16 %v6024, %v6020
    %v6677 = vpack.c.b16 %v6025, %v6021
    %v6678 = vpack.c.b16 %v6026, %v6022
    %v6679 = vpack.c.b16 %v6031, %v6027
    %v6680 = vpack.c.b16 %v6032, %v6028
    %v6681 = vpack.c.b16 %v6033, %v6029
    %v6682 = vpack.c.b16 %v6034, %v6030
    %v6683 = vpack.c.b16 %v6039, %v6035
    %v6684 = vpack.c.b16 %v6040, %v6036
    %v6685 = vpack.c.b16 %v6041, %v6037
    %v6686 = vpack.c.b16 %v6042, %v6038
    %v6687 = vpack.c.b16 %v6047, %v6043
    %v6688 = vpack.c.b16 %v6048, %v6044
    %v6689 = vpack.c.b16 %v6049, %v6045
    %v6690 = vpack.c.b16 %v6050, %v6046
    %v6691 = vpack.c.b16 %v6055, %v6051
    %v6692 = vpack.c.b16 %v6056, %v6052
    %v6693 = vpack.c.b16 %v6057, %v6053
    %v6694 = vpack.c.b16 %v6058, %v6054
    %v6695 = vpack.c.b16 %v6063, %v6059
    %v6696 = vpack.c.b16 %v6064, %v6060
    %v6697 = vpack.c.b16 %v6065, %v6061
    %v6698 = vpack.c.b16 %v6066, %v6062
    %v6699 = vpack.c.b16 %v6071, %v6067
    %v6700 = vpack.c.b16 %v6072, %v6068
    %v6701 = vpack.c.b16 %v6073, %v6069
    %v6702 = vpack.c.b16 %v6074, %v6070
    %v6703 = vpack.c.b16 %v6079, %v6075
    %v6704 = vpack.c.b16 %v6080, %v6076
    %v6705 = vpack.c.b16 %v6081, %v6077
    %v6706 = vpack.c.b16 %v6082, %v6078
    %v6707 = vpack.c.b16 %v6087, %v6083
    %v6708 = vpack.c.b16 %v6088, %v6084
    %v6709 = vpack.c.b16 %v6089, %v6085
    %v6710 = vpack.c.b16 %v6090, %v6086
    %v6711 = vpack.c.b16 %v6095, %v6091
    %v6712 = vpack.c.b16 %v6096, %v6092
    %v6713 = vpack.c.b16 %v6097, %v6093
    %v6714 = vpack.c.b16 %v6098, %v6094
    %v6715 = vpack.c.b16 %v6103, %v6099
    %v6716 = vpack.c.b16 %v6104, %v6100
    %v6717 = vpack.c.b16 %v6105, %v6101
    %v6718 = vpack.c.b16 %v6106, %v6102
    %v6719 = vpack.c.b16 %v6111, %v6107
    %v6720 = vpack.c.b16 %v6112, %v6108
    %v6721 = vpack.c.b16 %v6113, %v6109
    %v6722 = vpack.c.b16 %v6114, %v6110
    %v6723 = vpack.c.b16 %v6119, %v6115
    %v6724 = vpack.c.b16 %v6120, %v6116
    %v6725 = vpack.c.b16 %v6121, %v6117
    %v6726 = vpack.c.b16 %v6122, %v6118
    %v6727 = vpack.c.b16 %v6127, %v6123
    %v6728 = vpack.c.b16 %v6128, %v6124
    %v6729 = vpack.c.b16 %v6129, %v6125
    %v6730 = vpack.c.b16 %v6130, %v6126
    %v6731 = vpack.c.b16 %v6135, %v6131
    %v6732 = vpack.c.b16 %v6136, %v6132
    %v6733 = vpack.c.b16 %v6137, %v6133
    %v6734 = vpack.c.b16 %v6138, %v6134
    %v6735 = vpack.c.b16 %v6143, %v6139
    %v6736 = vpack.c.b16 %v6144, %v6140
    %v6737 = vpack.c.b16 %v6145, %v6141
    %v6738 = vpack.c.b16 %v6146, %v6142
    %v6739 = vpack.c.b16 %v6151, %v6147
    %v6740 = vpack.c.b16 %v6152, %v6148
    %v6741 = vpack.c.b16 %v6153, %v6149
    %v6742 = vpack.c.b16 %v6154, %v6150
    %v6743 = vpack.c.b16 %v6159, %v6155
    %v6744 = vpack.c.b16 %v6160, %v6156
    %v6745 = vpack.c.b16 %v6161, %v6157
    %v6746 = vpack.c.b16 %v6162, %v6158
    %v6747 = vpack.c.b16 %v6167, %v6163
    %v6748 = vpack.c.b16 %v6168, %v6164
    %v6749 = vpack.c.b16 %v6169, %v6165
    %v6750 = vpack.c.b16 %v6170, %v6166
    %v6751 = vpack.c.b16 %v6175, %v6171
    %v6752 = vpack.c.b16 %v6176, %v6172
    %v6753 = vpack.c.b16 %v6177, %v6173
    %v6754 = vpack.c.b16 %v6178, %v6174
    %v6755 = vpack.c.b16 %v6183, %v6179
    %v6756 = vpack.c.b16 %v6184, %v6180
    %v6757 = vpack.c.b16 %v6185, %v6181
    %v6758 = vpack.c.b16 %v6186, %v6182
    %v6759 = vpack.c.b16 %v6191, %v6187
    %v6760 = vpack.c.b16 %v6192, %v6188
    %v6761 = vpack.c.b16 %v6193, %v6189
    %v6762 = vpack.c.b16 %v6194, %v6190
    %v6763 = vpack.c.b16 %v6199, %v6195
    %v6764 = vpack.c.b16 %v6200, %v6196
    %v6765 = vpack.c.b16 %v6201, %v6197
    %v6766 = vpack.c.b16 %v6202, %v6198
    %v6767 = vpack.c.b16 %v6207, %v6203
    %v6768 = vpack.c.b16 %v6208, %v6204
    %v6769 = vpack.c.b16 %v6209, %v6205
    %v6770 = vpack.c.b16 %v6210, %v6206
    %v6771 = vpack.c.b16 %v6215, %v6211
    %v6772 = vpack.c.b16 %v6216, %v6212
    %v6773 = vpack.c.b16 %v6217, %v6213
    %v6774 = vpack.c.b16 %v6218, %v6214
    %v6775 = vpack.c.b16 %v6223, %v6219
    %v6776 = vpack.c.b16 %v6224, %v6220
    %v6777 = vpack.c.b16 %v6225, %v6221
    %v6778 = vpack.c.b16 %v6226, %v6222
    %v6779 = vpack.c.b16 %v6231, %v6227
    %v6780 = vpack.c.b16 %v6232, %v6228
    %v6781 = vpack.c.b16 %v6233, %v6229
    %v6782 = vpack.c.b16 %v6234, %v6230
    %v6783 = vpack.c.b16 %v6239, %v6235
    %v6784 = vpack.c.b16 %v6240, %v6236
    %v6785 = vpack.c.b16 %v6241, %v6237
    %v6786 = vpack.c.b16 %v6242, %v6238
    %v6787 = vpack.c.b16 %v6247, %v6243
    %v6788 = vpack.c.b16 %v6248, %v6244
    %v6789 = vpack.c.b16 %v6249, %v6245
    %v6790 = vpack.c.b16 %v6250, %v6246
    %v6791 = vpack.c.b16 %v6255, %v6251
    %v6792 = vpack.c.b16 %v6256, %v6252
    %v6793 = vpack.c.b16 %v6257, %v6253
    %v6794 = vpack.c.b16 %v6258, %v6254
    %v6795 = vpack.c.b16 %v6263, %v6259
    %v6796 = vpack.c.b16 %v6264, %v6260
    %v6797 = vpack.c.b16 %v6265, %v6261
    %v6798 = vpack.c.b16 %v6266, %v6262
    %v6799 = vpack.c.b16 %v6271, %v6267
    %v6800 = vpack.c.b16 %v6272, %v6268
    %v6801 = vpack.c.b16 %v6273, %v6269
    %v6802 = vpack.c.b16 %v6274, %v6270
    %v6803 = vpack.c.b16 %v6279, %v6275
    %v6804 = vpack.c.b16 %v6280, %v6276
    %v6805 = vpack.c.b16 %v6281, %v6277
    %v6806 = vpack.c.b16 %v6282, %v6278
    %v6807 = vpack.c.b16 %v6287, %v6283
    %v6808 = vpack.c.b16 %v6288, %v6284
    %v6809 = vpack.c.b16 %v6289, %v6285
    %v6810 = vpack.c.b16 %v6290, %v6286
    %v6811 = vpack.c.b16 %v6295, %v6291
    %v6812 = vpack.c.b16 %v6296, %v6292
    %v6813 = vpack.c.b16 %v6297, %v6293
    %v6814 = vpack.c.b16 %v6298, %v6294
    %v6815 = vpack.c.b16 %v6303, %v6299
    %v6816 = vpack.c.b16 %v6304, %v6300
    %v6817 = vpack.c.b16 %v6305, %v6301
    %v6818 = vpack.c.b16 %v6306, %v6302
    %7331 = vmatprep.subr.bf16.mxu0 %v6308
    %7332 = vmatpush1.bf16.msra.mxu0 %v6307
    %7333 = vmatprep.subr.bf16.mxu0 %v6312
    %7334 = vmatpush1.bf16.msra.mxu0 %v6311
    %7335 = vmatprep.subr.bf16.mxu0 %v6316
    %7336 = vmatpush1.bf16.msra.mxu0 %v6315
    %7337 = vmatprep.subr.bf16.mxu0 %v6320
    %7338 = vmatpush1.bf16.msra.mxu0 %v6319
    %7339 = vmatprep.subr.bf16.mxu0 %v6324
    %7340 = vmatpush1.bf16.msra.mxu0 %v6323
    %7341 = vmatprep.subr.bf16.mxu0 %v6328
    %7342 = vmatpush1.bf16.msra.mxu0 %v6327
    %7343 = vmatprep.subr.bf16.mxu0 %v6332
    %7344 = vmatpush1.bf16.msra.mxu0 %v6331
    %7345 = vmatprep.subr.bf16.mxu0 %v6336
    %7346 = vmatpush1.bf16.msra.mxu0 %v6335
    %7347 = vmatprep.subr.bf16.mxu0 %v6340
    %7348 = vmatpush1.bf16.msra.mxu0 %v6339
    %7349 = vmatprep.subr.bf16.mxu0 %v6344
    %7350 = vmatpush1.bf16.msra.mxu0 %v6343
    %7351 = vmatprep.subr.bf16.mxu0 %v6348
    %7352 = vmatpush1.bf16.msra.mxu0 %v6347
    %7353 = vmatprep.subr.bf16.mxu0 %v6352
    %7354 = vmatpush1.bf16.msra.mxu0 %v6351
    %7355 = vmatprep.subr.bf16.mxu0 %v6356
    %7356 = vmatpush1.bf16.msra.mxu0 %v6355
    %7357 = vmatprep.subr.bf16.mxu0 %v6360
    %7358 = vmatpush1.bf16.msra.mxu0 %v6359
    %7359 = vmatprep.subr.bf16.mxu0 %v6364
    %7360 = vmatpush1.bf16.msra.mxu0 %v6363
    %7361 = vmatprep.subr.bf16.mxu0 %v6368
    %7362 = vmatpush1.bf16.msra.mxu0 %v6367
    %7363 = vmatprep.mubr.bf16.mxu0 %v4484
    %7364 = vmatmul.mubr.bf16.gmra.mrb[0].mxu0 %v4483
    %v7365 = vpop.f32.mrb[0].mxu0
    %v7366 = vadd.f32 %v4434, %v7365
    %v7367 = vpop.f32.mrb[0].mxu0
    %v7368 = vadd.f32 %v4438, %v7367
    %v7369 = vpop.f32.mrb[0].mxu0
    %v7370 = vadd.f32 %v4434, %v7369
    %v7371 = vpop.f32.mrb[0].mxu0
    %v7372 = vadd.f32 %v4438, %v7371
    %7373 = vmatprep.mubr.bf16.mxu0 %v4628
    %7374 = vmatmul.mubr.bf16.gmra.mrb[0].mxu0 %v4627
    %v7375 = vpop.f32.mrb[0].mxu0
    %v7376 = vadd.f32 %v4434, %v7375
    %v7377 = vpop.f32.mrb[0].mxu0
    %v7378 = vadd.f32 %v4438, %v7377
    %v7379 = vpop.f32.mrb[0].mxu0
    %v7380 = vadd.f32 %v4434, %v7379
    %v7381 = vpop.f32.mrb[0].mxu0
    %v7382 = vadd.f32 %v4438, %v7381
    %7383 = vdwg.mxu0
    %7384 = vmatprep.subr.bf16.mxu0 %v6372
    %7385 = vmatpush1.bf16.msra.mxu0 %v6371
    %7386 = vmatprep.subr.bf16.mxu0 %v6376
    %7387 = vmatpush1.bf16.msra.mxu0 %v6375
    %7388 = vmatprep.subr.bf16.mxu0 %v6380
    %7389 = vmatpush1.bf16.msra.mxu0 %v6379
    %7390 = vmatprep.subr.bf16.mxu0 %v6384
    %7391 = vmatpush1.bf16.msra.mxu0 %v6383
    %7392 = vmatprep.subr.bf16.mxu0 %v6388
    %7393 = vmatpush1.bf16.msra.mxu0 %v6387
    %7394 = vmatprep.subr.bf16.mxu0 %v6392
    %7395 = vmatpush1.bf16.msra.mxu0 %v6391
    %7396 = vmatprep.subr.bf16.mxu0 %v6396
    %7397 = vmatpush1.bf16.msra.mxu0 %v6395
    %7398 = vmatprep.subr.bf16.mxu0 %v6400
    %7399 = vmatpush1.bf16.msra.mxu0 %v6399
    %7400 = vmatprep.subr.bf16.mxu0 %v6404
    %7401 = vmatpush1.bf16.msra.mxu0 %v6403
    %7402 = vmatprep.subr.bf16.mxu0 %v6408
    %7403 = vmatpush1.bf16.msra.mxu0 %v6407
    %7404 = vmatprep.subr.bf16.mxu0 %v6412
    %7405 = vmatpush1.bf16.msra.mxu0 %v6411
    %7406 = vmatprep.subr.bf16.mxu0 %v6416
    %7407 = vmatpush1.bf16.msra.mxu0 %v6415
    %7408 = vmatprep.subr.bf16.mxu0 %v6420
    %7409 = vmatpush1.bf16.msra.mxu0 %v6419
    %7410 = vmatprep.subr.bf16.mxu0 %v6424
    %7411 = vmatpush1.bf16.msra.mxu0 %v6423
    %7412 = vmatprep.subr.bf16.mxu0 %v6428
    %7413 = vmatpush1.bf16.msra.mxu0 %v6427
    %7414 = vmatprep.subr.bf16.mxu0 %v6432
    %7415 = vmatpush1.bf16.msra.mxu0 %v6431
    %7416 = vmatprep.mubr.bf16.mxu0 %v4486
    %7417 = vmatmul.mubr.bf16.gmra.mrb[0].mxu0 %v4485
    %v7418 = vpop.f32.mrb[0].mxu0
    %v7419 = vadd.f32 %v7366, %v7418
    %v7420 = vpop.f32.mrb[0].mxu0
    %v7421 = vadd.f32 %v7368, %v7420
    %v7422 = vpop.f32.mrb[0].mxu0
    %v7423 = vadd.f32 %v7370, %v7422
    %v7424 = vpop.f32.mrb[0].mxu0
    %v7425 = vadd.f32 %v7372, %v7424
    %7426 = vmatprep.mubr.bf16.mxu0 %v4630
    %7427 = vmatmul.mubr.bf16.gmra.mrb[0].mxu0 %v4629
    %v7428 = vpop.f32.mrb[0].mxu0
    %v7429 = vadd.f32 %v7376, %v7428
    %v7430 = vpop.f32.mrb[0].mxu0
    %v7431 = vadd.f32 %v7378, %v7430
    %v7432 = vpop.f32.mrb[0].mxu0
    %v7433 = vadd.f32 %v7380, %v7432
    %v7434 = vpop.f32.mrb[0].mxu0
    %v7435 = vadd.f32 %v7382, %v7434
    %7436 = vdwg.mxu0
    %7437 = vmatprep.subr.bf16.mxu0 %v6436
    %7438 = vmatpush1.bf16.msra.mxu0 %v6435
    %7439 = vmatprep.subr.bf16.mxu0 %v6440
    %7440 = vmatpush1.bf16.msra.mxu0 %v6439
    %7441 = vmatprep.subr.bf16.mxu0 %v6444
    %7442 = vmatpush1.bf16.msra.mxu0 %v6443
    %7443 = vmatprep.subr.bf16.mxu0 %v6448
    %7444 = vmatpush1.bf16.msra.mxu0 %v6447
    %7445 = vmatprep.subr.bf16.mxu0 %v6452
    %7446 = vmatpush1.bf16.msra.mxu0 %v6451
    %7447 = vmatprep.subr.bf16.mxu0 %v6456
    %7448 = vmatpush1.bf16.msra.mxu0 %v6455
    %7449 = vmatprep.subr.bf16.mxu0 %v6460
    %7450 = vmatpush1.bf16.msra.mxu0 %v6459
    %7451 = vmatprep.subr.bf16.mxu0 %v6464
    %7452 = vmatpush1.bf16.msra.mxu0 %v6463
    %7453 = vmatprep.subr.bf16.mxu0 %v6468
    %7454 = vmatpush1.bf16.msra.mxu0 %v6467
    %7455 = vmatprep.subr.bf16.mxu0 %v6472
    %7456 = vmatpush1.bf16.msra.mxu0 %v6471
    %7457 = vmatprep.subr.bf16.mxu0 %v6476
    %7458 = vmatpush1.bf16.msra.mxu0 %v6475
    %7459 = vmatprep.subr.bf16.mxu0 %v6480
    %7460 = vmatpush1.bf16.msra.mxu0 %v6479
    %7461 = vmatprep.subr.bf16.mxu0 %v6484
    %7462 = vmatpush1.bf16.msra.mxu0 %v6483
    %7463 = vmatprep.subr.bf16.mxu0 %v6488
    %7464 = vmatpush1.bf16.msra.mxu0 %v6487
    %7465 = vmatprep.subr.bf16.mxu0 %v6492
    %7466 = vmatpush1.bf16.msra.mxu0 %v6491
    %7467 = vmatprep.subr.bf16.mxu0 %v6496
    %7468 = vmatpush1.bf16.msra.mxu0 %v6495
    %7469 = vmatprep.mubr.bf16.mxu0 %v4520
    %7470 = vmatmul.mubr.bf16.gmra.mrb[0].mxu0 %v4519
    %v7471 = vpop.f32.mrb[0].mxu0
    %v7472 = vadd.f32 %v7419, %v7471
    %v7473 = vpop.f32.mrb[0].mxu0
    %v7474 = vadd.f32 %v7421, %v7473
    %v7475 = vpop.f32.mrb[0].mxu0
    %v7476 = vadd.f32 %v7423, %v7475
    %v7477 = vpop.f32.mrb[0].mxu0
    %v7478 = vadd.f32 %v7425, %v7477
    %7479 = vmatprep.mubr.bf16.mxu0 %v4664
    %7480 = vmatmul.mubr.bf16.gmra.mrb[0].mxu0 %v4663
    %v7481 = vpop.f32.mrb[0].mxu0
    %v7482 = vadd.f32 %v7429, %v7481
    %v7483 = vpop.f32.mrb[0].mxu0
    %v7484 = vadd.f32 %v7431, %v7483
    %v7485 = vpop.f32.mrb[0].mxu0
    %v7486 = vadd.f32 %v7433, %v7485
    %v7487 = vpop.f32.mrb[0].mxu0
    %v7488 = vadd.f32 %v7435, %v7487
    %7489 = vdwg.mxu0
    %7490 = vmatprep.subr.bf16.mxu0 %v6500
    %7491 = vmatpush1.bf16.msra.mxu0 %v6499
    %7492 = vmatprep.subr.bf16.mxu0 %v6504
    %7493 = vmatpush1.bf16.msra.mxu0 %v6503
    %7494 = vmatprep.subr.bf16.mxu0 %v6508
    %7495 = vmatpush1.bf16.msra.mxu0 %v6507
    %7496 = vmatprep.subr.bf16.mxu0 %v6512
    %7497 = vmatpush1.bf16.msra.mxu0 %v6511
    %7498 = vmatprep.subr.bf16.mxu0 %v6516
    %7499 = vmatpush1.bf16.msra.mxu0 %v6515
    %7500 = vmatprep.subr.bf16.mxu0 %v6520
    %7501 = vmatpush1.bf16.msra.mxu0 %v6519
    %7502 = vmatprep.subr.bf16.mxu0 %v6524
    %7503 = vmatpush1.bf16.msra.mxu0 %v6523
    %7504 = vmatprep.subr.bf16.mxu0 %v6528
    %7505 = vmatpush1.bf16.msra.mxu0 %v6527
    %7506 = vmatprep.subr.bf16.mxu0 %v6532
    %7507 = vmatpush1.bf16.msra.mxu0 %v6531
    %7508 = vmatprep.subr.bf16.mxu0 %v6536
    %7509 = vmatpush1.bf16.msra.mxu0 %v6535
    %7510 = vmatprep.subr.bf16.mxu0 %v6540
    %7511 = vmatpush1.bf16.msra.mxu0 %v6539
    %7512 = vmatprep.subr.bf16.mxu0 %v6544
    %7513 = vmatpush1.bf16.msra.mxu0 %v6543
    %7514 = vmatprep.subr.bf16.mxu0 %v6548
    %7515 = vmatpush1.bf16.msra.mxu0 %v6547
    %7516 = vmatprep.subr.bf16.mxu0 %v6552
    %7517 = vmatpush1.bf16.msra.mxu0 %v6551
    %7518 = vmatprep.subr.bf16.mxu0 %v6556
    %7519 = vmatpush1.bf16.msra.mxu0 %v6555
    %7520 = vmatprep.subr.bf16.mxu0 %v6560
    %7521 = vmatpush1.bf16.msra.mxu0 %v6559
    %7522 = vmatprep.mubr.bf16.mxu0 %v4522
    %7523 = vmatmul.mubr.bf16.gmra.mrb[0].mxu0 %v4521
    %v7524 = vpop.f32.mrb[0].mxu0
    %v7525 = vadd.f32 %v7472, %v7524
    %v7526 = vpop.f32.mrb[0].mxu0
    %v7527 = vadd.f32 %v7474, %v7526
    %v7528 = vpop.f32.mrb[0].mxu0
    %v7529 = vadd.f32 %v7476, %v7528
    %v7530 = vpop.f32.mrb[0].mxu0
    %v7531 = vadd.f32 %v7478, %v7530
    %7532 = vmatprep.mubr.bf16.mxu0 %v4666
    %7533 = vmatmul.mubr.bf16.gmra.mrb[0].mxu0 %v4665
    %v7534 = vpop.f32.mrb[0].mxu0
    %v7535 = vadd.f32 %v7482, %v7534
    %v7536 = vpop.f32.mrb[0].mxu0
    %v7537 = vadd.f32 %v7484, %v7536
    %v7538 = vpop.f32.mrb[0].mxu0
    %v7539 = vadd.f32 %v7486, %v7538
    %v7540 = vpop.f32.mrb[0].mxu0
    %v7541 = vadd.f32 %v7488, %v7540
    %7542 = vdwg.mxu0
    %7543 = vmatprep.subr.bf16.mxu0 %v6564
    %7544 = vmatpush1.bf16.msra.mxu0 %v6563
    %7545 = vmatprep.subr.bf16.mxu0 %v6568
    %7546 = vmatpush1.bf16.msra.mxu0 %v6567
    %7547 = vmatprep.subr.bf16.mxu0 %v6572
    %7548 = vmatpush1.bf16.msra.mxu0 %v6571
    %7549 = vmatprep.subr.bf16.mxu0 %v6576
    %7550 = vmatpush1.bf16.msra.mxu0 %v6575
    %7551 = vmatprep.subr.bf16.mxu0 %v6580
    %7552 = vmatpush1.bf16.msra.mxu0 %v6579
    %7553 = vmatprep.subr.bf16.mxu0 %v6584
    %7554 = vmatpush1.bf16.msra.mxu0 %v6583
    %7555 = vmatprep.subr.bf16.mxu0 %v6588
    %7556 = vmatpush1.bf16.msra.mxu0 %v6587
    %7557 = vmatprep.subr.bf16.mxu0 %v6592
    %7558 = vmatpush1.bf16.msra.mxu0 %v6591
    %7559 = vmatprep.subr.bf16.mxu0 %v6596
    %7560 = vmatpush1.bf16.msra.mxu0 %v6595
    %7561 = vmatprep.subr.bf16.mxu0 %v6600
    %7562 = vmatpush1.bf16.msra.mxu0 %v6599
    %7563 = vmatprep.subr.bf16.mxu0 %v6604
    %7564 = vmatpush1.bf16.msra.mxu0 %v6603
    %7565 = vmatprep.subr.bf16.mxu0 %v6608
    %7566 = vmatpush1.bf16.msra.mxu0 %v6607
    %7567 = vmatprep.subr.bf16.mxu0 %v6612
    %7568 = vmatpush1.bf16.msra.mxu0 %v6611
    %7569 = vmatprep.subr.bf16.mxu0 %v6616
    %7570 = vmatpush1.bf16.msra.mxu0 %v6615
    %7571 = vmatprep.subr.bf16.mxu0 %v6620
    %7572 = vmatpush1.bf16.msra.mxu0 %v6619
    %7573 = vmatprep.subr.bf16.mxu0 %v6624
    %7574 = vmatpush1.bf16.msra.mxu0 %v6623
    %7575 = vmatprep.mubr.bf16.mxu0 %v4556
    %7576 = vmatmul.mubr.bf16.gmra.mrb[0].mxu0 %v4555
    %v7577 = vpop.f32.mrb[0].mxu0
    %v7578 = vadd.f32 %v7525, %v7577
    %v7579 = vpop.f32.mrb[0].mxu0
    %v7580 = vadd.f32 %v7527, %v7579
    %v7581 = vpop.f32.mrb[0].mxu0
    %v7582 = vadd.f32 %v7529, %v7581
    %v7583 = vpop.f32.mrb[0].mxu0
    %v7584 = vadd.f32 %v7531, %v7583
    %7585 = vmatprep.mubr.bf16.mxu0 %v4700
    %7586 = vmatmul.mubr.bf16.gmra.mrb[0].mxu0 %v4699
    %v7587 = vpop.f32.mrb[0].mxu0
    %v7588 = vadd.f32 %v7535, %v7587
    %v7589 = vpop.f32.mrb[0].mxu0
    %v7590 = vadd.f32 %v7537, %v7589
    %v7591 = vpop.f32.mrb[0].mxu0
    %v7592 = vadd.f32 %v7539, %v7591
    %v7593 = vpop.f32.mrb[0].mxu0
    %v7594 = vadd.f32 %v7541, %v7593
    %7595 = vdwg.mxu0
    %7596 = vmatprep.subr.bf16.mxu0 %v6628
    %7597 = vmatpush1.bf16.msra.mxu0 %v6627
    %7598 = vmatprep.subr.bf16.mxu0 %v6632
    %7599 = vmatpush1.bf16.msra.mxu0 %v6631
    %7600 = vmatprep.subr.bf16.mxu0 %v6636
    %7601 = vmatpush1.bf16.msra.mxu0 %v6635
    %7602 = vmatprep.subr.bf16.mxu0 %v6640
    %7603 = vmatpush1.bf16.msra.mxu0 %v6639
    %7604 = vmatprep.subr.bf16.mxu0 %v6644
    %7605 = vmatpush1.bf16.msra.mxu0 %v6643
    %7606 = vmatprep.subr.bf16.mxu0 %v6648
    %7607 = vmatpush1.bf16.msra.mxu0 %v6647
    %7608 = vmatprep.subr.bf16.mxu0 %v6652
    %7609 = vmatpush1.bf16.msra.mxu0 %v6651
    %7610 = vmatprep.subr.bf16.mxu0 %v6656
    %7611 = vmatpush1.bf16.msra.mxu0 %v6655
    %7612 = vmatprep.subr.bf16.mxu0 %v6660
    %7613 = vmatpush1.bf16.msra.mxu0 %v6659
    %7614 = vmatprep.subr.bf16.mxu0 %v6664
    %7615 = vmatpush1.bf16.msra.mxu0 %v6663
    %7616 = vmatprep.subr.bf16.mxu0 %v6668
    %7617 = vmatpush1.bf16.msra.mxu0 %v6667
    %7618 = vmatprep.subr.bf16.mxu0 %v6672
    %7619 = vmatpush1.bf16.msra.mxu0 %v6671
    %7620 = vmatprep.subr.bf16.mxu0 %v6676
    %7621 = vmatpush1.bf16.msra.mxu0 %v6675
    %7622 = vmatprep.subr.bf16.mxu0 %v6680
    %7623 = vmatpush1.bf16.msra.mxu0 %v6679
    %7624 = vmatprep.subr.bf16.mxu0 %v6684
    %7625 = vmatpush1.bf16.msra.mxu0 %v6683
    %7626 = vmatprep.subr.bf16.mxu0 %v6688
    %7627 = vmatpush1.bf16.msra.mxu0 %v6687
    %7628 = vmatprep.mubr.bf16.mxu0 %v4558
    %7629 = vmatmul.mubr.bf16.gmra.mrb[0].mxu0 %v4557
    %v7630 = vpop.f32.mrb[0].mxu0
    %v7631 = vadd.f32 %v7578, %v7630
    %v7632 = vpop.f32.mrb[0].mxu0
    %v7633 = vadd.f32 %v7580, %v7632
    %v7634 = vpop.f32.mrb[0].mxu0
    %v7635 = vadd.f32 %v7582, %v7634
    %v7636 = vpop.f32.mrb[0].mxu0
    %v7637 = vadd.f32 %v7584, %v7636
    %7638 = vmatprep.mubr.bf16.mxu0 %v4702
    %7639 = vmatmul.mubr.bf16.gmra.mrb[0].mxu0 %v4701
    %v7640 = vpop.f32.mrb[0].mxu0
    %v7641 = vadd.f32 %v7588, %v7640
    %v7642 = vpop.f32.mrb[0].mxu0
    %v7643 = vadd.f32 %v7590, %v7642
    %v7644 = vpop.f32.mrb[0].mxu0
    %v7645 = vadd.f32 %v7592, %v7644
    %v7646 = vpop.f32.mrb[0].mxu0
    %v7647 = vadd.f32 %v7594, %v7646
    %7648 = vdwg.mxu0
    %7649 = vmatprep.subr.bf16.mxu0 %v6692
    %7650 = vmatpush1.bf16.msra.mxu0 %v6691
    %7651 = vmatprep.subr.bf16.mxu0 %v6696
    %7652 = vmatpush1.bf16.msra.mxu0 %v6695
    %7653 = vmatprep.subr.bf16.mxu0 %v6700
    %7654 = vmatpush1.bf16.msra.mxu0 %v6699
    %7655 = vmatprep.subr.bf16.mxu0 %v6704
    %7656 = vmatpush1.bf16.msra.mxu0 %v6703
    %7657 = vmatprep.subr.bf16.mxu0 %v6708
    %7658 = vmatpush1.bf16.msra.mxu0 %v6707
    %7659 = vmatprep.subr.bf16.mxu0 %v6712
    %7660 = vmatpush1.bf16.msra.mxu0 %v6711
    %7661 = vmatprep.subr.bf16.mxu0 %v6716
    %7662 = vmatpush1.bf16.msra.mxu0 %v6715
    %7663 = vmatprep.subr.bf16.mxu0 %v6720
    %7664 = vmatpush1.bf16.msra.mxu0 %v6719
    %7665 = vmatprep.subr.bf16.mxu0 %v6724
    %7666 = vmatpush1.bf16.msra.mxu0 %v6723
    %7667 = vmatprep.subr.bf16.mxu0 %v6728
    %7668 = vmatpush1.bf16.msra.mxu0 %v6727
    %7669 = vmatprep.subr.bf16.mxu0 %v6732
    %7670 = vmatpush1.bf16.msra.mxu0 %v6731
    %7671 = vmatprep.subr.bf16.mxu0 %v6736
    %7672 = vmatpush1.bf16.msra.mxu0 %v6735
    %7673 = vmatprep.subr.bf16.mxu0 %v6740
    %7674 = vmatpush1.bf16.msra.mxu0 %v6739
    %7675 = vmatprep.subr.bf16.mxu0 %v6744
    %7676 = vmatpush1.bf16.msra.mxu0 %v6743
    %7677 = vmatprep.subr.bf16.mxu0 %v6748
    %7678 = vmatpush1.bf16.msra.mxu0 %v6747
    %7679 = vmatprep.subr.bf16.mxu0 %v6752
    %7680 = vmatpush1.bf16.msra.mxu0 %v6751
    %7681 = vmatprep.mubr.bf16.mxu0 %v4592
    %7682 = vmatmul.mubr.bf16.gmra.mrb[0].mxu0 %v4591
    %v7683 = vpop.f32.mrb[0].mxu0
    %v7684 = vadd.f32 %v7631, %v7683
    %v7685 = vpop.f32.mrb[0].mxu0
    %v7686 = vadd.f32 %v7633, %v7685
    %v7687 = vpop.f32.mrb[0].mxu0
    %v7688 = vadd.f32 %v7635, %v7687
    %v7689 = vpop.f32.mrb[0].mxu0
    %v7690 = vadd.f32 %v7637, %v7689
    %7691 = vmatprep.mubr.bf16.mxu0 %v4736
    %7692 = vmatmul.mubr.bf16.gmra.mrb[0].mxu0 %v4735
    %v7693 = vpop.f32.mrb[0].mxu0
    %v7694 = vadd.f32 %v7641, %v7693
    %v7695 = vpop.f32.mrb[0].mxu0
    %v7696 = vadd.f32 %v7643, %v7695
    %v7697 = vpop.f32.mrb[0].mxu0
    %v7698 = vadd.f32 %v7645, %v7697
    %v7699 = vpop.f32.mrb[0].mxu0
    %v7700 = vadd.f32 %v7647, %v7699
    %7701 = vdwg.mxu0
    %7702 = vmatprep.subr.bf16.mxu0 %v6756
    %7703 = vmatpush1.bf16.msra.mxu0 %v6755
    %7704 = vmatprep.subr.bf16.mxu0 %v6760
    %7705 = vmatpush1.bf16.msra.mxu0 %v6759
    %7706 = vmatprep.subr.bf16.mxu0 %v6764
    %7707 = vmatpush1.bf16.msra.mxu0 %v6763
    %7708 = vmatprep.subr.bf16.mxu0 %v6768
    %7709 = vmatpush1.bf16.msra.mxu0 %v6767
    %7710 = vmatprep.subr.bf16.mxu0 %v6772
    %7711 = vmatpush1.bf16.msra.mxu0 %v6771
    %7712 = vmatprep.subr.bf16.mxu0 %v6776
    %7713 = vmatpush1.bf16.msra.mxu0 %v6775
    %7714 = vmatprep.subr.bf16.mxu0 %v6780
    %7715 = vmatpush1.bf16.msra.mxu0 %v6779
    %7716 = vmatprep.subr.bf16.mxu0 %v6784
    %7717 = vmatpush1.bf16.msra.mxu0 %v6783
    %7718 = vmatprep.subr.bf16.mxu0 %v6788
    %7719 = vmatpush1.bf16.msra.mxu0 %v6787
    %7720 = vmatprep.subr.bf16.mxu0 %v6792
    %7721 = vmatpush1.bf16.msra.mxu0 %v6791
    %7722 = vmatprep.subr.bf16.mxu0 %v6796
    %7723 = vmatpush1.bf16.msra.mxu0 %v6795
    %7724 = vmatprep.subr.bf16.mxu0 %v6800
    %7725 = vmatpush1.bf16.msra.mxu0 %v6799
    %7726 = vmatprep.subr.bf16.mxu0 %v6804
    %7727 = vmatpush1.bf16.msra.mxu0 %v6803
    %7728 = vmatprep.subr.bf16.mxu0 %v6808
    %7729 = vmatpush1.bf16.msra.mxu0 %v6807
    %7730 = vmatprep.subr.bf16.mxu0 %v6812
    %7731 = vmatpush1.bf16.msra.mxu0 %v6811
    %7732 = vmatprep.subr.bf16.mxu0 %v6816
    %7733 = vmatpush1.bf16.msra.mxu0 %v6815
    %7734 = vmatprep.mubr.bf16.mxu0 %v4594
    %7735 = vmatmul.mubr.bf16.gmra.mrb[0].mxu0 %v4593
    %v7736 = vpop.f32.mrb[0].mxu0
    %v7737 = vadd.f32 %v7684, %v7736
    %v7738 = vpop.f32.mrb[0].mxu0
    %v7739 = vadd.f32 %v7686, %v7738
    %v7740 = vpop.f32.mrb[0].mxu0
    %v7741 = vadd.f32 %v7688, %v7740
    %v7742 = vpop.f32.mrb[0].mxu0
    %v7743 = vadd.f32 %v7690, %v7742
    %7744 = vmatprep.mubr.bf16.mxu0 %v4738
    %7745 = vmatmul.mubr.bf16.gmra.mrb[0].mxu0 %v4737
    %v7746 = vpop.f32.mrb[0].mxu0
    %v7747 = vadd.f32 %v7694, %v7746
    %v7748 = vpop.f32.mrb[0].mxu0
    %v7749 = vadd.f32 %v7696, %v7748
    %v7750 = vpop.f32.mrb[0].mxu0
    %v7751 = vadd.f32 %v7698, %v7750
    %v7752 = vpop.f32.mrb[0].mxu0
    %v7753 = vadd.f32 %v7700, %v7752
    %7754 = vdwg.mxu0
    %7755 = vmatprep.subr.bf16.mxu0 %v6310
    %7756 = vmatpush1.bf16.msra.mxu0 %v6309
    %7757 = vmatprep.subr.bf16.mxu0 %v6314
    %7758 = vmatpush1.bf16.msra.mxu0 %v6313
    %7759 = vmatprep.subr.bf16.mxu0 %v6318
    %7760 = vmatpush1.bf16.msra.mxu0 %v6317
    %7761 = vmatprep.subr.bf16.mxu0 %v6322
    %7762 = vmatpush1.bf16.msra.mxu0 %v6321
    %7763 = vmatprep.subr.bf16.mxu0 %v6326
    %7764 = vmatpush1.bf16.msra.mxu0 %v6325
    %7765 = vmatprep.subr.bf16.mxu0 %v6330
    %7766 = vmatpush1.bf16.msra.mxu0 %v6329
    %7767 = vmatprep.subr.bf16.mxu0 %v6334
    %7768 = vmatpush1.bf16.msra.mxu0 %v6333
    %7769 = vmatprep.subr.bf16.mxu0 %v6338
    %7770 = vmatpush1.bf16.msra.mxu0 %v6337
    %7771 = vmatprep.subr.bf16.mxu0 %v6342
    %7772 = vmatpush1.bf16.msra.mxu0 %v6341
    %7773 = vmatprep.subr.bf16.mxu0 %v6346
    %7774 = vmatpush1.bf16.msra.mxu0 %v6345
    %7775 = vmatprep.subr.bf16.mxu0 %v6350
    %7776 = vmatpush1.bf16.msra.mxu0 %v6349
    %7777 = vmatprep.subr.bf16.mxu0 %v6354
    %7778 = vmatpush1.bf16.msra.mxu0 %v6353
    %7779 = vmatprep.subr.bf16.mxu0 %v6358
    %7780 = vmatpush1.bf16.msra.mxu0 %v6357
    %7781 = vmatprep.subr.bf16.mxu0 %v6362
    %7782 = vmatpush1.bf16.msra.mxu0 %v6361
    %7783 = vmatprep.subr.bf16.mxu0 %v6366
    %7784 = vmatpush1.bf16.msra.mxu0 %v6365
    %7785 = vmatprep.subr.bf16.mxu0 %v6370
    %7786 = vmatpush1.bf16.msra.mxu0 %v6369
    %7787 = vmatprep.mubr.bf16.mxu0 %v4484
    %7788 = vmatmul.mubr.bf16.gmra.mrb[0].mxu0 %v4483
    %v7789 = vpop.f32.mrb[0].mxu0
    %v7790 = vadd.f32 %v4442, %v7789
    %v7791 = vpop.f32.mrb[0].mxu0
    %v7792 = vadd.f32 %v4446, %v7791
    %v7793 = vpop.f32.mrb[0].mxu0
    %v7794 = vadd.f32 %v4442, %v7793
    %v7795 = vpop.f32.mrb[0].mxu0
    %v7796 = vadd.f32 %v4446, %v7795
    %7797 = vmatprep.mubr.bf16.mxu0 %v4628
    %7798 = vmatmul.mubr.bf16.gmra.mrb[0].mxu0 %v4627
    %v7799 = vpop.f32.mrb[0].mxu0
    %v7800 = vadd.f32 %v4442, %v7799
    %v7801 = vpop.f32.mrb[0].mxu0
    %v7802 = vadd.f32 %v4446, %v7801
    %v7803 = vpop.f32.mrb[0].mxu0
    %v7804 = vadd.f32 %v4442, %v7803
    %v7805 = vpop.f32.mrb[0].mxu0
    %v7806 = vadd.f32 %v4446, %v7805
    %7807 = vdwg.mxu0
    %7808 = vmatprep.subr.bf16.mxu0 %v6374
    %7809 = vmatpush1.bf16.msra.mxu0 %v6373
    %7810 = vmatprep.subr.bf16.mxu0 %v6378
    %7811 = vmatpush1.bf16.msra.mxu0 %v6377
    %7812 = vmatprep.subr.bf16.mxu0 %v6382
    %7813 = vmatpush1.bf16.msra.mxu0 %v6381
    %7814 = vmatprep.subr.bf16.mxu0 %v6386
    %7815 = vmatpush1.bf16.msra.mxu0 %v6385
    %7816 = vmatprep.subr.bf16.mxu0 %v6390
    %7817 = vmatpush1.bf16.msra.mxu0 %v6389
    %7818 = vmatprep.subr.bf16.mxu0 %v6394
    %7819 = vmatpush1.bf16.msra.mxu0 %v6393
    %7820 = vmatprep.subr.bf16.mxu0 %v6398
    %7821 = vmatpush1.bf16.msra.mxu0 %v6397
    %7822 = vmatprep.subr.bf16.mxu0 %v6402
    %7823 = vmatpush1.bf16.msra.mxu0 %v6401
    %7824 = vmatprep.subr.bf16.mxu0 %v6406
    %7825 = vmatpush1.bf16.msra.mxu0 %v6405
    %7826 = vmatprep.subr.bf16.mxu0 %v6410
    %7827 = vmatpush1.bf16.msra.mxu0 %v6409
    %7828 = vmatprep.subr.bf16.mxu0 %v6414
    %7829 = vmatpush1.bf16.msra.mxu0 %v6413
    %7830 = vmatprep.subr.bf16.mxu0 %v6418
    %7831 = vmatpush1.bf16.msra.mxu0 %v6417
    %7832 = vmatprep.subr.bf16.mxu0 %v6422
    %7833 = vmatpush1.bf16.msra.mxu0 %v6421
    %7834 = vmatprep.subr.bf16.mxu0 %v6426
    %7835 = vmatpush1.bf16.msra.mxu0 %v6425
    %7836 = vmatprep.subr.bf16.mxu0 %v6430
    %7837 = vmatpush1.bf16.msra.mxu0 %v6429
    %7838 = vmatprep.subr.bf16.mxu0 %v6434
    %7839 = vmatpush1.bf16.msra.mxu0 %v6433
    %7840 = vmatprep.mubr.bf16.mxu0 %v4486
    %7841 = vmatmul.mubr.bf16.gmra.mrb[0].mxu0 %v4485
    %v7842 = vpop.f32.mrb[0].mxu0
    %v7843 = vadd.f32 %v7790, %v7842
    %v7844 = vpop.f32.mrb[0].mxu0
    %v7845 = vadd.f32 %v7792, %v7844
    %v7846 = vpop.f32.mrb[0].mxu0
    %v7847 = vadd.f32 %v7794, %v7846
    %v7848 = vpop.f32.mrb[0].mxu0
    %v7849 = vadd.f32 %v7796, %v7848
    %7850 = vmatprep.mubr.bf16.mxu0 %v4630
    %7851 = vmatmul.mubr.bf16.gmra.mrb[0].mxu0 %v4629
    %v7852 = vpop.f32.mrb[0].mxu0
    %v7853 = vadd.f32 %v7800, %v7852
    %v7854 = vpop.f32.mrb[0].mxu0
    %v7855 = vadd.f32 %v7802, %v7854
    %v7856 = vpop.f32.mrb[0].mxu0
    %v7857 = vadd.f32 %v7804, %v7856
    %v7858 = vpop.f32.mrb[0].mxu0
    %v7859 = vadd.f32 %v7806, %v7858
    %7860 = vdwg.mxu0
    %7861 = vmatprep.subr.bf16.mxu0 %v6438
    %7862 = vmatpush1.bf16.msra.mxu0 %v6437
    %7863 = vmatprep.subr.bf16.mxu0 %v6442
    %7864 = vmatpush1.bf16.msra.mxu0 %v6441
    %7865 = vmatprep.subr.bf16.mxu0 %v6446
    %7866 = vmatpush1.bf16.msra.mxu0 %v6445
    %7867 = vmatprep.subr.bf16.mxu0 %v6450
    %7868 = vmatpush1.bf16.msra.mxu0 %v6449
    %7869 = vmatprep.subr.bf16.mxu0 %v6454
    %7870 = vmatpush1.bf16.msra.mxu0 %v6453
    %7871 = vmatprep.subr.bf16.mxu0 %v6458
    %7872 = vmatpush1.bf16.msra.mxu0 %v6457
    %7873 = vmatprep.subr.bf16.mxu0 %v6462
    %7874 = vmatpush1.bf16.msra.mxu0 %v6461
    %7875 = vmatprep.subr.bf16.mxu0 %v6466
    %7876 = vmatpush1.bf16.msra.mxu0 %v6465
    %7877 = vmatprep.subr.bf16.mxu0 %v6470
    %7878 = vmatpush1.bf16.msra.mxu0 %v6469
    %7879 = vmatprep.subr.bf16.mxu0 %v6474
    %7880 = vmatpush1.bf16.msra.mxu0 %v6473
    %7881 = vmatprep.subr.bf16.mxu0 %v6478
    %7882 = vmatpush1.bf16.msra.mxu0 %v6477
    %7883 = vmatprep.subr.bf16.mxu0 %v6482
    %7884 = vmatpush1.bf16.msra.mxu0 %v6481
    %7885 = vmatprep.subr.bf16.mxu0 %v6486
    %7886 = vmatpush1.bf16.msra.mxu0 %v6485
    %7887 = vmatprep.subr.bf16.mxu0 %v6490
    %7888 = vmatpush1.bf16.msra.mxu0 %v6489
    %7889 = vmatprep.subr.bf16.mxu0 %v6494
    %7890 = vmatpush1.bf16.msra.mxu0 %v6493
    %7891 = vmatprep.subr.bf16.mxu0 %v6498
    %7892 = vmatpush1.bf16.msra.mxu0 %v6497
    %7893 = vmatprep.mubr.bf16.mxu0 %v4520
    %7894 = vmatmul.mubr.bf16.gmra.mrb[0].mxu0 %v4519
    %v7895 = vpop.f32.mrb[0].mxu0
    %v7896 = vadd.f32 %v7843, %v7895
    %v7897 = vpop.f32.mrb[0].mxu0
    %v7898 = vadd.f32 %v7845, %v7897
    %v7899 = vpop.f32.mrb[0].mxu0
    %v7900 = vadd.f32 %v7847, %v7899
    %v7901 = vpop.f32.mrb[0].mxu0
    %v7902 = vadd.f32 %v7849, %v7901
    %7903 = vmatprep.mubr.bf16.mxu0 %v4664
    %7904 = vmatmul.mubr.bf16.gmra.mrb[0].mxu0 %v4663
    %v7905 = vpop.f32.mrb[0].mxu0
    %v7906 = vadd.f32 %v7853, %v7905
    %v7907 = vpop.f32.mrb[0].mxu0
    %v7908 = vadd.f32 %v7855, %v7907
    %v7909 = vpop.f32.mrb[0].mxu0
    %v7910 = vadd.f32 %v7857, %v7909
    %v7911 = vpop.f32.mrb[0].mxu0
    %v7912 = vadd.f32 %v7859, %v7911
    %7913 = vdwg.mxu0
    %7914 = vmatprep.subr.bf16.mxu0 %v6502
    %7915 = vmatpush1.bf16.msra.mxu0 %v6501
    %7916 = vmatprep.subr.bf16.mxu0 %v6506
    %7917 = vmatpush1.bf16.msra.mxu0 %v6505
    %7918 = vmatprep.subr.bf16.mxu0 %v6510
    %7919 = vmatpush1.bf16.msra.mxu0 %v6509
    %7920 = vmatprep.subr.bf16.mxu0 %v6514
    %7921 = vmatpush1.bf16.msra.mxu0 %v6513
    %7922 = vmatprep.subr.bf16.mxu0 %v6518
    %7923 = vmatpush1.bf16.msra.mxu0 %v6517
    %7924 = vmatprep.subr.bf16.mxu0 %v6522
    %7925 = vmatpush1.bf16.msra.mxu0 %v6521
    %7926 = vmatprep.subr.bf16.mxu0 %v6526
    %7927 = vmatpush1.bf16.msra.mxu0 %v6525
    %7928 = vmatprep.subr.bf16.mxu0 %v6530
    %7929 = vmatpush1.bf16.msra.mxu0 %v6529
    %7930 = vmatprep.subr.bf16.mxu0 %v6534
    %7931 = vmatpush1.bf16.msra.mxu0 %v6533
    %7932 = vmatprep.subr.bf16.mxu0 %v6538
    %7933 = vmatpush1.bf16.msra.mxu0 %v6537
    %7934 = vmatprep.subr.bf16.mxu0 %v6542
    %7935 = vmatpush1.bf16.msra.mxu0 %v6541
    %7936 = vmatprep.subr.bf16.mxu0 %v6546
    %7937 = vmatpush1.bf16.msra.mxu0 %v6545
    %7938 = vmatprep.subr.bf16.mxu0 %v6550
    %7939 = vmatpush1.bf16.msra.mxu0 %v6549
    %7940 = vmatprep.subr.bf16.mxu0 %v6554
    %7941 = vmatpush1.bf16.msra.mxu0 %v6553
    %7942 = vmatprep.subr.bf16.mxu0 %v6558
    %7943 = vmatpush1.bf16.msra.mxu0 %v6557
    %7944 = vmatprep.subr.bf16.mxu0 %v6562
    %7945 = vmatpush1.bf16.msra.mxu0 %v6561
    %7946 = vmatprep.mubr.bf16.mxu0 %v4522
    %7947 = vmatmul.mubr.bf16.gmra.mrb[0].mxu0 %v4521
    %v7948 = vpop.f32.mrb[0].mxu0
    %v7949 = vadd.f32 %v7896, %v7948
    %v7950 = vpop.f32.mrb[0].mxu0
    %v7951 = vadd.f32 %v7898, %v7950
    %v7952 = vpop.f32.mrb[0].mxu0
    %v7953 = vadd.f32 %v7900, %v7952
    %v7954 = vpop.f32.mrb[0].mxu0
    %v7955 = vadd.f32 %v7902, %v7954
    %7956 = vmatprep.mubr.bf16.mxu0 %v4666
    %7957 = vmatmul.mubr.bf16.gmra.mrb[0].mxu0 %v4665
    %v7958 = vpop.f32.mrb[0].mxu0
    %v7959 = vadd.f32 %v7906, %v7958
    %v7960 = vpop.f32.mrb[0].mxu0
    %v7961 = vadd.f32 %v7908, %v7960
    %v7962 = vpop.f32.mrb[0].mxu0
    %v7963 = vadd.f32 %v7910, %v7962
    %v7964 = vpop.f32.mrb[0].mxu0
    %v7965 = vadd.f32 %v7912, %v7964
    %7966 = vdwg.mxu0
    %7967 = vmatprep.subr.bf16.mxu0 %v6566
    %7968 = vmatpush1.bf16.msra.mxu0 %v6565
    %7969 = vmatprep.subr.bf16.mxu0 %v6570
    %7970 = vmatpush1.bf16.msra.mxu0 %v6569
    %7971 = vmatprep.subr.bf16.mxu0 %v6574
    %7972 = vmatpush1.bf16.msra.mxu0 %v6573
    %7973 = vmatprep.subr.bf16.mxu0 %v6578
    %7974 = vmatpush1.bf16.msra.mxu0 %v6577
    %7975 = vmatprep.subr.bf16.mxu0 %v6582
    %7976 = vmatpush1.bf16.msra.mxu0 %v6581
    %7977 = vmatprep.subr.bf16.mxu0 %v6586
    %7978 = vmatpush1.bf16.msra.mxu0 %v6585
    %7979 = vmatprep.subr.bf16.mxu0 %v6590
    %7980 = vmatpush1.bf16.msra.mxu0 %v6589
    %7981 = vmatprep.subr.bf16.mxu0 %v6594
    %7982 = vmatpush1.bf16.msra.mxu0 %v6593
    %7983 = vmatprep.subr.bf16.mxu0 %v6598
    %7984 = vmatpush1.bf16.msra.mxu0 %v6597
    %7985 = vmatprep.subr.bf16.mxu0 %v6602
    %7986 = vmatpush1.bf16.msra.mxu0 %v6601
    %7987 = vmatprep.subr.bf16.mxu0 %v6606
    %7988 = vmatpush1.bf16.msra.mxu0 %v6605
    %7989 = vmatprep.subr.bf16.mxu0 %v6610
    %7990 = vmatpush1.bf16.msra.mxu0 %v6609
    %7991 = vmatprep.subr.bf16.mxu0 %v6614
    %7992 = vmatpush1.bf16.msra.mxu0 %v6613
    %7993 = vmatprep.subr.bf16.mxu0 %v6618
    %7994 = vmatpush1.bf16.msra.mxu0 %v6617
    %7995 = vmatprep.subr.bf16.mxu0 %v6622
    %7996 = vmatpush1.bf16.msra.mxu0 %v6621
    %7997 = vmatprep.subr.bf16.mxu0 %v6626
    %7998 = vmatpush1.bf16.msra.mxu0 %v6625
    %7999 = vmatprep.mubr.bf16.mxu0 %v4556
    %8000 = vmatmul.mubr.bf16.gmra.mrb[0].mxu0 %v4555
    %v8001 = vpop.f32.mrb[0].mxu0
    %v8002 = vadd.f32 %v7949, %v8001
    %v8003 = vpop.f32.mrb[0].mxu0
    %v8004 = vadd.f32 %v7951, %v8003
    %v8005 = vpop.f32.mrb[0].mxu0
    %v8006 = vadd.f32 %v7953, %v8005
    %v8007 = vpop.f32.mrb[0].mxu0
    %v8008 = vadd.f32 %v7955, %v8007
    %8009 = vmatprep.mubr.bf16.mxu0 %v4700
    %8010 = vmatmul.mubr.bf16.gmra.mrb[0].mxu0 %v4699
    %v8011 = vpop.f32.mrb[0].mxu0
    %v8012 = vadd.f32 %v7959, %v8011
    %v8013 = vpop.f32.mrb[0].mxu0
    %v8014 = vadd.f32 %v7961, %v8013
    %v8015 = vpop.f32.mrb[0].mxu0
    %v8016 = vadd.f32 %v7963, %v8015
    %v8017 = vpop.f32.mrb[0].mxu0
    %v8018 = vadd.f32 %v7965, %v8017
    %8019 = vdwg.mxu0
    %8020 = vmatprep.subr.bf16.mxu0 %v6630
    %8021 = vmatpush1.bf16.msra.mxu0 %v6629
    %8022 = vmatprep.subr.bf16.mxu0 %v6634
    %8023 = vmatpush1.bf16.msra.mxu0 %v6633
    %8024 = vmatprep.subr.bf16.mxu0 %v6638
    %8025 = vmatpush1.bf16.msra.mxu0 %v6637
    %8026 = vmatprep.subr.bf16.mxu0 %v6642
    %8027 = vmatpush1.bf16.msra.mxu0 %v6641
    %8028 = vmatprep.subr.bf16.mxu0 %v6646
    %8029 = vmatpush1.bf16.msra.mxu0 %v6645
    %8030 = vmatprep.subr.bf16.mxu0 %v6650
    %8031 = vmatpush1.bf16.msra.mxu0 %v6649
    %8032 = vmatprep.subr.bf16.mxu0 %v6654
    %8033 = vmatpush1.bf16.msra.mxu0 %v6653
    %8034 = vmatprep.subr.bf16.mxu0 %v6658
    %8035 = vmatpush1.bf16.msra.mxu0 %v6657
    %8036 = vmatprep.subr.bf16.mxu0 %v6662
    %8037 = vmatpush1.bf16.msra.mxu0 %v6661
    %8038 = vmatprep.subr.bf16.mxu0 %v6666
    %8039 = vmatpush1.bf16.msra.mxu0 %v6665
    %8040 = vmatprep.subr.bf16.mxu0 %v6670
    %8041 = vmatpush1.bf16.msra.mxu0 %v6669
    %8042 = vmatprep.subr.bf16.mxu0 %v6674
    %8043 = vmatpush1.bf16.msra.mxu0 %v6673
    %8044 = vmatprep.subr.bf16.mxu0 %v6678
    %8045 = vmatpush1.bf16.msra.mxu0 %v6677
    %8046 = vmatprep.subr.bf16.mxu0 %v6682
    %8047 = vmatpush1.bf16.msra.mxu0 %v6681
    %8048 = vmatprep.subr.bf16.mxu0 %v6686
    %8049 = vmatpush1.bf16.msra.mxu0 %v6685
    %8050 = vmatprep.subr.bf16.mxu0 %v6690
    %8051 = vmatpush1.bf16.msra.mxu0 %v6689
    %8052 = vmatprep.mubr.bf16.mxu0 %v4558
    %8053 = vmatmul.mubr.bf16.gmra.mrb[0].mxu0 %v4557
    %v8054 = vpop.f32.mrb[0].mxu0
    %v8055 = vadd.f32 %v8002, %v8054
    %v8056 = vpop.f32.mrb[0].mxu0
    %v8057 = vadd.f32 %v8004, %v8056
    %v8058 = vpop.f32.mrb[0].mxu0
    %v8059 = vadd.f32 %v8006, %v8058
    %v8060 = vpop.f32.mrb[0].mxu0
    %v8061 = vadd.f32 %v8008, %v8060
    %8062 = vmatprep.mubr.bf16.mxu0 %v4702
    %8063 = vmatmul.mubr.bf16.gmra.mrb[0].mxu0 %v4701
    %v8064 = vpop.f32.mrb[0].mxu0
    %v8065 = vadd.f32 %v8012, %v8064
    %v8066 = vpop.f32.mrb[0].mxu0
    %v8067 = vadd.f32 %v8014, %v8066
    %v8068 = vpop.f32.mrb[0].mxu0
    %v8069 = vadd.f32 %v8016, %v8068
    %v8070 = vpop.f32.mrb[0].mxu0
    %v8071 = vadd.f32 %v8018, %v8070
    %8072 = vdwg.mxu0
    %8073 = vmatprep.subr.bf16.mxu0 %v6694
    %8074 = vmatpush1.bf16.msra.mxu0 %v6693
    %8075 = vmatprep.subr.bf16.mxu0 %v6698
    %8076 = vmatpush1.bf16.msra.mxu0 %v6697
    %8077 = vmatprep.subr.bf16.mxu0 %v6702
    %8078 = vmatpush1.bf16.msra.mxu0 %v6701
    %8079 = vmatprep.subr.bf16.mxu0 %v6706
    %8080 = vmatpush1.bf16.msra.mxu0 %v6705
    %8081 = vmatprep.subr.bf16.mxu0 %v6710
    %8082 = vmatpush1.bf16.msra.mxu0 %v6709
    %8083 = vmatprep.subr.bf16.mxu0 %v6714
    %8084 = vmatpush1.bf16.msra.mxu0 %v6713
    %8085 = vmatprep.subr.bf16.mxu0 %v6718
    %8086 = vmatpush1.bf16.msra.mxu0 %v6717
    %8087 = vmatprep.subr.bf16.mxu0 %v6722
    %8088 = vmatpush1.bf16.msra.mxu0 %v6721
    %8089 = vmatprep.subr.bf16.mxu0 %v6726
    %8090 = vmatpush1.bf16.msra.mxu0 %v6725
    %8091 = vmatprep.subr.bf16.mxu0 %v6730
    %8092 = vmatpush1.bf16.msra.mxu0 %v6729
    %8093 = vmatprep.subr.bf16.mxu0 %v6734
    %8094 = vmatpush1.bf16.msra.mxu0 %v6733
    %8095 = vmatprep.subr.bf16.mxu0 %v6738
    %8096 = vmatpush1.bf16.msra.mxu0 %v6737
    %8097 = vmatprep.subr.bf16.mxu0 %v6742
    %8098 = vmatpush1.bf16.msra.mxu0 %v6741
    %8099 = vmatprep.subr.bf16.mxu0 %v6746
    %8100 = vmatpush1.bf16.msra.mxu0 %v6745
    %8101 = vmatprep.subr.bf16.mxu0 %v6750
    %8102 = vmatpush1.bf16.msra.mxu0 %v6749
    %8103 = vmatprep.subr.bf16.mxu0 %v6754
    %8104 = vmatpush1.bf16.msra.mxu0 %v6753
    %8105 = vmatprep.mubr.bf16.mxu0 %v4592
    %8106 = vmatmul.mubr.bf16.gmra.mrb[0].mxu0 %v4591
    %v8107 = vpop.f32.mrb[0].mxu0
    %v8108 = vadd.f32 %v8055, %v8107
    %v8109 = vpop.f32.mrb[0].mxu0
    %v8110 = vadd.f32 %v8057, %v8109
    %v8111 = vpop.f32.mrb[0].mxu0
    %v8112 = vadd.f32 %v8059, %v8111
    %v8113 = vpop.f32.mrb[0].mxu0
    %v8114 = vadd.f32 %v8061, %v8113
    %8115 = vmatprep.mubr.bf16.mxu0 %v4736
    %8116 = vmatmul.mubr.bf16.gmra.mrb[0].mxu0 %v4735
    %v8117 = vpop.f32.mrb[0].mxu0
    %v8118 = vadd.f32 %v8065, %v8117
    %v8119 = vpop.f32.mrb[0].mxu0
    %v8120 = vadd.f32 %v8067, %v8119
    %v8121 = vpop.f32.mrb[0].mxu0
    %v8122 = vadd.f32 %v8069, %v8121
    %v8123 = vpop.f32.mrb[0].mxu0
    %v8124 = vadd.f32 %v8071, %v8123
    %8125 = vdwg.mxu0
    %8126 = vmatprep.subr.bf16.mxu0 %v6758
    %8127 = vmatpush1.bf16.msra.mxu0 %v6757
    %8128 = vmatprep.subr.bf16.mxu0 %v6762
    %8129 = vmatpush1.bf16.msra.mxu0 %v6761
    %8130 = vmatprep.subr.bf16.mxu0 %v6766
    %8131 = vmatpush1.bf16.msra.mxu0 %v6765
    %8132 = vmatprep.subr.bf16.mxu0 %v6770
    %8133 = vmatpush1.bf16.msra.mxu0 %v6769
    %8134 = vmatprep.subr.bf16.mxu0 %v6774
    %8135 = vmatpush1.bf16.msra.mxu0 %v6773
    %8136 = vmatprep.subr.bf16.mxu0 %v6778
    %8137 = vmatpush1.bf16.msra.mxu0 %v6777
    %8138 = vmatprep.subr.bf16.mxu0 %v6782
    %8139 = vmatpush1.bf16.msra.mxu0 %v6781
    %8140 = vmatprep.subr.bf16.mxu0 %v6786
    %8141 = vmatpush1.bf16.msra.mxu0 %v6785
    %8142 = vmatprep.subr.bf16.mxu0 %v6790
    %8143 = vmatpush1.bf16.msra.mxu0 %v6789
    %8144 = vmatprep.subr.bf16.mxu0 %v6794
    %8145 = vmatpush1.bf16.msra.mxu0 %v6793
    %8146 = vmatprep.subr.bf16.mxu0 %v6798
    %8147 = vmatpush1.bf16.msra.mxu0 %v6797
    %8148 = vmatprep.subr.bf16.mxu0 %v6802
    %8149 = vmatpush1.bf16.msra.mxu0 %v6801
    %8150 = vmatprep.subr.bf16.mxu0 %v6806
    %8151 = vmatpush1.bf16.msra.mxu0 %v6805
    %8152 = vmatprep.subr.bf16.mxu0 %v6810
    %8153 = vmatpush1.bf16.msra.mxu0 %v6809
    %8154 = vmatprep.subr.bf16.mxu0 %v6814
    %8155 = vmatpush1.bf16.msra.mxu0 %v6813
    %8156 = vmatprep.subr.bf16.mxu0 %v6818
    %8157 = vmatpush1.bf16.msra.mxu0 %v6817
    %8158 = vmatprep.mubr.bf16.mxu0 %v4594
    %8159 = vmatmul.mubr.bf16.gmra.mrb[0].mxu0 %v4593
    %v8160 = vpop.f32.mrb[0].mxu0
    %v8161 = vadd.f32 %v8108, %v8160
    %v8162 = vpop.f32.mrb[0].mxu0
    %v8163 = vadd.f32 %v8110, %v8162
    %v8164 = vpop.f32.mrb[0].mxu0
    %v8165 = vadd.f32 %v8112, %v8164
    %v8166 = vpop.f32.mrb[0].mxu0
    %v8167 = vadd.f32 %v8114, %v8166
    %8168 = vmatprep.mubr.bf16.mxu0 %v4738
    %8169 = vmatmul.mubr.bf16.gmra.mrb[0].mxu0 %v4737
    %v8170 = vpop.f32.mrb[0].mxu0
    %v8171 = vadd.f32 %v8118, %v8170
    %v8172 = vpop.f32.mrb[0].mxu0
    %v8173 = vadd.f32 %v8120, %v8172
    %v8174 = vpop.f32.mrb[0].mxu0
    %v8175 = vadd.f32 %v8122, %v8174
    %v8176 = vpop.f32.mrb[0].mxu0
    %v8177 = vadd.f32 %v8124, %v8176
    %8178 = vdwg.mxu0
    %v8179 = vmax.f32 %v7737, 0.0
    %v8180 = vmax.f32 %v7739, 0.0
    %v8181 = vmax.f32 %v8161, 0.0
    %v8182 = vmax.f32 %v8163, 0.0
    %v8183 = vmax.f32 %v7741, 0.0
    %v8184 = vmax.f32 %v7743, 0.0
    %v8185 = vmax.f32 %v8165, 0.0
    %v8186 = vmax.f32 %v8167, 0.0
    %v8187 = vmax.f32 %v7747, 0.0
    %v8188 = vmax.f32 %v7749, 0.0
    %v8189 = vmax.f32 %v8171, 0.0
    %v8190 = vmax.f32 %v8173, 0.0
    %v8191 = vmax.f32 %v7751, 0.0
    %v8192 = vmax.f32 %v7753, 0.0
    %v8193 = vmax.f32 %v8175, 0.0
    %v8194 = vmax.f32 %v8177, 0.0
    %v8195 = vmax.f32 %v8179, %v8180
    %v8196 = vmax.f32 %v8183, %v8184
    %v8197 = vmax.f32 %v8187, %v8188
    %v8198 = vmax.f32 %v8191, %v8192
    %v8199 = vmax.f32 %v8181, %v8182
    %v8200 = vmax.f32 %v8185, %v8186
    %v8201 = vmax.f32 %v8189, %v8190
    %v8202 = vmax.f32 %v8193, %v8194
    %v8203 = vmax.f32 %v8195, %v8199
    %v8204 = vmax.f32 %v8196, %v8200
    %v8205 = vmax.f32 %v8197, %v8201
    %v8206 = vmax.f32 %v8198, %v8202
    %v8207 = vpack.c.bf16 %v8204, %v8203
    %v8208 = vpack.c.bf16 %v8206, %v8205
    %v8211 = vcombine.high %v8207, %v8207
    %v8213 = vunpack.c.l.s4 1983009808
    %v8214 = vunpack.c.0.s8 %v8213
    %v8215 = vlaneseq
    %v8216 = vshrl.u32 %v8215, 7
    %v8217 = vsub.s32 %v8214, %v8216
    %v8218 = vrot.slane %v8207, %v8217
    %v8220 = vunpack.c.l.s4 1983009808
    %v8221 = vunpack.c.0.s8 %v8220
    %v8222 = vlaneseq
    %v8223 = vshrl.u32 %v8222, 7
    %v8224 = vsub.s32 %v8221, %v8223
    %v8225 = vrot.slane %v8211, %v8224
    %v8226 = vcombine.high %v8218, %v8218
    %v8227 = vcombine.high %v8225, %v8225
    %v8228 = vcombine.high %v8208, %v8208
    %v8230 = vunpack.c.l.s4 1983009808
    %v8231 = vunpack.c.0.s8 %v8230
    %v8232 = vlaneseq
    %v8233 = vshrl.u32 %v8232, 7
    %v8234 = vsub.s32 %v8231, %v8233
    %v8235 = vrot.slane %v8208, %v8234
    %v8237 = vunpack.c.l.s4 1983009808
    %v8238 = vunpack.c.0.s8 %v8237
    %v8239 = vlaneseq
    %v8240 = vshrl.u32 %v8239, 7
    %v8241 = vsub.s32 %v8238, %v8240
    %v8242 = vrot.slane %v8228, %v8241
    %v8243 = vcombine.high %v8235, %v8235
    %v8244 = vcombine.high %v8242, %v8242
    %v8246 = vunpack.c.l.s4 1983009808
    %v8247 = vunpack.c.0.s8 %v8246
    %v8248 = vlaneseq
    %v8249 = vshrl.u32 %v8248, 7
    %v8250 = vsub.s32 %v8247, %v8249
    %v8251 = vrot.slane %v8218, %v8250
    %v8253 = vunpack.c.l.s4 1983009808
    %v8254 = vunpack.c.0.s8 %v8253
    %v8255 = vlaneseq
    %v8256 = vshrl.u32 %v8255, 7
    %v8257 = vsub.s32 %v8254, %v8256
    %v8258 = vrot.slane %v8235, %v8257
    %v8259 = vunpack.c.l.b16 %v8251
    %v8260 = vunpack.c.l.b16 %v8258
    %v8261 = vrot.slane %v8260, 7
    %vm8262 = vcmask 1041409
    %v8263 = vsel %vm8262, %v8261, %v8259
    %v8264 = vpack.c.b16 %v8263, %v8263
    %v8265 = vrot.slane %v8259, 1
    %v8266 = vsel %vm8262, %v8260, %v8265
    %v8267 = vpack.c.b16 %v8266, %v8266
    %v8268 = vrot.slane %v8259, 2
    %v8269 = vrot.slane %v8260, 1
    %v8270 = vsel %vm8262, %v8269, %v8268
    %v8271 = vpack.c.b16 %v8270, %v8270
    %v8273 = vunpack.c.l.s4 1983009808
    %v8274 = vunpack.c.0.s8 %v8273
    %v8275 = vlaneseq
    %v8276 = vshrl.u32 %v8275, 7
    %v8277 = vsub.s32 %v8274, %v8276
    %v8278 = vrot.slane %v8226, %v8277
    %v8280 = vunpack.c.l.s4 1983009808
    %v8281 = vunpack.c.0.s8 %v8280
    %v8282 = vlaneseq
    %v8283 = vshrl.u32 %v8282, 7
    %v8284 = vsub.s32 %v8281, %v8283
    %v8285 = vrot.slane %v8243, %v8284
    %v8286 = vunpack.c.l.b16 %v8278
    %v8287 = vunpack.c.l.b16 %v8285
    %v8288 = vrot.slane %v8287, 7
    %v8289 = vsel %vm8262, %v8288, %v8286
    %v8290 = vpack.c.b16 %v8289, %v8289
    %v8291 = vrot.slane %v8286, 1
    %v8292 = vsel %vm8262, %v8287, %v8291
    %v8293 = vpack.c.b16 %v8292, %v8292
    %v8294 = vrot.slane %v8286, 2
    %v8295 = vrot.slane %v8287, 1
    %v8296 = vsel %vm8262, %v8295, %v8294
    %v8297 = vpack.c.b16 %v8296, %v8296
    %v8299 = vunpack.c.l.s4 1983009808
    %v8300 = vunpack.c.0.s8 %v8299
    %v8301 = vlaneseq
    %v8302 = vshrl.u32 %v8301, 7
    %v8303 = vsub.s32 %v8300, %v8302
    %v8304 = vrot.slane %v8225, %v8303
    %v8306 = vunpack.c.l.s4 1983009808
    %v8307 = vunpack.c.0.s8 %v8306
    %v8308 = vlaneseq
    %v8309 = vshrl.u32 %v8308, 7
    %v8310 = vsub.s32 %v8307, %v8309
    %v8311 = vrot.slane %v8242, %v8310
    %v8312 = vunpack.c.l.b16 %v8304
    %v8313 = vunpack.c.l.b16 %v8311
    %v8314 = vrot.slane %v8313, 7
    %v8315 = vsel %vm8262, %v8314, %v8312
    %v8316 = vpack.c.b16 %v8315, %v8315
    %v8317 = vrot.slane %v8312, 1
    %v8318 = vsel %vm8262, %v8313, %v8317
    %v8319 = vpack.c.b16 %v8318, %v8318
    %v8320 = vrot.slane %v8312, 2
    %v8321 = vrot.slane %v8313, 1
    %v8322 = vsel %vm8262, %v8321, %v8320
    %v8323 = vpack.c.b16 %v8322, %v8322
    %v8324 = vrot.slane %v8259, 3
    %v8325 = vrot.slane %v8260, 2
    %v8326 = vsel %vm8262, %v8325, %v8324
    %v8327 = vpack.c.b16 %v8326, %v8326
    %vm8328 = vcmask 1042434
    %v8329 = vsel %vm8328, %v8288, %v8286
    %v8330 = vpack.c.b16 %v8329, %v8329
    %v8331 = vsel %vm8328, %v8287, %v8291
    %v8332 = vpack.c.b16 %v8331, %v8331
    %v8333 = vsel %vm8328, %v8295, %v8294
    %v8334 = vpack.c.b16 %v8333, %v8333
    %v8335 = vrot.slane %v8312, 7
    %v8336 = vrot.slane %v8313, 6
    %v8337 = vsel %vm8328, %v8336, %v8335
    %v8338 = vpack.c.b16 %v8337, %v8337
    %v8339 = vsel %vm8328, %v8314, %v8312
    %v8340 = vpack.c.b16 %v8339, %v8339
    %v8341 = vsel %vm8328, %v8313, %v8317
    %v8342 = vpack.c.b16 %v8341, %v8341
    %v8343 = vsel %vm8328, %v8321, %v8320
    %v8344 = vpack.c.b16 %v8343, %v8343
    %v8346 = vshrl.u32 %v8330, 16
    %v8348 = vshll.u32 %v8330, 16
    %v8350 = vrot.slane %v8348, 1
    %v8351 = vor.u32 %v8346, %v8350
    %v8353 = vshrl.u32 %v8332, 16
    %v8355 = vshll.u32 %v8332, 16
    %v8357 = vrot.slane %v8355, 1
    %v8358 = vor.u32 %v8353, %v8357
    %v8360 = vshrl.u32 %v8334, 16
    %v8362 = vshll.u32 %v8334, 16
    %v8364 = vrot.slane %v8362, 1
    %v8365 = vor.u32 %v8360, %v8364
    %v8367 = vshrl.u32 %v8338, 16
    %v8369 = vshll.u32 %v8338, 16
    %v8371 = vrot.slane %v8369, 1
    %v8372 = vor.u32 %v8367, %v8371
    %v8374 = vshrl.u32 %v8340, 16
    %v8376 = vshll.u32 %v8340, 16
    %v8378 = vrot.slane %v8376, 1
    %v8379 = vor.u32 %v8374, %v8378
    %v8381 = vshrl.u32 %v8342, 16
    %v8383 = vshll.u32 %v8342, 16
    %v8385 = vrot.slane %v8383, 1
    %v8386 = vor.u32 %v8381, %v8385
    %v8388 = vshrl.u32 %v8344, 16
    %v8390 = vshll.u32 %v8344, 16
    %v8392 = vrot.slane %v8390, 1
    %v8393 = vor.u32 %v8388, %v8392
    %v8395 = vunpack.c.l.s4 1983009808
    %v8396 = vunpack.c.0.s8 %v8395
    %v8397 = vlaneseq
    %v8398 = vshrl.u32 %v8397, 7
    %v8399 = vsub.s32 %v8396, %v8398
    %v8400 = vrot.slane %v8227, %v8399
    %v8402 = vunpack.c.l.s4 1983009808
    %v8403 = vunpack.c.0.s8 %v8402
    %v8404 = vlaneseq
    %v8405 = vshrl.u32 %v8404, 7
    %v8406 = vsub.s32 %v8403, %v8405
    %v8407 = vrot.slane %v8244, %v8406
    %v8408 = vunpack.c.l.b16 %v8400
    %v8409 = vunpack.c.l.b16 %v8407
    %v8410 = vrot.slane %v8409, 7
    %v8411 = vsel %vm8262, %v8410, %v8408
    %v8412 = vpack.c.b16 %v8411, %v8411
    %v8413 = vrot.slane %v8408, 1
    %v8414 = vsel %vm8262, %v8409, %v8413
    %v8415 = vpack.c.b16 %v8414, %v8414
    %v8416 = vrot.slane %v8408, 2
    %v8417 = vrot.slane %v8409, 1
    %v8418 = vsel %vm8262, %v8417, %v8416
    %v8419 = vpack.c.b16 %v8418, %v8418
    %v8420 = vrot.slane %v8286, 3
    %v8421 = vrot.slane %v8287, 2
    %v8422 = vsel %vm8262, %v8421, %v8420
    %v8423 = vpack.c.b16 %v8422, %v8422
    %v8424 = vrot.slane %v8312, 3
    %v8425 = vrot.slane %v8313, 2
    %v8426 = vsel %vm8262, %v8425, %v8424
    %v8427 = vpack.c.b16 %v8426, %v8426
    %v8428 = vsel %vm8328, %v8410, %v8408
    %v8429 = vpack.c.b16 %v8428, %v8428
    %v8430 = vsel %vm8328, %v8409, %v8413
    %v8431 = vpack.c.b16 %v8430, %v8430
    %v8432 = vsel %vm8328, %v8417, %v8416
    %v8433 = vpack.c.b16 %v8432, %v8432
    %v8435 = vshrl.u32 %v8429, 16
    %v8437 = vshll.u32 %v8429, 16
    %v8439 = vrot.slane %v8437, 1
    %v8440 = vor.u32 %v8435, %v8439
    %v8442 = vshrl.u32 %v8431, 16
    %v8444 = vshll.u32 %v8431, 16
    %v8446 = vrot.slane %v8444, 1
    %v8447 = vor.u32 %v8442, %v8446
    %v8449 = vshrl.u32 %v8433, 16
    %v8451 = vshll.u32 %v8433, 16
    %v8453 = vrot.slane %v8451, 1
    %v8454 = vor.u32 %v8449, %v8453
    %v8455 = vrot.slane 0, 7
    %v8456 = vrot.slane %v8264, 7
    %v8457 = vrot.slane %v8267, 7
    %v8458 = vrot.slane %v8271, 7
    %v8459 = vrot.slane %v8327, 7
    %v8460 = vrot.slane %v8290, 7
    %v8461 = vrot.slane %v8351, 7
    %v8462 = vrot.slane %v8358, 7
    %v8463 = vrot.slane %v8365, 7
    %v8464 = vrot.slane %v3408, 7
    %v8465 = vrot.slane %v8372, 7
    %v8466 = vrot.slane %v8379, 7
    %v8467 = vrot.slane %v8386, 7
    %v8468 = vrot.slane %v8393, 7
    %v8469 = vrot.slane 0, 6
    %v8470 = vrot.slane %v8264, 6
    %v8471 = vrot.slane %v8267, 6
    %v8472 = vrot.slane %v8271, 6
    %v8473 = vrot.slane %v8290, 6
    %v8474 = vrot.slane %v8293, 6
    %v8475 = vrot.slane %v8297, 6
    %v8476 = vrot.slane %v8316, 6
    %v8477 = vrot.slane %v8319, 6
    %v8478 = vrot.slane %v8323, 6
    %v8479 = vrot.slane %v8412, 6
    %v8480 = vrot.slane %v8415, 6
    %v8481 = vrot.slane %v8419, 6
    %v8482 = vrot.slane %v8264, 5
    %v8483 = vrot.slane %v8267, 5
    %v8484 = vrot.slane %v8271, 5
    %v8485 = vrot.slane %v8327, 5
    %v8486 = vrot.slane 0, 5
    %v8487 = vrot.slane %v8290, 5
    %v8488 = vrot.slane %v8293, 5
    %v8489 = vrot.slane %v8297, 5
    %v8490 = vrot.slane %v8423, 5
    %v8491 = vrot.slane %v8316, 5
    %v8492 = vrot.slane %v8319, 5
    %v8493 = vrot.slane %v8323, 5
    %v8494 = vrot.slane %v8427, 5
    %v8495 = vrot.slane %v8412, 5
    %v8496 = vrot.slane %v8440, 5
    %v8497 = vrot.slane %v8447, 5
    %v8498 = vrot.slane %v8454, 5
    %v8499 = vrot.slane %v3408, 5
    %vm8500 = vcmask 1040384
    %v8502 = vsel %vm8500, 0, %v8455
    %v8504 = vsel %vm8500, 0, %v8456
    %v8506 = vsel %vm8500, 0, %v8457
    %v8509 = vsel %vm8500, %v8264, %v8458
    %v8512 = vsel %vm8500, %v8267, %v8459
    %v8514 = vsel %vm8500, %v8271, %v8455
    %v8516 = vsel %vm8500, 0, %v8460
    %v8518 = vsel %vm8500, 0, %v8461
    %v8521 = vsel %vm8500, %v8290, %v8462
    %v8524 = vsel %vm8500, %v8293, %v8463
    %v8527 = vsel %vm8500, %v8297, %v8464
    %v8529 = vsel %vm8500, 0, %v8465
    %v8531 = vsel %vm8500, 0, %v8466
    %v8534 = vsel %vm8500, %v8316, %v8467
    %v8537 = vsel %vm8500, %v8319, %v8468
    %v8539 = vsel %vm8500, %v8323, %v8464
    %vm8540 = vcmask 1041408
    %v8542 = vsel %vm8540, %v8502, %v8469
    %v8544 = vsel %vm8540, %v8502, %v8470
    %v8546 = vsel %vm8540, %v8502, %v8471
    %v8548 = vsel %vm8540, %v8502, %v8472
    %v8550 = vsel %vm8540, %v8502, %v8473
    %v8552 = vsel %vm8540, %v8502, %v8474
    %v8554 = vsel %vm8540, %v8502, %v8475
    %v8555 = vsel %vm8540, %v8504, %v8469
    %v8556 = vsel %vm8540, %v8506, %v8469
    %v8558 = vsel %vm8540, %v8509, %v8476
    %v8560 = vsel %vm8540, %v8512, %v8477
    %v8562 = vsel %vm8540, %v8514, %v8478
    %v8563 = vsel %vm8540, %v8516, %v8469
    %v8564 = vsel %vm8540, %v8518, %v8469
    %v8566 = vsel %vm8540, %v8521, %v8479
    %v8568 = vsel %vm8540, %v8524, %v8480
    %v8570 = vsel %vm8540, %v8527, %v8481
    %v8571 = vsel %vm8540, %v8529, %v8469
    %v8572 = vsel %vm8540, %v8531, %v8469
    %v8573 = vsel %vm8540, %v8534, %v8469
    %v8574 = vsel %vm8540, %v8537, %v8469
    %v8575 = vsel %vm8540, %v8539, %v8469
    %vm8576 = vcmask 1042432
    %v8578 = vsel %vm8576, %v8542, %v8482
    %v8581 = vsel %vm8576, %v8542, %v8483
    %v8584 = vsel %vm8576, %v8544, %v8484
    %v8587 = vsel %vm8576, %v8546, %v8485
    %v8590 = vsel %vm8576, %v8548, %v8486
    %v8593 = vsel %vm8576, %v8542, %v8487
    %v8596 = vsel %vm8576, %v8542, %v8488
    %v8599 = vsel %vm8576, %v8550, %v8489
    %v8602 = vsel %vm8576, %v8552, %v8490
    %v8604 = vsel %vm8576, %v8554, %v8486
    %v8607 = vsel %vm8576, %v8555, %v8491
    %v8610 = vsel %vm8576, %v8556, %v8492
    %v8613 = vsel %vm8576, %v8558, %v8493
    %v8616 = vsel %vm8576, %v8560, %v8494
    %v8618 = vsel %vm8576, %v8562, %v8486
    %v8621 = vsel %vm8576, %v8563, %v8495
    %v8624 = vsel %vm8576, %v8564, %v8496
    %v8627 = vsel %vm8576, %v8566, %v8497
    %v8630 = vsel %vm8576, %v8568, %v8498
    %v8633 = vsel %vm8576, %v8570, %v8499
    %v8635 = vsel %vm8576, %v8571, %v8499
    %v8637 = vsel %vm8576, %v8572, %v8499
    %v8639 = vsel %vm8576, %v8573, %v8499
    %v8641 = vsel %vm8576, %v8574, %v8499
    %v8643 = vsel %vm8576, %v8575, %v8499
    %v8645 = vld [vmem:[%s5] sm:$0xff]
    %v8646 = vld [vmem:[%s5 + $0x8] sm:$0xff]
    %v8647 = vld [vmem:[%s5 + $0x10] sm:$0xff]
    %v8648 = vld [vmem:[%s5 + $0x18] sm:$0xff]
    %v8649 = vld [vmem:[%s5 + $0x20] sm:$0xff]
    %v8650 = vld [vmem:[%s5 + $0x28] sm:$0xff]
    %v8651 = vld [vmem:[%s5 + $0x30] sm:$0xff]
    %v8652 = vld [vmem:[%s5 + $0x38] sm:$0xff]
    %v8653 = vld [vmem:[%s5 + $0x40] sm:$0xff]
    %v8654 = vld [vmem:[%s5 + $0x48] sm:$0xff]
    %v8655 = vld [vmem:[%s5 + $0x50] sm:$0xff]
    %v8656 = vld [vmem:[%s5 + $0x58] sm:$0xff]
    %v8657 = vld [vmem:[%s5 + $0x60] sm:$0xff]
    %v8658 = vld [vmem:[%s5 + $0x68] sm:$0xff]
    %v8659 = vld [vmem:[%s5 + $0x70] sm:$0xff]
    %v8660 = vld [vmem:[%s5 + $0x78] sm:$0xff]
    %v8661 = vld [vmem:[%s5 + $0x80] sm:$0xff]
    %v8662 = vld [vmem:[%s5 + $0x88] sm:$0xff]
    %v8663 = vld [vmem:[%s5 + $0x90] sm:$0xff]
    %v8664 = vld [vmem:[%s5 + $0x98] sm:$0xff]
    %v8665 = vld [vmem:[%s5 + $0xa0] sm:$0xff]
    %v8666 = vld [vmem:[%s5 + $0xa8] sm:$0xff]
    %v8667 = vld [vmem:[%s5 + $0xb0] sm:$0xff]
    %v8668 = vld [vmem:[%s5 + $0xb8] sm:$0xff]
    %v8669 = vld [vmem:[%s5 + $0xc0] sm:$0xff]
    %v8670 = vld [vmem:[%s5 + $0xc8] sm:$0xff]
    %v8671 = vld [vmem:[%s5 + $0xd0] sm:$0xff]
    %v8672 = vld [vmem:[%s5 + $0xd8] sm:$0xff]
    %v8673 = vld [vmem:[%s5 + $0xe0] sm:$0xff]
    %v8674 = vld [vmem:[%s5 + $0xe8] sm:$0xff]
    %v8675 = vld [vmem:[%s5 + $0xf0] sm:$0xff]
    %v8676 = vld [vmem:[%s5 + $0xf8] sm:$0xff]
    %v8677 = vld [vmem:[%s5 + $0x100] sm:$0xff]
    %v8678 = vld [vmem:[%s5 + $0x108] sm:$0xff]
    %v8679 = vld [vmem:[%s5 + $0x110] sm:$0xff]
    %v8680 = vld [vmem:[%s5 + $0x118] sm:$0xff]
    %v8681 = vld [vmem:[%s5 + $0x120] sm:$0xff]
    %v8682 = vld [vmem:[%s5 + $0x128] sm:$0xff]
    %v8683 = vld [vmem:[%s5 + $0x130] sm:$0xff]
    %v8684 = vld [vmem:[%s5 + $0x138] sm:$0xff]
    %v8685 = vld [vmem:[%s5 + $0x140] sm:$0xff]
    %v8686 = vld [vmem:[%s5 + $0x148] sm:$0xff]
    %v8687 = vld [vmem:[%s5 + $0x150] sm:$0xff]
    %v8688 = vld [vmem:[%s5 + $0x158] sm:$0xff]
    %v8689 = vld [vmem:[%s5 + $0x160] sm:$0xff]
    %v8690 = vld [vmem:[%s5 + $0x168] sm:$0xff]
    %v8691 = vld [vmem:[%s5 + $0x170] sm:$0xff]
    %v8692 = vld [vmem:[%s5 + $0x178] sm:$0xff]
    %v8693 = vld [vmem:[%s5 + $0x180] sm:$0xff]
    %v8694 = vld [vmem:[%s5 + $0x188] sm:$0xff]
    %v8695 = vld [vmem:[%s5 + $0x190] sm:$0xff]
    %v8696 = vld [vmem:[%s5 + $0x198] sm:$0xff]
    %v8697 = vld [vmem:[%s5 + $0x1a0] sm:$0xff]
    %v8698 = vld [vmem:[%s5 + $0x1a8] sm:$0xff]
    %v8699 = vld [vmem:[%s5 + $0x1b0] sm:$0xff]
    %v8700 = vld [vmem:[%s5 + $0x1b8] sm:$0xff]
    %v8701 = vld [vmem:[%s5 + $0x1c0] sm:$0xff]
    %v8702 = vld [vmem:[%s5 + $0x1c8] sm:$0xff]
    %v8703 = vld [vmem:[%s5 + $0x1d0] sm:$0xff]
    %v8704 = vld [vmem:[%s5 + $0x1d8] sm:$0xff]
    %v8705 = vld [vmem:[%s5 + $0x1e0] sm:$0xff]
    %v8706 = vld [vmem:[%s5 + $0x1e8] sm:$0xff]
    %v8707 = vld [vmem:[%s5 + $0x1f0] sm:$0xff]
    %v8708 = vld [vmem:[%s5 + $0x1f8] sm:$0xff]
    %v8709 = vld [vmem:[%s5 + $0x200] sm:$0xff]
    %v8710 = vld [vmem:[%s5 + $0x208] sm:$0xff]
    %v8711 = vld [vmem:[%s5 + $0x210] sm:$0xff]
    %v8712 = vld [vmem:[%s5 + $0x218] sm:$0xff]
    %v8713 = vld [vmem:[%s5 + $0x220] sm:$0xff]
    %v8714 = vld [vmem:[%s5 + $0x228] sm:$0xff]
    %v8715 = vld [vmem:[%s5 + $0x230] sm:$0xff]
    %v8716 = vld [vmem:[%s5 + $0x238] sm:$0xff]
    %v8717 = vld [vmem:[%s5 + $0x240] sm:$0xff]
    %v8718 = vld [vmem:[%s5 + $0x248] sm:$0xff]
    %v8719 = vld [vmem:[%s5 + $0x250] sm:$0xff]
    %v8720 = vld [vmem:[%s5 + $0x258] sm:$0xff]
    %v8721 = vld [vmem:[%s5 + $0x260] sm:$0xff]
    %v8722 = vld [vmem:[%s5 + $0x268] sm:$0xff]
    %v8723 = vld [vmem:[%s5 + $0x270] sm:$0xff]
    %v8724 = vld [vmem:[%s5 + $0x278] sm:$0xff]
    %v8725 = vld [vmem:[%s5 + $0x280] sm:$0xff]
    %v8726 = vld [vmem:[%s5 + $0x288] sm:$0xff]
    %v8727 = vld [vmem:[%s5 + $0x290] sm:$0xff]
    %v8728 = vld [vmem:[%s5 + $0x298] sm:$0xff]
    %v8729 = vld [vmem:[%s5 + $0x2a0] sm:$0xff]
    %v8730 = vld [vmem:[%s5 + $0x2a8] sm:$0xff]
    %v8731 = vld [vmem:[%s5 + $0x2b0] sm:$0xff]
    %v8732 = vld [vmem:[%s5 + $0x2b8] sm:$0xff]
    %v8733 = vld [vmem:[%s5 + $0x2c0] sm:$0xff]
    %v8734 = vld [vmem:[%s5 + $0x2c8] sm:$0xff]
    %v8735 = vld [vmem:[%s5 + $0x2d0] sm:$0xff]
    %v8736 = vld [vmem:[%s5 + $0x2d8] sm:$0xff]
    %v8737 = vld [vmem:[%s5 + $0x2e0] sm:$0xff]
    %v8738 = vld [vmem:[%s5 + $0x2e8] sm:$0xff]
    %v8739 = vld [vmem:[%s5 + $0x2f0] sm:$0xff]
    %v8740 = vld [vmem:[%s5 + $0x2f8] sm:$0xff]
    %v8741 = vld [vmem:[%s5 + $0x300] sm:$0xff]
    %v8742 = vld [vmem:[%s5 + $0x308] sm:$0xff]
    %v8743 = vld [vmem:[%s5 + $0x310] sm:$0xff]
    %v8744 = vld [vmem:[%s5 + $0x318] sm:$0xff]
    %v8745 = vld [vmem:[%s5 + $0x320] sm:$0xff]
    %v8746 = vld [vmem:[%s5 + $0x328] sm:$0xff]
    %v8747 = vld [vmem:[%s5 + $0x330] sm:$0xff]
    %v8748 = vld [vmem:[%s5 + $0x338] sm:$0xff]
    %v8749 = vld [vmem:[%s5 + $0x340] sm:$0xff]
    %v8750 = vld [vmem:[%s5 + $0x348] sm:$0xff]
    %v8751 = vld [vmem:[%s5 + $0x350] sm:$0xff]
    %v8752 = vld [vmem:[%s5 + $0x358] sm:$0xff]
    %v8753 = vld [vmem:[%s5 + $0x360] sm:$0xff]
    %v8754 = vld [vmem:[%s5 + $0x368] sm:$0xff]
    %v8755 = vld [vmem:[%s5 + $0x370] sm:$0xff]
    %v8756 = vld [vmem:[%s5 + $0x378] sm:$0xff]
    %v8757 = vld [vmem:[%s5 + $0x380] sm:$0xff]
    %v8758 = vld [vmem:[%s5 + $0x388] sm:$0xff]
    %v8759 = vld [vmem:[%s5 + $0x390] sm:$0xff]
    %v8760 = vld [vmem:[%s5 + $0x398] sm:$0xff]
    %v8761 = vld [vmem:[%s5 + $0x3a0] sm:$0xff]
    %v8762 = vld [vmem:[%s5 + $0x3a8] sm:$0xff]
    %v8763 = vld [vmem:[%s5 + $0x3b0] sm:$0xff]
    %v8764 = vld [vmem:[%s5 + $0x3b8] sm:$0xff]
    %v8765 = vld [vmem:[%s5 + $0x3c0] sm:$0xff]
    %v8766 = vld [vmem:[%s5 + $0x3c8] sm:$0xff]
    %v8767 = vld [vmem:[%s5 + $0x3d0] sm:$0xff]
    %v8768 = vld [vmem:[%s5 + $0x3d8] sm:$0xff]
    %v8769 = vld [vmem:[%s5 + $0x3e0] sm:$0xff]
    %v8770 = vld [vmem:[%s5 + $0x3e8] sm:$0xff]
    %v8771 = vld [vmem:[%s5 + $0x3f0] sm:$0xff]
    %v8772 = vld [vmem:[%s5 + $0x3f8] sm:$0xff]
    %v8773 = vld [vmem:[%s5 + $0x400] sm:$0xff]
    %v8774 = vld [vmem:[%s5 + $0x408] sm:$0xff]
    %v8775 = vld [vmem:[%s5 + $0x410] sm:$0xff]
    %v8776 = vld [vmem:[%s5 + $0x418] sm:$0xff]
    %v8777 = vld [vmem:[%s5 + $0x420] sm:$0xff]
    %v8778 = vld [vmem:[%s5 + $0x428] sm:$0xff]
    %v8779 = vld [vmem:[%s5 + $0x430] sm:$0xff]
    %v8780 = vld [vmem:[%s5 + $0x438] sm:$0xff]
    %v8781 = vld [vmem:[%s5 + $0x440] sm:$0xff]
    %v8782 = vld [vmem:[%s5 + $0x448] sm:$0xff]
    %v8783 = vld [vmem:[%s5 + $0x450] sm:$0xff]
    %v8784 = vld [vmem:[%s5 + $0x458] sm:$0xff]
    %v8785 = vld [vmem:[%s5 + $0x460] sm:$0xff]
    %v8786 = vld [vmem:[%s5 + $0x468] sm:$0xff]
    %v8787 = vld [vmem:[%s5 + $0x470] sm:$0xff]
    %v8788 = vld [vmem:[%s5 + $0x478] sm:$0xff]
    %v8789 = vld [vmem:[%s5 + $0x480] sm:$0xff]
    %v8790 = vld [vmem:[%s5 + $0x488] sm:$0xff]
    %v8791 = vld [vmem:[%s5 + $0x490] sm:$0xff]
    %v8792 = vld [vmem:[%s5 + $0x498] sm:$0xff]
    %v8793 = vld [vmem:[%s5 + $0x4a0] sm:$0xff]
    %v8794 = vld [vmem:[%s5 + $0x4a8] sm:$0xff]
    %v8795 = vld [vmem:[%s5 + $0x4b0] sm:$0xff]
    %v8796 = vld [vmem:[%s5 + $0x4b8] sm:$0xff]
    %v8797 = vld [vmem:[%s5 + $0x4c0] sm:$0xff]
    %v8798 = vld [vmem:[%s5 + $0x4c8] sm:$0xff]
    %v8799 = vld [vmem:[%s5 + $0x4d0] sm:$0xff]
    %v8800 = vld [vmem:[%s5 + $0x4d8] sm:$0xff]
    %v8801 = vld [vmem:[%s5 + $0x4e0] sm:$0xff]
    %v8802 = vld [vmem:[%s5 + $0x4e8] sm:$0xff]
    %v8803 = vld [vmem:[%s5 + $0x4f0] sm:$0xff]
    %v8804 = vld [vmem:[%s5 + $0x4f8] sm:$0xff]
    %v8805 = vld [vmem:[%s5 + $0x500] sm:$0xff]
    %v8806 = vld [vmem:[%s5 + $0x508] sm:$0xff]
    %v8807 = vld [vmem:[%s5 + $0x510] sm:$0xff]
    %v8808 = vld [vmem:[%s5 + $0x518] sm:$0xff]
    %v8809 = vld [vmem:[%s5 + $0x520] sm:$0xff]
    %v8810 = vld [vmem:[%s5 + $0x528] sm:$0xff]
    %v8811 = vld [vmem:[%s5 + $0x530] sm:$0xff]
    %v8812 = vld [vmem:[%s5 + $0x538] sm:$0xff]
    %v8813 = vld [vmem:[%s5 + $0x540] sm:$0xff]
    %v8814 = vld [vmem:[%s5 + $0x548] sm:$0xff]
    %v8815 = vld [vmem:[%s5 + $0x550] sm:$0xff]
    %v8816 = vld [vmem:[%s5 + $0x558] sm:$0xff]
    %v8817 = vld [vmem:[%s5 + $0x560] sm:$0xff]
    %v8818 = vld [vmem:[%s5 + $0x568] sm:$0xff]
    %v8819 = vld [vmem:[%s5 + $0x570] sm:$0xff]
    %v8820 = vld [vmem:[%s5 + $0x578] sm:$0xff]
    %v8821 = vld [vmem:[%s5 + $0x580] sm:$0xff]
    %v8822 = vld [vmem:[%s5 + $0x588] sm:$0xff]
    %v8823 = vld [vmem:[%s5 + $0x590] sm:$0xff]
    %v8824 = vld [vmem:[%s5 + $0x598] sm:$0xff]
    %v8825 = vld [vmem:[%s5 + $0x5a0] sm:$0xff]
    %v8826 = vld [vmem:[%s5 + $0x5a8] sm:$0xff]
    %v8827 = vld [vmem:[%s5 + $0x5b0] sm:$0xff]
    %v8828 = vld [vmem:[%s5 + $0x5b8] sm:$0xff]
    %v8829 = vld [vmem:[%s5 + $0x5c0] sm:$0xff]
    %v8830 = vld [vmem:[%s5 + $0x5c8] sm:$0xff]
    %v8831 = vld [vmem:[%s5 + $0x5d0] sm:$0xff]
    %v8832 = vld [vmem:[%s5 + $0x5d8] sm:$0xff]
    %v8833 = vld [vmem:[%s5 + $0x5e0] sm:$0xff]
    %v8834 = vld [vmem:[%s5 + $0x5e8] sm:$0xff]
    %v8835 = vld [vmem:[%s5 + $0x5f0] sm:$0xff]
    %v8836 = vld [vmem:[%s5 + $0x5f8] sm:$0xff]
    %v8837 = vld [vmem:[%s5 + $0x600] sm:$0xff]
    %v8838 = vld [vmem:[%s5 + $0x608] sm:$0xff]
    %v8839 = vld [vmem:[%s5 + $0x610] sm:$0xff]
    %v8840 = vld [vmem:[%s5 + $0x618] sm:$0xff]
    %v8841 = vld [vmem:[%s5 + $0x620] sm:$0xff]
    %v8842 = vld [vmem:[%s5 + $0x628] sm:$0xff]
    %v8843 = vld [vmem:[%s5 + $0x630] sm:$0xff]
    %v8844 = vld [vmem:[%s5 + $0x638] sm:$0xff]
    %v8845 = vld [vmem:[%s5 + $0x640] sm:$0xff]
    %v8846 = vld [vmem:[%s5 + $0x648] sm:$0xff]
    %v8847 = vld [vmem:[%s5 + $0x650] sm:$0xff]
    %v8848 = vld [vmem:[%s5 + $0x658] sm:$0xff]
    %v8849 = vld [vmem:[%s5 + $0x660] sm:$0xff]
    %v8850 = vld [vmem:[%s5 + $0x668] sm:$0xff]
    %v8851 = vld [vmem:[%s5 + $0x670] sm:$0xff]
    %v8852 = vld [vmem:[%s5 + $0x678] sm:$0xff]
    %v8853 = vld [vmem:[%s5 + $0x680] sm:$0xff]
    %v8854 = vld [vmem:[%s5 + $0x688] sm:$0xff]
    %v8855 = vld [vmem:[%s5 + $0x690] sm:$0xff]
    %v8856 = vld [vmem:[%s5 + $0x698] sm:$0xff]
    %v8857 = vld [vmem:[%s5 + $0x6a0] sm:$0xff]
    %v8858 = vld [vmem:[%s5 + $0x6a8] sm:$0xff]
    %v8859 = vld [vmem:[%s5 + $0x6b0] sm:$0xff]
    %v8860 = vld [vmem:[%s5 + $0x6b8] sm:$0xff]
    %v8861 = vld [vmem:[%s5 + $0x6c0] sm:$0xff]
    %v8862 = vld [vmem:[%s5 + $0x6c8] sm:$0xff]
    %v8863 = vld [vmem:[%s5 + $0x6d0] sm:$0xff]
    %v8864 = vld [vmem:[%s5 + $0x6d8] sm:$0xff]
    %v8865 = vld [vmem:[%s5 + $0x6e0] sm:$0xff]
    %v8866 = vld [vmem:[%s5 + $0x6e8] sm:$0xff]
    %v8867 = vld [vmem:[%s5 + $0x6f0] sm:$0xff]
    %v8868 = vld [vmem:[%s5 + $0x6f8] sm:$0xff]
    %v8869 = vld [vmem:[%s5 + $0x700] sm:$0xff]
    %v8870 = vld [vmem:[%s5 + $0x708] sm:$0xff]
    %v8871 = vld [vmem:[%s5 + $0x710] sm:$0xff]
    %v8872 = vld [vmem:[%s5 + $0x718] sm:$0xff]
    %v8873 = vld [vmem:[%s5 + $0x720] sm:$0xff]
    %v8874 = vld [vmem:[%s5 + $0x728] sm:$0xff]
    %v8875 = vld [vmem:[%s5 + $0x730] sm:$0xff]
    %v8876 = vld [vmem:[%s5 + $0x738] sm:$0xff]
    %v8877 = vld [vmem:[%s5 + $0x740] sm:$0xff]
    %v8878 = vld [vmem:[%s5 + $0x748] sm:$0xff]
    %v8879 = vld [vmem:[%s5 + $0x750] sm:$0xff]
    %v8880 = vld [vmem:[%s5 + $0x758] sm:$0xff]
    %v8881 = vld [vmem:[%s5 + $0x760] sm:$0xff]
    %v8882 = vld [vmem:[%s5 + $0x768] sm:$0xff]
    %v8883 = vld [vmem:[%s5 + $0x770] sm:$0xff]
    %v8884 = vld [vmem:[%s5 + $0x778] sm:$0xff]
    %v8885 = vld [vmem:[%s5 + $0x780] sm:$0xff]
    %v8886 = vld [vmem:[%s5 + $0x788] sm:$0xff]
    %v8887 = vld [vmem:[%s5 + $0x790] sm:$0xff]
    %v8888 = vld [vmem:[%s5 + $0x798] sm:$0xff]
    %v8889 = vld [vmem:[%s5 + $0x7a0] sm:$0xff]
    %v8890 = vld [vmem:[%s5 + $0x7a8] sm:$0xff]
    %v8891 = vld [vmem:[%s5 + $0x7b0] sm:$0xff]
    %v8892 = vld [vmem:[%s5 + $0x7b8] sm:$0xff]
    %v8893 = vld [vmem:[%s5 + $0x7c0] sm:$0xff]
    %v8894 = vld [vmem:[%s5 + $0x7c8] sm:$0xff]
    %v8895 = vld [vmem:[%s5 + $0x7d0] sm:$0xff]
    %v8896 = vld [vmem:[%s5 + $0x7d8] sm:$0xff]
    %v8897 = vld [vmem:[%s5 + $0x7e0] sm:$0xff]
    %v8898 = vld [vmem:[%s5 + $0x7e8] sm:$0xff]
    %v8899 = vld [vmem:[%s5 + $0x7f0] sm:$0xff]
    %v8900 = vld [vmem:[%s5 + $0x7f8] sm:$0xff]
    %v8901 = vld [vmem:[%s5 + $0x800] sm:$0xff]
    %v8902 = vld [vmem:[%s5 + $0x808] sm:$0xff]
    %v8903 = vld [vmem:[%s5 + $0x810] sm:$0xff]
    %v8904 = vld [vmem:[%s5 + $0x818] sm:$0xff]
    %v8905 = vld [vmem:[%s5 + $0x820] sm:$0xff]
    %v8906 = vld [vmem:[%s5 + $0x828] sm:$0xff]
    %v8907 = vld [vmem:[%s5 + $0x830] sm:$0xff]
    %v8908 = vld [vmem:[%s5 + $0x838] sm:$0xff]
    %v8909 = vld [vmem:[%s5 + $0x840] sm:$0xff]
    %v8910 = vld [vmem:[%s5 + $0x848] sm:$0xff]
    %v8911 = vld [vmem:[%s5 + $0x850] sm:$0xff]
    %v8912 = vld [vmem:[%s5 + $0x858] sm:$0xff]
    %v8913 = vld [vmem:[%s5 + $0x860] sm:$0xff]
    %v8914 = vld [vmem:[%s5 + $0x868] sm:$0xff]
    %v8915 = vld [vmem:[%s5 + $0x870] sm:$0xff]
    %v8916 = vld [vmem:[%s5 + $0x878] sm:$0xff]
    %v8917 = vld [vmem:[%s5 + $0x880] sm:$0xff]
    %v8918 = vld [vmem:[%s5 + $0x888] sm:$0xff]
    %v8919 = vld [vmem:[%s5 + $0x890] sm:$0xff]
    %v8920 = vld [vmem:[%s5 + $0x898] sm:$0xff]
    %v8921 = vld [vmem:[%s5 + $0x8a0] sm:$0xff]
    %v8922 = vld [vmem:[%s5 + $0x8a8] sm:$0xff]
    %v8923 = vld [vmem:[%s5 + $0x8b0] sm:$0xff]
    %v8924 = vld [vmem:[%s5 + $0x8b8] sm:$0xff]
    %v8925 = vld [vmem:[%s5 + $0x8c0] sm:$0xff]
    %v8926 = vld [vmem:[%s5 + $0x8c8] sm:$0xff]
    %v8927 = vld [vmem:[%s5 + $0x8d0] sm:$0xff]
    %v8928 = vld [vmem:[%s5 + $0x8d8] sm:$0xff]
    %v8929 = vld [vmem:[%s5 + $0x8e0] sm:$0xff]
    %v8930 = vld [vmem:[%s5 + $0x8e8] sm:$0xff]
    %v8931 = vld [vmem:[%s5 + $0x8f0] sm:$0xff]
    %v8932 = vld [vmem:[%s5 + $0x8f8] sm:$0xff]
    %v8933 = vld [vmem:[%s5 + $0x900] sm:$0xff]
    %v8934 = vld [vmem:[%s5 + $0x908] sm:$0xff]
    %v8935 = vld [vmem:[%s5 + $0x910] sm:$0xff]
    %v8936 = vld [vmem:[%s5 + $0x918] sm:$0xff]
    %v8937 = vld [vmem:[%s5 + $0x920] sm:$0xff]
    %v8938 = vld [vmem:[%s5 + $0x928] sm:$0xff]
    %v8939 = vld [vmem:[%s5 + $0x930] sm:$0xff]
    %v8940 = vld [vmem:[%s5 + $0x938] sm:$0xff]
    %v8941 = vld [vmem:[%s5 + $0x940] sm:$0xff]
    %v8942 = vld [vmem:[%s5 + $0x948] sm:$0xff]
    %v8943 = vld [vmem:[%s5 + $0x950] sm:$0xff]
    %v8944 = vld [vmem:[%s5 + $0x958] sm:$0xff]
    %v8945 = vld [vmem:[%s5 + $0x960] sm:$0xff]
    %v8946 = vld [vmem:[%s5 + $0x968] sm:$0xff]
    %v8947 = vld [vmem:[%s5 + $0x970] sm:$0xff]
    %v8948 = vld [vmem:[%s5 + $0x978] sm:$0xff]
    %v8949 = vld [vmem:[%s5 + $0x980] sm:$0xff]
    %v8950 = vld [vmem:[%s5 + $0x988] sm:$0xff]
    %v8951 = vld [vmem:[%s5 + $0x990] sm:$0xff]
    %v8952 = vld [vmem:[%s5 + $0x998] sm:$0xff]
    %v8953 = vld [vmem:[%s5 + $0x9a0] sm:$0xff]
    %v8954 = vld [vmem:[%s5 + $0x9a8] sm:$0xff]
    %v8955 = vld [vmem:[%s5 + $0x9b0] sm:$0xff]
    %v8956 = vld [vmem:[%s5 + $0x9b8] sm:$0xff]
    %v8957 = vld [vmem:[%s5 + $0x9c0] sm:$0xff]
    %v8958 = vld [vmem:[%s5 + $0x9c8] sm:$0xff]
    %v8959 = vld [vmem:[%s5 + $0x9d0] sm:$0xff]
    %v8960 = vld [vmem:[%s5 + $0x9d8] sm:$0xff]
    %v8961 = vld [vmem:[%s5 + $0x9e0] sm:$0xff]
    %v8962 = vld [vmem:[%s5 + $0x9e8] sm:$0xff]
    %v8963 = vld [vmem:[%s5 + $0x9f0] sm:$0xff]
    %v8964 = vld [vmem:[%s5 + $0x9f8] sm:$0xff]
    %v8965 = vld [vmem:[%s5 + $0xa00] sm:$0xff]
    %v8966 = vld [vmem:[%s5 + $0xa08] sm:$0xff]
    %v8967 = vld [vmem:[%s5 + $0xa10] sm:$0xff]
    %v8968 = vld [vmem:[%s5 + $0xa18] sm:$0xff]
    %v8969 = vld [vmem:[%s5 + $0xa20] sm:$0xff]
    %v8970 = vld [vmem:[%s5 + $0xa28] sm:$0xff]
    %v8971 = vld [vmem:[%s5 + $0xa30] sm:$0xff]
    %v8972 = vld [vmem:[%s5 + $0xa38] sm:$0xff]
    %v8973 = vld [vmem:[%s5 + $0xa40] sm:$0xff]
    %v8974 = vld [vmem:[%s5 + $0xa48] sm:$0xff]
    %v8975 = vld [vmem:[%s5 + $0xa50] sm:$0xff]
    %v8976 = vld [vmem:[%s5 + $0xa58] sm:$0xff]
    %v8977 = vld [vmem:[%s5 + $0xa60] sm:$0xff]
    %v8978 = vld [vmem:[%s5 + $0xa68] sm:$0xff]
    %v8979 = vld [vmem:[%s5 + $0xa70] sm:$0xff]
    %v8980 = vld [vmem:[%s5 + $0xa78] sm:$0xff]
    %v8981 = vld [vmem:[%s5 + $0xa80] sm:$0xff]
    %v8982 = vld [vmem:[%s5 + $0xa88] sm:$0xff]
    %v8983 = vld [vmem:[%s5 + $0xa90] sm:$0xff]
    %v8984 = vld [vmem:[%s5 + $0xa98] sm:$0xff]
    %v8985 = vld [vmem:[%s5 + $0xaa0] sm:$0xff]
    %v8986 = vld [vmem:[%s5 + $0xaa8] sm:$0xff]
    %v8987 = vld [vmem:[%s5 + $0xab0] sm:$0xff]
    %v8988 = vld [vmem:[%s5 + $0xab8] sm:$0xff]
    %v8989 = vld [vmem:[%s5 + $0xac0] sm:$0xff]
    %v8990 = vld [vmem:[%s5 + $0xac8] sm:$0xff]
    %v8991 = vld [vmem:[%s5 + $0xad0] sm:$0xff]
    %v8992 = vld [vmem:[%s5 + $0xad8] sm:$0xff]
    %v8993 = vld [vmem:[%s5 + $0xae0] sm:$0xff]
    %v8994 = vld [vmem:[%s5 + $0xae8] sm:$0xff]
    %v8995 = vld [vmem:[%s5 + $0xaf0] sm:$0xff]
    %v8996 = vld [vmem:[%s5 + $0xaf8] sm:$0xff]
    %v8997 = vld [vmem:[%s5 + $0xb00] sm:$0xff]
    %v8998 = vld [vmem:[%s5 + $0xb08] sm:$0xff]
    %v8999 = vld [vmem:[%s5 + $0xb10] sm:$0xff]
    %v9000 = vld [vmem:[%s5 + $0xb18] sm:$0xff]
    %v9001 = vld [vmem:[%s5 + $0xb20] sm:$0xff]
    %v9002 = vld [vmem:[%s5 + $0xb28] sm:$0xff]
    %v9003 = vld [vmem:[%s5 + $0xb30] sm:$0xff]
    %v9004 = vld [vmem:[%s5 + $0xb38] sm:$0xff]
    %v9005 = vld [vmem:[%s5 + $0xb40] sm:$0xff]
    %v9006 = vld [vmem:[%s5 + $0xb48] sm:$0xff]
    %v9007 = vld [vmem:[%s5 + $0xb50] sm:$0xff]
    %v9008 = vld [vmem:[%s5 + $0xb58] sm:$0xff]
    %v9009 = vld [vmem:[%s5 + $0xb60] sm:$0xff]
    %v9010 = vld [vmem:[%s5 + $0xb68] sm:$0xff]
    %v9011 = vld [vmem:[%s5 + $0xb70] sm:$0xff]
    %v9012 = vld [vmem:[%s5 + $0xb78] sm:$0xff]
    %v9013 = vld [vmem:[%s5 + $0xb80] sm:$0xff]
    %v9014 = vld [vmem:[%s5 + $0xb88] sm:$0xff]
    %v9015 = vld [vmem:[%s5 + $0xb90] sm:$0xff]
    %v9016 = vld [vmem:[%s5 + $0xb98] sm:$0xff]
    %v9017 = vld [vmem:[%s5 + $0xba0] sm:$0xff]
    %v9018 = vld [vmem:[%s5 + $0xba8] sm:$0xff]
    %v9019 = vld [vmem:[%s5 + $0xbb0] sm:$0xff]
    %v9020 = vld [vmem:[%s5 + $0xbb8] sm:$0xff]
    %v9021 = vld [vmem:[%s5 + $0xbc0] sm:$0xff]
    %v9022 = vld [vmem:[%s5 + $0xbc8] sm:$0xff]
    %v9023 = vld [vmem:[%s5 + $0xbd0] sm:$0xff]
    %v9024 = vld [vmem:[%s5 + $0xbd8] sm:$0xff]
    %v9025 = vld [vmem:[%s5 + $0xbe0] sm:$0xff]
    %v9026 = vld [vmem:[%s5 + $0xbe8] sm:$0xff]
    %v9027 = vld [vmem:[%s5 + $0xbf0] sm:$0xff]
    %v9028 = vld [vmem:[%s5 + $0xbf8] sm:$0xff]
    %v9029 = vld [vmem:[%s5 + $0xc00] sm:$0xff]
    %v9030 = vld [vmem:[%s5 + $0xc08] sm:$0xff]
    %v9031 = vld [vmem:[%s5 + $0xc10] sm:$0xff]
    %v9032 = vld [vmem:[%s5 + $0xc18] sm:$0xff]
    %v9033 = vld [vmem:[%s5 + $0xc20] sm:$0xff]
    %v9034 = vld [vmem:[%s5 + $0xc28] sm:$0xff]
    %v9035 = vld [vmem:[%s5 + $0xc30] sm:$0xff]
    %v9036 = vld [vmem:[%s5 + $0xc38] sm:$0xff]
    %v9037 = vld [vmem:[%s5 + $0xc40] sm:$0xff]
    %v9038 = vld [vmem:[%s5 + $0xc48] sm:$0xff]
    %v9039 = vld [vmem:[%s5 + $0xc50] sm:$0xff]
    %v9040 = vld [vmem:[%s5 + $0xc58] sm:$0xff]
    %v9041 = vld [vmem:[%s5 + $0xc60] sm:$0xff]
    %v9042 = vld [vmem:[%s5 + $0xc68] sm:$0xff]
    %v9043 = vld [vmem:[%s5 + $0xc70] sm:$0xff]
    %v9044 = vld [vmem:[%s5 + $0xc78] sm:$0xff]
    %v9045 = vld [vmem:[%s6] sm:$0x3]
    %v9047 = vlaneseq
    %v9048 = vshrl.u32 %v9047, 7
    %v9049 = vsub.s32 0, %v9048
    %v9050 = vrot.slane %v9045, %v9049
    %v9051 = vlaneseq
    %v9052 = vshrl.u32 %v9051, 7
    %v9053 = vsub.s32 1, %v9052
    %v9054 = vrot.slane %v9045, %v9053
    %v9457 = vunpack.c.l.b16 %v8645
    %v9458 = vunpack.c.h.b16 %v8645
    %v9459 = vunpack.c.l.b16 %v8646
    %v9460 = vunpack.c.h.b16 %v8646
    %v9461 = vunpack.c.l.b16 %v8647
    %v9462 = vunpack.c.h.b16 %v8647
    %v9463 = vunpack.c.l.b16 %v8648
    %v9464 = vunpack.c.h.b16 %v8648
    %v9465 = vunpack.c.l.b16 %v8649
    %v9466 = vunpack.c.h.b16 %v8649
    %v9467 = vunpack.c.l.b16 %v8650
    %v9468 = vunpack.c.h.b16 %v8650
    %v9469 = vunpack.c.l.b16 %v8651
    %v9470 = vunpack.c.h.b16 %v8651
    %v9471 = vunpack.c.l.b16 %v8652
    %v9472 = vunpack.c.h.b16 %v8652
    %v9473 = vunpack.c.l.b16 %v8653
    %v9474 = vunpack.c.h.b16 %v8653
    %v9475 = vunpack.c.l.b16 %v8654
    %v9476 = vunpack.c.h.b16 %v8654
    %v9477 = vunpack.c.l.b16 %v8655
    %v9478 = vunpack.c.h.b16 %v8655
    %v9479 = vunpack.c.l.b16 %v8656
    %v9480 = vunpack.c.h.b16 %v8656
    %v9481 = vunpack.c.l.b16 %v8657
    %v9482 = vunpack.c.h.b16 %v8657
    %v9483 = vunpack.c.l.b16 %v8658
    %v9484 = vunpack.c.h.b16 %v8658
    %v9485 = vunpack.c.l.b16 %v8659
    %v9486 = vunpack.c.h.b16 %v8659
    %v9487 = vunpack.c.l.b16 %v8660
    %v9488 = vunpack.c.h.b16 %v8660
    %v9489 = vunpack.c.l.b16 %v8661
    %v9490 = vunpack.c.h.b16 %v8661
    %v9491 = vunpack.c.l.b16 %v8662
    %v9492 = vunpack.c.h.b16 %v8662
    %v9493 = vunpack.c.l.b16 %v8663
    %v9494 = vunpack.c.h.b16 %v8663
    %v9495 = vunpack.c.l.b16 %v8664
    %v9496 = vunpack.c.h.b16 %v8664
    %v9497 = vunpack.c.l.b16 %v8665
    %v9498 = vunpack.c.h.b16 %v8665
    %v9499 = vunpack.c.l.b16 %v8666
    %v9500 = vunpack.c.h.b16 %v8666
    %v9501 = vunpack.c.l.b16 %v8667
    %v9502 = vunpack.c.h.b16 %v8667
    %v9503 = vunpack.c.l.b16 %v8668
    %v9504 = vunpack.c.h.b16 %v8668
    %v9505 = vunpack.c.l.b16 %v8669
    %v9506 = vunpack.c.h.b16 %v8669
    %v9507 = vunpack.c.l.b16 %v8670
    %v9508 = vunpack.c.h.b16 %v8670
    %v9509 = vunpack.c.l.b16 %v8671
    %v9510 = vunpack.c.h.b16 %v8671
    %v9511 = vunpack.c.l.b16 %v8672
    %v9512 = vunpack.c.h.b16 %v8672
    %v9513 = vunpack.c.l.b16 %v8673
    %v9514 = vunpack.c.h.b16 %v8673
    %v9515 = vunpack.c.l.b16 %v8674
    %v9516 = vunpack.c.h.b16 %v8674
    %v9517 = vunpack.c.l.b16 %v8675
    %v9518 = vunpack.c.h.b16 %v8675
    %v9519 = vunpack.c.l.b16 %v8676
    %v9520 = vunpack.c.h.b16 %v8676
    %v9521 = vunpack.c.l.b16 %v8677
    %v9522 = vunpack.c.h.b16 %v8677
    %v9523 = vunpack.c.l.b16 %v8678
    %v9524 = vunpack.c.h.b16 %v8678
    %v9525 = vunpack.c.l.b16 %v8679
    %v9526 = vunpack.c.h.b16 %v8679
    %v9527 = vunpack.c.l.b16 %v8680
    %v9528 = vunpack.c.h.b16 %v8680
    %v9529 = vunpack.c.l.b16 %v8681
    %v9530 = vunpack.c.h.b16 %v8681
    %v9531 = vunpack.c.l.b16 %v8682
    %v9532 = vunpack.c.h.b16 %v8682
    %v9533 = vunpack.c.l.b16 %v8683
    %v9534 = vunpack.c.h.b16 %v8683
    %v9535 = vunpack.c.l.b16 %v8684
    %v9536 = vunpack.c.h.b16 %v8684
    %v9537 = vunpack.c.l.b16 %v8685
    %v9538 = vunpack.c.h.b16 %v8685
    %v9539 = vunpack.c.l.b16 %v8686
    %v9540 = vunpack.c.h.b16 %v8686
    %v9541 = vunpack.c.l.b16 %v8687
    %v9542 = vunpack.c.h.b16 %v8687
    %v9543 = vunpack.c.l.b16 %v8688
    %v9544 = vunpack.c.h.b16 %v8688
    %v9545 = vunpack.c.l.b16 %v8689
    %v9546 = vunpack.c.h.b16 %v8689
    %v9547 = vunpack.c.l.b16 %v8690
    %v9548 = vunpack.c.h.b16 %v8690
    %v9549 = vunpack.c.l.b16 %v8691
    %v9550 = vunpack.c.h.b16 %v8691
    %v9551 = vunpack.c.l.b16 %v8692
    %v9552 = vunpack.c.h.b16 %v8692
    %v9553 = vunpack.c.l.b16 %v8693
    %v9554 = vunpack.c.h.b16 %v8693
    %v9555 = vunpack.c.l.b16 %v8694
    %v9556 = vunpack.c.h.b16 %v8694
    %v9557 = vunpack.c.l.b16 %v8695
    %v9558 = vunpack.c.h.b16 %v8695
    %v9559 = vunpack.c.l.b16 %v8696
    %v9560 = vunpack.c.h.b16 %v8696
    %v9561 = vunpack.c.l.b16 %v8697
    %v9562 = vunpack.c.h.b16 %v8697
    %v9563 = vunpack.c.l.b16 %v8698
    %v9564 = vunpack.c.h.b16 %v8698
    %v9565 = vunpack.c.l.b16 %v8699
    %v9566 = vunpack.c.h.b16 %v8699
    %v9567 = vunpack.c.l.b16 %v8700
    %v9568 = vunpack.c.h.b16 %v8700
    %v9569 = vunpack.c.l.b16 %v8701
    %v9570 = vunpack.c.h.b16 %v8701
    %v9571 = vunpack.c.l.b16 %v8702
    %v9572 = vunpack.c.h.b16 %v8702
    %v9573 = vunpack.c.l.b16 %v8703
    %v9574 = vunpack.c.h.b16 %v8703
    %v9575 = vunpack.c.l.b16 %v8704
    %v9576 = vunpack.c.h.b16 %v8704
    %v9577 = vunpack.c.l.b16 %v8705
    %v9578 = vunpack.c.h.b16 %v8705
    %v9579 = vunpack.c.l.b16 %v8706
    %v9580 = vunpack.c.h.b16 %v8706
    %v9581 = vunpack.c.l.b16 %v8707
    %v9582 = vunpack.c.h.b16 %v8707
    %v9583 = vunpack.c.l.b16 %v8708
    %v9584 = vunpack.c.h.b16 %v8708
    %v9585 = vunpack.c.l.b16 %v8709
    %v9586 = vunpack.c.h.b16 %v8709
    %v9587 = vunpack.c.l.b16 %v8710
    %v9588 = vunpack.c.h.b16 %v8710
    %v9589 = vunpack.c.l.b16 %v8711
    %v9590 = vunpack.c.h.b16 %v8711
    %v9591 = vunpack.c.l.b16 %v8712
    %v9592 = vunpack.c.h.b16 %v8712
    %v9593 = vunpack.c.l.b16 %v8713
    %v9594 = vunpack.c.h.b16 %v8713
    %v9595 = vunpack.c.l.b16 %v8714
    %v9596 = vunpack.c.h.b16 %v8714
    %v9597 = vunpack.c.l.b16 %v8715
    %v9598 = vunpack.c.h.b16 %v8715
    %v9599 = vunpack.c.l.b16 %v8716
    %v9600 = vunpack.c.h.b16 %v8716
    %v9601 = vunpack.c.l.b16 %v8717
    %v9602 = vunpack.c.h.b16 %v8717
    %v9603 = vunpack.c.l.b16 %v8718
    %v9604 = vunpack.c.h.b16 %v8718
    %v9605 = vunpack.c.l.b16 %v8719
    %v9606 = vunpack.c.h.b16 %v8719
    %v9607 = vunpack.c.l.b16 %v8720
    %v9608 = vunpack.c.h.b16 %v8720
    %v9609 = vunpack.c.l.b16 %v8721
    %v9610 = vunpack.c.h.b16 %v8721
    %v9611 = vunpack.c.l.b16 %v8722
    %v9612 = vunpack.c.h.b16 %v8722
    %v9613 = vunpack.c.l.b16 %v8723
    %v9614 = vunpack.c.h.b16 %v8723
    %v9615 = vunpack.c.l.b16 %v8724
    %v9616 = vunpack.c.h.b16 %v8724
    %v9617 = vunpack.c.l.b16 %v8725
    %v9618 = vunpack.c.h.b16 %v8725
    %v9619 = vunpack.c.l.b16 %v8726
    %v9620 = vunpack.c.h.b16 %v8726
    %v9621 = vunpack.c.l.b16 %v8727
    %v9622 = vunpack.c.h.b16 %v8727
    %v9623 = vunpack.c.l.b16 %v8728
    %v9624 = vunpack.c.h.b16 %v8728
    %v9625 = vunpack.c.l.b16 %v8729
    %v9626 = vunpack.c.h.b16 %v8729
    %v9627 = vunpack.c.l.b16 %v8730
    %v9628 = vunpack.c.h.b16 %v8730
    %v9629 = vunpack.c.l.b16 %v8731
    %v9630 = vunpack.c.h.b16 %v8731
    %v9631 = vunpack.c.l.b16 %v8732
    %v9632 = vunpack.c.h.b16 %v8732
    %v9633 = vunpack.c.l.b16 %v8733
    %v9634 = vunpack.c.h.b16 %v8733
    %v9635 = vunpack.c.l.b16 %v8734
    %v9636 = vunpack.c.h.b16 %v8734
    %v9637 = vunpack.c.l.b16 %v8735
    %v9638 = vunpack.c.h.b16 %v8735
    %v9639 = vunpack.c.l.b16 %v8736
    %v9640 = vunpack.c.h.b16 %v8736
    %v9641 = vunpack.c.l.b16 %v8737
    %v9642 = vunpack.c.h.b16 %v8737
    %v9643 = vunpack.c.l.b16 %v8738
    %v9644 = vunpack.c.h.b16 %v8738
    %v9645 = vunpack.c.l.b16 %v8739
    %v9646 = vunpack.c.h.b16 %v8739
    %v9647 = vunpack.c.l.b16 %v8740
    %v9648 = vunpack.c.h.b16 %v8740
    %v9649 = vunpack.c.l.b16 %v8741
    %v9650 = vunpack.c.h.b16 %v8741
    %v9651 = vunpack.c.l.b16 %v8742
    %v9652 = vunpack.c.h.b16 %v8742
    %v9653 = vunpack.c.l.b16 %v8743
    %v9654 = vunpack.c.h.b16 %v8743
    %v9655 = vunpack.c.l.b16 %v8744
    %v9656 = vunpack.c.h.b16 %v8744
    %v9657 = vunpack.c.l.b16 %v8745
    %v9658 = vunpack.c.h.b16 %v8745
    %v9659 = vunpack.c.l.b16 %v8746
    %v9660 = vunpack.c.h.b16 %v8746
    %v9661 = vunpack.c.l.b16 %v8747
    %v9662 = vunpack.c.h.b16 %v8747
    %v9663 = vunpack.c.l.b16 %v8748
    %v9664 = vunpack.c.h.b16 %v8748
    %v9665 = vunpack.c.l.b16 %v8749
    %v9666 = vunpack.c.h.b16 %v8749
    %v9667 = vunpack.c.l.b16 %v8750
    %v9668 = vunpack.c.h.b16 %v8750
    %v9669 = vunpack.c.l.b16 %v8751
    %v9670 = vunpack.c.h.b16 %v8751
    %v9671 = vunpack.c.l.b16 %v8752
    %v9672 = vunpack.c.h.b16 %v8752
    %v9673 = vunpack.c.l.b16 %v8753
    %v9674 = vunpack.c.h.b16 %v8753
    %v9675 = vunpack.c.l.b16 %v8754
    %v9676 = vunpack.c.h.b16 %v8754
    %v9677 = vunpack.c.l.b16 %v8755
    %v9678 = vunpack.c.h.b16 %v8755
    %v9679 = vunpack.c.l.b16 %v8756
    %v9680 = vunpack.c.h.b16 %v8756
    %v9681 = vunpack.c.l.b16 %v8757
    %v9682 = vunpack.c.h.b16 %v8757
    %v9683 = vunpack.c.l.b16 %v8758
    %v9684 = vunpack.c.h.b16 %v8758
    %v9685 = vunpack.c.l.b16 %v8759
    %v9686 = vunpack.c.h.b16 %v8759
    %v9687 = vunpack.c.l.b16 %v8760
    %v9688 = vunpack.c.h.b16 %v8760
    %v9689 = vunpack.c.l.b16 %v8761
    %v9690 = vunpack.c.h.b16 %v8761
    %v9691 = vunpack.c.l.b16 %v8762
    %v9692 = vunpack.c.h.b16 %v8762
    %v9693 = vunpack.c.l.b16 %v8763
    %v9694 = vunpack.c.h.b16 %v8763
    %v9695 = vunpack.c.l.b16 %v8764
    %v9696 = vunpack.c.h.b16 %v8764
    %v9697 = vunpack.c.l.b16 %v8765
    %v9698 = vunpack.c.h.b16 %v8765
    %v9699 = vunpack.c.l.b16 %v8766
    %v9700 = vunpack.c.h.b16 %v8766
    %v9701 = vunpack.c.l.b16 %v8767
    %v9702 = vunpack.c.h.b16 %v8767
    %v9703 = vunpack.c.l.b16 %v8768
    %v9704 = vunpack.c.h.b16 %v8768
    %v9705 = vunpack.c.l.b16 %v8769
    %v9706 = vunpack.c.h.b16 %v8769
    %v9707 = vunpack.c.l.b16 %v8770
    %v9708 = vunpack.c.h.b16 %v8770
    %v9709 = vunpack.c.l.b16 %v8771
    %v9710 = vunpack.c.h.b16 %v8771
    %v9711 = vunpack.c.l.b16 %v8772
    %v9712 = vunpack.c.h.b16 %v8772
    %v9713 = vunpack.c.l.b16 %v8773
    %v9714 = vunpack.c.h.b16 %v8773
    %v9715 = vunpack.c.l.b16 %v8774
    %v9716 = vunpack.c.h.b16 %v8774
    %v9717 = vunpack.c.l.b16 %v8775
    %v9718 = vunpack.c.h.b16 %v8775
    %v9719 = vunpack.c.l.b16 %v8776
    %v9720 = vunpack.c.h.b16 %v8776
    %v9721 = vunpack.c.l.b16 %v8777
    %v9722 = vunpack.c.h.b16 %v8777
    %v9723 = vunpack.c.l.b16 %v8778
    %v9724 = vunpack.c.h.b16 %v8778
    %v9725 = vunpack.c.l.b16 %v8779
    %v9726 = vunpack.c.h.b16 %v8779
    %v9727 = vunpack.c.l.b16 %v8780
    %v9728 = vunpack.c.h.b16 %v8780
    %v9729 = vunpack.c.l.b16 %v8781
    %v9730 = vunpack.c.h.b16 %v8781
    %v9731 = vunpack.c.l.b16 %v8782
    %v9732 = vunpack.c.h.b16 %v8782
    %v9733 = vunpack.c.l.b16 %v8783
    %v9734 = vunpack.c.h.b16 %v8783
    %v9735 = vunpack.c.l.b16 %v8784
    %v9736 = vunpack.c.h.b16 %v8784
    %v9737 = vunpack.c.l.b16 %v8785
    %v9738 = vunpack.c.h.b16 %v8785
    %v9739 = vunpack.c.l.b16 %v8786
    %v9740 = vunpack.c.h.b16 %v8786
    %v9741 = vunpack.c.l.b16 %v8787
    %v9742 = vunpack.c.h.b16 %v8787
    %v9743 = vunpack.c.l.b16 %v8788
    %v9744 = vunpack.c.h.b16 %v8788
    %v9745 = vunpack.c.l.b16 %v8789
    %v9746 = vunpack.c.h.b16 %v8789
    %v9747 = vunpack.c.l.b16 %v8790
    %v9748 = vunpack.c.h.b16 %v8790
    %v9749 = vunpack.c.l.b16 %v8791
    %v9750 = vunpack.c.h.b16 %v8791
    %v9751 = vunpack.c.l.b16 %v8792
    %v9752 = vunpack.c.h.b16 %v8792
    %v9753 = vunpack.c.l.b16 %v8793
    %v9754 = vunpack.c.h.b16 %v8793
    %v9755 = vunpack.c.l.b16 %v8794
    %v9756 = vunpack.c.h.b16 %v8794
    %v9757 = vunpack.c.l.b16 %v8795
    %v9758 = vunpack.c.h.b16 %v8795
    %v9759 = vunpack.c.l.b16 %v8796
    %v9760 = vunpack.c.h.b16 %v8796
    %v9761 = vunpack.c.l.b16 %v8797
    %v9762 = vunpack.c.h.b16 %v8797
    %v9763 = vunpack.c.l.b16 %v8798
    %v9764 = vunpack.c.h.b16 %v8798
    %v9765 = vunpack.c.l.b16 %v8799
    %v9766 = vunpack.c.h.b16 %v8799
    %v9767 = vunpack.c.l.b16 %v8800
    %v9768 = vunpack.c.h.b16 %v8800
    %v9769 = vunpack.c.l.b16 %v8801
    %v9770 = vunpack.c.h.b16 %v8801
    %v9771 = vunpack.c.l.b16 %v8802
    %v9772 = vunpack.c.h.b16 %v8802
    %v9773 = vunpack.c.l.b16 %v8803
    %v9774 = vunpack.c.h.b16 %v8803
    %v9775 = vunpack.c.l.b16 %v8804
    %v9776 = vunpack.c.h.b16 %v8804
    %v9777 = vunpack.c.l.b16 %v8805
    %v9778 = vunpack.c.h.b16 %v8805
    %v9779 = vunpack.c.l.b16 %v8806
    %v9780 = vunpack.c.h.b16 %v8806
    %v9781 = vunpack.c.l.b16 %v8807
    %v9782 = vunpack.c.h.b16 %v8807
    %v9783 = vunpack.c.l.b16 %v8808
    %v9784 = vunpack.c.h.b16 %v8808
    %v9785 = vunpack.c.l.b16 %v8809
    %v9786 = vunpack.c.h.b16 %v8809
    %v9787 = vunpack.c.l.b16 %v8810
    %v9788 = vunpack.c.h.b16 %v8810
    %v9789 = vunpack.c.l.b16 %v8811
    %v9790 = vunpack.c.h.b16 %v8811
    %v9791 = vunpack.c.l.b16 %v8812
    %v9792 = vunpack.c.h.b16 %v8812
    %v9793 = vunpack.c.l.b16 %v8813
    %v9794 = vunpack.c.h.b16 %v8813
    %v9795 = vunpack.c.l.b16 %v8814
    %v9796 = vunpack.c.h.b16 %v8814
    %v9797 = vunpack.c.l.b16 %v8815
    %v9798 = vunpack.c.h.b16 %v8815
    %v9799 = vunpack.c.l.b16 %v8816
    %v9800 = vunpack.c.h.b16 %v8816
    %v9801 = vunpack.c.l.b16 %v8817
    %v9802 = vunpack.c.h.b16 %v8817
    %v9803 = vunpack.c.l.b16 %v8818
    %v9804 = vunpack.c.h.b16 %v8818
    %v9805 = vunpack.c.l.b16 %v8819
    %v9806 = vunpack.c.h.b16 %v8819
    %v9807 = vunpack.c.l.b16 %v8820
    %v9808 = vunpack.c.h.b16 %v8820
    %v9809 = vunpack.c.l.b16 %v8821
    %v9810 = vunpack.c.h.b16 %v8821
    %v9811 = vunpack.c.l.b16 %v8822
    %v9812 = vunpack.c.h.b16 %v8822
    %v9813 = vunpack.c.l.b16 %v8823
    %v9814 = vunpack.c.h.b16 %v8823
    %v9815 = vunpack.c.l.b16 %v8824
    %v9816 = vunpack.c.h.b16 %v8824
    %v9817 = vunpack.c.l.b16 %v8825
    %v9818 = vunpack.c.h.b16 %v8825
    %v9819 = vunpack.c.l.b16 %v8826
    %v9820 = vunpack.c.h.b16 %v8826
    %v9821 = vunpack.c.l.b16 %v8827
    %v9822 = vunpack.c.h.b16 %v8827
    %v9823 = vunpack.c.l.b16 %v8828
    %v9824 = vunpack.c.h.b16 %v8828
    %v9825 = vunpack.c.l.b16 %v8829
    %v9826 = vunpack.c.h.b16 %v8829
    %v9827 = vunpack.c.l.b16 %v8830
    %v9828 = vunpack.c.h.b16 %v8830
    %v9829 = vunpack.c.l.b16 %v8831
    %v9830 = vunpack.c.h.b16 %v8831
    %v9831 = vunpack.c.l.b16 %v8832
    %v9832 = vunpack.c.h.b16 %v8832
    %v9833 = vunpack.c.l.b16 %v8833
    %v9834 = vunpack.c.h.b16 %v8833
    %v9835 = vunpack.c.l.b16 %v8834
    %v9836 = vunpack.c.h.b16 %v8834
    %v9837 = vunpack.c.l.b16 %v8835
    %v9838 = vunpack.c.h.b16 %v8835
    %v9839 = vunpack.c.l.b16 %v8836
    %v9840 = vunpack.c.h.b16 %v8836
    %v9841 = vunpack.c.l.b16 %v8837
    %v9842 = vunpack.c.h.b16 %v8837
    %v9843 = vunpack.c.l.b16 %v8838
    %v9844 = vunpack.c.h.b16 %v8838
    %v9845 = vunpack.c.l.b16 %v8839
    %v9846 = vunpack.c.h.b16 %v8839
    %v9847 = vunpack.c.l.b16 %v8840
    %v9848 = vunpack.c.h.b16 %v8840
    %v9849 = vunpack.c.l.b16 %v8841
    %v9850 = vunpack.c.h.b16 %v8841
    %v9851 = vunpack.c.l.b16 %v8842
    %v9852 = vunpack.c.h.b16 %v8842
    %v9853 = vunpack.c.l.b16 %v8843
    %v9854 = vunpack.c.h.b16 %v8843
    %v9855 = vunpack.c.l.b16 %v8844
    %v9856 = vunpack.c.h.b16 %v8844
    %v9857 = vunpack.c.l.b16 %v8845
    %v9858 = vunpack.c.h.b16 %v8845
    %v9859 = vunpack.c.l.b16 %v8846
    %v9860 = vunpack.c.h.b16 %v8846
    %v9861 = vunpack.c.l.b16 %v8847
    %v9862 = vunpack.c.h.b16 %v8847
    %v9863 = vunpack.c.l.b16 %v8848
    %v9864 = vunpack.c.h.b16 %v8848
    %v9865 = vunpack.c.l.b16 %v8849
    %v9866 = vunpack.c.h.b16 %v8849
    %v9867 = vunpack.c.l.b16 %v8850
    %v9868 = vunpack.c.h.b16 %v8850
    %v9869 = vunpack.c.l.b16 %v8851
    %v9870 = vunpack.c.h.b16 %v8851
    %v9871 = vunpack.c.l.b16 %v8852
    %v9872 = vunpack.c.h.b16 %v8852
    %v9873 = vunpack.c.l.b16 %v8853
    %v9874 = vunpack.c.h.b16 %v8853
    %v9875 = vunpack.c.l.b16 %v8854
    %v9876 = vunpack.c.h.b16 %v8854
    %v9877 = vunpack.c.l.b16 %v8855
    %v9878 = vunpack.c.h.b16 %v8855
    %v9879 = vunpack.c.l.b16 %v8856
    %v9880 = vunpack.c.h.b16 %v8856
    %v9881 = vunpack.c.l.b16 %v8857
    %v9882 = vunpack.c.h.b16 %v8857
    %v9883 = vunpack.c.l.b16 %v8858
    %v9884 = vunpack.c.h.b16 %v8858
    %v9885 = vunpack.c.l.b16 %v8859
    %v9886 = vunpack.c.h.b16 %v8859
    %v9887 = vunpack.c.l.b16 %v8860
    %v9888 = vunpack.c.h.b16 %v8860
    %v9889 = vunpack.c.l.b16 %v8861
    %v9890 = vunpack.c.h.b16 %v8861
    %v9891 = vunpack.c.l.b16 %v8862
    %v9892 = vunpack.c.h.b16 %v8862
    %v9893 = vunpack.c.l.b16 %v8863
    %v9894 = vunpack.c.h.b16 %v8863
    %v9895 = vunpack.c.l.b16 %v8864
    %v9896 = vunpack.c.h.b16 %v8864
    %v9897 = vunpack.c.l.b16 %v8865
    %v9898 = vunpack.c.h.b16 %v8865
    %v9899 = vunpack.c.l.b16 %v8866
    %v9900 = vunpack.c.h.b16 %v8866
    %v9901 = vunpack.c.l.b16 %v8867
    %v9902 = vunpack.c.h.b16 %v8867
    %v9903 = vunpack.c.l.b16 %v8868
    %v9904 = vunpack.c.h.b16 %v8868
    %v9905 = vunpack.c.l.b16 %v8869
    %v9906 = vunpack.c.h.b16 %v8869
    %v9907 = vunpack.c.l.b16 %v8870
    %v9908 = vunpack.c.h.b16 %v8870
    %v9909 = vunpack.c.l.b16 %v8871
    %v9910 = vunpack.c.h.b16 %v8871
    %v9911 = vunpack.c.l.b16 %v8872
    %v9912 = vunpack.c.h.b16 %v8872
    %v9913 = vunpack.c.l.b16 %v8873
    %v9914 = vunpack.c.h.b16 %v8873
    %v9915 = vunpack.c.l.b16 %v8874
    %v9916 = vunpack.c.h.b16 %v8874
    %v9917 = vunpack.c.l.b16 %v8875
    %v9918 = vunpack.c.h.b16 %v8875
    %v9919 = vunpack.c.l.b16 %v8876
    %v9920 = vunpack.c.h.b16 %v8876
    %v9921 = vunpack.c.l.b16 %v8877
    %v9922 = vunpack.c.h.b16 %v8877
    %v9923 = vunpack.c.l.b16 %v8878
    %v9924 = vunpack.c.h.b16 %v8878
    %v9925 = vunpack.c.l.b16 %v8879
    %v9926 = vunpack.c.h.b16 %v8879
    %v9927 = vunpack.c.l.b16 %v8880
    %v9928 = vunpack.c.h.b16 %v8880
    %v9929 = vunpack.c.l.b16 %v8881
    %v9930 = vunpack.c.h.b16 %v8881
    %v9931 = vunpack.c.l.b16 %v8882
    %v9932 = vunpack.c.h.b16 %v8882
    %v9933 = vunpack.c.l.b16 %v8883
    %v9934 = vunpack.c.h.b16 %v8883
    %v9935 = vunpack.c.l.b16 %v8884
    %v9936 = vunpack.c.h.b16 %v8884
    %v9937 = vunpack.c.l.b16 %v8885
    %v9938 = vunpack.c.h.b16 %v8885
    %v9939 = vunpack.c.l.b16 %v8886
    %v9940 = vunpack.c.h.b16 %v8886
    %v9941 = vunpack.c.l.b16 %v8887
    %v9942 = vunpack.c.h.b16 %v8887
    %v9943 = vunpack.c.l.b16 %v8888
    %v9944 = vunpack.c.h.b16 %v8888
    %v9945 = vunpack.c.l.b16 %v8889
    %v9946 = vunpack.c.h.b16 %v8889
    %v9947 = vunpack.c.l.b16 %v8890
    %v9948 = vunpack.c.h.b16 %v8890
    %v9949 = vunpack.c.l.b16 %v8891
    %v9950 = vunpack.c.h.b16 %v8891
    %v9951 = vunpack.c.l.b16 %v8892
    %v9952 = vunpack.c.h.b16 %v8892
    %v9953 = vunpack.c.l.b16 %v8893
    %v9954 = vunpack.c.h.b16 %v8893
    %v9955 = vunpack.c.l.b16 %v8894
    %v9956 = vunpack.c.h.b16 %v8894
    %v9957 = vunpack.c.l.b16 %v8895
    %v9958 = vunpack.c.h.b16 %v8895
    %v9959 = vunpack.c.l.b16 %v8896
    %v9960 = vunpack.c.h.b16 %v8896
    %v9961 = vunpack.c.l.b16 %v8897
    %v9962 = vunpack.c.h.b16 %v8897
    %v9963 = vunpack.c.l.b16 %v8898
    %v9964 = vunpack.c.h.b16 %v8898
    %v9965 = vunpack.c.l.b16 %v8899
    %v9966 = vunpack.c.h.b16 %v8899
    %v9967 = vunpack.c.l.b16 %v8900
    %v9968 = vunpack.c.h.b16 %v8900
    %v9969 = vunpack.c.l.b16 %v8901
    %v9970 = vunpack.c.h.b16 %v8901
    %v9971 = vunpack.c.l.b16 %v8902
    %v9972 = vunpack.c.h.b16 %v8902
    %v9973 = vunpack.c.l.b16 %v8903
    %v9974 = vunpack.c.h.b16 %v8903
    %v9975 = vunpack.c.l.b16 %v8904
    %v9976 = vunpack.c.h.b16 %v8904
    %v9977 = vunpack.c.l.b16 %v8905
    %v9978 = vunpack.c.h.b16 %v8905
    %v9979 = vunpack.c.l.b16 %v8906
    %v9980 = vunpack.c.h.b16 %v8906
    %v9981 = vunpack.c.l.b16 %v8907
    %v9982 = vunpack.c.h.b16 %v8907
    %v9983 = vunpack.c.l.b16 %v8908
    %v9984 = vunpack.c.h.b16 %v8908
    %v9985 = vunpack.c.l.b16 %v8909
    %v9986 = vunpack.c.h.b16 %v8909
    %v9987 = vunpack.c.l.b16 %v8910
    %v9988 = vunpack.c.h.b16 %v8910
    %v9989 = vunpack.c.l.b16 %v8911
    %v9990 = vunpack.c.h.b16 %v8911
    %v9991 = vunpack.c.l.b16 %v8912
    %v9992 = vunpack.c.h.b16 %v8912
    %v9993 = vunpack.c.l.b16 %v8913
    %v9994 = vunpack.c.h.b16 %v8913
    %v9995 = vunpack.c.l.b16 %v8914
    %v9996 = vunpack.c.h.b16 %v8914
    %v9997 = vunpack.c.l.b16 %v8915
    %v9998 = vunpack.c.h.b16 %v8915
    %v9999 = vunpack.c.l.b16 %v8916
    %v10000 = vunpack.c.h.b16 %v8916
    %v10001 = vunpack.c.l.b16 %v8917
    %v10002 = vunpack.c.h.b16 %v8917
    %v10003 = vunpack.c.l.b16 %v8918
    %v10004 = vunpack.c.h.b16 %v8918
    %v10005 = vunpack.c.l.b16 %v8919
    %v10006 = vunpack.c.h.b16 %v8919
    %v10007 = vunpack.c.l.b16 %v8920
    %v10008 = vunpack.c.h.b16 %v8920
    %v10009 = vunpack.c.l.b16 %v8921
    %v10010 = vunpack.c.h.b16 %v8921
    %v10011 = vunpack.c.l.b16 %v8922
    %v10012 = vunpack.c.h.b16 %v8922
    %v10013 = vunpack.c.l.b16 %v8923
    %v10014 = vunpack.c.h.b16 %v8923
    %v10015 = vunpack.c.l.b16 %v8924
    %v10016 = vunpack.c.h.b16 %v8924
    %v10017 = vunpack.c.l.b16 %v8925
    %v10018 = vunpack.c.h.b16 %v8925
    %v10019 = vunpack.c.l.b16 %v8926
    %v10020 = vunpack.c.h.b16 %v8926
    %v10021 = vunpack.c.l.b16 %v8927
    %v10022 = vunpack.c.h.b16 %v8927
    %v10023 = vunpack.c.l.b16 %v8928
    %v10024 = vunpack.c.h.b16 %v8928
    %v10025 = vunpack.c.l.b16 %v8929
    %v10026 = vunpack.c.h.b16 %v8929
    %v10027 = vunpack.c.l.b16 %v8930
    %v10028 = vunpack.c.h.b16 %v8930
    %v10029 = vunpack.c.l.b16 %v8931
    %v10030 = vunpack.c.h.b16 %v8931
    %v10031 = vunpack.c.l.b16 %v8932
    %v10032 = vunpack.c.h.b16 %v8932
    %v10033 = vunpack.c.l.b16 %v8933
    %v10034 = vunpack.c.h.b16 %v8933
    %v10035 = vunpack.c.l.b16 %v8934
    %v10036 = vunpack.c.h.b16 %v8934
    %v10037 = vunpack.c.l.b16 %v8935
    %v10038 = vunpack.c.h.b16 %v8935
    %v10039 = vunpack.c.l.b16 %v8936
    %v10040 = vunpack.c.h.b16 %v8936
    %v10041 = vunpack.c.l.b16 %v8937
    %v10042 = vunpack.c.h.b16 %v8937
    %v10043 = vunpack.c.l.b16 %v8938
    %v10044 = vunpack.c.h.b16 %v8938
    %v10045 = vunpack.c.l.b16 %v8939
    %v10046 = vunpack.c.h.b16 %v8939
    %v10047 = vunpack.c.l.b16 %v8940
    %v10048 = vunpack.c.h.b16 %v8940
    %v10049 = vunpack.c.l.b16 %v8941
    %v10050 = vunpack.c.h.b16 %v8941
    %v10051 = vunpack.c.l.b16 %v8942
    %v10052 = vunpack.c.h.b16 %v8942
    %v10053 = vunpack.c.l.b16 %v8943
    %v10054 = vunpack.c.h.b16 %v8943
    %v10055 = vunpack.c.l.b16 %v8944
    %v10056 = vunpack.c.h.b16 %v8944
    %v10057 = vunpack.c.l.b16 %v8945
    %v10058 = vunpack.c.h.b16 %v8945
    %v10059 = vunpack.c.l.b16 %v8946
    %v10060 = vunpack.c.h.b16 %v8946
    %v10061 = vunpack.c.l.b16 %v8947
    %v10062 = vunpack.c.h.b16 %v8947
    %v10063 = vunpack.c.l.b16 %v8948
    %v10064 = vunpack.c.h.b16 %v8948
    %v10065 = vunpack.c.l.b16 %v8949
    %v10066 = vunpack.c.h.b16 %v8949
    %v10067 = vunpack.c.l.b16 %v8950
    %v10068 = vunpack.c.h.b16 %v8950
    %v10069 = vunpack.c.l.b16 %v8951
    %v10070 = vunpack.c.h.b16 %v8951
    %v10071 = vunpack.c.l.b16 %v8952
    %v10072 = vunpack.c.h.b16 %v8952
    %v10073 = vunpack.c.l.b16 %v8953
    %v10074 = vunpack.c.h.b16 %v8953
    %v10075 = vunpack.c.l.b16 %v8954
    %v10076 = vunpack.c.h.b16 %v8954
    %v10077 = vunpack.c.l.b16 %v8955
    %v10078 = vunpack.c.h.b16 %v8955
    %v10079 = vunpack.c.l.b16 %v8956
    %v10080 = vunpack.c.h.b16 %v8956
    %v10081 = vunpack.c.l.b16 %v8957
    %v10082 = vunpack.c.h.b16 %v8957
    %v10083 = vunpack.c.l.b16 %v8958
    %v10084 = vunpack.c.h.b16 %v8958
    %v10085 = vunpack.c.l.b16 %v8959
    %v10086 = vunpack.c.h.b16 %v8959
    %v10087 = vunpack.c.l.b16 %v8960
    %v10088 = vunpack.c.h.b16 %v8960
    %v10089 = vunpack.c.l.b16 %v8961
    %v10090 = vunpack.c.h.b16 %v8961
    %v10091 = vunpack.c.l.b16 %v8962
    %v10092 = vunpack.c.h.b16 %v8962
    %v10093 = vunpack.c.l.b16 %v8963
    %v10094 = vunpack.c.h.b16 %v8963
    %v10095 = vunpack.c.l.b16 %v8964
    %v10096 = vunpack.c.h.b16 %v8964
    %v10097 = vunpack.c.l.b16 %v8965
    %v10098 = vunpack.c.h.b16 %v8965
    %v10099 = vunpack.c.l.b16 %v8966
    %v10100 = vunpack.c.h.b16 %v8966
    %v10101 = vunpack.c.l.b16 %v8967
    %v10102 = vunpack.c.h.b16 %v8967
    %v10103 = vunpack.c.l.b16 %v8968
    %v10104 = vunpack.c.h.b16 %v8968
    %v10105 = vunpack.c.l.b16 %v8969
    %v10106 = vunpack.c.h.b16 %v8969
    %v10107 = vunpack.c.l.b16 %v8970
    %v10108 = vunpack.c.h.b16 %v8970
    %v10109 = vunpack.c.l.b16 %v8971
    %v10110 = vunpack.c.h.b16 %v8971
    %v10111 = vunpack.c.l.b16 %v8972
    %v10112 = vunpack.c.h.b16 %v8972
    %v10113 = vunpack.c.l.b16 %v8973
    %v10114 = vunpack.c.h.b16 %v8973
    %v10115 = vunpack.c.l.b16 %v8974
    %v10116 = vunpack.c.h.b16 %v8974
    %v10117 = vunpack.c.l.b16 %v8975
    %v10118 = vunpack.c.h.b16 %v8975
    %v10119 = vunpack.c.l.b16 %v8976
    %v10120 = vunpack.c.h.b16 %v8976
    %v10121 = vunpack.c.l.b16 %v8977
    %v10122 = vunpack.c.h.b16 %v8977
    %v10123 = vunpack.c.l.b16 %v8978
    %v10124 = vunpack.c.h.b16 %v8978
    %v10125 = vunpack.c.l.b16 %v8979
    %v10126 = vunpack.c.h.b16 %v8979
    %v10127 = vunpack.c.l.b16 %v8980
    %v10128 = vunpack.c.h.b16 %v8980
    %v10129 = vunpack.c.l.b16 %v8981
    %v10130 = vunpack.c.h.b16 %v8981
    %v10131 = vunpack.c.l.b16 %v8982
    %v10132 = vunpack.c.h.b16 %v8982
    %v10133 = vunpack.c.l.b16 %v8983
    %v10134 = vunpack.c.h.b16 %v8983
    %v10135 = vunpack.c.l.b16 %v8984
    %v10136 = vunpack.c.h.b16 %v8984
    %v10137 = vunpack.c.l.b16 %v8985
    %v10138 = vunpack.c.h.b16 %v8985
    %v10139 = vunpack.c.l.b16 %v8986
    %v10140 = vunpack.c.h.b16 %v8986
    %v10141 = vunpack.c.l.b16 %v8987
    %v10142 = vunpack.c.h.b16 %v8987
    %v10143 = vunpack.c.l.b16 %v8988
    %v10144 = vunpack.c.h.b16 %v8988
    %v10145 = vunpack.c.l.b16 %v8989
    %v10146 = vunpack.c.h.b16 %v8989
    %v10147 = vunpack.c.l.b16 %v8990
    %v10148 = vunpack.c.h.b16 %v8990
    %v10149 = vunpack.c.l.b16 %v8991
    %v10150 = vunpack.c.h.b16 %v8991
    %v10151 = vunpack.c.l.b16 %v8992
    %v10152 = vunpack.c.h.b16 %v8992
    %v10153 = vunpack.c.l.b16 %v8993
    %v10154 = vunpack.c.h.b16 %v8993
    %v10155 = vunpack.c.l.b16 %v8994
    %v10156 = vunpack.c.h.b16 %v8994
    %v10157 = vunpack.c.l.b16 %v8995
    %v10158 = vunpack.c.h.b16 %v8995
    %v10159 = vunpack.c.l.b16 %v8996
    %v10160 = vunpack.c.h.b16 %v8996
    %v10161 = vunpack.c.l.b16 %v8997
    %v10162 = vunpack.c.h.b16 %v8997
    %v10163 = vunpack.c.l.b16 %v8998
    %v10164 = vunpack.c.h.b16 %v8998
    %v10165 = vunpack.c.l.b16 %v8999
    %v10166 = vunpack.c.h.b16 %v8999
    %v10167 = vunpack.c.l.b16 %v9000
    %v10168 = vunpack.c.h.b16 %v9000
    %v10169 = vunpack.c.l.b16 %v9001
    %v10170 = vunpack.c.h.b16 %v9001
    %v10171 = vunpack.c.l.b16 %v9002
    %v10172 = vunpack.c.h.b16 %v9002
    %v10173 = vunpack.c.l.b16 %v9003
    %v10174 = vunpack.c.h.b16 %v9003
    %v10175 = vunpack.c.l.b16 %v9004
    %v10176 = vunpack.c.h.b16 %v9004
    %v10177 = vunpack.c.l.b16 %v9005
    %v10178 = vunpack.c.h.b16 %v9005
    %v10179 = vunpack.c.l.b16 %v9006
    %v10180 = vunpack.c.h.b16 %v9006
    %v10181 = vunpack.c.l.b16 %v9007
    %v10182 = vunpack.c.h.b16 %v9007
    %v10183 = vunpack.c.l.b16 %v9008
    %v10184 = vunpack.c.h.b16 %v9008
    %v10185 = vunpack.c.l.b16 %v9009
    %v10186 = vunpack.c.h.b16 %v9009
    %v10187 = vunpack.c.l.b16 %v9010
    %v10188 = vunpack.c.h.b16 %v9010
    %v10189 = vunpack.c.l.b16 %v9011
    %v10190 = vunpack.c.h.b16 %v9011
    %v10191 = vunpack.c.l.b16 %v9012
    %v10192 = vunpack.c.h.b16 %v9012
    %v10193 = vunpack.c.l.b16 %v9013
    %v10194 = vunpack.c.h.b16 %v9013
    %v10195 = vunpack.c.l.b16 %v9014
    %v10196 = vunpack.c.h.b16 %v9014
    %v10197 = vunpack.c.l.b16 %v9015
    %v10198 = vunpack.c.h.b16 %v9015
    %v10199 = vunpack.c.l.b16 %v9016
    %v10200 = vunpack.c.h.b16 %v9016
    %v10201 = vunpack.c.l.b16 %v9017
    %v10202 = vunpack.c.h.b16 %v9017
    %v10203 = vunpack.c.l.b16 %v9018
    %v10204 = vunpack.c.h.b16 %v9018
    %v10205 = vunpack.c.l.b16 %v9019
    %v10206 = vunpack.c.h.b16 %v9019
    %v10207 = vunpack.c.l.b16 %v9020
    %v10208 = vunpack.c.h.b16 %v9020
    %v10209 = vunpack.c.l.b16 %v9021
    %v10210 = vunpack.c.h.b16 %v9021
    %v10211 = vunpack.c.l.b16 %v9022
    %v10212 = vunpack.c.h.b16 %v9022
    %v10213 = vunpack.c.l.b16 %v9023
    %v10214 = vunpack.c.h.b16 %v9023
    %v10215 = vunpack.c.l.b16 %v9024
    %v10216 = vunpack.c.h.b16 %v9024
    %v10217 = vunpack.c.l.b16 %v9025
    %v10218 = vunpack.c.h.b16 %v9025
    %v10219 = vunpack.c.l.b16 %v9026
    %v10220 = vunpack.c.h.b16 %v9026
    %v10221 = vunpack.c.l.b16 %v9027
    %v10222 = vunpack.c.h.b16 %v9027
    %v10223 = vunpack.c.l.b16 %v9028
    %v10224 = vunpack.c.h.b16 %v9028
    %v10225 = vunpack.c.l.b16 %v9029
    %v10226 = vunpack.c.h.b16 %v9029
    %v10227 = vunpack.c.l.b16 %v9030
    %v10228 = vunpack.c.h.b16 %v9030
    %v10229 = vunpack.c.l.b16 %v9031
    %v10230 = vunpack.c.h.b16 %v9031
    %v10231 = vunpack.c.l.b16 %v9032
    %v10232 = vunpack.c.h.b16 %v9032
    %v10233 = vunpack.c.l.b16 %v9033
    %v10234 = vunpack.c.h.b16 %v9033
    %v10235 = vunpack.c.l.b16 %v9034
    %v10236 = vunpack.c.h.b16 %v9034
    %v10237 = vunpack.c.l.b16 %v9035
    %v10238 = vunpack.c.h.b16 %v9035
    %v10239 = vunpack.c.l.b16 %v9036
    %v10240 = vunpack.c.h.b16 %v9036
    %v10241 = vunpack.c.l.b16 %v9037
    %v10242 = vunpack.c.h.b16 %v9037
    %v10243 = vunpack.c.l.b16 %v9038
    %v10244 = vunpack.c.h.b16 %v9038
    %v10245 = vunpack.c.l.b16 %v9039
    %v10246 = vunpack.c.h.b16 %v9039
    %v10247 = vunpack.c.l.b16 %v9040
    %v10248 = vunpack.c.h.b16 %v9040
    %v10249 = vunpack.c.l.b16 %v9041
    %v10250 = vunpack.c.h.b16 %v9041
    %v10251 = vunpack.c.l.b16 %v9042
    %v10252 = vunpack.c.h.b16 %v9042
    %v10253 = vunpack.c.l.b16 %v9043
    %v10254 = vunpack.c.h.b16 %v9043
    %v10255 = vunpack.c.l.b16 %v9044
    %v10256 = vunpack.c.h.b16 %v9044
    %v10257 = vpack.c.b16 %v9459, %v9457
    %v10258 = vpack.c.b16 %v9460, %v9458
    %v10259 = vpack.c.b16 %v9463, %v9461
    %v10260 = vpack.c.b16 %v9464, %v9462
    %v10261 = vpack.c.b16 %v9467, %v9465
    %v10262 = vpack.c.b16 %v9468, %v9466
    %v10263 = vpack.c.b16 %v9471, %v9469
    %v10264 = vpack.c.b16 %v9472, %v9470
    %v10265 = vpack.c.b16 %v9475, %v9473
    %v10266 = vpack.c.b16 %v9476, %v9474
    %v10267 = vpack.c.b16 %v9479, %v9477
    %v10268 = vpack.c.b16 %v9480, %v9478
    %v10269 = vpack.c.b16 %v9483, %v9481
    %v10270 = vpack.c.b16 %v9484, %v9482
    %v10271 = vpack.c.b16 %v9487, %v9485
    %v10272 = vpack.c.b16 %v9488, %v9486
    %v10273 = vpack.c.b16 %v9491, %v9489
    %v10274 = vpack.c.b16 %v9492, %v9490
    %v10275 = vpack.c.b16 %v9495, %v9493
    %v10276 = vpack.c.b16 %v9496, %v9494
    %v10277 = vpack.c.b16 %v9499, %v9497
    %v10278 = vpack.c.b16 %v9500, %v9498
    %v10279 = vpack.c.b16 %v9503, %v9501
    %v10280 = vpack.c.b16 %v9504, %v9502
    %v10281 = vpack.c.b16 %v9507, %v9505
    %v10282 = vpack.c.b16 %v9508, %v9506
    %v10283 = vpack.c.b16 %v9511, %v9509
    %v10284 = vpack.c.b16 %v9512, %v9510
    %v10285 = vpack.c.b16 %v9515, %v9513
    %v10286 = vpack.c.b16 %v9516, %v9514
    %v10287 = vpack.c.b16 %v9519, %v9517
    %v10288 = vpack.c.b16 %v9520, %v9518
    %v10289 = vpack.c.b16 %v9523, %v9521
    %v10290 = vpack.c.b16 %v9524, %v9522
    %v10291 = vpack.c.b16 %v9527, %v9525
    %v10292 = vpack.c.b16 %v9528, %v9526
    %v10293 = vpack.c.b16 %v9531, %v9529
    %v10294 = vpack.c.b16 %v9532, %v9530
    %v10295 = vpack.c.b16 %v9535, %v9533
    %v10296 = vpack.c.b16 %v9536, %v9534
    %v10297 = vpack.c.b16 %v9539, %v9537
    %v10298 = vpack.c.b16 %v9540, %v9538
    %v10299 = vpack.c.b16 %v9543, %v9541
    %v10300 = vpack.c.b16 %v9544, %v9542
    %v10301 = vpack.c.b16 %v9547, %v9545
    %v10302 = vpack.c.b16 %v9548, %v9546
    %v10303 = vpack.c.b16 %v9551, %v9549
    %v10304 = vpack.c.b16 %v9552, %v9550
    %v10305 = vpack.c.b16 %v9555, %v9553
    %v10306 = vpack.c.b16 %v9556, %v9554
    %v10307 = vpack.c.b16 %v9559, %v9557
    %v10308 = vpack.c.b16 %v9560, %v9558
    %v10309 = vpack.c.b16 %v9563, %v9561
    %v10310 = vpack.c.b16 %v9564, %v9562
    %v10311 = vpack.c.b16 %v9567, %v9565
    %v10312 = vpack.c.b16 %v9568, %v9566
    %v10313 = vpack.c.b16 %v9571, %v9569
    %v10314 = vpack.c.b16 %v9572, %v9570
    %v10315 = vpack.c.b16 %v9575, %v9573
    %v10316 = vpack.c.b16 %v9576, %v9574
    %v10317 = vpack.c.b16 %v9579, %v9577
    %v10318 = vpack.c.b16 %v9580, %v9578
    %v10319 = vpack.c.b16 %v9583, %v9581
    %v10320 = vpack.c.b16 %v9584, %v9582
    %v10321 = vpack.c.b16 %v9587, %v9585
    %v10322 = vpack.c.b16 %v9588, %v9586
    %v10323 = vpack.c.b16 %v9591, %v9589
    %v10324 = vpack.c.b16 %v9592, %v9590
    %v10325 = vpack.c.b16 %v9595, %v9593
    %v10326 = vpack.c.b16 %v9596, %v9594
    %v10327 = vpack.c.b16 %v9599, %v9597
    %v10328 = vpack.c.b16 %v9600, %v9598
    %v10329 = vpack.c.b16 %v9603, %v9601
    %v10330 = vpack.c.b16 %v9604, %v9602
    %v10331 = vpack.c.b16 %v9607, %v9605
    %v10332 = vpack.c.b16 %v9608, %v9606
    %v10333 = vpack.c.b16 %v9611, %v9609
    %v10334 = vpack.c.b16 %v9612, %v9610
    %v10335 = vpack.c.b16 %v9615, %v9613
    %v10336 = vpack.c.b16 %v9616, %v9614
    %v10337 = vpack.c.b16 %v9619, %v9617
    %v10338 = vpack.c.b16 %v9620, %v9618
    %v10339 = vpack.c.b16 %v9623, %v9621
    %v10340 = vpack.c.b16 %v9624, %v9622
    %v10341 = vpack.c.b16 %v9627, %v9625
    %v10342 = vpack.c.b16 %v9628, %v9626
    %v10343 = vpack.c.b16 %v9631, %v9629
    %v10344 = vpack.c.b16 %v9632, %v9630
    %v10345 = vpack.c.b16 %v9635, %v9633
    %v10346 = vpack.c.b16 %v9636, %v9634
    %v10347 = vpack.c.b16 %v9639, %v9637
    %v10348 = vpack.c.b16 %v9640, %v9638
    %v10349 = vpack.c.b16 %v9643, %v9641
    %v10350 = vpack.c.b16 %v9644, %v9642
    %v10351 = vpack.c.b16 %v9647, %v9645
    %v10352 = vpack.c.b16 %v9648, %v9646
    %v10353 = vpack.c.b16 %v9651, %v9649
    %v10354 = vpack.c.b16 %v9652, %v9650
    %v10355 = vpack.c.b16 %v9655, %v9653
    %v10356 = vpack.c.b16 %v9656, %v9654
    %v10357 = vpack.c.b16 %v9659, %v9657
    %v10358 = vpack.c.b16 %v9660, %v9658
    %v10359 = vpack.c.b16 %v9663, %v9661
    %v10360 = vpack.c.b16 %v9664, %v9662
    %v10361 = vpack.c.b16 %v9667, %v9665
    %v10362 = vpack.c.b16 %v9668, %v9666
    %v10363 = vpack.c.b16 %v9671, %v9669
    %v10364 = vpack.c.b16 %v9672, %v9670
    %v10365 = vpack.c.b16 %v9675, %v9673
    %v10366 = vpack.c.b16 %v9676, %v9674
    %v10367 = vpack.c.b16 %v9679, %v9677
    %v10368 = vpack.c.b16 %v9680, %v9678
    %v10369 = vpack.c.b16 %v9683, %v9681
    %v10370 = vpack.c.b16 %v9684, %v9682
    %v10371 = vpack.c.b16 %v9687, %v9685
    %v10372 = vpack.c.b16 %v9688, %v9686
    %v10373 = vpack.c.b16 %v9691, %v9689
    %v10374 = vpack.c.b16 %v9692, %v9690
    %v10375 = vpack.c.b16 %v9695, %v9693
    %v10376 = vpack.c.b16 %v9696, %v9694
    %v10377 = vpack.c.b16 %v9699, %v9697
    %v10378 = vpack.c.b16 %v9700, %v9698
    %v10379 = vpack.c.b16 %v9703, %v9701
    %v10380 = vpack.c.b16 %v9704, %v9702
    %v10381 = vpack.c.b16 %v9707, %v9705
    %v10382 = vpack.c.b16 %v9708, %v9706
    %v10383 = vpack.c.b16 %v9711, %v9709
    %v10384 = vpack.c.b16 %v9712, %v9710
    %v10385 = vpack.c.b16 %v9715, %v9713
    %v10386 = vpack.c.b16 %v9716, %v9714
    %v10387 = vpack.c.b16 %v9719, %v9717
    %v10388 = vpack.c.b16 %v9720, %v9718
    %v10389 = vpack.c.b16 %v9723, %v9721
    %v10390 = vpack.c.b16 %v9724, %v9722
    %v10391 = vpack.c.b16 %v9727, %v9725
    %v10392 = vpack.c.b16 %v9728, %v9726
    %v10393 = vpack.c.b16 %v9731, %v9729
    %v10394 = vpack.c.b16 %v9732, %v9730
    %v10395 = vpack.c.b16 %v9735, %v9733
    %v10396 = vpack.c.b16 %v9736, %v9734
    %v10397 = vpack.c.b16 %v9739, %v9737
    %v10398 = vpack.c.b16 %v9740, %v9738
    %v10399 = vpack.c.b16 %v9743, %v9741
    %v10400 = vpack.c.b16 %v9744, %v9742
    %v10401 = vpack.c.b16 %v9747, %v9745
    %v10402 = vpack.c.b16 %v9748, %v9746
    %v10403 = vpack.c.b16 %v9751, %v9749
    %v10404 = vpack.c.b16 %v9752, %v9750
    %v10405 = vpack.c.b16 %v9755, %v9753
    %v10406 = vpack.c.b16 %v9756, %v9754
    %v10407 = vpack.c.b16 %v9759, %v9757
    %v10408 = vpack.c.b16 %v9760, %v9758
    %v10409 = vpack.c.b16 %v9763, %v9761
    %v10410 = vpack.c.b16 %v9764, %v9762
    %v10411 = vpack.c.b16 %v9767, %v9765
    %v10412 = vpack.c.b16 %v9768, %v9766
    %v10413 = vpack.c.b16 %v9771, %v9769
    %v10414 = vpack.c.b16 %v9772, %v9770
    %v10415 = vpack.c.b16 %v9775, %v9773
    %v10416 = vpack.c.b16 %v9776, %v9774
    %v10417 = vpack.c.b16 %v9779, %v9777
    %v10418 = vpack.c.b16 %v9780, %v9778
    %v10419 = vpack.c.b16 %v9783, %v9781
    %v10420 = vpack.c.b16 %v9784, %v9782
    %v10421 = vpack.c.b16 %v9787, %v9785
    %v10422 = vpack.c.b16 %v9788, %v9786
    %v10423 = vpack.c.b16 %v9791, %v9789
    %v10424 = vpack.c.b16 %v9792, %v9790
    %v10425 = vpack.c.b16 %v9795, %v9793
    %v10426 = vpack.c.b16 %v9796, %v9794
    %v10427 = vpack.c.b16 %v9799, %v9797
    %v10428 = vpack.c.b16 %v9800, %v9798
    %v10429 = vpack.c.b16 %v9803, %v9801
    %v10430 = vpack.c.b16 %v9804, %v9802
    %v10431 = vpack.c.b16 %v9807, %v9805
    %v10432 = vpack.c.b16 %v9808, %v9806
    %v10433 = vpack.c.b16 %v9811, %v9809
    %v10434 = vpack.c.b16 %v9812, %v9810
    %v10435 = vpack.c.b16 %v9815, %v9813
    %v10436 = vpack.c.b16 %v9816, %v9814
    %v10437 = vpack.c.b16 %v9819, %v9817
    %v10438 = vpack.c.b16 %v9820, %v9818
    %v10439 = vpack.c.b16 %v9823, %v9821
    %v10440 = vpack.c.b16 %v9824, %v9822
    %v10441 = vpack.c.b16 %v9827, %v9825
    %v10442 = vpack.c.b16 %v9828, %v9826
    %v10443 = vpack.c.b16 %v9831, %v9829
    %v10444 = vpack.c.b16 %v9832, %v9830
    %v10445 = vpack.c.b16 %v9835, %v9833
    %v10446 = vpack.c.b16 %v9836, %v9834
    %v10447 = vpack.c.b16 %v9839, %v9837
    %v10448 = vpack.c.b16 %v9840, %v9838
    %v10449 = vpack.c.b16 %v9843, %v9841
    %v10450 = vpack.c.b16 %v9844, %v9842
    %v10451 = vpack.c.b16 %v9847, %v9845
    %v10452 = vpack.c.b16 %v9848, %v9846
    %v10453 = vpack.c.b16 %v9851, %v9849
    %v10454 = vpack.c.b16 %v9852, %v9850
    %v10455 = vpack.c.b16 %v9855, %v9853
    %v10456 = vpack.c.b16 %v9856, %v9854
    %v10457 = vpack.c.b16 %v9859, %v9857
    %v10458 = vpack.c.b16 %v9860, %v9858
    %v10459 = vpack.c.b16 %v9863, %v9861
    %v10460 = vpack.c.b16 %v9864, %v9862
    %v10461 = vpack.c.b16 %v9867, %v9865
    %v10462 = vpack.c.b16 %v9868, %v9866
    %v10463 = vpack.c.b16 %v9871, %v9869
    %v10464 = vpack.c.b16 %v9872, %v9870
    %v10465 = vpack.c.b16 %v9875, %v9873
    %v10466 = vpack.c.b16 %v9876, %v9874
    %v10467 = vpack.c.b16 %v9879, %v9877
    %v10468 = vpack.c.b16 %v9880, %v9878
    %v10469 = vpack.c.b16 %v9883, %v9881
    %v10470 = vpack.c.b16 %v9884, %v9882
    %v10471 = vpack.c.b16 %v9887, %v9885
    %v10472 = vpack.c.b16 %v9888, %v9886
    %v10473 = vpack.c.b16 %v9891, %v9889
    %v10474 = vpack.c.b16 %v9892, %v9890
    %v10475 = vpack.c.b16 %v9895, %v9893
    %v10476 = vpack.c.b16 %v9896, %v9894
    %v10477 = vpack.c.b16 %v9899, %v9897
    %v10478 = vpack.c.b16 %v9900, %v9898
    %v10479 = vpack.c.b16 %v9903, %v9901
    %v10480 = vpack.c.b16 %v9904, %v9902
    %v10481 = vpack.c.b16 %v9907, %v9905
    %v10482 = vpack.c.b16 %v9908, %v9906
    %v10483 = vpack.c.b16 %v9911, %v9909
    %v10484 = vpack.c.b16 %v9912, %v9910
    %v10485 = vpack.c.b16 %v9915, %v9913
    %v10486 = vpack.c.b16 %v9916, %v9914
    %v10487 = vpack.c.b16 %v9919, %v9917
    %v10488 = vpack.c.b16 %v9920, %v9918
    %v10489 = vpack.c.b16 %v9923, %v9921
    %v10490 = vpack.c.b16 %v9924, %v9922
    %v10491 = vpack.c.b16 %v9927, %v9925
    %v10492 = vpack.c.b16 %v9928, %v9926
    %v10493 = vpack.c.b16 %v9931, %v9929
    %v10494 = vpack.c.b16 %v9932, %v9930
    %v10495 = vpack.c.b16 %v9935, %v9933
    %v10496 = vpack.c.b16 %v9936, %v9934
    %v10497 = vpack.c.b16 %v9939, %v9937
    %v10498 = vpack.c.b16 %v9940, %v9938
    %v10499 = vpack.c.b16 %v9943, %v9941
    %v10500 = vpack.c.b16 %v9944, %v9942
    %v10501 = vpack.c.b16 %v9947, %v9945
    %v10502 = vpack.c.b16 %v9948, %v9946
    %v10503 = vpack.c.b16 %v9951, %v9949
    %v10504 = vpack.c.b16 %v9952, %v9950
    %v10505 = vpack.c.b16 %v9955, %v9953
    %v10506 = vpack.c.b16 %v9956, %v9954
    %v10507 = vpack.c.b16 %v9959, %v9957
    %v10508 = vpack.c.b16 %v9960, %v9958
    %v10509 = vpack.c.b16 %v9963, %v9961
    %v10510 = vpack.c.b16 %v9964, %v9962
    %v10511 = vpack.c.b16 %v9967, %v9965
    %v10512 = vpack.c.b16 %v9968, %v9966
    %v10513 = vpack.c.b16 %v9971, %v9969
    %v10514 = vpack.c.b16 %v9972, %v9970
    %v10515 = vpack.c.b16 %v9975, %v9973
    %v10516 = vpack.c.b16 %v9976, %v9974
    %v10517 = vpack.c.b16 %v9979, %v9977
    %v10518 = vpack.c.b16 %v9980, %v9978
    %v10519 = vpack.c.b16 %v9983, %v9981
    %v10520 = vpack.c.b16 %v9984, %v9982
    %v10521 = vpack.c.b16 %v9987, %v9985
    %v10522 = vpack.c.b16 %v9988, %v9986
    %v10523 = vpack.c.b16 %v9991, %v9989
    %v10524 = vpack.c.b16 %v9992, %v9990
    %v10525 = vpack.c.b16 %v9995, %v9993
    %v10526 = vpack.c.b16 %v9996, %v9994
    %v10527 = vpack.c.b16 %v9999, %v9997
    %v10528 = vpack.c.b16 %v10000, %v9998
    %v10529 = vpack.c.b16 %v10003, %v10001
    %v10530 = vpack.c.b16 %v10004, %v10002
    %v10531 = vpack.c.b16 %v10007, %v10005
    %v10532 = vpack.c.b16 %v10008, %v10006
    %v10533 = vpack.c.b16 %v10011, %v10009
    %v10534 = vpack.c.b16 %v10012, %v10010
    %v10535 = vpack.c.b16 %v10015, %v10013
    %v10536 = vpack.c.b16 %v10016, %v10014
    %v10537 = vpack.c.b16 %v10019, %v10017
    %v10538 = vpack.c.b16 %v10020, %v10018
    %v10539 = vpack.c.b16 %v10023, %v10021
    %v10540 = vpack.c.b16 %v10024, %v10022
    %v10541 = vpack.c.b16 %v10027, %v10025
    %v10542 = vpack.c.b16 %v10028, %v10026
    %v10543 = vpack.c.b16 %v10031, %v10029
    %v10544 = vpack.c.b16 %v10032, %v10030
    %v10545 = vpack.c.b16 %v10035, %v10033
    %v10546 = vpack.c.b16 %v10036, %v10034
    %v10547 = vpack.c.b16 %v10039, %v10037
    %v10548 = vpack.c.b16 %v10040, %v10038
    %v10549 = vpack.c.b16 %v10043, %v10041
    %v10550 = vpack.c.b16 %v10044, %v10042
    %v10551 = vpack.c.b16 %v10047, %v10045
    %v10552 = vpack.c.b16 %v10048, %v10046
    %v10553 = vpack.c.b16 %v10051, %v10049
    %v10554 = vpack.c.b16 %v10052, %v10050
    %v10555 = vpack.c.b16 %v10055, %v10053
    %v10556 = vpack.c.b16 %v10056, %v10054
    %v10557 = vpack.c.b16 %v10059, %v10057
    %v10558 = vpack.c.b16 %v10060, %v10058
    %v10559 = vpack.c.b16 %v10063, %v10061
    %v10560 = vpack.c.b16 %v10064, %v10062
    %v10561 = vpack.c.b16 %v10067, %v10065
    %v10562 = vpack.c.b16 %v10068, %v10066
    %v10563 = vpack.c.b16 %v10071, %v10069
    %v10564 = vpack.c.b16 %v10072, %v10070
    %v10565 = vpack.c.b16 %v10075, %v10073
    %v10566 = vpack.c.b16 %v10076, %v10074
    %v10567 = vpack.c.b16 %v10079, %v10077
    %v10568 = vpack.c.b16 %v10080, %v10078
    %v10569 = vpack.c.b16 %v10083, %v10081
    %v10570 = vpack.c.b16 %v10084, %v10082
    %v10571 = vpack.c.b16 %v10087, %v10085
    %v10572 = vpack.c.b16 %v10088, %v10086
    %v10573 = vpack.c.b16 %v10091, %v10089
    %v10574 = vpack.c.b16 %v10092, %v10090
    %v10575 = vpack.c.b16 %v10095, %v10093
    %v10576 = vpack.c.b16 %v10096, %v10094
    %v10577 = vpack.c.b16 %v10099, %v10097
    %v10578 = vpack.c.b16 %v10100, %v10098
    %v10579 = vpack.c.b16 %v10103, %v10101
    %v10580 = vpack.c.b16 %v10104, %v10102
    %v10581 = vpack.c.b16 %v10107, %v10105
    %v10582 = vpack.c.b16 %v10108, %v10106
    %v10583 = vpack.c.b16 %v10111, %v10109
    %v10584 = vpack.c.b16 %v10112, %v10110
    %v10585 = vpack.c.b16 %v10115, %v10113
    %v10586 = vpack.c.b16 %v10116, %v10114
    %v10587 = vpack.c.b16 %v10119, %v10117
    %v10588 = vpack.c.b16 %v10120, %v10118
    %v10589 = vpack.c.b16 %v10123, %v10121
    %v10590 = vpack.c.b16 %v10124, %v10122
    %v10591 = vpack.c.b16 %v10127, %v10125
    %v10592 = vpack.c.b16 %v10128, %v10126
    %v10593 = vpack.c.b16 %v10131, %v10129
    %v10594 = vpack.c.b16 %v10132, %v10130
    %v10595 = vpack.c.b16 %v10135, %v10133
    %v10596 = vpack.c.b16 %v10136, %v10134
    %v10597 = vpack.c.b16 %v10139, %v10137
    %v10598 = vpack.c.b16 %v10140, %v10138
    %v10599 = vpack.c.b16 %v10143, %v10141
    %v10600 = vpack.c.b16 %v10144, %v10142
    %v10601 = vpack.c.b16 %v10147, %v10145
    %v10602 = vpack.c.b16 %v10148, %v10146
    %v10603 = vpack.c.b16 %v10151, %v10149
    %v10604 = vpack.c.b16 %v10152, %v10150
    %v10605 = vpack.c.b16 %v10155, %v10153
    %v10606 = vpack.c.b16 %v10156, %v10154
    %v10607 = vpack.c.b16 %v10159, %v10157
    %v10608 = vpack.c.b16 %v10160, %v10158
    %v10609 = vpack.c.b16 %v10163, %v10161
    %v10610 = vpack.c.b16 %v10164, %v10162
    %v10611 = vpack.c.b16 %v10167, %v10165
    %v10612 = vpack.c.b16 %v10168, %v10166
    %v10613 = vpack.c.b16 %v10171, %v10169
    %v10614 = vpack.c.b16 %v10172, %v10170
    %v10615 = vpack.c.b16 %v10175, %v10173
    %v10616 = vpack.c.b16 %v10176, %v10174
    %v10617 = vpack.c.b16 %v10179, %v10177
    %v10618 = vpack.c.b16 %v10180, %v10178
    %v10619 = vpack.c.b16 %v10183, %v10181
    %v10620 = vpack.c.b16 %v10184, %v10182
    %v10621 = vpack.c.b16 %v10187, %v10185
    %v10622 = vpack.c.b16 %v10188, %v10186
    %v10623 = vpack.c.b16 %v10191, %v10189
    %v10624 = vpack.c.b16 %v10192, %v10190
    %v10625 = vpack.c.b16 %v10195, %v10193
    %v10626 = vpack.c.b16 %v10196, %v10194
    %v10627 = vpack.c.b16 %v10199, %v10197
    %v10628 = vpack.c.b16 %v10200, %v10198
    %v10629 = vpack.c.b16 %v10203, %v10201
    %v10630 = vpack.c.b16 %v10204, %v10202
    %v10631 = vpack.c.b16 %v10207, %v10205
    %v10632 = vpack.c.b16 %v10208, %v10206
    %v10633 = vpack.c.b16 %v10211, %v10209
    %v10634 = vpack.c.b16 %v10212, %v10210
    %v10635 = vpack.c.b16 %v10215, %v10213
    %v10636 = vpack.c.b16 %v10216, %v10214
    %v10637 = vpack.c.b16 %v10219, %v10217
    %v10638 = vpack.c.b16 %v10220, %v10218
    %v10639 = vpack.c.b16 %v10223, %v10221
    %v10640 = vpack.c.b16 %v10224, %v10222
    %v10641 = vpack.c.b16 %v10227, %v10225
    %v10642 = vpack.c.b16 %v10228, %v10226
    %v10643 = vpack.c.b16 %v10231, %v10229
    %v10644 = vpack.c.b16 %v10232, %v10230
    %v10645 = vpack.c.b16 %v10235, %v10233
    %v10646 = vpack.c.b16 %v10236, %v10234
    %v10647 = vpack.c.b16 %v10239, %v10237
    %v10648 = vpack.c.b16 %v10240, %v10238
    %v10649 = vpack.c.b16 %v10243, %v10241
    %v10650 = vpack.c.b16 %v10244, %v10242
    %v10651 = vpack.c.b16 %v10247, %v10245
    %v10652 = vpack.c.b16 %v10248, %v10246
    %v10653 = vpack.c.b16 %v10251, %v10249
    %v10654 = vpack.c.b16 %v10252, %v10250
    %v10655 = vpack.c.b16 %v10255, %v10253
    %v10656 = vpack.c.b16 %v10256, %v10254
    %11057 = vmatprep.subr.bf16.mxu0 %v10258
    %11058 = vmatpush1.bf16.msra.mxu0 %v10257
    %11059 = vmatprep.subr.bf16.mxu0 %v10260
    %11060 = vmatpush1.bf16.msra.mxu0 %v10259
    %11061 = vmatprep.subr.bf16.mxu0 %v10262
    %11062 = vmatpush1.bf16.msra.mxu0 %v10261
    %11063 = vmatprep.subr.bf16.mxu0 %v10264
    %11064 = vmatpush1.bf16.msra.mxu0 %v10263
    %11065 = vmatprep.subr.bf16.mxu0 %v10266
    %11066 = vmatpush1.bf16.msra.mxu0 %v10265
    %11067 = vmatprep.subr.bf16.mxu0 %v10268
    %11068 = vmatpush1.bf16.msra.mxu0 %v10267
    %11069 = vmatprep.subr.bf16.mxu0 %v10270
    %11070 = vmatpush1.bf16.msra.mxu0 %v10269
    %11071 = vmatprep.subr.bf16.mxu0 %v10272
    %11072 = vmatpush1.bf16.msra.mxu0 %v10271
    %11073 = vmatprep.subr.bf16.mxu0 %v10274
    %11074 = vmatpush1.bf16.msra.mxu0 %v10273
    %11075 = vmatprep.subr.bf16.mxu0 %v10276
    %11076 = vmatpush1.bf16.msra.mxu0 %v10275
    %11077 = vmatprep.subr.bf16.mxu0 %v10278
    %11078 = vmatpush1.bf16.msra.mxu0 %v10277
    %11079 = vmatprep.subr.bf16.mxu0 %v10280
    %11080 = vmatpush1.bf16.msra.mxu0 %v10279
    %11081 = vmatprep.subr.bf16.mxu0 %v10282
    %11082 = vmatpush1.bf16.msra.mxu0 %v10281
    %11083 = vmatprep.subr.bf16.mxu0 %v10284
    %11084 = vmatpush1.bf16.msra.mxu0 %v10283
    %11085 = vmatprep.subr.bf16.mxu0 %v10286
    %11086 = vmatpush1.bf16.msra.mxu0 %v10285
    %11087 = vmatprep.subr.bf16.mxu0 %v10288
    %11088 = vmatpush1.bf16.msra.mxu0 %v10287
    %11089 = vmatprep.mubr.bf16.mxu0 %v8581
    %11090 = vmatmul.mubr.bf16.gmra.mrb[0].mxu0 %v8578
    %v11091 = vpop.f32.mrb[0].mxu0
    %v11092 = vadd.f32 %v9050, %v11091
    %v11093 = vpop.f32.mrb[0].mxu0
    %v11094 = vadd.f32 %v9054, %v11093
    %v11095 = vpop.f32.mrb[0].mxu0
    %v11096 = vpop.f32.mrb[0].mxu0
    %11097 = vdwg.mxu0
    %11098 = vmatprep.subr.bf16.mxu0 %v10290
    %11099 = vmatpush1.bf16.msra.mxu0 %v10289
    %11100 = vmatprep.subr.bf16.mxu0 %v10292
    %11101 = vmatpush1.bf16.msra.mxu0 %v10291
    %11102 = vmatprep.subr.bf16.mxu0 %v10294
    %11103 = vmatpush1.bf16.msra.mxu0 %v10293
    %11104 = vmatprep.subr.bf16.mxu0 %v10296
    %11105 = vmatpush1.bf16.msra.mxu0 %v10295
    %11106 = vmatprep.subr.bf16.mxu0 %v10298
    %11107 = vmatpush1.bf16.msra.mxu0 %v10297
    %11108 = vmatprep.subr.bf16.mxu0 %v10300
    %11109 = vmatpush1.bf16.msra.mxu0 %v10299
    %11110 = vmatprep.subr.bf16.mxu0 %v10302
    %11111 = vmatpush1.bf16.msra.mxu0 %v10301
    %11112 = vmatprep.subr.bf16.mxu0 %v10304
    %11113 = vmatpush1.bf16.msra.mxu0 %v10303
    %11114 = vmatprep.subr.bf16.mxu0 %v10306
    %11115 = vmatpush1.bf16.msra.mxu0 %v10305
    %11116 = vmatprep.subr.bf16.mxu0 %v10308
    %11117 = vmatpush1.bf16.msra.mxu0 %v10307
    %11118 = vmatprep.subr.bf16.mxu0 %v10310
    %11119 = vmatpush1.bf16.msra.mxu0 %v10309
    %11120 = vmatprep.subr.bf16.mxu0 %v10312
    %11121 = vmatpush1.bf16.msra.mxu0 %v10311
    %11122 = vmatprep.subr.bf16.mxu0 %v10314
    %11123 = vmatpush1.bf16.msra.mxu0 %v10313
    %11124 = vmatprep.subr.bf16.mxu0 %v10316
    %11125 = vmatpush1.bf16.msra.mxu0 %v10315
    %11126 = vmatprep.subr.bf16.mxu0 %v10318
    %11127 = vmatpush1.bf16.msra.mxu0 %v10317
    %11128 = vmatprep.subr.bf16.mxu0 %v10320
    %11129 = vmatpush1.bf16.msra.mxu0 %v10319
    %11130 = vmatprep.mubr.bf16.mxu0 %v8587
    %11131 = vmatmul.mubr.bf16.gmra.mrb[0].mxu0 %v8584
    %v11132 = vpop.f32.mrb[0].mxu0
    %v11133 = vadd.f32 %v11092, %v11132
    %v11134 = vpop.f32.mrb[0].mxu0
    %v11135 = vadd.f32 %v11094, %v11134
    %v11136 = vpop.f32.mrb[0].mxu0
    %v11137 = vpop.f32.mrb[0].mxu0
    %11138 = vdwg.mxu0
    %11139 = vmatprep.subr.bf16.mxu0 %v10322
    %11140 = vmatpush1.bf16.msra.mxu0 %v10321
    %11141 = vmatprep.subr.bf16.mxu0 %v10324
    %11142 = vmatpush1.bf16.msra.mxu0 %v10323
    %11143 = vmatprep.subr.bf16.mxu0 %v10326
    %11144 = vmatpush1.bf16.msra.mxu0 %v10325
    %11145 = vmatprep.subr.bf16.mxu0 %v10328
    %11146 = vmatpush1.bf16.msra.mxu0 %v10327
    %11147 = vmatprep.subr.bf16.mxu0 %v10330
    %11148 = vmatpush1.bf16.msra.mxu0 %v10329
    %11149 = vmatprep.subr.bf16.mxu0 %v10332
    %11150 = vmatpush1.bf16.msra.mxu0 %v10331
    %11151 = vmatprep.subr.bf16.mxu0 %v10334
    %11152 = vmatpush1.bf16.msra.mxu0 %v10333
    %11153 = vmatprep.subr.bf16.mxu0 %v10336
    %11154 = vmatpush1.bf16.msra.mxu0 %v10335
    %11155 = vmatprep.subr.bf16.mxu0 %v10338
    %11156 = vmatpush1.bf16.msra.mxu0 %v10337
    %11157 = vmatprep.subr.bf16.mxu0 %v10340
    %11158 = vmatpush1.bf16.msra.mxu0 %v10339
    %11159 = vmatprep.subr.bf16.mxu0 %v10342
    %11160 = vmatpush1.bf16.msra.mxu0 %v10341
    %11161 = vmatprep.subr.bf16.mxu0 %v10344
    %11162 = vmatpush1.bf16.msra.mxu0 %v10343
    %11163 = vmatprep.subr.bf16.mxu0 %v10346
    %11164 = vmatpush1.bf16.msra.mxu0 %v10345
    %11165 = vmatprep.subr.bf16.mxu0 %v10348
    %11166 = vmatpush1.bf16.msra.mxu0 %v10347
    %11167 = vmatprep.subr.bf16.mxu0 %v10350
    %11168 = vmatpush1.bf16.msra.mxu0 %v10349
    %11169 = vmatprep.subr.bf16.mxu0 %v10352
    %11170 = vmatpush1.bf16.msra.mxu0 %v10351
    %11171 = vmatprep.mubr.bf16.mxu0 %v8593
    %11172 = vmatmul.mubr.bf16.gmra.mrb[0].mxu0 %v8590
    %v11173 = vpop.f32.mrb[0].mxu0
    %v11174 = vadd.f32 %v11133, %v11173
    %v11175 = vpop.f32.mrb[0].mxu0
    %v11176 = vadd.f32 %v11135, %v11175
    %v11177 = vpop.f32.mrb[0].mxu0
    %v11178 = vpop.f32.mrb[0].mxu0
    %11179 = vdwg.mxu0
    %11180 = vmatprep.subr.bf16.mxu0 %v10354
    %11181 = vmatpush1.bf16.msra.mxu0 %v10353
    %11182 = vmatprep.subr.bf16.mxu0 %v10356
    %11183 = vmatpush1.bf16.msra.mxu0 %v10355
    %11184 = vmatprep.subr.bf16.mxu0 %v10358
    %11185 = vmatpush1.bf16.msra.mxu0 %v10357
    %11186 = vmatprep.subr.bf16.mxu0 %v10360
    %11187 = vmatpush1.bf16.msra.mxu0 %v10359
    %11188 = vmatprep.subr.bf16.mxu0 %v10362
    %11189 = vmatpush1.bf16.msra.mxu0 %v10361
    %11190 = vmatprep.subr.bf16.mxu0 %v10364
    %11191 = vmatpush1.bf16.msra.mxu0 %v10363
    %11192 = vmatprep.subr.bf16.mxu0 %v10366
    %11193 = vmatpush1.bf16.msra.mxu0 %v10365
    %11194 = vmatprep.subr.bf16.mxu0 %v10368
    %11195 = vmatpush1.bf16.msra.mxu0 %v10367
    %11196 = vmatprep.subr.bf16.mxu0 %v10370
    %11197 = vmatpush1.bf16.msra.mxu0 %v10369
    %11198 = vmatprep.subr.bf16.mxu0 %v10372
    %11199 = vmatpush1.bf16.msra.mxu0 %v10371
    %11200 = vmatprep.subr.bf16.mxu0 %v10374
    %11201 = vmatpush1.bf16.msra.mxu0 %v10373
    %11202 = vmatprep.subr.bf16.mxu0 %v10376
    %11203 = vmatpush1.bf16.msra.mxu0 %v10375
    %11204 = vmatprep.subr.bf16.mxu0 %v10378
    %11205 = vmatpush1.bf16.msra.mxu0 %v10377
    %11206 = vmatprep.subr.bf16.mxu0 %v10380
    %11207 = vmatpush1.bf16.msra.mxu0 %v10379
    %11208 = vmatprep.subr.bf16.mxu0 %v10382
    %11209 = vmatpush1.bf16.msra.mxu0 %v10381
    %11210 = vmatprep.subr.bf16.mxu0 %v10384
    %11211 = vmatpush1.bf16.msra.mxu0 %v10383
    %11212 = vmatprep.mubr.bf16.mxu0 %v8599
    %11213 = vmatmul.mubr.bf16.gmra.mrb[0].mxu0 %v8596
    %v11214 = vpop.f32.mrb[0].mxu0
    %v11215 = vadd.f32 %v11174, %v11214
    %v11216 = vpop.f32.mrb[0].mxu0
    %v11217 = vadd.f32 %v11176, %v11216
    %v11218 = vpop.f32.mrb[0].mxu0
    %v11219 = vpop.f32.mrb[0].mxu0
    %11220 = vdwg.mxu0
    %11221 = vmatprep.subr.bf16.mxu0 %v10386
    %11222 = vmatpush1.bf16.msra.mxu0 %v10385
    %11223 = vmatprep.subr.bf16.mxu0 %v10388
    %11224 = vmatpush1.bf16.msra.mxu0 %v10387
    %11225 = vmatprep.subr.bf16.mxu0 %v10390
    %11226 = vmatpush1.bf16.msra.mxu0 %v10389
    %11227 = vmatprep.subr.bf16.mxu0 %v10392
    %11228 = vmatpush1.bf16.msra.mxu0 %v10391
    %11229 = vmatprep.subr.bf16.mxu0 %v10394
    %11230 = vmatpush1.bf16.msra.mxu0 %v10393
    %11231 = vmatprep.subr.bf16.mxu0 %v10396
    %11232 = vmatpush1.bf16.msra.mxu0 %v10395
    %11233 = vmatprep.subr.bf16.mxu0 %v10398
    %11234 = vmatpush1.bf16.msra.mxu0 %v10397
    %11235 = vmatprep.subr.bf16.mxu0 %v10400
    %11236 = vmatpush1.bf16.msra.mxu0 %v10399
    %11237 = vmatprep.subr.bf16.mxu0 %v10402
    %11238 = vmatpush1.bf16.msra.mxu0 %v10401
    %11239 = vmatprep.subr.bf16.mxu0 %v10404
    %11240 = vmatpush1.bf16.msra.mxu0 %v10403
    %11241 = vmatprep.subr.bf16.mxu0 %v10406
    %11242 = vmatpush1.bf16.msra.mxu0 %v10405
    %11243 = vmatprep.subr.bf16.mxu0 %v10408
    %11244 = vmatpush1.bf16.msra.mxu0 %v10407
    %11245 = vmatprep.subr.bf16.mxu0 %v10410
    %11246 = vmatpush1.bf16.msra.mxu0 %v10409
    %11247 = vmatprep.subr.bf16.mxu0 %v10412
    %11248 = vmatpush1.bf16.msra.mxu0 %v10411
    %11249 = vmatprep.subr.bf16.mxu0 %v10414
    %11250 = vmatpush1.bf16.msra.mxu0 %v10413
    %11251 = vmatprep.subr.bf16.mxu0 %v10416
    %11252 = vmatpush1.bf16.msra.mxu0 %v10415
    %11253 = vmatprep.mubr.bf16.mxu0 %v8604
    %11254 = vmatmul.mubr.bf16.gmra.mrb[0].mxu0 %v8602
    %v11255 = vpop.f32.mrb[0].mxu0
    %v11256 = vadd.f32 %v11215, %v11255
    %v11257 = vpop.f32.mrb[0].mxu0
    %v11258 = vadd.f32 %v11217, %v11257
    %v11259 = vpop.f32.mrb[0].mxu0
    %v11260 = vpop.f32.mrb[0].mxu0
    %11261 = vdwg.mxu0
    %11262 = vmatprep.subr.bf16.mxu0 %v10418
    %11263 = vmatpush1.bf16.msra.mxu0 %v10417
    %11264 = vmatprep.subr.bf16.mxu0 %v10420
    %11265 = vmatpush1.bf16.msra.mxu0 %v10419
    %11266 = vmatprep.subr.bf16.mxu0 %v10422
    %11267 = vmatpush1.bf16.msra.mxu0 %v10421
    %11268 = vmatprep.subr.bf16.mxu0 %v10424
    %11269 = vmatpush1.bf16.msra.mxu0 %v10423
    %11270 = vmatprep.subr.bf16.mxu0 %v10426
    %11271 = vmatpush1.bf16.msra.mxu0 %v10425
    %11272 = vmatprep.subr.bf16.mxu0 %v10428
    %11273 = vmatpush1.bf16.msra.mxu0 %v10427
    %11274 = vmatprep.subr.bf16.mxu0 %v10430
    %11275 = vmatpush1.bf16.msra.mxu0 %v10429
    %11276 = vmatprep.subr.bf16.mxu0 %v10432
    %11277 = vmatpush1.bf16.msra.mxu0 %v10431
    %11278 = vmatprep.subr.bf16.mxu0 %v10434
    %11279 = vmatpush1.bf16.msra.mxu0 %v10433
    %11280 = vmatprep.subr.bf16.mxu0 %v10436
    %11281 = vmatpush1.bf16.msra.mxu0 %v10435
    %11282 = vmatprep.subr.bf16.mxu0 %v10438
    %11283 = vmatpush1.bf16.msra.mxu0 %v10437
    %11284 = vmatprep.subr.bf16.mxu0 %v10440
    %11285 = vmatpush1.bf16.msra.mxu0 %v10439
    %11286 = vmatprep.subr.bf16.mxu0 %v10442
    %11287 = vmatpush1.bf16.msra.mxu0 %v10441
    %11288 = vmatprep.subr.bf16.mxu0 %v10444
    %11289 = vmatpush1.bf16.msra.mxu0 %v10443
    %11290 = vmatprep.subr.bf16.mxu0 %v10446
    %11291 = vmatpush1.bf16.msra.mxu0 %v10445
    %11292 = vmatprep.subr.bf16.mxu0 %v10448
    %11293 = vmatpush1.bf16.msra.mxu0 %v10447
    %11294 = vmatprep.mubr.bf16.mxu0 %v8610
    %11295 = vmatmul.mubr.bf16.gmra.mrb[0].mxu0 %v8607
    %v11296 = vpop.f32.mrb[0].mxu0
    %v11297 = vadd.f32 %v11256, %v11296
    %v11298 = vpop.f32.mrb[0].mxu0
    %v11299 = vadd.f32 %v11258, %v11298
    %v11300 = vpop.f32.mrb[0].mxu0
    %v11301 = vpop.f32.mrb[0].mxu0
    %11302 = vdwg.mxu0
    %11303 = vmatprep.subr.bf16.mxu0 %v10450
    %11304 = vmatpush1.bf16.msra.mxu0 %v10449
    %11305 = vmatprep.subr.bf16.mxu0 %v10452
    %11306 = vmatpush1.bf16.msra.mxu0 %v10451
    %11307 = vmatprep.subr.bf16.mxu0 %v10454
    %11308 = vmatpush1.bf16.msra.mxu0 %v10453
    %11309 = vmatprep.subr.bf16.mxu0 %v10456
    %11310 = vmatpush1.bf16.msra.mxu0 %v10455
    %11311 = vmatprep.subr.bf16.mxu0 %v10458
    %11312 = vmatpush1.bf16.msra.mxu0 %v10457
    %11313 = vmatprep.subr.bf16.mxu0 %v10460
    %11314 = vmatpush1.bf16.msra.mxu0 %v10459
    %11315 = vmatprep.subr.bf16.mxu0 %v10462
    %11316 = vmatpush1.bf16.msra.mxu0 %v10461
    %11317 = vmatprep.subr.bf16.mxu0 %v10464
    %11318 = vmatpush1.bf16.msra.mxu0 %v10463
    %11319 = vmatprep.subr.bf16.mxu0 %v10466
    %11320 = vmatpush1.bf16.msra.mxu0 %v10465
    %11321 = vmatprep.subr.bf16.mxu0 %v10468
    %11322 = vmatpush1.bf16.msra.mxu0 %v10467
    %11323 = vmatprep.subr.bf16.mxu0 %v10470
    %11324 = vmatpush1.bf16.msra.mxu0 %v10469
    %11325 = vmatprep.subr.bf16.mxu0 %v10472
    %11326 = vmatpush1.bf16.msra.mxu0 %v10471
    %11327 = vmatprep.subr.bf16.mxu0 %v10474
    %11328 = vmatpush1.bf16.msra.mxu0 %v10473
    %11329 = vmatprep.subr.bf16.mxu0 %v10476
    %11330 = vmatpush1.bf16.msra.mxu0 %v10475
    %11331 = vmatprep.subr.bf16.mxu0 %v10478
    %11332 = vmatpush1.bf16.msra.mxu0 %v10477
    %11333 = vmatprep.subr.bf16.mxu0 %v10480
    %11334 = vmatpush1.bf16.msra.mxu0 %v10479
    %11335 = vmatprep.mubr.bf16.mxu0 %v8616
    %11336 = vmatmul.mubr.bf16.gmra.mrb[0].mxu0 %v8613
    %v11337 = vpop.f32.mrb[0].mxu0
    %v11338 = vadd.f32 %v11297, %v11337
    %v11339 = vpop.f32.mrb[0].mxu0
    %v11340 = vadd.f32 %v11299, %v11339
    %v11341 = vpop.f32.mrb[0].mxu0
    %v11342 = vpop.f32.mrb[0].mxu0
    %11343 = vdwg.mxu0
    %11344 = vmatprep.subr.bf16.mxu0 %v10482
    %11345 = vmatpush1.bf16.msra.mxu0 %v10481
    %11346 = vmatprep.subr.bf16.mxu0 %v10484
    %11347 = vmatpush1.bf16.msra.mxu0 %v10483
    %11348 = vmatprep.subr.bf16.mxu0 %v10486
    %11349 = vmatpush1.bf16.msra.mxu0 %v10485
    %11350 = vmatprep.subr.bf16.mxu0 %v10488
    %11351 = vmatpush1.bf16.msra.mxu0 %v10487
    %11352 = vmatprep.subr.bf16.mxu0 %v10490
    %11353 = vmatpush1.bf16.msra.mxu0 %v10489
    %11354 = vmatprep.subr.bf16.mxu0 %v10492
    %11355 = vmatpush1.bf16.msra.mxu0 %v10491
    %11356 = vmatprep.subr.bf16.mxu0 %v10494
    %11357 = vmatpush1.bf16.msra.mxu0 %v10493
    %11358 = vmatprep.subr.bf16.mxu0 %v10496
    %11359 = vmatpush1.bf16.msra.mxu0 %v10495
    %11360 = vmatprep.subr.bf16.mxu0 %v10498
    %11361 = vmatpush1.bf16.msra.mxu0 %v10497
    %11362 = vmatprep.subr.bf16.mxu0 %v10500
    %11363 = vmatpush1.bf16.msra.mxu0 %v10499
    %11364 = vmatprep.subr.bf16.mxu0 %v10502
    %11365 = vmatpush1.bf16.msra.mxu0 %v10501
    %11366 = vmatprep.subr.bf16.mxu0 %v10504
    %11367 = vmatpush1.bf16.msra.mxu0 %v10503
    %11368 = vmatprep.subr.bf16.mxu0 %v10506
    %11369 = vmatpush1.bf16.msra.mxu0 %v10505
    %11370 = vmatprep.subr.bf16.mxu0 %v10508
    %11371 = vmatpush1.bf16.msra.mxu0 %v10507
    %11372 = vmatprep.subr.bf16.mxu0 %v10510
    %11373 = vmatpush1.bf16.msra.mxu0 %v10509
    %11374 = vmatprep.subr.bf16.mxu0 %v10512
    %11375 = vmatpush1.bf16.msra.mxu0 %v10511
    %11376 = vmatprep.mubr.bf16.mxu0 %v8621
    %11377 = vmatmul.mubr.bf16.gmra.mrb[0].mxu0 %v8618
    %v11378 = vpop.f32.mrb[0].mxu0
    %v11379 = vadd.f32 %v11338, %v11378
    %v11380 = vpop.f32.mrb[0].mxu0
    %v11381 = vadd.f32 %v11340, %v11380
    %v11382 = vpop.f32.mrb[0].mxu0
    %v11383 = vpop.f32.mrb[0].mxu0
    %11384 = vdwg.mxu0
    %11385 = vmatprep.subr.bf16.mxu0 %v10514
    %11386 = vmatpush1.bf16.msra.mxu0 %v10513
    %11387 = vmatprep.subr.bf16.mxu0 %v10516
    %11388 = vmatpush1.bf16.msra.mxu0 %v10515
    %11389 = vmatprep.subr.bf16.mxu0 %v10518
    %11390 = vmatpush1.bf16.msra.mxu0 %v10517
    %11391 = vmatprep.subr.bf16.mxu0 %v10520
    %11392 = vmatpush1.bf16.msra.mxu0 %v10519
    %11393 = vmatprep.subr.bf16.mxu0 %v10522
    %11394 = vmatpush1.bf16.msra.mxu0 %v10521
    %11395 = vmatprep.subr.bf16.mxu0 %v10524
    %11396 = vmatpush1.bf16.msra.mxu0 %v10523
    %11397 = vmatprep.subr.bf16.mxu0 %v10526
    %11398 = vmatpush1.bf16.msra.mxu0 %v10525
    %11399 = vmatprep.subr.bf16.mxu0 %v10528
    %11400 = vmatpush1.bf16.msra.mxu0 %v10527
    %11401 = vmatprep.subr.bf16.mxu0 %v10530
    %11402 = vmatpush1.bf16.msra.mxu0 %v10529
    %11403 = vmatprep.subr.bf16.mxu0 %v10532
    %11404 = vmatpush1.bf16.msra.mxu0 %v10531
    %11405 = vmatprep.subr.bf16.mxu0 %v10534
    %11406 = vmatpush1.bf16.msra.mxu0 %v10533
    %11407 = vmatprep.subr.bf16.mxu0 %v10536
    %11408 = vmatpush1.bf16.msra.mxu0 %v10535
    %11409 = vmatprep.subr.bf16.mxu0 %v10538
    %11410 = vmatpush1.bf16.msra.mxu0 %v10537
    %11411 = vmatprep.subr.bf16.mxu0 %v10540
    %11412 = vmatpush1.bf16.msra.mxu0 %v10539
    %11413 = vmatprep.subr.bf16.mxu0 %v10542
    %11414 = vmatpush1.bf16.msra.mxu0 %v10541
    %11415 = vmatprep.subr.bf16.mxu0 %v10544
    %11416 = vmatpush1.bf16.msra.mxu0 %v10543
    %11417 = vmatprep.mubr.bf16.mxu0 %v8627
    %11418 = vmatmul.mubr.bf16.gmra.mrb[0].mxu0 %v8624
    %v11419 = vpop.f32.mrb[0].mxu0
    %v11420 = vadd.f32 %v11379, %v11419
    %v11421 = vpop.f32.mrb[0].mxu0
    %v11422 = vadd.f32 %v11381, %v11421
    %v11423 = vpop.f32.mrb[0].mxu0
    %v11424 = vpop.f32.mrb[0].mxu0
    %11425 = vdwg.mxu0
    %11426 = vmatprep.subr.bf16.mxu0 %v10546
    %11427 = vmatpush1.bf16.msra.mxu0 %v10545
    %11428 = vmatprep.subr.bf16.mxu0 %v10548
    %11429 = vmatpush1.bf16.msra.mxu0 %v10547
    %11430 = vmatprep.subr.bf16.mxu0 %v10550
    %11431 = vmatpush1.bf16.msra.mxu0 %v10549
    %11432 = vmatprep.subr.bf16.mxu0 %v10552
    %11433 = vmatpush1.bf16.msra.mxu0 %v10551
    %11434 = vmatprep.subr.bf16.mxu0 %v10554
    %11435 = vmatpush1.bf16.msra.mxu0 %v10553
    %11436 = vmatprep.subr.bf16.mxu0 %v10556
    %11437 = vmatpush1.bf16.msra.mxu0 %v10555
    %11438 = vmatprep.subr.bf16.mxu0 %v10558
    %11439 = vmatpush1.bf16.msra.mxu0 %v10557
    %11440 = vmatprep.subr.bf16.mxu0 %v10560
    %11441 = vmatpush1.bf16.msra.mxu0 %v10559
    %11442 = vmatprep.subr.bf16.mxu0 %v10562
    %11443 = vmatpush1.bf16.msra.mxu0 %v10561
    %11444 = vmatprep.subr.bf16.mxu0 %v10564
    %11445 = vmatpush1.bf16.msra.mxu0 %v10563
    %11446 = vmatprep.subr.bf16.mxu0 %v10566
    %11447 = vmatpush1.bf16.msra.mxu0 %v10565
    %11448 = vmatprep.subr.bf16.mxu0 %v10568
    %11449 = vmatpush1.bf16.msra.mxu0 %v10567
    %11450 = vmatprep.subr.bf16.mxu0 %v10570
    %11451 = vmatpush1.bf16.msra.mxu0 %v10569
    %11452 = vmatprep.subr.bf16.mxu0 %v10572
    %11453 = vmatpush1.bf16.msra.mxu0 %v10571
    %11454 = vmatprep.subr.bf16.mxu0 %v10574
    %11455 = vmatpush1.bf16.msra.mxu0 %v10573
    %11456 = vmatprep.subr.bf16.mxu0 %v10576
    %11457 = vmatpush1.bf16.msra.mxu0 %v10575
    %11458 = vmatprep.mubr.bf16.mxu0 %v8633
    %11459 = vmatmul.mubr.bf16.gmra.mrb[0].mxu0 %v8630
    %v11460 = vpop.f32.mrb[0].mxu0
    %v11461 = vadd.f32 %v11420, %v11460
    %v11462 = vpop.f32.mrb[0].mxu0
    %v11463 = vadd.f32 %v11422, %v11462
    %v11464 = vpop.f32.mrb[0].mxu0
    %v11465 = vpop.f32.mrb[0].mxu0
    %11466 = vdwg.mxu0
    %11467 = vmatprep.subr.bf16.mxu0 %v10578
    %11468 = vmatpush1.bf16.msra.mxu0 %v10577
    %11469 = vmatprep.subr.bf16.mxu0 %v10580
    %11470 = vmatpush1.bf16.msra.mxu0 %v10579
    %11471 = vmatprep.subr.bf16.mxu0 %v10582
    %11472 = vmatpush1.bf16.msra.mxu0 %v10581
    %11473 = vmatprep.subr.bf16.mxu0 %v10584
    %11474 = vmatpush1.bf16.msra.mxu0 %v10583
    %11475 = vmatprep.subr.bf16.mxu0 %v10586
    %11476 = vmatpush1.bf16.msra.mxu0 %v10585
    %11477 = vmatprep.subr.bf16.mxu0 %v10588
    %11478 = vmatpush1.bf16.msra.mxu0 %v10587
    %11479 = vmatprep.subr.bf16.mxu0 %v10590
    %11480 = vmatpush1.bf16.msra.mxu0 %v10589
    %11481 = vmatprep.subr.bf16.mxu0 %v10592
    %11482 = vmatpush1.bf16.msra.mxu0 %v10591
    %11483 = vmatprep.subr.bf16.mxu0 %v10594
    %11484 = vmatpush1.bf16.msra.mxu0 %v10593
    %11485 = vmatprep.subr.bf16.mxu0 %v10596
    %11486 = vmatpush1.bf16.msra.mxu0 %v10595
    %11487 = vmatprep.subr.bf16.mxu0 %v10598
    %11488 = vmatpush1.bf16.msra.mxu0 %v10597
    %11489 = vmatprep.subr.bf16.mxu0 %v10600
    %11490 = vmatpush1.bf16.msra.mxu0 %v10599
    %11491 = vmatprep.subr.bf16.mxu0 %v10602
    %11492 = vmatpush1.bf16.msra.mxu0 %v10601
    %11493 = vmatprep.subr.bf16.mxu0 %v10604
    %11494 = vmatpush1.bf16.msra.mxu0 %v10603
    %11495 = vmatprep.subr.bf16.mxu0 %v10606
    %11496 = vmatpush1.bf16.msra.mxu0 %v10605
    %11497 = vmatprep.subr.bf16.mxu0 %v10608
    %11498 = vmatpush1.bf16.msra.mxu0 %v10607
    %11499 = vmatprep.mubr.bf16.mxu0 %v8637
    %11500 = vmatmul.mubr.bf16.gmra.mrb[0].mxu0 %v8635
    %v11501 = vpop.f32.mrb[0].mxu0
    %v11502 = vadd.f32 %v11461, %v11501
    %v11503 = vpop.f32.mrb[0].mxu0
    %v11504 = vadd.f32 %v11463, %v11503
    %v11505 = vpop.f32.mrb[0].mxu0
    %v11506 = vpop.f32.mrb[0].mxu0
    %11507 = vdwg.mxu0
    %11508 = vmatprep.subr.bf16.mxu0 %v10610
    %11509 = vmatpush1.bf16.msra.mxu0 %v10609
    %11510 = vmatprep.subr.bf16.mxu0 %v10612
    %11511 = vmatpush1.bf16.msra.mxu0 %v10611
    %11512 = vmatprep.subr.bf16.mxu0 %v10614
    %11513 = vmatpush1.bf16.msra.mxu0 %v10613
    %11514 = vmatprep.subr.bf16.mxu0 %v10616
    %11515 = vmatpush1.bf16.msra.mxu0 %v10615
    %11516 = vmatprep.subr.bf16.mxu0 %v10618
    %11517 = vmatpush1.bf16.msra.mxu0 %v10617
    %11518 = vmatprep.subr.bf16.mxu0 %v10620
    %11519 = vmatpush1.bf16.msra.mxu0 %v10619
    %11520 = vmatprep.subr.bf16.mxu0 %v10622
    %11521 = vmatpush1.bf16.msra.mxu0 %v10621
    %11522 = vmatprep.subr.bf16.mxu0 %v10624
    %11523 = vmatpush1.bf16.msra.mxu0 %v10623
    %11524 = vmatprep.subr.bf16.mxu0 %v10626
    %11525 = vmatpush1.bf16.msra.mxu0 %v10625
    %11526 = vmatprep.subr.bf16.mxu0 %v10628
    %11527 = vmatpush1.bf16.msra.mxu0 %v10627
    %11528 = vmatprep.subr.bf16.mxu0 %v10630
    %11529 = vmatpush1.bf16.msra.mxu0 %v10629
    %11530 = vmatprep.subr.bf16.mxu0 %v10632
    %11531 = vmatpush1.bf16.msra.mxu0 %v10631
    %11532 = vmatprep.subr.bf16.mxu0 %v10634
    %11533 = vmatpush1.bf16.msra.mxu0 %v10633
    %11534 = vmatprep.subr.bf16.mxu0 %v10636
    %11535 = vmatpush1.bf16.msra.mxu0 %v10635
    %11536 = vmatprep.subr.bf16.mxu0 %v10638
    %11537 = vmatpush1.bf16.msra.mxu0 %v10637
    %11538 = vmatprep.subr.bf16.mxu0 %v10640
    %11539 = vmatpush1.bf16.msra.mxu0 %v10639
    %11540 = vmatprep.mubr.bf16.mxu0 %v8641
    %11541 = vmatmul.mubr.bf16.gmra.mrb[0].mxu0 %v8639
    %v11542 = vpop.f32.mrb[0].mxu0
    %v11543 = vadd.f32 %v11502, %v11542
    %v11544 = vpop.f32.mrb[0].mxu0
    %v11545 = vadd.f32 %v11504, %v11544
    %v11546 = vpop.f32.mrb[0].mxu0
    %v11547 = vpop.f32.mrb[0].mxu0
    %11548 = vdwg.mxu0
    %11549 = vmatprep.subr.bf16.mxu0 %v10642
    %11550 = vmatpush1.bf16.msra.mxu0 %v10641
    %11551 = vmatprep.subr.bf16.mxu0 %v10644
    %11552 = vmatpush1.bf16.msra.mxu0 %v10643
    %11553 = vmatprep.subr.bf16.mxu0 %v10646
    %11554 = vmatpush1.bf16.msra.mxu0 %v10645
    %11555 = vmatprep.subr.bf16.mxu0 %v10648
    %11556 = vmatpush1.bf16.msra.mxu0 %v10647
    %11557 = vmatprep.subr.bf16.mxu0 %v10650
    %11558 = vmatpush1.bf16.msra.mxu0 %v10649
    %11559 = vmatprep.subr.bf16.mxu0 %v10652
    %11560 = vmatpush1.bf16.msra.mxu0 %v10651
    %11561 = vmatprep.subr.bf16.mxu0 %v10654
    %11562 = vmatpush1.bf16.msra.mxu0 %v10653
    %11563 = vmatprep.subr.bf16.mxu0 %v10656
    %11564 = vmatpush1.bf16.msra.mxu0 %v10655
    %11565 = vmatprep.subr.bf16.mxu0 0
    %11566 = vmatpush1.bf16.msra.mxu0 0
    %11567 = vmatprep.subr.bf16.mxu0 0
    %11568 = vmatpush1.bf16.msra.mxu0 0
    %11569 = vmatprep.subr.bf16.mxu0 0
    %11570 = vmatpush1.bf16.msra.mxu0 0
    %11571 = vmatprep.subr.bf16.mxu0 0
    %11572 = vmatpush1.bf16.msra.mxu0 0
    %11573 = vmatprep.subr.bf16.mxu0 0
    %11574 = vmatpush1.bf16.msra.mxu0 0
    %11575 = vmatprep.subr.bf16.mxu0 0
    %11576 = vmatpush1.bf16.msra.mxu0 0
    %11577 = vmatprep.subr.bf16.mxu0 0
    %11578 = vmatpush1.bf16.msra.mxu0 0
    %11579 = vmatprep.subr.bf16.mxu0 0
    %11580 = vmatpush1.bf16.msra.mxu0 0
    %11581 = vmatprep.mubr.bf16.mxu0 0
    %11582 = vmatmul.mubr.bf16.gmra.mrb[0].mxu0 %v8643
    %v11583 = vpop.f32.mrb[0].mxu0
    %v11584 = vadd.f32 %v11543, %v11583
    %v11585 = vpop.f32.mrb[0].mxu0
    %v11586 = vadd.f32 %v11545, %v11585
    %v11587 = vpop.f32.mrb[0].mxu0
    %v11588 = vpop.f32.mrb[0].mxu0
    %11589 = vdwg.mxu0
    %v11590 = vmax.f32 %v11584, 0.0
    %v11591 = vmax.f32 %v11586, 0.0
    %v11594 = vrot.slane %v11590, 2
    %v11595 = vrot.slane %v11591, 2
    %v11598 = vrot.slane %v11590, 4
    %v11599 = vrot.slane %v11591, 4
    %v11602 = vrot.slane %v11590, 6
    %v11603 = vrot.slane %v11591, 6
    %v11606 = vpack.c.bf16 %v11590, %v11590
    %v11607 = vpack.c.bf16 %v11591, %v11591
    %v11608 = vpack.c.bf16 %v11594, %v11594
    %v11609 = vpack.c.bf16 %v11595, %v11595
    %v11610 = vpack.c.bf16 %v11598, %v11598
    %v11611 = vpack.c.bf16 %v11599, %v11599
    %v11612 = vpack.c.bf16 %v11602, %v11602
    %v11613 = vpack.c.bf16 %v11603, %v11603
    %v11614 = vld [vmem:[%s7] sm:$0xf]
    %v11615 = vld [vmem:[%s7 + $0x4] sm:$0xf]
    %v11616 = vld [vmem:[%s7 + $0x8] sm:$0xf]
    %v11617 = vld [vmem:[%s7 + $0xc] sm:$0xf]
    %v11618 = vld [vmem:[%s7 + $0x10] sm:$0xf]
    %v11619 = vld [vmem:[%s7 + $0x14] sm:$0xf]
    %v11620 = vld [vmem:[%s7 + $0x18] sm:$0xf]
    %v11621 = vld [vmem:[%s7 + $0x1c] sm:$0xf]
    %v11622 = vld [vmem:[%s7 + $0x20] sm:$0xf]
    %v11623 = vld [vmem:[%s7 + $0x24] sm:$0xf]
    %v11624 = vld [vmem:[%s7 + $0x28] sm:$0xf]
    %v11625 = vld [vmem:[%s7 + $0x2c] sm:$0xf]
    %v11626 = vld [vmem:[%s7 + $0x30] sm:$0xf]
    %v11627 = vld [vmem:[%s7 + $0x34] sm:$0xf]
    %v11628 = vld [vmem:[%s7 + $0x38] sm:$0xf]
    %v11629 = vld [vmem:[%s7 + $0x3c] sm:$0xf]
    %v11630 = vld [vmem:[%s7 + $0x40] sm:$0xf]
    %v11631 = vld [vmem:[%s7 + $0x44] sm:$0xf]
    %v11632 = vld [vmem:[%s7 + $0x48] sm:$0xf]
    %v11633 = vld [vmem:[%s7 + $0x4c] sm:$0xf]
    %v11634 = vld [vmem:[%s7 + $0x50] sm:$0xf]
    %v11635 = vld [vmem:[%s7 + $0x54] sm:$0xf]
    %v11636 = vld [vmem:[%s7 + $0x58] sm:$0xf]
    %v11637 = vld [vmem:[%s7 + $0x5c] sm:$0xf]
    %v11638 = vld [vmem:[%s7 + $0x60] sm:$0xf]
    %v11639 = vld [vmem:[%s7 + $0x64] sm:$0xf]
    %v11640 = vld [vmem:[%s7 + $0x68] sm:$0xf]
    %v11641 = vld [vmem:[%s7 + $0x6c] sm:$0xf]
    %v11642 = vld [vmem:[%s7 + $0x70] sm:$0xf]
    %v11643 = vld [vmem:[%s7 + $0x74] sm:$0xf]
    %v11644 = vld [vmem:[%s7 + $0x78] sm:$0xf]
    %v11645 = vld [vmem:[%s7 + $0x7c] sm:$0xf]
    %v11646 = vld [vmem:[%s7 + $0x80] sm:$0xf]
    %v11647 = vld [vmem:[%s7 + $0x84] sm:$0xf]
    %v11648 = vld [vmem:[%s7 + $0x88] sm:$0xf]
    %v11649 = vld [vmem:[%s7 + $0x8c] sm:$0xf]
    %v11650 = vld [vmem:[%s7 + $0x90] sm:$0xf]
    %v11651 = vld [vmem:[%s7 + $0x94] sm:$0xf]
    %v11652 = vld [vmem:[%s7 + $0x98] sm:$0xf]
    %v11653 = vld [vmem:[%s7 + $0x9c] sm:$0xf]
    %v11654 = vld [vmem:[%s7 + $0xa0] sm:$0xf]
    %v11655 = vld [vmem:[%s7 + $0xa4] sm:$0xf]
    %v11656 = vld [vmem:[%s7 + $0xa8] sm:$0xf]
    %v11657 = vld [vmem:[%s7 + $0xac] sm:$0xf]
    %v11658 = vld [vmem:[%s7 + $0xb0] sm:$0xf]
    %v11659 = vld [vmem:[%s7 + $0xb4] sm:$0xf]
    %v11660 = vld [vmem:[%s7 + $0xb8] sm:$0xf]
    %v11661 = vld [vmem:[%s7 + $0xbc] sm:$0xf]
    %v11662 = vld [vmem:[%s7 + $0xc0] sm:$0xf]
    %v11663 = vld [vmem:[%s7 + $0xc4] sm:$0xf]
    %v11664 = vld [vmem:[%s7 + $0xc8] sm:$0xf]
    %v11665 = vld [vmem:[%s7 + $0xcc] sm:$0xf]
    %v11666 = vld [vmem:[%s7 + $0xd0] sm:$0xf]
    %v11667 = vld [vmem:[%s7 + $0xd4] sm:$0xf]
    %v11668 = vld [vmem:[%s7 + $0xd8] sm:$0xf]
    %v11669 = vld [vmem:[%s7 + $0xdc] sm:$0xf]
    %v11670 = vld [vmem:[%s7 + $0xe0] sm:$0xf]
    %v11671 = vld [vmem:[%s7 + $0xe4] sm:$0xf]
    %v11672 = vld [vmem:[%s7 + $0xe8] sm:$0xf]
    %v11673 = vld [vmem:[%s7 + $0xec] sm:$0xf]
    %v11674 = vld [vmem:[%s7 + $0xf0] sm:$0xf]
    %v11675 = vld [vmem:[%s7 + $0xf4] sm:$0xf]
    %v11676 = vld [vmem:[%s7 + $0xf8] sm:$0xf]
    %v11677 = vld [vmem:[%s7 + $0xfc] sm:$0xf]
    %v11678 = vld [vmem:[%s7 + $0x100] sm:$0xf]
    %v11679 = vld [vmem:[%s7 + $0x104] sm:$0xf]
    %v11680 = vld [vmem:[%s7 + $0x108] sm:$0xf]
    %v11681 = vld [vmem:[%s7 + $0x10c] sm:$0xf]
    %v11682 = vld [vmem:[%s7 + $0x110] sm:$0xf]
    %v11683 = vld [vmem:[%s7 + $0x114] sm:$0xf]
    %v11684 = vld [vmem:[%s7 + $0x118] sm:$0xf]
    %v11685 = vld [vmem:[%s7 + $0x11c] sm:$0xf]
    %v11686 = vld [vmem:[%s7 + $0x120] sm:$0xf]
    %v11687 = vld [vmem:[%s7 + $0x124] sm:$0xf]
    %v11688 = vld [vmem:[%s7 + $0x128] sm:$0xf]
    %v11689 = vld [vmem:[%s7 + $0x12c] sm:$0xf]
    %v11690 = vld [vmem:[%s7 + $0x130] sm:$0xf]
    %v11691 = vld [vmem:[%s7 + $0x134] sm:$0xf]
    %v11692 = vld [vmem:[%s7 + $0x138] sm:$0xf]
    %v11693 = vld [vmem:[%s7 + $0x13c] sm:$0xf]
    %v11694 = vld [vmem:[%s7 + $0x140] sm:$0xf]
    %v11695 = vld [vmem:[%s7 + $0x144] sm:$0xf]
    %v11696 = vld [vmem:[%s7 + $0x148] sm:$0xf]
    %v11697 = vld [vmem:[%s7 + $0x14c] sm:$0xf]
    %v11698 = vld [vmem:[%s7 + $0x150] sm:$0xf]
    %v11699 = vld [vmem:[%s7 + $0x154] sm:$0xf]
    %v11700 = vld [vmem:[%s7 + $0x158] sm:$0xf]
    %v11701 = vld [vmem:[%s7 + $0x15c] sm:$0xf]
    %v11702 = vld [vmem:[%s7 + $0x160] sm:$0xf]
    %v11703 = vld [vmem:[%s7 + $0x164] sm:$0xf]
    %v11704 = vld [vmem:[%s7 + $0x168] sm:$0xf]
    %v11705 = vld [vmem:[%s7 + $0x16c] sm:$0xf]
    %v11706 = vld [vmem:[%s7 + $0x170] sm:$0xf]
    %v11707 = vld [vmem:[%s7 + $0x174] sm:$0xf]
    %v11708 = vld [vmem:[%s7 + $0x178] sm:$0xf]
    %v11709 = vld [vmem:[%s7 + $0x17c] sm:$0xf]
    %v11710 = vld [vmem:[%s7 + $0x180] sm:$0xf]
    %v11711 = vld [vmem:[%s7 + $0x184] sm:$0xf]
    %v11712 = vld [vmem:[%s7 + $0x188] sm:$0xf]
    %v11713 = vld [vmem:[%s7 + $0x18c] sm:$0xf]
    %v11714 = vld [vmem:[%s7 + $0x190] sm:$0xf]
    %v11715 = vld [vmem:[%s7 + $0x194] sm:$0xf]
    %v11716 = vld [vmem:[%s7 + $0x198] sm:$0xf]
    %v11717 = vld [vmem:[%s7 + $0x19c] sm:$0xf]
    %v11718 = vld [vmem:[%s7 + $0x1a0] sm:$0xf]
    %v11719 = vld [vmem:[%s7 + $0x1a4] sm:$0xf]
    %v11720 = vld [vmem:[%s7 + $0x1a8] sm:$0xf]
    %v11721 = vld [vmem:[%s7 + $0x1ac] sm:$0xf]
    %v11722 = vld [vmem:[%s7 + $0x1b0] sm:$0xf]
    %v11723 = vld [vmem:[%s7 + $0x1b4] sm:$0xf]
    %v11724 = vld [vmem:[%s7 + $0x1b8] sm:$0xf]
    %v11725 = vld [vmem:[%s7 + $0x1bc] sm:$0xf]
    %v11726 = vld [vmem:[%s7 + $0x1c0] sm:$0xf]
    %v11727 = vld [vmem:[%s7 + $0x1c4] sm:$0xf]
    %v11728 = vld [vmem:[%s7 + $0x1c8] sm:$0xf]
    %v11729 = vld [vmem:[%s7 + $0x1cc] sm:$0xf]
    %v11730 = vld [vmem:[%s7 + $0x1d0] sm:$0xf]
    %v11731 = vld [vmem:[%s7 + $0x1d4] sm:$0xf]
    %v11732 = vld [vmem:[%s7 + $0x1d8] sm:$0xf]
    %v11733 = vld [vmem:[%s7 + $0x1dc] sm:$0xf]
    %v11734 = vld [vmem:[%s7 + $0x1e0] sm:$0xf]
    %v11735 = vld [vmem:[%s7 + $0x1e4] sm:$0xf]
    %v11736 = vld [vmem:[%s7 + $0x1e8] sm:$0xf]
    %v11737 = vld [vmem:[%s7 + $0x1ec] sm:$0xf]
    %v11738 = vld [vmem:[%s7 + $0x1f0] sm:$0xf]
    %v11739 = vld [vmem:[%s7 + $0x1f4] sm:$0xf]
    %v11740 = vld [vmem:[%s7 + $0x1f8] sm:$0xf]
    %v11741 = vld [vmem:[%s7 + $0x1fc] sm:$0xf]
    %v11742 = vld [vmem:[%s8] sm:$0x1]
    %v11744 = vlaneseq
    %v11745 = vshrl.u32 %v11744, 7
    %v11746 = vsub.s32 0, %v11745
    %v11747 = vrot.slane %v11742, %v11746
    %v11877 = vunpack.c.l.b16 %v11614
    %v11878 = vunpack.c.l.b16 %v11615
    %v11879 = vunpack.c.l.b16 %v11616
    %v11880 = vunpack.c.l.b16 %v11617
    %v11881 = vunpack.c.l.b16 %v11618
    %v11882 = vunpack.c.l.b16 %v11619
    %v11883 = vunpack.c.l.b16 %v11620
    %v11884 = vunpack.c.l.b16 %v11621
    %v11885 = vunpack.c.l.b16 %v11622
    %v11886 = vunpack.c.l.b16 %v11623
    %v11887 = vunpack.c.l.b16 %v11624
    %v11888 = vunpack.c.l.b16 %v11625
    %v11889 = vunpack.c.l.b16 %v11626
    %v11890 = vunpack.c.l.b16 %v11627
    %v11891 = vunpack.c.l.b16 %v11628
    %v11892 = vunpack.c.l.b16 %v11629
    %v11893 = vunpack.c.l.b16 %v11630
    %v11894 = vunpack.c.l.b16 %v11631
    %v11895 = vunpack.c.l.b16 %v11632
    %v11896 = vunpack.c.l.b16 %v11633
    %v11897 = vunpack.c.l.b16 %v11634
    %v11898 = vunpack.c.l.b16 %v11635
    %v11899 = vunpack.c.l.b16 %v11636
    %v11900 = vunpack.c.l.b16 %v11637
    %v11901 = vunpack.c.l.b16 %v11638
    %v11902 = vunpack.c.l.b16 %v11639
    %v11903 = vunpack.c.l.b16 %v11640
    %v11904 = vunpack.c.l.b16 %v11641
    %v11905 = vunpack.c.l.b16 %v11642
    %v11906 = vunpack.c.l.b16 %v11643
    %v11907 = vunpack.c.l.b16 %v11644
    %v11908 = vunpack.c.l.b16 %v11645
    %v11909 = vunpack.c.l.b16 %v11646
    %v11910 = vunpack.c.l.b16 %v11647
    %v11911 = vunpack.c.l.b16 %v11648
    %v11912 = vunpack.c.l.b16 %v11649
    %v11913 = vunpack.c.l.b16 %v11650
    %v11914 = vunpack.c.l.b16 %v11651
    %v11915 = vunpack.c.l.b16 %v11652
    %v11916 = vunpack.c.l.b16 %v11653
    %v11917 = vunpack.c.l.b16 %v11654
    %v11918 = vunpack.c.l.b16 %v11655
    %v11919 = vunpack.c.l.b16 %v11656
    %v11920 = vunpack.c.l.b16 %v11657
    %v11921 = vunpack.c.l.b16 %v11658
    %v11922 = vunpack.c.l.b16 %v11659
    %v11923 = vunpack.c.l.b16 %v11660
    %v11924 = vunpack.c.l.b16 %v11661
    %v11925 = vunpack.c.l.b16 %v11662
    %v11926 = vunpack.c.l.b16 %v11663
    %v11927 = vunpack.c.l.b16 %v11664
    %v11928 = vunpack.c.l.b16 %v11665
    %v11929 = vunpack.c.l.b16 %v11666
    %v11930 = vunpack.c.l.b16 %v11667
    %v11931 = vunpack.c.l.b16 %v11668
    %v11932 = vunpack.c.l.b16 %v11669
    %v11933 = vunpack.c.l.b16 %v11670
    %v11934 = vunpack.c.l.b16 %v11671
    %v11935 = vunpack.c.l.b16 %v11672
    %v11936 = vunpack.c.l.b16 %v11673
    %v11937 = vunpack.c.l.b16 %v11674
    %v11938 = vunpack.c.l.b16 %v11675
    %v11939 = vunpack.c.l.b16 %v11676
    %v11940 = vunpack.c.l.b16 %v11677
    %v11941 = vunpack.c.l.b16 %v11678
    %v11942 = vunpack.c.l.b16 %v11679
    %v11943 = vunpack.c.l.b16 %v11680
    %v11944 = vunpack.c.l.b16 %v11681
    %v11945 = vunpack.c.l.b16 %v11682
    %v11946 = vunpack.c.l.b16 %v11683
    %v11947 = vunpack.c.l.b16 %v11684
    %v11948 = vunpack.c.l.b16 %v11685
    %v11949 = vunpack.c.l.b16 %v11686
    %v11950 = vunpack.c.l.b16 %v11687
    %v11951 = vunpack.c.l.b16 %v11688
    %v11952 = vunpack.c.l.b16 %v11689
    %v11953 = vunpack.c.l.b16 %v11690
    %v11954 = vunpack.c.l.b16 %v11691
    %v11955 = vunpack.c.l.b16 %v11692
    %v11956 = vunpack.c.l.b16 %v11693
    %v11957 = vunpack.c.l.b16 %v11694
    %v11958 = vunpack.c.l.b16 %v11695
    %v11959 = vunpack.c.l.b16 %v11696
    %v11960 = vunpack.c.l.b16 %v11697
    %v11961 = vunpack.c.l.b16 %v11698
    %v11962 = vunpack.c.l.b16 %v11699
    %v11963 = vunpack.c.l.b16 %v11700
    %v11964 = vunpack.c.l.b16 %v11701
    %v11965 = vunpack.c.l.b16 %v11702
    %v11966 = vunpack.c.l.b16 %v11703
    %v11967 = vunpack.c.l.b16 %v11704
    %v11968 = vunpack.c.l.b16 %v11705
    %v11969 = vunpack.c.l.b16 %v11706
    %v11970 = vunpack.c.l.b16 %v11707
    %v11971 = vunpack.c.l.b16 %v11708
    %v11972 = vunpack.c.l.b16 %v11709
    %v11973 = vunpack.c.l.b16 %v11710
    %v11974 = vunpack.c.l.b16 %v11711
    %v11975 = vunpack.c.l.b16 %v11712
    %v11976 = vunpack.c.l.b16 %v11713
    %v11977 = vunpack.c.l.b16 %v11714
    %v11978 = vunpack.c.l.b16 %v11715
    %v11979 = vunpack.c.l.b16 %v11716
    %v11980 = vunpack.c.l.b16 %v11717
    %v11981 = vunpack.c.l.b16 %v11718
    %v11982 = vunpack.c.l.b16 %v11719
    %v11983 = vunpack.c.l.b16 %v11720
    %v11984 = vunpack.c.l.b16 %v11721
    %v11985 = vunpack.c.l.b16 %v11722
    %v11986 = vunpack.c.l.b16 %v11723
    %v11987 = vunpack.c.l.b16 %v11724
    %v11988 = vunpack.c.l.b16 %v11725
    %v11989 = vunpack.c.l.b16 %v11726
    %v11990 = vunpack.c.l.b16 %v11727
    %v11991 = vunpack.c.l.b16 %v11728
    %v11992 = vunpack.c.l.b16 %v11729
    %v11993 = vunpack.c.l.b16 %v11730
    %v11994 = vunpack.c.l.b16 %v11731
    %v11995 = vunpack.c.l.b16 %v11732
    %v11996 = vunpack.c.l.b16 %v11733
    %v11997 = vunpack.c.l.b16 %v11734
    %v11998 = vunpack.c.l.b16 %v11735
    %v11999 = vunpack.c.l.b16 %v11736
    %v12000 = vunpack.c.l.b16 %v11737
    %v12001 = vunpack.c.l.b16 %v11738
    %v12002 = vunpack.c.l.b16 %v11739
    %v12003 = vunpack.c.l.b16 %v11740
    %v12004 = vunpack.c.l.b16 %v11741
    %v12005 = vpack.c.b16 %v11878, %v11877
    %v12006 = vpack.c.b16 %v11880, %v11879
    %v12007 = vpack.c.b16 %v11882, %v11881
    %v12008 = vpack.c.b16 %v11884, %v11883
    %v12009 = vpack.c.b16 %v11886, %v11885
    %v12010 = vpack.c.b16 %v11888, %v11887
    %v12011 = vpack.c.b16 %v11890, %v11889
    %v12012 = vpack.c.b16 %v11892, %v11891
    %v12013 = vpack.c.b16 %v11894, %v11893
    %v12014 = vpack.c.b16 %v11896, %v11895
    %v12015 = vpack.c.b16 %v11898, %v11897
    %v12016 = vpack.c.b16 %v11900, %v11899
    %v12017 = vpack.c.b16 %v11902, %v11901
    %v12018 = vpack.c.b16 %v11904, %v11903
    %v12019 = vpack.c.b16 %v11906, %v11905
    %v12020 = vpack.c.b16 %v11908, %v11907
    %v12021 = vpack.c.b16 %v11910, %v11909
    %v12022 = vpack.c.b16 %v11912, %v11911
    %v12023 = vpack.c.b16 %v11914, %v11913
    %v12024 = vpack.c.b16 %v11916, %v11915
    %v12025 = vpack.c.b16 %v11918, %v11917
    %v12026 = vpack.c.b16 %v11920, %v11919
    %v12027 = vpack.c.b16 %v11922, %v11921
    %v12028 = vpack.c.b16 %v11924, %v11923
    %v12029 = vpack.c.b16 %v11926, %v11925
    %v12030 = vpack.c.b16 %v11928, %v11927
    %v12031 = vpack.c.b16 %v11930, %v11929
    %v12032 = vpack.c.b16 %v11932, %v11931
    %v12033 = vpack.c.b16 %v11934, %v11933
    %v12034 = vpack.c.b16 %v11936, %v11935
    %v12035 = vpack.c.b16 %v11938, %v11937
    %v12036 = vpack.c.b16 %v11940, %v11939
    %v12037 = vpack.c.b16 %v11942, %v11941
    %v12038 = vpack.c.b16 %v11944, %v11943
    %v12039 = vpack.c.b16 %v11946, %v11945
    %v12040 = vpack.c.b16 %v11948, %v11947
    %v12041 = vpack.c.b16 %v11950, %v11949
    %v12042 = vpack.c.b16 %v11952, %v11951
    %v12043 = vpack.c.b16 %v11954, %v11953
    %v12044 = vpack.c.b16 %v11956, %v11955
    %v12045 = vpack.c.b16 %v11958, %v11957
    %v12046 = vpack.c.b16 %v11960, %v11959
    %v12047 = vpack.c.b16 %v11962, %v11961
    %v12048 = vpack.c.b16 %v11964, %v11963
    %v12049 = vpack.c.b16 %v11966, %v11965
    %v12050 = vpack.c.b16 %v11968, %v11967
    %v12051 = vpack.c.b16 %v11970, %v11969
    %v12052 = vpack.c.b16 %v11972, %v11971
    %v12053 = vpack.c.b16 %v11974, %v11973
    %v12054 = vpack.c.b16 %v11976, %v11975
    %v12055 = vpack.c.b16 %v11978, %v11977
    %v12056 = vpack.c.b16 %v11980, %v11979
    %v12057 = vpack.c.b16 %v11982, %v11981
    %v12058 = vpack.c.b16 %v11984, %v11983
    %v12059 = vpack.c.b16 %v11986, %v11985
    %v12060 = vpack.c.b16 %v11988, %v11987
    %v12061 = vpack.c.b16 %v11990, %v11989
    %v12062 = vpack.c.b16 %v11992, %v11991
    %v12063 = vpack.c.b16 %v11994, %v11993
    %v12064 = vpack.c.b16 %v11996, %v11995
    %v12065 = vpack.c.b16 %v11998, %v11997
    %v12066 = vpack.c.b16 %v12000, %v11999
    %v12067 = vpack.c.b16 %v12002, %v12001
    %v12068 = vpack.c.b16 %v12004, %v12003
    %12133 = vmatprep.subr.bf16.mxu0 0
    %12134 = vmatpush1.bf16.msra.mxu0 %v12005
    %12135 = vmatprep.subr.bf16.mxu0 0
    %12136 = vmatpush1.bf16.msra.mxu0 %v12006
    %12137 = vmatprep.subr.bf16.mxu0 0
    %12138 = vmatpush1.bf16.msra.mxu0 %v12007
    %12139 = vmatprep.subr.bf16.mxu0 0
    %12140 = vmatpush1.bf16.msra.mxu0 %v12008
    %12141 = vmatprep.subr.bf16.mxu0 0
    %12142 = vmatpush1.bf16.msra.mxu0 %v12009
    %12143 = vmatprep.subr.bf16.mxu0 0
    %12144 = vmatpush1.bf16.msra.mxu0 %v12010
    %12145 = vmatprep.subr.bf16.mxu0 0
    %12146 = vmatpush1.bf16.msra.mxu0 %v12011
    %12147 = vmatprep.subr.bf16.mxu0 0
    %12148 = vmatpush1.bf16.msra.mxu0 %v12012
    %12149 = vmatprep.subr.bf16.mxu0 0
    %12150 = vmatpush1.bf16.msra.mxu0 %v12013
    %12151 = vmatprep.subr.bf16.mxu0 0
    %12152 = vmatpush1.bf16.msra.mxu0 %v12014
    %12153 = vmatprep.subr.bf16.mxu0 0
    %12154 = vmatpush1.bf16.msra.mxu0 %v12015
    %12155 = vmatprep.subr.bf16.mxu0 0
    %12156 = vmatpush1.bf16.msra.mxu0 %v12016
    %12157 = vmatprep.subr.bf16.mxu0 0
    %12158 = vmatpush1.bf16.msra.mxu0 %v12017
    %12159 = vmatprep.subr.bf16.mxu0 0
    %12160 = vmatpush1.bf16.msra.mxu0 %v12018
    %12161 = vmatprep.subr.bf16.mxu0 0
    %12162 = vmatpush1.bf16.msra.mxu0 %v12019
    %12163 = vmatprep.subr.bf16.mxu0 0
    %12164 = vmatpush1.bf16.msra.mxu0 %v12020
    %12165 = vmatprep.mubr.bf16.mxu0 %v11607
    %12166 = vmatmul.mubr.bf16.gmra.mrb[0].mxu0 %v11606
    %v12167 = vpop.f32.mrb[0].mxu0
    %v12168 = vadd.f32 %v11747, %v12167
    %v12169 = vpop.f32.mrb[0].mxu0
    %v12170 = vpop.f32.mrb[0].mxu0
    %v12171 = vpop.f32.mrb[0].mxu0
    %12172 = vdwg.mxu0
    %12173 = vmatprep.subr.bf16.mxu0 0
    %12174 = vmatpush1.bf16.msra.mxu0 %v12021
    %12175 = vmatprep.subr.bf16.mxu0 0
    %12176 = vmatpush1.bf16.msra.mxu0 %v12022
    %12177 = vmatprep.subr.bf16.mxu0 0
    %12178 = vmatpush1.bf16.msra.mxu0 %v12023
    %12179 = vmatprep.subr.bf16.mxu0 0
    %12180 = vmatpush1.bf16.msra.mxu0 %v12024
    %12181 = vmatprep.subr.bf16.mxu0 0
    %12182 = vmatpush1.bf16.msra.mxu0 %v12025
    %12183 = vmatprep.subr.bf16.mxu0 0
    %12184 = vmatpush1.bf16.msra.mxu0 %v12026
    %12185 = vmatprep.subr.bf16.mxu0 0
    %12186 = vmatpush1.bf16.msra.mxu0 %v12027
    %12187 = vmatprep.subr.bf16.mxu0 0
    %12188 = vmatpush1.bf16.msra.mxu0 %v12028
    %12189 = vmatprep.subr.bf16.mxu0 0
    %12190 = vmatpush1.bf16.msra.mxu0 %v12029
    %12191 = vmatprep.subr.bf16.mxu0 0
    %12192 = vmatpush1.bf16.msra.mxu0 %v12030
    %12193 = vmatprep.subr.bf16.mxu0 0
    %12194 = vmatpush1.bf16.msra.mxu0 %v12031
    %12195 = vmatprep.subr.bf16.mxu0 0
    %12196 = vmatpush1.bf16.msra.mxu0 %v12032
    %12197 = vmatprep.subr.bf16.mxu0 0
    %12198 = vmatpush1.bf16.msra.mxu0 %v12033
    %12199 = vmatprep.subr.bf16.mxu0 0
    %12200 = vmatpush1.bf16.msra.mxu0 %v12034
    %12201 = vmatprep.subr.bf16.mxu0 0
    %12202 = vmatpush1.bf16.msra.mxu0 %v12035
    %12203 = vmatprep.subr.bf16.mxu0 0
    %12204 = vmatpush1.bf16.msra.mxu0 %v12036
    %12205 = vmatprep.mubr.bf16.mxu0 %v11609
    %12206 = vmatmul.mubr.bf16.gmra.mrb[0].mxu0 %v11608
    %v12207 = vpop.f32.mrb[0].mxu0
    %v12208 = vadd.f32 %v12168, %v12207
    %v12209 = vpop.f32.mrb[0].mxu0
    %v12210 = vpop.f32.mrb[0].mxu0
    %v12211 = vpop.f32.mrb[0].mxu0
    %12212 = vdwg.mxu0
    %12213 = vmatprep.subr.bf16.mxu0 0
    %12214 = vmatpush1.bf16.msra.mxu0 %v12037
    %12215 = vmatprep.subr.bf16.mxu0 0
    %12216 = vmatpush1.bf16.msra.mxu0 %v12038
    %12217 = vmatprep.subr.bf16.mxu0 0
    %12218 = vmatpush1.bf16.msra.mxu0 %v12039
    %12219 = vmatprep.subr.bf16.mxu0 0
    %12220 = vmatpush1.bf16.msra.mxu0 %v12040
    %12221 = vmatprep.subr.bf16.mxu0 0
    %12222 = vmatpush1.bf16.msra.mxu0 %v12041
    %12223 = vmatprep.subr.bf16.mxu0 0
    %12224 = vmatpush1.bf16.msra.mxu0 %v12042
    %12225 = vmatprep.subr.bf16.mxu0 0
    %12226 = vmatpush1.bf16.msra.mxu0 %v12043
    %12227 = vmatprep.subr.bf16.mxu0 0
    %12228 = vmatpush1.bf16.msra.mxu0 %v12044
    %12229 = vmatprep.subr.bf16.mxu0 0
    %12230 = vmatpush1.bf16.msra.mxu0 %v12045
    %12231 = vmatprep.subr.bf16.mxu0 0
    %12232 = vmatpush1.bf16.msra.mxu0 %v12046
    %12233 = vmatprep.subr.bf16.mxu0 0
    %12234 = vmatpush1.bf16.msra.mxu0 %v12047
    %12235 = vmatprep.subr.bf16.mxu0 0
    %12236 = vmatpush1.bf16.msra.mxu0 %v12048
    %12237 = vmatprep.subr.bf16.mxu0 0
    %12238 = vmatpush1.bf16.msra.mxu0 %v12049
    %12239 = vmatprep.subr.bf16.mxu0 0
    %12240 = vmatpush1.bf16.msra.mxu0 %v12050
    %12241 = vmatprep.subr.bf16.mxu0 0
    %12242 = vmatpush1.bf16.msra.mxu0 %v12051
    %12243 = vmatprep.subr.bf16.mxu0 0
    %12244 = vmatpush1.bf16.msra.mxu0 %v12052
    %12245 = vmatprep.mubr.bf16.mxu0 %v11611
    %12246 = vmatmul.mubr.bf16.gmra.mrb[0].mxu0 %v11610
    %v12247 = vpop.f32.mrb[0].mxu0
    %v12248 = vadd.f32 %v12208, %v12247
    %v12249 = vpop.f32.mrb[0].mxu0
    %v12250 = vpop.f32.mrb[0].mxu0
    %v12251 = vpop.f32.mrb[0].mxu0
    %12252 = vdwg.mxu0
    %12253 = vmatprep.subr.bf16.mxu0 0
    %12254 = vmatpush1.bf16.msra.mxu0 %v12053
    %12255 = vmatprep.subr.bf16.mxu0 0
    %12256 = vmatpush1.bf16.msra.mxu0 %v12054
    %12257 = vmatprep.subr.bf16.mxu0 0
    %12258 = vmatpush1.bf16.msra.mxu0 %v12055
    %12259 = vmatprep.subr.bf16.mxu0 0
    %12260 = vmatpush1.bf16.msra.mxu0 %v12056
    %12261 = vmatprep.subr.bf16.mxu0 0
    %12262 = vmatpush1.bf16.msra.mxu0 %v12057
    %12263 = vmatprep.subr.bf16.mxu0 0
    %12264 = vmatpush1.bf16.msra.mxu0 %v12058
    %12265 = vmatprep.subr.bf16.mxu0 0
    %12266 = vmatpush1.bf16.msra.mxu0 %v12059
    %12267 = vmatprep.subr.bf16.mxu0 0
    %12268 = vmatpush1.bf16.msra.mxu0 %v12060
    %12269 = vmatprep.subr.bf16.mxu0 0
    %12270 = vmatpush1.bf16.msra.mxu0 %v12061
    %12271 = vmatprep.subr.bf16.mxu0 0
    %12272 = vmatpush1.bf16.msra.mxu0 %v12062
    %12273 = vmatprep.subr.bf16.mxu0 0
    %12274 = vmatpush1.bf16.msra.mxu0 %v12063
    %12275 = vmatprep.subr.bf16.mxu0 0
    %12276 = vmatpush1.bf16.msra.mxu0 %v12064
    %12277 = vmatprep.subr.bf16.mxu0 0
    %12278 = vmatpush1.bf16.msra.mxu0 %v12065
    %12279 = vmatprep.subr.bf16.mxu0 0
    %12280 = vmatpush1.bf16.msra.mxu0 %v12066
    %12281 = vmatprep.subr.bf16.mxu0 0
    %12282 = vmatpush1.bf16.msra.mxu0 %v12067
    %12283 = vmatprep.subr.bf16.mxu0 0
    %12284 = vmatpush1.bf16.msra.mxu0 %v12068
    %12285 = vmatprep.mubr.bf16.mxu0 %v11613
    %12286 = vmatmul.mubr.bf16.gmra.mrb[0].mxu0 %v11612
    %v12287 = vpop.f32.mrb[0].mxu0
    %v12288 = vadd.f32 %v12248, %v12287
    %v12289 = vpop.f32.mrb[0].mxu0
    %v12290 = vpop.f32.mrb[0].mxu0
    %v12291 = vpop.f32.mrb[0].mxu0
    %12292 = vdwg.mxu0
    %v12293 = vmax.f32 %v12288, 0.0
    %v12294 = vpack.c.bf16 %v12293, %v12293
    %v12295 = vld [vmem:[%s9] sm:$0xf]
    %v12296 = vld [vmem:[%s9 + $0x4] sm:$0xf]
    %v12297 = vld [vmem:[%s9 + $0x8] sm:$0xf]
    %v12298 = vld [vmem:[%s9 + $0xc] sm:$0xf]
    %v12299 = vld [vmem:[%s9 + $0x10] sm:$0xf]
    %v12300 = vld [vmem:[%s9 + $0x14] sm:$0xf]
    %v12301 = vld [vmem:[%s9 + $0x18] sm:$0xf]
    %v12302 = vld [vmem:[%s9 + $0x1c] sm:$0xf]
    %v12303 = vld [vmem:[%s9 + $0x20] sm:$0xf]
    %v12304 = vld [vmem:[%s9 + $0x24] sm:$0xf]
    %v12305 = vld [vmem:[%s9 + $0x28] sm:$0xf]
    %v12306 = vld [vmem:[%s9 + $0x2c] sm:$0xf]
    %v12307 = vld [vmem:[%s9 + $0x30] sm:$0xf]
    %v12308 = vld [vmem:[%s9 + $0x34] sm:$0xf]
    %v12309 = vld [vmem:[%s9 + $0x38] sm:$0xf]
    %v12310 = vld [vmem:[%s9 + $0x3c] sm:$0xf]
    %v12311 = vld [vmem:[%s10] sm:$0x1]
    %v12313 = vlaneseq
    %v12314 = vshrl.u32 %v12313, 7
    %v12315 = vsub.s32 0, %v12314
    %v12316 = vrot.slane %v12311, %v12315
    %v12334 = vunpack.c.l.b16 %v12295
    %v12335 = vunpack.c.l.b16 %v12296
    %v12336 = vunpack.c.l.b16 %v12297
    %v12337 = vunpack.c.l.b16 %v12298
    %v12338 = vunpack.c.l.b16 %v12299
    %v12339 = vunpack.c.l.b16 %v12300
    %v12340 = vunpack.c.l.b16 %v12301
    %v12341 = vunpack.c.l.b16 %v12302
    %v12342 = vunpack.c.l.b16 %v12303
    %v12343 = vunpack.c.l.b16 %v12304
    %v12344 = vunpack.c.l.b16 %v12305
    %v12345 = vunpack.c.l.b16 %v12306
    %v12346 = vunpack.c.l.b16 %v12307
    %v12347 = vunpack.c.l.b16 %v12308
    %v12348 = vunpack.c.l.b16 %v12309
    %v12349 = vunpack.c.l.b16 %v12310
    %v12350 = vpack.c.b16 %v12335, %v12334
    %v12351 = vpack.c.b16 %v12337, %v12336
    %v12352 = vpack.c.b16 %v12339, %v12338
    %v12353 = vpack.c.b16 %v12341, %v12340
    %v12354 = vpack.c.b16 %v12343, %v12342
    %v12355 = vpack.c.b16 %v12345, %v12344
    %v12356 = vpack.c.b16 %v12347, %v12346
    %v12357 = vpack.c.b16 %v12349, %v12348
    %12366 = vmatprep.subr.bf16.mxu0 0
    %12367 = vmatpush1.bf16.msra.mxu0 %v12350
    %12368 = vmatprep.subr.bf16.mxu0 0
    %12369 = vmatpush1.bf16.msra.mxu0 %v12351
    %12370 = vmatprep.subr.bf16.mxu0 0
    %12371 = vmatpush1.bf16.msra.mxu0 %v12352
    %12372 = vmatprep.subr.bf16.mxu0 0
    %12373 = vmatpush1.bf16.msra.mxu0 %v12353
    %12374 = vmatprep.subr.bf16.mxu0 0
    %12375 = vmatpush1.bf16.msra.mxu0 %v12354
    %12376 = vmatprep.subr.bf16.mxu0 0
    %12377 = vmatpush1.bf16.msra.mxu0 %v12355
    %12378 = vmatprep.subr.bf16.mxu0 0
    %12379 = vmatpush1.bf16.msra.mxu0 %v12356
    %12380 = vmatprep.subr.bf16.mxu0 0
    %12381 = vmatpush1.bf16.msra.mxu0 %v12357
    %12382 = vmatprep.subr.bf16.mxu0 0
    %12383 = vmatpush1.bf16.msra.mxu0 0
    %12384 = vmatprep.subr.bf16.mxu0 0
    %12385 = vmatpush1.bf16.msra.mxu0 0
    %12386 = vmatprep.subr.bf16.mxu0 0
    %12387 = vmatpush1.bf16.msra.mxu0 0
    %12388 = vmatprep.subr.bf16.mxu0 0
    %12389 = vmatpush1.bf16.msra.mxu0 0
    %12390 = vmatprep.subr.bf16.mxu0 0
    %12391 = vmatpush1.bf16.msra.mxu0 0
    %12392 = vmatprep.subr.bf16.mxu0 0
    %12393 = vmatpush1.bf16.msra.mxu0 0
    %12394 = vmatprep.subr.bf16.mxu0 0
    %12395 = vmatpush1.bf16.msra.mxu0 0
    %12396 = vmatprep.subr.bf16.mxu0 0
    %12397 = vmatpush1.bf16.msra.mxu0 0
    %12398 = vmatprep.mubr.bf16.mxu0 0
    %12399 = vmatmul.mubr.bf16.gmra.mrb[0].mxu0 %v12294
    %v12400 = vpop.f32.mrb[0].mxu0
    %v12401 = vadd.f32 %v12316, %v12400
    %v12402 = vpop.f32.mrb[0].mxu0
    %v12403 = vpop.f32.mrb[0].mxu0
    %v12404 = vpop.f32.mrb[0].mxu0
    %12405 = vdwg.mxu0
    %vm12406 = vcmask 9216
    %12407 = vst.msk [vmem:[#allocation2] sm:$0x3] %vm12406, %v12401
    // Predicated region
    $region46: #{challenge_forward.1} parent=1 // pred_check
      _
    $region47: #{challenge_forward.1} parent=1 // pred_check_branch
      %12409 = sbr.rel (0) target = $region49
    $region48: #{challenge_forward.1} parent=1 // pred_region
      %s12411 = ssub.s32 32, 32
      %12412 = vsyncadd [#allocation3], %s12411
      %s12414 = sshll.u32 [#allocation2], 4
      %s12415 = int_to_ptr.vmem [resolvable:$true] %s12414
      %12417 = dma.vmem_to_hbm [thread:$0]  %s12415, 32, %s11, [#allocation3]
    $region49: #{challenge_forward.1} parent=1 // pred_fallthru
      _
    // Predicated region
    $region50: #{challenge_forward.1} parent=1 // pred_check
      _
    $region51: #{challenge_forward.1} parent=1 // pred_check_branch
      %12419 = sbr.rel (0) target = $region53
    $region52: #{challenge_forward.1} parent=1 // pred_region
      %12420 = dma.done [#allocation3], 32
    $region53: #{challenge_forward.1} parent=1 // pred_fallthru
      _
    %12421 = vsyncpa [#allocation3], 1

</llo_original>
